<compile_context>
chip_gen: v6e
topology: v6e:2x2x1
jax: 0.10.0
libtpu: 0.0.40
codegen_flags: <defaults>
</compile_context>

<pallas_src>
import functools
import math

import jax
import jax.numpy as jnp
from jax.experimental import pallas as pl
from jax.experimental.pallas import tpu as pltpu

# ---- model hyper-parameters (mirroring the PyTorch script) -----------------
D_MODEL = 128
FF_DIM = 32
N_STEPS = 10
INPUT_DIM = N_STEPS
OUTPUT_DIM = 1
NHEAD = 4
NUM_LAYERS = 2
LN_EPS = 1e-5

IN_PAD = 128     # embedding contraction dim padded for MXU / lane density
HEAD_PAD = 128   # fc head output lanes padded so the final store is lane-dense


# ---- small in-kernel helpers ------------------------------------------------
def _mm(a, w_bf16):
    """a: (M, K) f32/bf16, w: (N, K) bf16  ->  (M, N) f32  (== a @ w.T)."""
    return jax.lax.dot_general(
        a.astype(jnp.bfloat16), w_bf16,
        dimension_numbers=(((1,), (1,)), ((), ())),
        preferred_element_type=jnp.float32)


def _layer_norm(x, w, b, eps):
    mu = jnp.mean(x, axis=-1, keepdims=True)
    var = jnp.mean((x - mu) ** 2, axis=-1, keepdims=True)
    return (x - mu) * jax.lax.rsqrt(var + eps) * w[None, :] + b[None, :]


# ---- the Pallas kernel: full encoder forward for one batch block ------------
def _transformer_kernel(x_ref, pe_ref, emb_w_ref, emb_b_ref,
                        inproj_w_ref, inproj_b_ref,
                        outproj_w_ref, outproj_b_ref,
                        lin1_w_ref, lin1_b_ref, lin2_w_ref, lin2_b_ref,
                        n1_w_ref, n1_b_ref, n2_w_ref, n2_b_ref,
                        fc_w_ref, out_ref, *, nhead, num_layers, eps):
    TB, L, IN = x_ref.shape                     # batch-major block
    D = pe_ref.shape[-1]
    Dh = D // nhead
    scale = 1.0 / math.sqrt(Dh)

    # embedding: Linear(input_dim -> d_model); contraction dim is zero-padded.
    x2 = x_ref[...].reshape(TB * L, IN)
    h = _mm(x2, emb_w_ref[...]) + emb_b_ref[...]                  # (TB*L, D)

    # PositionalEncoding: added along the batch axis (faithful to the original
    # script's broadcast, which requires L == N).
    h = h.reshape(TB, L, D) + pe_ref[...][:, None, :]
    h2 = h.reshape(TB * L, D)

    for layer in range(num_layers):
        # --- fused QKV projection: one (TB*L,128) @ (128,384) matmul ---------
        qkv = _mm(h2, inproj_w_ref[layer]) + inproj_b_ref[layer][None, :]
        q_all = qkv[:, 0:D] * scale                               # f32
        k_all = qkv[:, D:2 * D]
        v_all = qkv[:, 2 * D:3 * D]

        attn = None
        for hh in range(nhead):
            sl = slice(hh * Dh, (hh + 1) * Dh)
            qh = q_all[:, sl].reshape(TB, L, Dh).astype(jnp.bfloat16)
            kh = k_all[:, sl].reshape(TB, L, Dh).astype(jnp.bfloat16)
            vh = v_all[:, sl].reshape(TB, L, Dh).astype(jnp.bfloat16)

            # scores: batched over the block, contract the head dim
            s = jax.lax.dot_general(qh, kh, (((2,), (2,)), ((0,), (0,))),
                                    preferred_element_type=jnp.float32)
            s = s - jnp.max(s, axis=-1, keepdims=True)
            p = jnp.exp(s)
            p = p * pl.reciprocal(jnp.sum(p, axis=-1, keepdims=True),
                                  approx=True)

            # context: (TB, L, Dh)
            oh = jax.lax.dot_general(p.astype(jnp.bfloat16), vh,
                                     (((2,), (1,)), ((0,), (0,))),
                                     preferred_element_type=jnp.float32)

            # per-head slice of out_proj; summing these over heads is exactly
            # out_proj(concat(heads)) -- no lane-axis concatenation needed.
            part = _mm(oh.reshape(TB * L, Dh), outproj_w_ref[layer, hh])
            attn = part if attn is None else attn + part
        attn = attn + outproj_b_ref[layer][None, :]

        # residual + LayerNorm 1 (dropout == identity in eval mode)
        h2 = _layer_norm(h2 + attn, n1_w_ref[layer], n1_b_ref[layer], eps)

        # feed-forward: linear1 -> relu -> linear2, residual + LayerNorm 2
        f = jnp.maximum(_mm(h2, lin1_w_ref[layer]) + lin1_b_ref[layer][None, :],
                        0.0)
        f = _mm(f, lin2_w_ref[layer]) + lin2_b_ref[layer][None, :]
        h2 = _layer_norm(h2 + f, n2_w_ref[layer], n2_b_ref[layer], eps)

    # torch.mean(x, dim=1) reduces over the batch axis: emit this block's
    # partial sum pushed through the (zero-padded, lane-dense) fc weight.
    # The wrapper finishes: sum over blocks, * 1/N, + fc bias, slice out_dim.
    block_sum = jnp.sum(h2.reshape(TB, L, D), axis=0)             # (L, D)
    out_ref[...] = _mm(block_sum, fc_w_ref[...])[None, :, :].astype(out_ref.dtype)


# ---- wrapper ----------------------------------------------------------------
def transformer_forward(x, params, *, batch_block=8):
    L, N, in_dim = x.shape
    assert L == N, "PositionalEncoding broadcast (as written in PyTorch) needs L == N"
    assert in_dim <= IN_PAD
    D = params["emb_w"].shape[0]
    Dh = D // NHEAD
    out_dim = params["fc_w"].shape[0]

    TB = min(batch_block, N)
    assert N % TB == 0
    G = N // TB

    # ---- plain-JAX glue: layout, zero-padding, one-time bf16 weight casts ---
    x_bm = jnp.swapaxes(x, 0, 1)                                   # (N, L, in_dim)
    x_p = jnp.pad(x_bm, ((0, 0), (0, 0), (0, IN_PAD - in_dim))).astype(jnp.bfloat16)
    emb_w = jnp.pad(params["emb_w"],
                    ((0, 0), (0, IN_PAD - in_dim))).astype(jnp.bfloat16)
    emb_b = params["emb_b"].reshape(1, D)
    inproj_w = params["inproj_w"].astype(jnp.bfloat16)             # (layers, 3D, D)
    outproj_w = (params["outproj_w"]
                 .reshape(NUM_LAYERS, D, NHEAD, Dh)
                 .transpose(0, 2, 1, 3)
                 .astype(jnp.bfloat16))                            # (layers, nhead, D, Dh)
    lin1_w = params["lin1_w"].astype(jnp.bfloat16)
    lin2_w = params["lin2_w"].astype(jnp.bfloat16)
    fc_w = jnp.pad(params["fc_w"],
                   ((0, HEAD_PAD - out_dim), (0, 0))).astype(jnp.bfloat16)

    args = (x_p, params["pe"], emb_w, emb_b,
            inproj_w, params["inproj_b"],
            outproj_w, params["outproj_b"],
            lin1_w, params["lin1_b"], lin2_w, params["lin2_b"],
            params["n1_w"], params["n1_b"], params["n2_w"], params["n2_b"],
            fc_w)

    def resident(a):
        zeros = (0,) * a.ndim
        return pl.BlockSpec(a.shape, lambda i, z=zeros: z)   # stays VMEM-resident

    in_specs = [
        pl.BlockSpec((TB, L, IN_PAD), lambda i: (i, 0, 0)),   # x: batch-blocked
        pl.BlockSpec((TB, D), lambda i: (i, 0)),              # pe: batch-indexed
        resident(emb_w), resident(emb_b),
        resident(inproj_w), resident(params["inproj_b"]),
        resident(outproj_w), resident(params["outproj_b"]),
        resident(lin1_w), resident(params["lin1_b"]),
        resident(lin2_w), resident(params["lin2_b"]),
        resident(params["n1_w"]), resident(params["n1_b"]),
        resident(params["n2_w"]), resident(params["n2_b"]),
        resident(fc_w),
    ]

    kernel = functools.partial(_transformer_kernel, nhead=NHEAD,
                               num_layers=NUM_LAYERS, eps=LN_EPS)

    partials = pl.pallas_call(
        kernel,
        out_shape=jax.ShapeDtypeStruct((G, L, HEAD_PAD), jnp.float32),
        grid=(G,),
        in_specs=in_specs,
        out_specs=pl.BlockSpec((1, L, HEAD_PAD), lambda i: (i, 0, 0)),
        compiler_params=pltpu.CompilerParams(
            dimension_semantics=("parallel",)),
    )(*args)

    # Finish the batch mean + fc bias + drop the lane padding (tiny XLA ops).
    pooled_fc = jnp.sum(partials, axis=0) * (1.0 / N)              # (L, HEAD_PAD)
    return pooled_fc[:, :out_dim] + params["fc_b"][None, :]


# ---- deterministic parameter construction -----------------------------------
def _positional_encoding(max_len, d_model):
    pos = jnp.arange(max_len, dtype=jnp.float32)[:, None]
    div = jnp.exp(jnp.arange(0, d_model, 2, dtype=jnp.float32)
                  * (-math.log(10000.0) / d_model))
    ang = pos * div
    # interleave sin / cos exactly like pe[:, 0::2]=sin, pe[:, 1::2]=cos
    return jnp.stack([jnp.sin(ang), jnp.cos(ang)], axis=-1).reshape(max_len, d_model)


def init_params(key, *, input_dim, d_model, ff_dim, num_layers, output_dim, seq_len):
    ks = jax.random.split(key, 12)

    def w(k, shape, fan_in):
        return jax.random.normal(k, shape, jnp.float32) / math.sqrt(fan_in)

    def b(k, shape):
        return 0.01 * jax.random.normal(k, shape, jnp.float32)

    return {
        "pe": _positional_encoding(seq_len, d_model),
        "emb_w": w(ks[0], (d_model, input_dim), input_dim),
        "emb_b": b(ks[1], (d_model,)),
        "inproj_w": w(ks[2], (num_layers, 3 * d_model, d_model), d_model),
        "inproj_b": b(ks[3], (num_layers, 3 * d_model)),
        "outproj_w": w(ks[4], (num_layers, d_model, d_model), d_model),
        "outproj_b": b(ks[5], (num_layers, d_model)),
        "lin1_w": w(ks[6], (num_layers, ff_dim, d_model), d_model),
        "lin1_b": b(ks[7], (num_layers, ff_dim)),
        "lin2_w": w(ks[8], (num_layers, d_model, ff_dim), ff_dim),
        "lin2_b": b(ks[9], (num_layers, d_model)),
        "n1_w": jnp.ones((num_layers, d_model), jnp.float32),
        "n1_b": jnp.zeros((num_layers, d_model), jnp.float32),
        "n2_w": jnp.ones((num_layers, d_model), jnp.float32),
        "n2_b": jnp.zeros((num_layers, d_model), jnp.float32),
        "fc_w": w(ks[10], (output_dim, d_model), d_model),
        "fc_b": b(ks[11], (output_dim,)),
    }


if __name__ == "__main__":
    L = N = 8   # seq-like and batch-like dims (must match, see layout note)
    key = jax.random.PRNGKey(0)
    kx, kp = jax.random.split(key)

    x = jax.random.normal(kx, (L, N, INPUT_DIM), jnp.float32)   # (L, N, input_dim)
    params = init_params(kp, input_dim=INPUT_DIM, d_model=D_MODEL, ff_dim=FF_DIM,
                         num_layers=NUM_LAYERS, output_dim=OUTPUT_DIM, seq_len=L)

    out = transformer_forward(x, params)
    out = jax.block_until_ready(out)
    assert out.shape == (L, OUTPUT_DIM), out.shape
    assert bool(jnp.all(jnp.isfinite(out)))
    print("KERNEL_OK")
</pallas_src>

<mosaic_0001>
module attributes {stable_mosaic.version = 11 : i64} {
  func.func @_transformer_kernel(%arg0: i32, %arg1: memref<8x8x128xbf16, #tpu.memory_space<vmem>>, %arg2: memref<8x128xf32, #tpu.memory_space<vmem>>, %arg3: memref<128x128xbf16, #tpu.memory_space<vmem>>, %arg4: memref<1x128xf32, #tpu.memory_space<vmem>>, %arg5: memref<2x384x128xbf16, #tpu.memory_space<vmem>>, %arg6: memref<2x384xf32, #tpu.memory_space<vmem>>, %arg7: memref<2x4x128x32xbf16, #tpu.memory_space<vmem>>, %arg8: memref<2x128xf32, #tpu.memory_space<vmem>>, %arg9: memref<2x32x128xbf16, #tpu.memory_space<vmem>>, %arg10: memref<2x32xf32, #tpu.memory_space<vmem>>, %arg11: memref<2x128x32xbf16, #tpu.memory_space<vmem>>, %arg12: memref<2x128xf32, #tpu.memory_space<vmem>>, %arg13: memref<2x128xf32, #tpu.memory_space<vmem>>, %arg14: memref<2x128xf32, #tpu.memory_space<vmem>>, %arg15: memref<2x128xf32, #tpu.memory_space<vmem>>, %arg16: memref<2x128xf32, #tpu.memory_space<vmem>>, %arg17: memref<128x128xbf16, #tpu.memory_space<vmem>>, %arg18: memref<1x8x128xf32, #tpu.memory_space<vmem>>) attributes {dimension_semantics = [#tpu.dimension_semantics<parallel>], iteration_bounds = array<i64: 1>, scalar_prefetch = 0 : i64, scratch_operands = 0 : i64, tpu.core_type = #tpu.core_type<tc>, window_params = [{transform_indices = @transform_0, window_bounds = array<i64: 8, 8, 128>}, {transform_indices = @transform_1, window_bounds = array<i64: 8, 128>}, {pipeline_mode = #tpu.pipeline_mode<synchronous>, transform_indices = @transform_2, window_bounds = array<i64: 128, 128>}, {pipeline_mode = #tpu.pipeline_mode<synchronous>, transform_indices = @transform_3, window_bounds = array<i64: 1, 128>}, {pipeline_mode = #tpu.pipeline_mode<synchronous>, transform_indices = @transform_4, window_bounds = array<i64: 2, 384, 128>}, {pipeline_mode = #tpu.pipeline_mode<synchronous>, transform_indices = @transform_5, window_bounds = array<i64: 2, 384>}, {pipeline_mode = #tpu.pipeline_mode<synchronous>, transform_indices = @transform_6, window_bounds = array<i64: 2, 4, 128, 32>}, {pipeline_mode = #tpu.pipeline_mode<synchronous>, transform_indices = @transform_7, window_bounds = array<i64: 2, 128>}, {pipeline_mode = #tpu.pipeline_mode<synchronous>, transform_indices = @transform_8, window_bounds = array<i64: 2, 32, 128>}, {pipeline_mode = #tpu.pipeline_mode<synchronous>, transform_indices = @transform_9, window_bounds = array<i64: 2, 32>}, {pipeline_mode = #tpu.pipeline_mode<synchronous>, transform_indices = @transform_10, window_bounds = array<i64: 2, 128, 32>}, {pipeline_mode = #tpu.pipeline_mode<synchronous>, transform_indices = @transform_11, window_bounds = array<i64: 2, 128>}, {pipeline_mode = #tpu.pipeline_mode<synchronous>, transform_indices = @transform_12, window_bounds = array<i64: 2, 128>}, {pipeline_mode = #tpu.pipeline_mode<synchronous>, transform_indices = @transform_13, window_bounds = array<i64: 2, 128>}, {pipeline_mode = #tpu.pipeline_mode<synchronous>, transform_indices = @transform_14, window_bounds = array<i64: 2, 128>}, {pipeline_mode = #tpu.pipeline_mode<synchronous>, transform_indices = @transform_15, window_bounds = array<i64: 2, 128>}, {pipeline_mode = #tpu.pipeline_mode<synchronous>, transform_indices = @transform_16, window_bounds = array<i64: 128, 128>}, {transform_indices = @transform_17, window_bounds = array<i64: 1, 8, 128>}]} {
    %c0 = arith.constant 0 : index
    %c0_0 = arith.constant 0 : index
    %c0_1 = arith.constant 0 : index
    %0 = vector.load %arg1[%c0, %c0_0, %c0_1] : memref<8x8x128xbf16, #tpu.memory_space<vmem>>, vector<8x8x128xbf16>
    %1 = vector.shape_cast %0 : vector<8x8x128xbf16> to vector<64x128xbf16>
    %c0_2 = arith.constant 0 : index
    %c0_3 = arith.constant 0 : index
    %2 = vector.load %arg3[%c0_2, %c0_3] : memref<128x128xbf16, #tpu.memory_space<vmem>>, vector<128x128xbf16>
    %cst = arith.constant dense<0.000000e+00> : vector<64x128xf32>
    %3 = tpu.matmul %1, %2, %cst {dimension_numbers = #tpu.dot_dimension_numbers<[1], [1], [0], [0], [0, 0, 1, 0], [], []>} : vector<64x128xbf16>, vector<128x128xbf16>, vector<64x128xf32> -> vector<64x128xf32>
    %c0_4 = arith.constant 0 : index
    %c0_5 = arith.constant 0 : index
    %4 = vector.load %arg4[%c0_4, %c0_5] : memref<1x128xf32, #tpu.memory_space<vmem>>, vector<1x128xf32>
    %5 = vector.broadcast %4 : vector<1x128xf32> to vector<64x128xf32>
    %6 = arith.addf %3, %5 : vector<64x128xf32>
    %7 = vector.shape_cast %6 : vector<64x128xf32> to vector<8x8x128xf32>
    %c0_6 = arith.constant 0 : index
    %c0_7 = arith.constant 0 : index
    %8 = vector.load %arg2[%c0_6, %c0_7] : memref<8x128xf32, #tpu.memory_space<vmem>>, vector<8x128xf32>
    %9 = vector.shape_cast %8 : vector<8x128xf32> to vector<8x1x128xf32>
    %10 = vector.broadcast %9 : vector<8x1x128xf32> to vector<8x8x128xf32>
    %11 = arith.addf %7, %10 : vector<8x8x128xf32>
    %12 = vector.shape_cast %11 : vector<8x8x128xf32> to vector<64x128xf32>
    %c0_8 = arith.constant 0 : index
    %c0_9 = arith.constant 0 : index
    %c0_10 = arith.constant 0 : index
    %13 = vector.load %arg5[%c0_8, %c0_9, %c0_10] : memref<2x384x128xbf16, #tpu.memory_space<vmem>>, vector<1x384x128xbf16>
    %14 = vector.shape_cast %13 : vector<1x384x128xbf16> to vector<384x128xbf16>
    %15 = arith.truncf %12 : vector<64x128xf32> to vector<64x128xbf16>
    %cst_11 = arith.constant dense<0.000000e+00> : vector<64x384xf32>
    %16 = tpu.matmul %15, %14, %cst_11 {dimension_numbers = #tpu.dot_dimension_numbers<[1], [1], [0], [0], [0, 0, 1, 0], [], []>} : vector<64x128xbf16>, vector<384x128xbf16>, vector<64x384xf32> -> vector<64x384xf32>
    %c0_12 = arith.constant 0 : index
    %c0_13 = arith.constant 0 : index
    %17 = vector.load %arg6[%c0_12, %c0_13] : memref<2x384xf32, #tpu.memory_space<vmem>>, vector<1x384xf32>
    %18 = vector.shape_cast %17 : vector<1x384xf32> to vector<384xf32>
    %19 = vector.shape_cast %18 : vector<384xf32> to vector<1x384xf32>
    %20 = vector.broadcast %19 : vector<1x384xf32> to vector<64x384xf32>
    %21 = arith.addf %16, %20 : vector<64x384xf32>
    %22 = vector.extract_strided_slice %21 {offsets = [0, 0], sizes = [64, 128], strides = [1, 1]} : vector<64x384xf32> to vector<64x128xf32>
    %cst_14 = arith.constant 0.176776692 : f32
    %23 = vector.broadcast %cst_14 : f32 to vector<64x128xf32>
    %24 = arith.mulf %22, %23 : vector<64x128xf32>
    %25 = vector.extract_strided_slice %21 {offsets = [0, 128], sizes = [64, 128], strides = [1, 1]} : vector<64x384xf32> to vector<64x128xf32>
    %26 = vector.extract_strided_slice %21 {offsets = [0, 256], sizes = [64, 128], strides = [1, 1]} : vector<64x384xf32> to vector<64x128xf32>
    %27 = vector.extract_strided_slice %24 {offsets = [0, 0], sizes = [64, 32], strides = [1, 1]} : vector<64x128xf32> to vector<64x32xf32>
    %28 = vector.shape_cast %27 : vector<64x32xf32> to vector<8x8x32xf32>
    %29 = arith.truncf %28 : vector<8x8x32xf32> to vector<8x8x32xbf16>
    %30 = vector.extract_strided_slice %25 {offsets = [0, 0], sizes = [64, 32], strides = [1, 1]} : vector<64x128xf32> to vector<64x32xf32>
    %31 = vector.shape_cast %30 : vector<64x32xf32> to vector<8x8x32xf32>
    %32 = arith.truncf %31 : vector<8x8x32xf32> to vector<8x8x32xbf16>
    %33 = vector.extract_strided_slice %26 {offsets = [0, 0], sizes = [64, 32], strides = [1, 1]} : vector<64x128xf32> to vector<64x32xf32>
    %34 = vector.shape_cast %33 : vector<64x32xf32> to vector<8x8x32xf32>
    %35 = arith.truncf %34 : vector<8x8x32xf32> to vector<8x8x32xbf16>
    %cst_15 = arith.constant dense<0.000000e+00> : vector<8x8x8xf32>
    %36 = tpu.matmul %29, %32, %cst_15 {dimension_numbers = #tpu.dot_dimension_numbers<[2], [2], [1], [1], [0, 0, 0, 1, 1, 1], [0], [0]>} : vector<8x8x32xbf16>, vector<8x8x32xbf16>, vector<8x8x8xf32> -> vector<8x8x8xf32>
    %cst_16 = arith.constant dense<0xFF800000> : vector<8x8xf32>
    %37 = vector.multi_reduction <maximumf>, %36, %cst_16 [2] : vector<8x8x8xf32> to vector<8x8xf32>
    %38 = vector.shape_cast %37 : vector<8x8xf32> to vector<8x8x1xf32>
    %39 = vector.broadcast %38 : vector<8x8x1xf32> to vector<8x8x8xf32>
    %40 = arith.subf %36, %39 : vector<8x8x8xf32>
    %41 = math.exp %40 : vector<8x8x8xf32>
    %cst_17 = arith.constant dense<0.000000e+00> : vector<8x8xf32>
    %42 = vector.multi_reduction <add>, %41, %cst_17 [2] : vector<8x8x8xf32> to vector<8x8xf32>
    %43 = vector.shape_cast %42 : vector<8x8xf32> to vector<8x8x1xf32>
    %44 = tpu.reciprocal %43 {approx = true} : vector<8x8x1xf32> -> vector<8x8x1xf32>
    %45 = vector.broadcast %44 : vector<8x8x1xf32> to vector<8x8x8xf32>
    %46 = arith.mulf %41, %45 : vector<8x8x8xf32>
    %47 = arith.truncf %46 : vector<8x8x8xf32> to vector<8x8x8xbf16>
    %cst_18 = arith.constant dense<0.000000e+00> : vector<8x8x32xf32>
    %48 = tpu.matmul %47, %35, %cst_18 {dimension_numbers = #tpu.dot_dimension_numbers<[2], [1], [1], [2], [0, 0, 0, 1, 1, 2], [0], [0]>} : vector<8x8x8xbf16>, vector<8x8x32xbf16>, vector<8x8x32xf32> -> vector<8x8x32xf32>
    %49 = vector.shape_cast %48 : vector<8x8x32xf32> to vector<64x32xf32>
    %c0_19 = arith.constant 0 : index
    %c0_20 = arith.constant 0 : index
    %c0_21 = arith.constant 0 : index
    %c0_22 = arith.constant 0 : index
    %50 = vector.load %arg7[%c0_19, %c0_20, %c0_21, %c0_22] : memref<2x4x128x32xbf16, #tpu.memory_space<vmem>>, vector<1x1x128x32xbf16>
    %51 = vector.shape_cast %50 : vector<1x1x128x32xbf16> to vector<128x32xbf16>
    %52 = arith.truncf %49 : vector<64x32xf32> to vector<64x32xbf16>
    %cst_23 = arith.constant dense<0.000000e+00> : vector<64x128xf32>
    %53 = tpu.matmul %52, %51, %cst_23 {dimension_numbers = #tpu.dot_dimension_numbers<[1], [1], [0], [0], [0, 0, 1, 0], [], []>} : vector<64x32xbf16>, vector<128x32xbf16>, vector<64x128xf32> -> vector<64x128xf32>
    %54 = vector.extract_strided_slice %24 {offsets = [0, 32], sizes = [64, 32], strides = [1, 1]} : vector<64x128xf32> to vector<64x32xf32>
    %55 = vector.shape_cast %54 : vector<64x32xf32> to vector<8x8x32xf32>
    %56 = arith.truncf %55 : vector<8x8x32xf32> to vector<8x8x32xbf16>
    %57 = vector.extract_strided_slice %25 {offsets = [0, 32], sizes = [64, 32], strides = [1, 1]} : vector<64x128xf32> to vector<64x32xf32>
    %58 = vector.shape_cast %57 : vector<64x32xf32> to vector<8x8x32xf32>
    %59 = arith.truncf %58 : vector<8x8x32xf32> to vector<8x8x32xbf16>
    %60 = vector.extract_strided_slice %26 {offsets = [0, 32], sizes = [64, 32], strides = [1, 1]} : vector<64x128xf32> to vector<64x32xf32>
    %61 = vector.shape_cast %60 : vector<64x32xf32> to vector<8x8x32xf32>
    %62 = arith.truncf %61 : vector<8x8x32xf32> to vector<8x8x32xbf16>
    %cst_24 = arith.constant dense<0.000000e+00> : vector<8x8x8xf32>
    %63 = tpu.matmul %56, %59, %cst_24 {dimension_numbers = #tpu.dot_dimension_numbers<[2], [2], [1], [1], [0, 0, 0, 1, 1, 1], [0], [0]>} : vector<8x8x32xbf16>, vector<8x8x32xbf16>, vector<8x8x8xf32> -> vector<8x8x8xf32>
    %cst_25 = arith.constant dense<0xFF800000> : vector<8x8xf32>
    %64 = vector.multi_reduction <maximumf>, %63, %cst_25 [2] : vector<8x8x8xf32> to vector<8x8xf32>
    %65 = vector.shape_cast %64 : vector<8x8xf32> to vector<8x8x1xf32>
    %66 = vector.broadcast %65 : vector<8x8x1xf32> to vector<8x8x8xf32>
    %67 = arith.subf %63, %66 : vector<8x8x8xf32>
    %68 = math.exp %67 : vector<8x8x8xf32>
    %cst_26 = arith.constant dense<0.000000e+00> : vector<8x8xf32>
    %69 = vector.multi_reduction <add>, %68, %cst_26 [2] : vector<8x8x8xf32> to vector<8x8xf32>
    %70 = vector.shape_cast %69 : vector<8x8xf32> to vector<8x8x1xf32>
    %71 = tpu.reciprocal %70 {approx = true} : vector<8x8x1xf32> -> vector<8x8x1xf32>
    %72 = vector.broadcast %71 : vector<8x8x1xf32> to vector<8x8x8xf32>
    %73 = arith.mulf %68, %72 : vector<8x8x8xf32>
    %74 = arith.truncf %73 : vector<8x8x8xf32> to vector<8x8x8xbf16>
    %cst_27 = arith.constant dense<0.000000e+00> : vector<8x8x32xf32>
    %75 = tpu.matmul %74, %62, %cst_27 {dimension_numbers = #tpu.dot_dimension_numbers<[2], [1], [1], [2], [0, 0, 0, 1, 1, 2], [0], [0]>} : vector<8x8x8xbf16>, vector<8x8x32xbf16>, vector<8x8x32xf32> -> vector<8x8x32xf32>
    %76 = vector.shape_cast %75 : vector<8x8x32xf32> to vector<64x32xf32>
    %c0_28 = arith.constant 0 : index
    %c1 = arith.constant 1 : index
    %c0_29 = arith.constant 0 : index
    %c0_30 = arith.constant 0 : index
    %77 = vector.load %arg7[%c0_28, %c1, %c0_29, %c0_30] : memref<2x4x128x32xbf16, #tpu.memory_space<vmem>>, vector<1x1x128x32xbf16>
    %78 = vector.shape_cast %77 : vector<1x1x128x32xbf16> to vector<128x32xbf16>
    %79 = arith.truncf %76 : vector<64x32xf32> to vector<64x32xbf16>
    %cst_31 = arith.constant dense<0.000000e+00> : vector<64x128xf32>
    %80 = tpu.matmul %79, %78, %cst_31 {dimension_numbers = #tpu.dot_dimension_numbers<[1], [1], [0], [0], [0, 0, 1, 0], [], []>} : vector<64x32xbf16>, vector<128x32xbf16>, vector<64x128xf32> -> vector<64x128xf32>
    %81 = arith.addf %53, %80 : vector<64x128xf32>
    %82 = vector.extract_strided_slice %24 {offsets = [0, 64], sizes = [64, 32], strides = [1, 1]} : vector<64x128xf32> to vector<64x32xf32>
    %83 = vector.shape_cast %82 : vector<64x32xf32> to vector<8x8x32xf32>
    %84 = arith.truncf %83 : vector<8x8x32xf32> to vector<8x8x32xbf16>
    %85 = vector.extract_strided_slice %25 {offsets = [0, 64], sizes = [64, 32], strides = [1, 1]} : vector<64x128xf32> to vector<64x32xf32>
    %86 = vector.shape_cast %85 : vector<64x32xf32> to vector<8x8x32xf32>
    %87 = arith.truncf %86 : vector<8x8x32xf32> to vector<8x8x32xbf16>
    %88 = vector.extract_strided_slice %26 {offsets = [0, 64], sizes = [64, 32], strides = [1, 1]} : vector<64x128xf32> to vector<64x32xf32>
    %89 = vector.shape_cast %88 : vector<64x32xf32> to vector<8x8x32xf32>
    %90 = arith.truncf %89 : vector<8x8x32xf32> to vector<8x8x32xbf16>
    %cst_32 = arith.constant dense<0.000000e+00> : vector<8x8x8xf32>
    %91 = tpu.matmul %84, %87, %cst_32 {dimension_numbers = #tpu.dot_dimension_numbers<[2], [2], [1], [1], [0, 0, 0, 1, 1, 1], [0], [0]>} : vector<8x8x32xbf16>, vector<8x8x32xbf16>, vector<8x8x8xf32> -> vector<8x8x8xf32>
    %cst_33 = arith.constant dense<0xFF800000> : vector<8x8xf32>
    %92 = vector.multi_reduction <maximumf>, %91, %cst_33 [2] : vector<8x8x8xf32> to vector<8x8xf32>
    %93 = vector.shape_cast %92 : vector<8x8xf32> to vector<8x8x1xf32>
    %94 = vector.broadcast %93 : vector<8x8x1xf32> to vector<8x8x8xf32>
    %95 = arith.subf %91, %94 : vector<8x8x8xf32>
    %96 = math.exp %95 : vector<8x8x8xf32>
    %cst_34 = arith.constant dense<0.000000e+00> : vector<8x8xf32>
    %97 = vector.multi_reduction <add>, %96, %cst_34 [2] : vector<8x8x8xf32> to vector<8x8xf32>
    %98 = vector.shape_cast %97 : vector<8x8xf32> to vector<8x8x1xf32>
    %99 = tpu.reciprocal %98 {approx = true} : vector<8x8x1xf32> -> vector<8x8x1xf32>
    %100 = vector.broadcast %99 : vector<8x8x1xf32> to vector<8x8x8xf32>
    %101 = arith.mulf %96, %100 : vector<8x8x8xf32>
    %102 = arith.truncf %101 : vector<8x8x8xf32> to vector<8x8x8xbf16>
    %cst_35 = arith.constant dense<0.000000e+00> : vector<8x8x32xf32>
    %103 = tpu.matmul %102, %90, %cst_35 {dimension_numbers = #tpu.dot_dimension_numbers<[2], [1], [1], [2], [0, 0, 0, 1, 1, 2], [0], [0]>} : vector<8x8x8xbf16>, vector<8x8x32xbf16>, vector<8x8x32xf32> -> vector<8x8x32xf32>
    %104 = vector.shape_cast %103 : vector<8x8x32xf32> to vector<64x32xf32>
    %c0_36 = arith.constant 0 : index
    %c2 = arith.constant 2 : index
    %c0_37 = arith.constant 0 : index
    %c0_38 = arith.constant 0 : index
    %105 = vector.load %arg7[%c0_36, %c2, %c0_37, %c0_38] : memref<2x4x128x32xbf16, #tpu.memory_space<vmem>>, vector<1x1x128x32xbf16>
    %106 = vector.shape_cast %105 : vector<1x1x128x32xbf16> to vector<128x32xbf16>
    %107 = arith.truncf %104 : vector<64x32xf32> to vector<64x32xbf16>
    %cst_39 = arith.constant dense<0.000000e+00> : vector<64x128xf32>
    %108 = tpu.matmul %107, %106, %cst_39 {dimension_numbers = #tpu.dot_dimension_numbers<[1], [1], [0], [0], [0, 0, 1, 0], [], []>} : vector<64x32xbf16>, vector<128x32xbf16>, vector<64x128xf32> -> vector<64x128xf32>
    %109 = arith.addf %81, %108 : vector<64x128xf32>
    %110 = vector.extract_strided_slice %24 {offsets = [0, 96], sizes = [64, 32], strides = [1, 1]} : vector<64x128xf32> to vector<64x32xf32>
    %111 = vector.shape_cast %110 : vector<64x32xf32> to vector<8x8x32xf32>
    %112 = arith.truncf %111 : vector<8x8x32xf32> to vector<8x8x32xbf16>
    %113 = vector.extract_strided_slice %25 {offsets = [0, 96], sizes = [64, 32], strides = [1, 1]} : vector<64x128xf32> to vector<64x32xf32>
    %114 = vector.shape_cast %113 : vector<64x32xf32> to vector<8x8x32xf32>
    %115 = arith.truncf %114 : vector<8x8x32xf32> to vector<8x8x32xbf16>
    %116 = vector.extract_strided_slice %26 {offsets = [0, 96], sizes = [64, 32], strides = [1, 1]} : vector<64x128xf32> to vector<64x32xf32>
    %117 = vector.shape_cast %116 : vector<64x32xf32> to vector<8x8x32xf32>
    %118 = arith.truncf %117 : vector<8x8x32xf32> to vector<8x8x32xbf16>
    %cst_40 = arith.constant dense<0.000000e+00> : vector<8x8x8xf32>
    %119 = tpu.matmul %112, %115, %cst_40 {dimension_numbers = #tpu.dot_dimension_numbers<[2], [2], [1], [1], [0, 0, 0, 1, 1, 1], [0], [0]>} : vector<8x8x32xbf16>, vector<8x8x32xbf16>, vector<8x8x8xf32> -> vector<8x8x8xf32>
    %cst_41 = arith.constant dense<0xFF800000> : vector<8x8xf32>
    %120 = vector.multi_reduction <maximumf>, %119, %cst_41 [2] : vector<8x8x8xf32> to vector<8x8xf32>
    %121 = vector.shape_cast %120 : vector<8x8xf32> to vector<8x8x1xf32>
    %122 = vector.broadcast %121 : vector<8x8x1xf32> to vector<8x8x8xf32>
    %123 = arith.subf %119, %122 : vector<8x8x8xf32>
    %124 = math.exp %123 : vector<8x8x8xf32>
    %cst_42 = arith.constant dense<0.000000e+00> : vector<8x8xf32>
    %125 = vector.multi_reduction <add>, %124, %cst_42 [2] : vector<8x8x8xf32> to vector<8x8xf32>
    %126 = vector.shape_cast %125 : vector<8x8xf32> to vector<8x8x1xf32>
    %127 = tpu.reciprocal %126 {approx = true} : vector<8x8x1xf32> -> vector<8x8x1xf32>
    %128 = vector.broadcast %127 : vector<8x8x1xf32> to vector<8x8x8xf32>
    %129 = arith.mulf %124, %128 : vector<8x8x8xf32>
    %130 = arith.truncf %129 : vector<8x8x8xf32> to vector<8x8x8xbf16>
    %cst_43 = arith.constant dense<0.000000e+00> : vector<8x8x32xf32>
    %131 = tpu.matmul %130, %118, %cst_43 {dimension_numbers = #tpu.dot_dimension_numbers<[2], [1], [1], [2], [0, 0, 0, 1, 1, 2], [0], [0]>} : vector<8x8x8xbf16>, vector<8x8x32xbf16>, vector<8x8x32xf32> -> vector<8x8x32xf32>
    %132 = vector.shape_cast %131 : vector<8x8x32xf32> to vector<64x32xf32>
    %c0_44 = arith.constant 0 : index
    %c3 = arith.constant 3 : index
    %c0_45 = arith.constant 0 : index
    %c0_46 = arith.constant 0 : index
    %133 = vector.load %arg7[%c0_44, %c3, %c0_45, %c0_46] : memref<2x4x128x32xbf16, #tpu.memory_space<vmem>>, vector<1x1x128x32xbf16>
    %134 = vector.shape_cast %133 : vector<1x1x128x32xbf16> to vector<128x32xbf16>
    %135 = arith.truncf %132 : vector<64x32xf32> to vector<64x32xbf16>
    %cst_47 = arith.constant dense<0.000000e+00> : vector<64x128xf32>
    %136 = tpu.matmul %135, %134, %cst_47 {dimension_numbers = #tpu.dot_dimension_numbers<[1], [1], [0], [0], [0, 0, 1, 0], [], []>} : vector<64x32xbf16>, vector<128x32xbf16>, vector<64x128xf32> -> vector<64x128xf32>
    %137 = arith.addf %109, %136 : vector<64x128xf32>
    %c0_48 = arith.constant 0 : index
    %c0_49 = arith.constant 0 : index
    %138 = vector.load %arg8[%c0_48, %c0_49] : memref<2x128xf32, #tpu.memory_space<vmem>>, vector<1x128xf32>
    %139 = vector.shape_cast %138 : vector<1x128xf32> to vector<128xf32>
    %140 = vector.shape_cast %139 : vector<128xf32> to vector<1x128xf32>
    %141 = vector.broadcast %140 : vector<1x128xf32> to vector<64x128xf32>
    %142 = arith.addf %137, %141 : vector<64x128xf32>
    %143 = arith.addf %12, %142 : vector<64x128xf32>
    %c0_50 = arith.constant 0 : index
    %c0_51 = arith.constant 0 : index
    %144 = vector.load %arg13[%c0_50, %c0_51] : memref<2x128xf32, #tpu.memory_space<vmem>>, vector<1x128xf32>
    %145 = vector.shape_cast %144 : vector<1x128xf32> to vector<128xf32>
    %c0_52 = arith.constant 0 : index
    %c0_53 = arith.constant 0 : index
    %146 = vector.load %arg14[%c0_52, %c0_53] : memref<2x128xf32, #tpu.memory_space<vmem>>, vector<1x128xf32>
    %147 = vector.shape_cast %146 : vector<1x128xf32> to vector<128xf32>
    %cst_54 = arith.constant dense<0.000000e+00> : vector<64xf32>
    %148 = vector.multi_reduction <add>, %143, %cst_54 [1] : vector<64x128xf32> to vector<64xf32>
    %149 = vector.shape_cast %148 : vector<64xf32> to vector<64x1xf32>
    %cst_55 = arith.constant 1.280000e+02 : f32
    %150 = vector.broadcast %cst_55 : f32 to vector<64x1xf32>
    %151 = arith.divf %149, %150 : vector<64x1xf32>
    %152 = vector.broadcast %151 : vector<64x1xf32> to vector<64x128xf32>
    %153 = arith.subf %143, %152 : vector<64x128xf32>
    %154 = arith.mulf %153, %153 : vector<64x128xf32>
    %cst_56 = arith.constant dense<0.000000e+00> : vector<64xf32>
    %155 = vector.multi_reduction <add>, %154, %cst_56 [1] : vector<64x128xf32> to vector<64xf32>
    %156 = vector.shape_cast %155 : vector<64xf32> to vector<64x1xf32>
    %cst_57 = arith.constant 1.280000e+02 : f32
    %157 = vector.broadcast %cst_57 : f32 to vector<64x1xf32>
    %158 = arith.divf %156, %157 : vector<64x1xf32>
    %159 = vector.broadcast %151 : vector<64x1xf32> to vector<64x128xf32>
    %160 = arith.subf %143, %159 : vector<64x128xf32>
    %cst_58 = arith.constant 9.99999974E-6 : f32
    %161 = vector.broadcast %cst_58 : f32 to vector<64x1xf32>
    %162 = arith.addf %158, %161 : vector<64x1xf32>
    %163 = math.rsqrt %162 : vector<64x1xf32>
    %164 = vector.broadcast %163 : vector<64x1xf32> to vector<64x128xf32>
    %165 = arith.mulf %160, %164 : vector<64x128xf32>
    %166 = vector.shape_cast %145 : vector<128xf32> to vector<1x128xf32>
    %167 = vector.broadcast %166 : vector<1x128xf32> to vector<64x128xf32>
    %168 = arith.mulf %165, %167 : vector<64x128xf32>
    %169 = vector.shape_cast %147 : vector<128xf32> to vector<1x128xf32>
    %170 = vector.broadcast %169 : vector<1x128xf32> to vector<64x128xf32>
    %171 = arith.addf %168, %170 : vector<64x128xf32>
    %c0_59 = arith.constant 0 : index
    %c0_60 = arith.constant 0 : index
    %c0_61 = arith.constant 0 : index
    %172 = vector.load %arg9[%c0_59, %c0_60, %c0_61] : memref<2x32x128xbf16, #tpu.memory_space<vmem>>, vector<1x32x128xbf16>
    %173 = vector.shape_cast %172 : vector<1x32x128xbf16> to vector<32x128xbf16>
    %174 = arith.truncf %171 : vector<64x128xf32> to vector<64x128xbf16>
    %cst_62 = arith.constant dense<0.000000e+00> : vector<64x32xf32>
    %175 = tpu.matmul %174, %173, %cst_62 {dimension_numbers = #tpu.dot_dimension_numbers<[1], [1], [0], [0], [0, 0, 1, 0], [], []>} : vector<64x128xbf16>, vector<32x128xbf16>, vector<64x32xf32> -> vector<64x32xf32>
    %c0_63 = arith.constant 0 : index
    %c0_64 = arith.constant 0 : index
    %176 = vector.load %arg10[%c0_63, %c0_64] : memref<2x32xf32, #tpu.memory_space<vmem>>, vector<1x32xf32>
    %177 = vector.shape_cast %176 : vector<1x32xf32> to vector<32xf32>
    %178 = vector.shape_cast %177 : vector<32xf32> to vector<1x32xf32>
    %179 = vector.broadcast %178 : vector<1x32xf32> to vector<64x32xf32>
    %180 = arith.addf %175, %179 : vector<64x32xf32>
    %cst_65 = arith.constant 0.000000e+00 : f32
    %181 = vector.broadcast %cst_65 : f32 to vector<64x32xf32>
    %182 = arith.maximumf %180, %181 : vector<64x32xf32>
    %c0_66 = arith.constant 0 : index
    %c0_67 = arith.constant 0 : index
    %c0_68 = arith.constant 0 : index
    %183 = vector.load %arg11[%c0_66, %c0_67, %c0_68] : memref<2x128x32xbf16, #tpu.memory_space<vmem>>, vector<1x128x32xbf16>
    %184 = vector.shape_cast %183 : vector<1x128x32xbf16> to vector<128x32xbf16>
    %185 = arith.truncf %182 : vector<64x32xf32> to vector<64x32xbf16>
    %cst_69 = arith.constant dense<0.000000e+00> : vector<64x128xf32>
    %186 = tpu.matmul %185, %184, %cst_69 {dimension_numbers = #tpu.dot_dimension_numbers<[1], [1], [0], [0], [0, 0, 1, 0], [], []>} : vector<64x32xbf16>, vector<128x32xbf16>, vector<64x128xf32> -> vector<64x128xf32>
    %c0_70 = arith.constant 0 : index
    %c0_71 = arith.constant 0 : index
    %187 = vector.load %arg12[%c0_70, %c0_71] : memref<2x128xf32, #tpu.memory_space<vmem>>, vector<1x128xf32>
    %188 = vector.shape_cast %187 : vector<1x128xf32> to vector<128xf32>
    %189 = vector.shape_cast %188 : vector<128xf32> to vector<1x128xf32>
    %190 = vector.broadcast %189 : vector<1x128xf32> to vector<64x128xf32>
    %191 = arith.addf %186, %190 : vector<64x128xf32>
    %192 = arith.addf %171, %191 : vector<64x128xf32>
    %c0_72 = arith.constant 0 : index
    %c0_73 = arith.constant 0 : index
    %193 = vector.load %arg15[%c0_72, %c0_73] : memref<2x128xf32, #tpu.memory_space<vmem>>, vector<1x128xf32>
    %194 = vector.shape_cast %193 : vector<1x128xf32> to vector<128xf32>
    %c0_74 = arith.constant 0 : index
    %c0_75 = arith.constant 0 : index
    %195 = vector.load %arg16[%c0_74, %c0_75] : memref<2x128xf32, #tpu.memory_space<vmem>>, vector<1x128xf32>
    %196 = vector.shape_cast %195 : vector<1x128xf32> to vector<128xf32>
    %cst_76 = arith.constant dense<0.000000e+00> : vector<64xf32>
    %197 = vector.multi_reduction <add>, %192, %cst_76 [1] : vector<64x128xf32> to vector<64xf32>
    %198 = vector.shape_cast %197 : vector<64xf32> to vector<64x1xf32>
    %cst_77 = arith.constant 1.280000e+02 : f32
    %199 = vector.broadcast %cst_77 : f32 to vector<64x1xf32>
    %200 = arith.divf %198, %199 : vector<64x1xf32>
    %201 = vector.broadcast %200 : vector<64x1xf32> to vector<64x128xf32>
    %202 = arith.subf %192, %201 : vector<64x128xf32>
    %203 = arith.mulf %202, %202 : vector<64x128xf32>
    %cst_78 = arith.constant dense<0.000000e+00> : vector<64xf32>
    %204 = vector.multi_reduction <add>, %203, %cst_78 [1] : vector<64x128xf32> to vector<64xf32>
    %205 = vector.shape_cast %204 : vector<64xf32> to vector<64x1xf32>
    %cst_79 = arith.constant 1.280000e+02 : f32
    %206 = vector.broadcast %cst_79 : f32 to vector<64x1xf32>
    %207 = arith.divf %205, %206 : vector<64x1xf32>
    %208 = vector.broadcast %200 : vector<64x1xf32> to vector<64x128xf32>
    %209 = arith.subf %192, %208 : vector<64x128xf32>
    %cst_80 = arith.constant 9.99999974E-6 : f32
    %210 = vector.broadcast %cst_80 : f32 to vector<64x1xf32>
    %211 = arith.addf %207, %210 : vector<64x1xf32>
    %212 = math.rsqrt %211 : vector<64x1xf32>
    %213 = vector.broadcast %212 : vector<64x1xf32> to vector<64x128xf32>
    %214 = arith.mulf %209, %213 : vector<64x128xf32>
    %215 = vector.shape_cast %194 : vector<128xf32> to vector<1x128xf32>
    %216 = vector.broadcast %215 : vector<1x128xf32> to vector<64x128xf32>
    %217 = arith.mulf %214, %216 : vector<64x128xf32>
    %218 = vector.shape_cast %196 : vector<128xf32> to vector<1x128xf32>
    %219 = vector.broadcast %218 : vector<1x128xf32> to vector<64x128xf32>
    %220 = arith.addf %217, %219 : vector<64x128xf32>
    %c1_81 = arith.constant 1 : index
    %c0_82 = arith.constant 0 : index
    %c0_83 = arith.constant 0 : index
    %221 = vector.load %arg5[%c1_81, %c0_82, %c0_83] : memref<2x384x128xbf16, #tpu.memory_space<vmem>>, vector<1x384x128xbf16>
    %222 = vector.shape_cast %221 : vector<1x384x128xbf16> to vector<384x128xbf16>
    %223 = arith.truncf %220 : vector<64x128xf32> to vector<64x128xbf16>
    %cst_84 = arith.constant dense<0.000000e+00> : vector<64x384xf32>
    %224 = tpu.matmul %223, %222, %cst_84 {dimension_numbers = #tpu.dot_dimension_numbers<[1], [1], [0], [0], [0, 0, 1, 0], [], []>} : vector<64x128xbf16>, vector<384x128xbf16>, vector<64x384xf32> -> vector<64x384xf32>
    %c1_85 = arith.constant 1 : index
    %c0_86 = arith.constant 0 : index
    %225 = vector.load %arg6[%c1_85, %c0_86] : memref<2x384xf32, #tpu.memory_space<vmem>>, vector<1x384xf32>
    %226 = vector.shape_cast %225 : vector<1x384xf32> to vector<384xf32>
    %227 = vector.shape_cast %226 : vector<384xf32> to vector<1x384xf32>
    %228 = vector.broadcast %227 : vector<1x384xf32> to vector<64x384xf32>
    %229 = arith.addf %224, %228 : vector<64x384xf32>
    %230 = vector.extract_strided_slice %229 {offsets = [0, 0], sizes = [64, 128], strides = [1, 1]} : vector<64x384xf32> to vector<64x128xf32>
    %cst_87 = arith.constant 0.176776692 : f32
    %231 = vector.broadcast %cst_87 : f32 to vector<64x128xf32>
    %232 = arith.mulf %230, %231 : vector<64x128xf32>
    %233 = vector.extract_strided_slice %229 {offsets = [0, 128], sizes = [64, 128], strides = [1, 1]} : vector<64x384xf32> to vector<64x128xf32>
    %234 = vector.extract_strided_slice %229 {offsets = [0, 256], sizes = [64, 128], strides = [1, 1]} : vector<64x384xf32> to vector<64x128xf32>
    %235 = vector.extract_strided_slice %232 {offsets = [0, 0], sizes = [64, 32], strides = [1, 1]} : vector<64x128xf32> to vector<64x32xf32>
    %236 = vector.shape_cast %235 : vector<64x32xf32> to vector<8x8x32xf32>
    %237 = arith.truncf %236 : vector<8x8x32xf32> to vector<8x8x32xbf16>
    %238 = vector.extract_strided_slice %233 {offsets = [0, 0], sizes = [64, 32], strides = [1, 1]} : vector<64x128xf32> to vector<64x32xf32>
    %239 = vector.shape_cast %238 : vector<64x32xf32> to vector<8x8x32xf32>
    %240 = arith.truncf %239 : vector<8x8x32xf32> to vector<8x8x32xbf16>
    %241 = vector.extract_strided_slice %234 {offsets = [0, 0], sizes = [64, 32], strides = [1, 1]} : vector<64x128xf32> to vector<64x32xf32>
    %242 = vector.shape_cast %241 : vector<64x32xf32> to vector<8x8x32xf32>
    %243 = arith.truncf %242 : vector<8x8x32xf32> to vector<8x8x32xbf16>
    %cst_88 = arith.constant dense<0.000000e+00> : vector<8x8x8xf32>
    %244 = tpu.matmul %237, %240, %cst_88 {dimension_numbers = #tpu.dot_dimension_numbers<[2], [2], [1], [1], [0, 0, 0, 1, 1, 1], [0], [0]>} : vector<8x8x32xbf16>, vector<8x8x32xbf16>, vector<8x8x8xf32> -> vector<8x8x8xf32>
    %cst_89 = arith.constant dense<0xFF800000> : vector<8x8xf32>
    %245 = vector.multi_reduction <maximumf>, %244, %cst_89 [2] : vector<8x8x8xf32> to vector<8x8xf32>
    %246 = vector.shape_cast %245 : vector<8x8xf32> to vector<8x8x1xf32>
    %247 = vector.broadcast %246 : vector<8x8x1xf32> to vector<8x8x8xf32>
    %248 = arith.subf %244, %247 : vector<8x8x8xf32>
    %249 = math.exp %248 : vector<8x8x8xf32>
    %cst_90 = arith.constant dense<0.000000e+00> : vector<8x8xf32>
    %250 = vector.multi_reduction <add>, %249, %cst_90 [2] : vector<8x8x8xf32> to vector<8x8xf32>
    %251 = vector.shape_cast %250 : vector<8x8xf32> to vector<8x8x1xf32>
    %252 = tpu.reciprocal %251 {approx = true} : vector<8x8x1xf32> -> vector<8x8x1xf32>
    %253 = vector.broadcast %252 : vector<8x8x1xf32> to vector<8x8x8xf32>
    %254 = arith.mulf %249, %253 : vector<8x8x8xf32>
    %255 = arith.truncf %254 : vector<8x8x8xf32> to vector<8x8x8xbf16>
    %cst_91 = arith.constant dense<0.000000e+00> : vector<8x8x32xf32>
    %256 = tpu.matmul %255, %243, %cst_91 {dimension_numbers = #tpu.dot_dimension_numbers<[2], [1], [1], [2], [0, 0, 0, 1, 1, 2], [0], [0]>} : vector<8x8x8xbf16>, vector<8x8x32xbf16>, vector<8x8x32xf32> -> vector<8x8x32xf32>
    %257 = vector.shape_cast %256 : vector<8x8x32xf32> to vector<64x32xf32>
    %c1_92 = arith.constant 1 : index
    %c0_93 = arith.constant 0 : index
    %c0_94 = arith.constant 0 : index
    %c0_95 = arith.constant 0 : index
    %258 = vector.load %arg7[%c1_92, %c0_93, %c0_94, %c0_95] : memref<2x4x128x32xbf16, #tpu.memory_space<vmem>>, vector<1x1x128x32xbf16>
    %259 = vector.shape_cast %258 : vector<1x1x128x32xbf16> to vector<128x32xbf16>
    %260 = arith.truncf %257 : vector<64x32xf32> to vector<64x32xbf16>
    %cst_96 = arith.constant dense<0.000000e+00> : vector<64x128xf32>
    %261 = tpu.matmul %260, %259, %cst_96 {dimension_numbers = #tpu.dot_dimension_numbers<[1], [1], [0], [0], [0, 0, 1, 0], [], []>} : vector<64x32xbf16>, vector<128x32xbf16>, vector<64x128xf32> -> vector<64x128xf32>
    %262 = vector.extract_strided_slice %232 {offsets = [0, 32], sizes = [64, 32], strides = [1, 1]} : vector<64x128xf32> to vector<64x32xf32>
    %263 = vector.shape_cast %262 : vector<64x32xf32> to vector<8x8x32xf32>
    %264 = arith.truncf %263 : vector<8x8x32xf32> to vector<8x8x32xbf16>
    %265 = vector.extract_strided_slice %233 {offsets = [0, 32], sizes = [64, 32], strides = [1, 1]} : vector<64x128xf32> to vector<64x32xf32>
    %266 = vector.shape_cast %265 : vector<64x32xf32> to vector<8x8x32xf32>
    %267 = arith.truncf %266 : vector<8x8x32xf32> to vector<8x8x32xbf16>
    %268 = vector.extract_strided_slice %234 {offsets = [0, 32], sizes = [64, 32], strides = [1, 1]} : vector<64x128xf32> to vector<64x32xf32>
    %269 = vector.shape_cast %268 : vector<64x32xf32> to vector<8x8x32xf32>
    %270 = arith.truncf %269 : vector<8x8x32xf32> to vector<8x8x32xbf16>
    %cst_97 = arith.constant dense<0.000000e+00> : vector<8x8x8xf32>
    %271 = tpu.matmul %264, %267, %cst_97 {dimension_numbers = #tpu.dot_dimension_numbers<[2], [2], [1], [1], [0, 0, 0, 1, 1, 1], [0], [0]>} : vector<8x8x32xbf16>, vector<8x8x32xbf16>, vector<8x8x8xf32> -> vector<8x8x8xf32>
    %cst_98 = arith.constant dense<0xFF800000> : vector<8x8xf32>
    %272 = vector.multi_reduction <maximumf>, %271, %cst_98 [2] : vector<8x8x8xf32> to vector<8x8xf32>
    %273 = vector.shape_cast %272 : vector<8x8xf32> to vector<8x8x1xf32>
    %274 = vector.broadcast %273 : vector<8x8x1xf32> to vector<8x8x8xf32>
    %275 = arith.subf %271, %274 : vector<8x8x8xf32>
    %276 = math.exp %275 : vector<8x8x8xf32>
    %cst_99 = arith.constant dense<0.000000e+00> : vector<8x8xf32>
    %277 = vector.multi_reduction <add>, %276, %cst_99 [2] : vector<8x8x8xf32> to vector<8x8xf32>
    %278 = vector.shape_cast %277 : vector<8x8xf32> to vector<8x8x1xf32>
    %279 = tpu.reciprocal %278 {approx = true} : vector<8x8x1xf32> -> vector<8x8x1xf32>
    %280 = vector.broadcast %279 : vector<8x8x1xf32> to vector<8x8x8xf32>
    %281 = arith.mulf %276, %280 : vector<8x8x8xf32>
    %282 = arith.truncf %281 : vector<8x8x8xf32> to vector<8x8x8xbf16>
    %cst_100 = arith.constant dense<0.000000e+00> : vector<8x8x32xf32>
    %283 = tpu.matmul %282, %270, %cst_100 {dimension_numbers = #tpu.dot_dimension_numbers<[2], [1], [1], [2], [0, 0, 0, 1, 1, 2], [0], [0]>} : vector<8x8x8xbf16>, vector<8x8x32xbf16>, vector<8x8x32xf32> -> vector<8x8x32xf32>
    %284 = vector.shape_cast %283 : vector<8x8x32xf32> to vector<64x32xf32>
    %c1_101 = arith.constant 1 : index
    %c1_102 = arith.constant 1 : index
    %c0_103 = arith.constant 0 : index
    %c0_104 = arith.constant 0 : index
    %285 = vector.load %arg7[%c1_101, %c1_102, %c0_103, %c0_104] : memref<2x4x128x32xbf16, #tpu.memory_space<vmem>>, vector<1x1x128x32xbf16>
    %286 = vector.shape_cast %285 : vector<1x1x128x32xbf16> to vector<128x32xbf16>
    %287 = arith.truncf %284 : vector<64x32xf32> to vector<64x32xbf16>
    %cst_105 = arith.constant dense<0.000000e+00> : vector<64x128xf32>
    %288 = tpu.matmul %287, %286, %cst_105 {dimension_numbers = #tpu.dot_dimension_numbers<[1], [1], [0], [0], [0, 0, 1, 0], [], []>} : vector<64x32xbf16>, vector<128x32xbf16>, vector<64x128xf32> -> vector<64x128xf32>
    %289 = arith.addf %261, %288 : vector<64x128xf32>
    %290 = vector.extract_strided_slice %232 {offsets = [0, 64], sizes = [64, 32], strides = [1, 1]} : vector<64x128xf32> to vector<64x32xf32>
    %291 = vector.shape_cast %290 : vector<64x32xf32> to vector<8x8x32xf32>
    %292 = arith.truncf %291 : vector<8x8x32xf32> to vector<8x8x32xbf16>
    %293 = vector.extract_strided_slice %233 {offsets = [0, 64], sizes = [64, 32], strides = [1, 1]} : vector<64x128xf32> to vector<64x32xf32>
    %294 = vector.shape_cast %293 : vector<64x32xf32> to vector<8x8x32xf32>
    %295 = arith.truncf %294 : vector<8x8x32xf32> to vector<8x8x32xbf16>
    %296 = vector.extract_strided_slice %234 {offsets = [0, 64], sizes = [64, 32], strides = [1, 1]} : vector<64x128xf32> to vector<64x32xf32>
    %297 = vector.shape_cast %296 : vector<64x32xf32> to vector<8x8x32xf32>
    %298 = arith.truncf %297 : vector<8x8x32xf32> to vector<8x8x32xbf16>
    %cst_106 = arith.constant dense<0.000000e+00> : vector<8x8x8xf32>
    %299 = tpu.matmul %292, %295, %cst_106 {dimension_numbers = #tpu.dot_dimension_numbers<[2], [2], [1], [1], [0, 0, 0, 1, 1, 1], [0], [0]>} : vector<8x8x32xbf16>, vector<8x8x32xbf16>, vector<8x8x8xf32> -> vector<8x8x8xf32>
    %cst_107 = arith.constant dense<0xFF800000> : vector<8x8xf32>
    %300 = vector.multi_reduction <maximumf>, %299, %cst_107 [2] : vector<8x8x8xf32> to vector<8x8xf32>
    %301 = vector.shape_cast %300 : vector<8x8xf32> to vector<8x8x1xf32>
    %302 = vector.broadcast %301 : vector<8x8x1xf32> to vector<8x8x8xf32>
    %303 = arith.subf %299, %302 : vector<8x8x8xf32>
    %304 = math.exp %303 : vector<8x8x8xf32>
    %cst_108 = arith.constant dense<0.000000e+00> : vector<8x8xf32>
    %305 = vector.multi_reduction <add>, %304, %cst_108 [2] : vector<8x8x8xf32> to vector<8x8xf32>
    %306 = vector.shape_cast %305 : vector<8x8xf32> to vector<8x8x1xf32>
    %307 = tpu.reciprocal %306 {approx = true} : vector<8x8x1xf32> -> vector<8x8x1xf32>
    %308 = vector.broadcast %307 : vector<8x8x1xf32> to vector<8x8x8xf32>
    %309 = arith.mulf %304, %308 : vector<8x8x8xf32>
    %310 = arith.truncf %309 : vector<8x8x8xf32> to vector<8x8x8xbf16>
    %cst_109 = arith.constant dense<0.000000e+00> : vector<8x8x32xf32>
    %311 = tpu.matmul %310, %298, %cst_109 {dimension_numbers = #tpu.dot_dimension_numbers<[2], [1], [1], [2], [0, 0, 0, 1, 1, 2], [0], [0]>} : vector<8x8x8xbf16>, vector<8x8x32xbf16>, vector<8x8x32xf32> -> vector<8x8x32xf32>
    %312 = vector.shape_cast %311 : vector<8x8x32xf32> to vector<64x32xf32>
    %c1_110 = arith.constant 1 : index
    %c2_111 = arith.constant 2 : index
    %c0_112 = arith.constant 0 : index
    %c0_113 = arith.constant 0 : index
    %313 = vector.load %arg7[%c1_110, %c2_111, %c0_112, %c0_113] : memref<2x4x128x32xbf16, #tpu.memory_space<vmem>>, vector<1x1x128x32xbf16>
    %314 = vector.shape_cast %313 : vector<1x1x128x32xbf16> to vector<128x32xbf16>
    %315 = arith.truncf %312 : vector<64x32xf32> to vector<64x32xbf16>
    %cst_114 = arith.constant dense<0.000000e+00> : vector<64x128xf32>
    %316 = tpu.matmul %315, %314, %cst_114 {dimension_numbers = #tpu.dot_dimension_numbers<[1], [1], [0], [0], [0, 0, 1, 0], [], []>} : vector<64x32xbf16>, vector<128x32xbf16>, vector<64x128xf32> -> vector<64x128xf32>
    %317 = arith.addf %289, %316 : vector<64x128xf32>
    %318 = vector.extract_strided_slice %232 {offsets = [0, 96], sizes = [64, 32], strides = [1, 1]} : vector<64x128xf32> to vector<64x32xf32>
    %319 = vector.shape_cast %318 : vector<64x32xf32> to vector<8x8x32xf32>
    %320 = arith.truncf %319 : vector<8x8x32xf32> to vector<8x8x32xbf16>
    %321 = vector.extract_strided_slice %233 {offsets = [0, 96], sizes = [64, 32], strides = [1, 1]} : vector<64x128xf32> to vector<64x32xf32>
    %322 = vector.shape_cast %321 : vector<64x32xf32> to vector<8x8x32xf32>
    %323 = arith.truncf %322 : vector<8x8x32xf32> to vector<8x8x32xbf16>
    %324 = vector.extract_strided_slice %234 {offsets = [0, 96], sizes = [64, 32], strides = [1, 1]} : vector<64x128xf32> to vector<64x32xf32>
    %325 = vector.shape_cast %324 : vector<64x32xf32> to vector<8x8x32xf32>
    %326 = arith.truncf %325 : vector<8x8x32xf32> to vector<8x8x32xbf16>
    %cst_115 = arith.constant dense<0.000000e+00> : vector<8x8x8xf32>
    %327 = tpu.matmul %320, %323, %cst_115 {dimension_numbers = #tpu.dot_dimension_numbers<[2], [2], [1], [1], [0, 0, 0, 1, 1, 1], [0], [0]>} : vector<8x8x32xbf16>, vector<8x8x32xbf16>, vector<8x8x8xf32> -> vector<8x8x8xf32>
    %cst_116 = arith.constant dense<0xFF800000> : vector<8x8xf32>
    %328 = vector.multi_reduction <maximumf>, %327, %cst_116 [2] : vector<8x8x8xf32> to vector<8x8xf32>
    %329 = vector.shape_cast %328 : vector<8x8xf32> to vector<8x8x1xf32>
    %330 = vector.broadcast %329 : vector<8x8x1xf32> to vector<8x8x8xf32>
    %331 = arith.subf %327, %330 : vector<8x8x8xf32>
    %332 = math.exp %331 : vector<8x8x8xf32>
    %cst_117 = arith.constant dense<0.000000e+00> : vector<8x8xf32>
    %333 = vector.multi_reduction <add>, %332, %cst_117 [2] : vector<8x8x8xf32> to vector<8x8xf32>
    %334 = vector.shape_cast %333 : vector<8x8xf32> to vector<8x8x1xf32>
    %335 = tpu.reciprocal %334 {approx = true} : vector<8x8x1xf32> -> vector<8x8x1xf32>
    %336 = vector.broadcast %335 : vector<8x8x1xf32> to vector<8x8x8xf32>
    %337 = arith.mulf %332, %336 : vector<8x8x8xf32>
    %338 = arith.truncf %337 : vector<8x8x8xf32> to vector<8x8x8xbf16>
    %cst_118 = arith.constant dense<0.000000e+00> : vector<8x8x32xf32>
    %339 = tpu.matmul %338, %326, %cst_118 {dimension_numbers = #tpu.dot_dimension_numbers<[2], [1], [1], [2], [0, 0, 0, 1, 1, 2], [0], [0]>} : vector<8x8x8xbf16>, vector<8x8x32xbf16>, vector<8x8x32xf32> -> vector<8x8x32xf32>
    %340 = vector.shape_cast %339 : vector<8x8x32xf32> to vector<64x32xf32>
    %c1_119 = arith.constant 1 : index
    %c3_120 = arith.constant 3 : index
    %c0_121 = arith.constant 0 : index
    %c0_122 = arith.constant 0 : index
    %341 = vector.load %arg7[%c1_119, %c3_120, %c0_121, %c0_122] : memref<2x4x128x32xbf16, #tpu.memory_space<vmem>>, vector<1x1x128x32xbf16>
    %342 = vector.shape_cast %341 : vector<1x1x128x32xbf16> to vector<128x32xbf16>
    %343 = arith.truncf %340 : vector<64x32xf32> to vector<64x32xbf16>
    %cst_123 = arith.constant dense<0.000000e+00> : vector<64x128xf32>
    %344 = tpu.matmul %343, %342, %cst_123 {dimension_numbers = #tpu.dot_dimension_numbers<[1], [1], [0], [0], [0, 0, 1, 0], [], []>} : vector<64x32xbf16>, vector<128x32xbf16>, vector<64x128xf32> -> vector<64x128xf32>
    %345 = arith.addf %317, %344 : vector<64x128xf32>
    %c1_124 = arith.constant 1 : index
    %c0_125 = arith.constant 0 : index
    %346 = vector.load %arg8[%c1_124, %c0_125] : memref<2x128xf32, #tpu.memory_space<vmem>>, vector<1x128xf32>
    %347 = vector.shape_cast %346 : vector<1x128xf32> to vector<128xf32>
    %348 = vector.shape_cast %347 : vector<128xf32> to vector<1x128xf32>
    %349 = vector.broadcast %348 : vector<1x128xf32> to vector<64x128xf32>
    %350 = arith.addf %345, %349 : vector<64x128xf32>
    %351 = arith.addf %220, %350 : vector<64x128xf32>
    %c1_126 = arith.constant 1 : index
    %c0_127 = arith.constant 0 : index
    %352 = vector.load %arg13[%c1_126, %c0_127] : memref<2x128xf32, #tpu.memory_space<vmem>>, vector<1x128xf32>
    %353 = vector.shape_cast %352 : vector<1x128xf32> to vector<128xf32>
    %c1_128 = arith.constant 1 : index
    %c0_129 = arith.constant 0 : index
    %354 = vector.load %arg14[%c1_128, %c0_129] : memref<2x128xf32, #tpu.memory_space<vmem>>, vector<1x128xf32>
    %355 = vector.shape_cast %354 : vector<1x128xf32> to vector<128xf32>
    %cst_130 = arith.constant dense<0.000000e+00> : vector<64xf32>
    %356 = vector.multi_reduction <add>, %351, %cst_130 [1] : vector<64x128xf32> to vector<64xf32>
    %357 = vector.shape_cast %356 : vector<64xf32> to vector<64x1xf32>
    %cst_131 = arith.constant 1.280000e+02 : f32
    %358 = vector.broadcast %cst_131 : f32 to vector<64x1xf32>
    %359 = arith.divf %357, %358 : vector<64x1xf32>
    %360 = vector.broadcast %359 : vector<64x1xf32> to vector<64x128xf32>
    %361 = arith.subf %351, %360 : vector<64x128xf32>
    %362 = arith.mulf %361, %361 : vector<64x128xf32>
    %cst_132 = arith.constant dense<0.000000e+00> : vector<64xf32>
    %363 = vector.multi_reduction <add>, %362, %cst_132 [1] : vector<64x128xf32> to vector<64xf32>
    %364 = vector.shape_cast %363 : vector<64xf32> to vector<64x1xf32>
    %cst_133 = arith.constant 1.280000e+02 : f32
    %365 = vector.broadcast %cst_133 : f32 to vector<64x1xf32>
    %366 = arith.divf %364, %365 : vector<64x1xf32>
    %367 = vector.broadcast %359 : vector<64x1xf32> to vector<64x128xf32>
    %368 = arith.subf %351, %367 : vector<64x128xf32>
    %cst_134 = arith.constant 9.99999974E-6 : f32
    %369 = vector.broadcast %cst_134 : f32 to vector<64x1xf32>
    %370 = arith.addf %366, %369 : vector<64x1xf32>
    %371 = math.rsqrt %370 : vector<64x1xf32>
    %372 = vector.broadcast %371 : vector<64x1xf32> to vector<64x128xf32>
    %373 = arith.mulf %368, %372 : vector<64x128xf32>
    %374 = vector.shape_cast %353 : vector<128xf32> to vector<1x128xf32>
    %375 = vector.broadcast %374 : vector<1x128xf32> to vector<64x128xf32>
    %376 = arith.mulf %373, %375 : vector<64x128xf32>
    %377 = vector.shape_cast %355 : vector<128xf32> to vector<1x128xf32>
    %378 = vector.broadcast %377 : vector<1x128xf32> to vector<64x128xf32>
    %379 = arith.addf %376, %378 : vector<64x128xf32>
    %c1_135 = arith.constant 1 : index
    %c0_136 = arith.constant 0 : index
    %c0_137 = arith.constant 0 : index
    %380 = vector.load %arg9[%c1_135, %c0_136, %c0_137] : memref<2x32x128xbf16, #tpu.memory_space<vmem>>, vector<1x32x128xbf16>
    %381 = vector.shape_cast %380 : vector<1x32x128xbf16> to vector<32x128xbf16>
    %382 = arith.truncf %379 : vector<64x128xf32> to vector<64x128xbf16>
    %cst_138 = arith.constant dense<0.000000e+00> : vector<64x32xf32>
    %383 = tpu.matmul %382, %381, %cst_138 {dimension_numbers = #tpu.dot_dimension_numbers<[1], [1], [0], [0], [0, 0, 1, 0], [], []>} : vector<64x128xbf16>, vector<32x128xbf16>, vector<64x32xf32> -> vector<64x32xf32>
    %c1_139 = arith.constant 1 : index
    %c0_140 = arith.constant 0 : index
    %384 = vector.load %arg10[%c1_139, %c0_140] : memref<2x32xf32, #tpu.memory_space<vmem>>, vector<1x32xf32>
    %385 = vector.shape_cast %384 : vector<1x32xf32> to vector<32xf32>
    %386 = vector.shape_cast %385 : vector<32xf32> to vector<1x32xf32>
    %387 = vector.broadcast %386 : vector<1x32xf32> to vector<64x32xf32>
    %388 = arith.addf %383, %387 : vector<64x32xf32>
    %cst_141 = arith.constant 0.000000e+00 : f32
    %389 = vector.broadcast %cst_141 : f32 to vector<64x32xf32>
    %390 = arith.maximumf %388, %389 : vector<64x32xf32>
    %c1_142 = arith.constant 1 : index
    %c0_143 = arith.constant 0 : index
    %c0_144 = arith.constant 0 : index
    %391 = vector.load %arg11[%c1_142, %c0_143, %c0_144] : memref<2x128x32xbf16, #tpu.memory_space<vmem>>, vector<1x128x32xbf16>
    %392 = vector.shape_cast %391 : vector<1x128x32xbf16> to vector<128x32xbf16>
    %393 = arith.truncf %390 : vector<64x32xf32> to vector<64x32xbf16>
    %cst_145 = arith.constant dense<0.000000e+00> : vector<64x128xf32>
    %394 = tpu.matmul %393, %392, %cst_145 {dimension_numbers = #tpu.dot_dimension_numbers<[1], [1], [0], [0], [0, 0, 1, 0], [], []>} : vector<64x32xbf16>, vector<128x32xbf16>, vector<64x128xf32> -> vector<64x128xf32>
    %c1_146 = arith.constant 1 : index
    %c0_147 = arith.constant 0 : index
    %395 = vector.load %arg12[%c1_146, %c0_147] : memref<2x128xf32, #tpu.memory_space<vmem>>, vector<1x128xf32>
    %396 = vector.shape_cast %395 : vector<1x128xf32> to vector<128xf32>
    %397 = vector.shape_cast %396 : vector<128xf32> to vector<1x128xf32>
    %398 = vector.broadcast %397 : vector<1x128xf32> to vector<64x128xf32>
    %399 = arith.addf %394, %398 : vector<64x128xf32>
    %400 = arith.addf %379, %399 : vector<64x128xf32>
    %c1_148 = arith.constant 1 : index
    %c0_149 = arith.constant 0 : index
    %401 = vector.load %arg15[%c1_148, %c0_149] : memref<2x128xf32, #tpu.memory_space<vmem>>, vector<1x128xf32>
    %402 = vector.shape_cast %401 : vector<1x128xf32> to vector<128xf32>
    %c1_150 = arith.constant 1 : index
    %c0_151 = arith.constant 0 : index
    %403 = vector.load %arg16[%c1_150, %c0_151] : memref<2x128xf32, #tpu.memory_space<vmem>>, vector<1x128xf32>
    %404 = vector.shape_cast %403 : vector<1x128xf32> to vector<128xf32>
    %cst_152 = arith.constant dense<0.000000e+00> : vector<64xf32>
    %405 = vector.multi_reduction <add>, %400, %cst_152 [1] : vector<64x128xf32> to vector<64xf32>
    %406 = vector.shape_cast %405 : vector<64xf32> to vector<64x1xf32>
    %cst_153 = arith.constant 1.280000e+02 : f32
    %407 = vector.broadcast %cst_153 : f32 to vector<64x1xf32>
    %408 = arith.divf %406, %407 : vector<64x1xf32>
    %409 = vector.broadcast %408 : vector<64x1xf32> to vector<64x128xf32>
    %410 = arith.subf %400, %409 : vector<64x128xf32>
    %411 = arith.mulf %410, %410 : vector<64x128xf32>
    %cst_154 = arith.constant dense<0.000000e+00> : vector<64xf32>
    %412 = vector.multi_reduction <add>, %411, %cst_154 [1] : vector<64x128xf32> to vector<64xf32>
    %413 = vector.shape_cast %412 : vector<64xf32> to vector<64x1xf32>
    %cst_155 = arith.constant 1.280000e+02 : f32
    %414 = vector.broadcast %cst_155 : f32 to vector<64x1xf32>
    %415 = arith.divf %413, %414 : vector<64x1xf32>
    %416 = vector.broadcast %408 : vector<64x1xf32> to vector<64x128xf32>
    %417 = arith.subf %400, %416 : vector<64x128xf32>
    %cst_156 = arith.constant 9.99999974E-6 : f32
    %418 = vector.broadcast %cst_156 : f32 to vector<64x1xf32>
    %419 = arith.addf %415, %418 : vector<64x1xf32>
    %420 = math.rsqrt %419 : vector<64x1xf32>
    %421 = vector.broadcast %420 : vector<64x1xf32> to vector<64x128xf32>
    %422 = arith.mulf %417, %421 : vector<64x128xf32>
    %423 = vector.shape_cast %402 : vector<128xf32> to vector<1x128xf32>
    %424 = vector.broadcast %423 : vector<1x128xf32> to vector<64x128xf32>
    %425 = arith.mulf %422, %424 : vector<64x128xf32>
    %426 = vector.shape_cast %404 : vector<128xf32> to vector<1x128xf32>
    %427 = vector.broadcast %426 : vector<1x128xf32> to vector<64x128xf32>
    %428 = arith.addf %425, %427 : vector<64x128xf32>
    %429 = vector.shape_cast %428 : vector<64x128xf32> to vector<8x8x128xf32>
    %cst_157 = arith.constant dense<0.000000e+00> : vector<8x128xf32>
    %430 = vector.multi_reduction <add>, %429, %cst_157 [0] : vector<8x8x128xf32> to vector<8x128xf32>
    %c0_158 = arith.constant 0 : index
    %c0_159 = arith.constant 0 : index
    %431 = vector.load %arg17[%c0_158, %c0_159] : memref<128x128xbf16, #tpu.memory_space<vmem>>, vector<128x128xbf16>
    %432 = arith.truncf %430 : vector<8x128xf32> to vector<8x128xbf16>
    %cst_160 = arith.constant dense<0.000000e+00> : vector<8x128xf32>
    %433 = tpu.matmul %432, %431, %cst_160 {dimension_numbers = #tpu.dot_dimension_numbers<[1], [1], [0], [0], [0, 0, 1, 0], [], []>} : vector<8x128xbf16>, vector<128x128xbf16>, vector<8x128xf32> -> vector<8x128xf32>
    %434 = vector.shape_cast %433 : vector<8x128xf32> to vector<1x8x128xf32>
    %c0_161 = arith.constant 0 : index
    %c0_162 = arith.constant 0 : index
    %c0_163 = arith.constant 0 : index
    %435 = vector.load %arg18[%c0_161, %c0_162, %c0_163] : memref<1x8x128xf32, #tpu.memory_space<vmem>>, vector<1x8x128xf32>
    tpu.vector_store %arg18[%c0_161, %c0_162, %c0_163], %434 {strides = array<i32>} : memref<1x8x128xf32, #tpu.memory_space<vmem>>, vector<1x8x128xf32>,
    return
  }
  func.func @transform_0(%arg0: i32) -> (i32, i32, i32) {
    %c0_i32 = arith.constant 0 : i32
    %c0_i32_0 = arith.constant 0 : i32
    %c0_i32_1 = arith.constant 0 : i32
    return %arg0, %c0_i32, %c0_i32_0 : i32, i32, i32
  }
  func.func @transform_1(%arg0: i32) -> (i32, i32) {
    %c0_i32 = arith.constant 0 : i32
    %c0_i32_0 = arith.constant 0 : i32
    return %arg0, %c0_i32 : i32, i32
  }
  func.func @transform_2(%arg0: i32) -> (i32, i32) {
    %c0_i32 = arith.constant 0 : i32
    %c0_i32_0 = arith.constant 0 : i32
    %c0_i32_1 = arith.constant 0 : i32
    return %c0_i32, %c0_i32_0 : i32, i32
  }
  func.func @transform_3(%arg0: i32) -> (i32, i32) {
    %c0_i32 = arith.constant 0 : i32
    %c0_i32_0 = arith.constant 0 : i32
    %c0_i32_1 = arith.constant 0 : i32
    return %c0_i32, %c0_i32_0 : i32, i32
  }
  func.func @transform_4(%arg0: i32) -> (i32, i32, i32) {
    %c0_i32 = arith.constant 0 : i32
    %c0_i32_0 = arith.constant 0 : i32
    %c0_i32_1 = arith.constant 0 : i32
    %c0_i32_2 = arith.constant 0 : i32
    return %c0_i32, %c0_i32_0, %c0_i32_1 : i32, i32, i32
  }
  func.func @transform_5(%arg0: i32) -> (i32, i32) {
    %c0_i32 = arith.constant 0 : i32
    %c0_i32_0 = arith.constant 0 : i32
    %c0_i32_1 = arith.constant 0 : i32
    return %c0_i32, %c0_i32_0 : i32, i32
  }
  func.func @transform_6(%arg0: i32) -> (i32, i32, i32, i32) {
    %c0_i32 = arith.constant 0 : i32
    %c0_i32_0 = arith.constant 0 : i32
    %c0_i32_1 = arith.constant 0 : i32
    %c0_i32_2 = arith.constant 0 : i32
    %c0_i32_3 = arith.constant 0 : i32
    return %c0_i32, %c0_i32_0, %c0_i32_1, %c0_i32_2 : i32, i32, i32, i32
  }
  func.func @transform_7(%arg0: i32) -> (i32, i32) {
    %c0_i32 = arith.constant 0 : i32
    %c0_i32_0 = arith.constant 0 : i32
    %c0_i32_1 = arith.constant 0 : i32
    return %c0_i32, %c0_i32_0 : i32, i32
  }
  func.func @transform_8(%arg0: i32) -> (i32, i32, i32) {
    %c0_i32 = arith.constant 0 : i32
    %c0_i32_0 = arith.constant 0 : i32
    %c0_i32_1 = arith.constant 0 : i32
    %c0_i32_2 = arith.constant 0 : i32
    return %c0_i32, %c0_i32_0, %c0_i32_1 : i32, i32, i32
  }
  func.func @transform_9(%arg0: i32) -> (i32, i32) {
    %c0_i32 = arith.constant 0 : i32
    %c0_i32_0 = arith.constant 0 : i32
    %c0_i32_1 = arith.constant 0 : i32
    return %c0_i32, %c0_i32_0 : i32, i32
  }
  func.func @transform_10(%arg0: i32) -> (i32, i32, i32) {
    %c0_i32 = arith.constant 0 : i32
    %c0_i32_0 = arith.constant 0 : i32
    %c0_i32_1 = arith.constant 0 : i32
    %c0_i32_2 = arith.constant 0 : i32
    return %c0_i32, %c0_i32_0, %c0_i32_1 : i32, i32, i32
  }
  func.func @transform_11(%arg0: i32) -> (i32, i32) {
    %c0_i32 = arith.constant 0 : i32
    %c0_i32_0 = arith.constant 0 : i32
    %c0_i32_1 = arith.constant 0 : i32
    return %c0_i32, %c0_i32_0 : i32, i32
  }
  func.func @transform_12(%arg0: i32) -> (i32, i32) {
    %c0_i32 = arith.constant 0 : i32
    %c0_i32_0 = arith.constant 0 : i32
    %c0_i32_1 = arith.constant 0 : i32
    return %c0_i32, %c0_i32_0 : i32, i32
  }
  func.func @transform_13(%arg0: i32) -> (i32, i32) {
    %c0_i32 = arith.constant 0 : i32
    %c0_i32_0 = arith.constant 0 : i32
    %c0_i32_1 = arith.constant 0 : i32
    return %c0_i32, %c0_i32_0 : i32, i32
  }
  func.func @transform_14(%arg0: i32) -> (i32, i32) {
    %c0_i32 = arith.constant 0 : i32
    %c0_i32_0 = arith.constant 0 : i32
    %c0_i32_1 = arith.constant 0 : i32
    return %c0_i32, %c0_i32_0 : i32, i32
  }
  func.func @transform_15(%arg0: i32) -> (i32, i32) {
    %c0_i32 = arith.constant 0 : i32
    %c0_i32_0 = arith.constant 0 : i32
    %c0_i32_1 = arith.constant 0 : i32
    return %c0_i32, %c0_i32_0 : i32, i32
  }
  func.func @transform_16(%arg0: i32) -> (i32, i32) {
    %c0_i32 = arith.constant 0 : i32
    %c0_i32_0 = arith.constant 0 : i32
    %c0_i32_1 = arith.constant 0 : i32
    return %c0_i32, %c0_i32_0 : i32, i32
  }
  func.func @transform_17(%arg0: i32) -> (i32, i32, i32) {
    %c0_i32 = arith.constant 0 : i32
    %c0_i32_0 = arith.constant 0 : i32
    %c0_i32_1 = arith.constant 0 : i32
    return %arg0, %c0_i32, %c0_i32_0 : i32, i32, i32
  }
}

</mosaic_0001>

<llo_original>
// kernel: tpu_custom_call.1
$region0: #{tpu_custom_call.1}
  #allocation0 [shape = 'u32[]', space=smem, size = 0x4, offset = 0x4, fixed_abs, tag = 'smem constant byte address 0x4 - core index']
  #allocation1 [shape = 'u32[144,128]{1,0:T(1,128)}', space=vmem, size = 0x12000, scoped, tag = 'internal scratch']
  %s0 = inlined_call_operand.vmem [shape: bf16[8,8,128], index: 0, kind: input, shape index: {}]
  %s1 = inlined_call_operand.vmem [shape: f32[8,128], index: 1, kind: input, shape index: {}]
  %s2 = inlined_call_operand.vmem [shape: bf16[128,128], index: 2, kind: input, shape index: {}]
  %s3 = inlined_call_operand.vmem [shape: f32[1,128], index: 3, kind: input, shape index: {}]
  %s4 = inlined_call_operand.vmem [shape: bf16[2,384,128], index: 4, kind: input, shape index: {}]
  %s5 = inlined_call_operand.vmem [shape: f32[2,384], index: 5, kind: input, shape index: {}]
  %s6 = inlined_call_operand.vmem [shape: bf16[2,4,128,32], index: 6, kind: input, shape index: {}]
  %s7 = inlined_call_operand.vmem [shape: f32[2,128], index: 7, kind: input, shape index: {}]
  %s8 = inlined_call_operand.vmem [shape: bf16[2,32,128], index: 8, kind: input, shape index: {}]
  %s9 = inlined_call_operand.vmem [shape: f32[2,32], index: 9, kind: input, shape index: {}]
  %s10 = inlined_call_operand.vmem [shape: bf16[2,128,32], index: 10, kind: input, shape index: {}]
  %s11 = inlined_call_operand.vmem [shape: f32[2,128], index: 11, kind: input, shape index: {}]
  %s12 = inlined_call_operand.vmem [shape: f32[2,128], index: 12, kind: input, shape index: {}]
  %s13 = inlined_call_operand.vmem [shape: f32[2,128], index: 13, kind: input, shape index: {}]
  %s14 = inlined_call_operand.vmem [shape: f32[2,128], index: 14, kind: input, shape index: {}]
  %s15 = inlined_call_operand.vmem [shape: f32[2,128], index: 15, kind: input, shape index: {}]
  %s16 = inlined_call_operand.vmem [shape: bf16[128,128], index: 16, kind: input, shape index: {}]
  %s17 = inlined_call_operand.hbm [shape: f32[1,8,128], index: 17, kind: output, shape index: {}]
  %s18 = sld [smem:[#allocation0]]
  $region78: #{tpu_custom_call.1} parent=0
    _
  %s20 = ssub.s32 1, %s18
  %s21 = scalar_select 0, %s20, %s18
  $region1: #{tpu_custom_call.1} parent=0
    #allocation2 [shape = 'u8[4096]{0}', space=vmem, size = 0x1000, scoped, tag = 'output window, operand 0, single buffered']
    #allocation3 [shape = 's32[1]{0}', space=sflag, size = 0x4, scoped, tag = 'scoped memory for tpu_custom_call.1']
    %22 = vsyncpa [#allocation3], 0
    // Predicated region
    $region2: #{tpu_custom_call.1} parent=1 // pred_check
      _
    $region3: #{tpu_custom_call.1} parent=1 // pred_check_branch
      %24 = sbr.rel (0) target = $region5
    $region4: #{tpu_custom_call.1} parent=1 // pred_region
      _
    $region5: #{tpu_custom_call.1} parent=1 // pred_fallthru
      _
    // Predicated region
    $region6: #{tpu_custom_call.1} parent=1 // pred_check
      _
    $region7: #{tpu_custom_call.1} parent=1 // pred_check_branch
      %26 = sbr.rel (0) target = $region9
    $region8: #{tpu_custom_call.1} parent=1 // pred_region
      _
    $region9: #{tpu_custom_call.1} parent=1 // pred_fallthru
      _
    // Predicated region
    $region10: #{tpu_custom_call.1} parent=1 // pred_check
      _
    $region11: #{tpu_custom_call.1} parent=1 // pred_check_branch
      %28 = sbr.rel (0) target = $region13
    $region12: #{tpu_custom_call.1} parent=1 // pred_region
      _
    $region13: #{tpu_custom_call.1} parent=1 // pred_fallthru
      _
    // Predicated region
    $region14: #{tpu_custom_call.1} parent=1 // pred_check
      _
    $region15: #{tpu_custom_call.1} parent=1 // pred_check_branch
      %30 = sbr.rel (0) target = $region17
    $region16: #{tpu_custom_call.1} parent=1 // pred_region
      _
    $region17: #{tpu_custom_call.1} parent=1 // pred_fallthru
      _
    // Predicated region
    $region18: #{tpu_custom_call.1} parent=1 // pred_check
      _
    $region19: #{tpu_custom_call.1} parent=1 // pred_check_branch
      %32 = sbr.rel (0) target = $region21
    $region20: #{tpu_custom_call.1} parent=1 // pred_region
      _
    $region21: #{tpu_custom_call.1} parent=1 // pred_fallthru
      _
    // Predicated region
    $region22: #{tpu_custom_call.1} parent=1 // pred_check
      _
    $region23: #{tpu_custom_call.1} parent=1 // pred_check_branch
      %34 = sbr.rel (0) target = $region25
    $region24: #{tpu_custom_call.1} parent=1 // pred_region
      _
    $region25: #{tpu_custom_call.1} parent=1 // pred_fallthru
      _
    // Predicated region
    $region26: #{tpu_custom_call.1} parent=1 // pred_check
      _
    $region27: #{tpu_custom_call.1} parent=1 // pred_check_branch
      %36 = sbr.rel (0) target = $region29
    $region28: #{tpu_custom_call.1} parent=1 // pred_region
      _
    $region29: #{tpu_custom_call.1} parent=1 // pred_fallthru
      _
    // Predicated region
    $region30: #{tpu_custom_call.1} parent=1 // pred_check
      _
    $region31: #{tpu_custom_call.1} parent=1 // pred_check_branch
      %38 = sbr.rel (0) target = $region33
    $region32: #{tpu_custom_call.1} parent=1 // pred_region
      _
    $region33: #{tpu_custom_call.1} parent=1 // pred_fallthru
      _
    // Predicated region
    $region34: #{tpu_custom_call.1} parent=1 // pred_check
      _
    $region35: #{tpu_custom_call.1} parent=1 // pred_check_branch
      %40 = sbr.rel (0) target = $region37
    $region36: #{tpu_custom_call.1} parent=1 // pred_region
      _
    $region37: #{tpu_custom_call.1} parent=1 // pred_fallthru
      _
    // Predicated region
    $region38: #{tpu_custom_call.1} parent=1 // pred_check
      _
    $region39: #{tpu_custom_call.1} parent=1 // pred_check_branch
      %42 = sbr.rel (0) target = $region41
    $region40: #{tpu_custom_call.1} parent=1 // pred_region
      _
    $region41: #{tpu_custom_call.1} parent=1 // pred_fallthru
      _
    // Predicated region
    $region42: #{tpu_custom_call.1} parent=1 // pred_check
      _
    $region43: #{tpu_custom_call.1} parent=1 // pred_check_branch
      %44 = sbr.rel (0) target = $region45
    $region44: #{tpu_custom_call.1} parent=1 // pred_region
      _
    $region45: #{tpu_custom_call.1} parent=1 // pred_fallthru
      _
    // Predicated region
    $region46: #{tpu_custom_call.1} parent=1 // pred_check
      _
    $region47: #{tpu_custom_call.1} parent=1 // pred_check_branch
      %46 = sbr.rel (0) target = $region49
    $region48: #{tpu_custom_call.1} parent=1 // pred_region
      _
    $region49: #{tpu_custom_call.1} parent=1 // pred_fallthru
      _
    // Predicated region
    $region50: #{tpu_custom_call.1} parent=1 // pred_check
      _
    $region51: #{tpu_custom_call.1} parent=1 // pred_check_branch
      %48 = sbr.rel (0) target = $region53
    $region52: #{tpu_custom_call.1} parent=1 // pred_region
      _
    $region53: #{tpu_custom_call.1} parent=1 // pred_fallthru
      _
    // Predicated region
    $region54: #{tpu_custom_call.1} parent=1 // pred_check
      _
    $region55: #{tpu_custom_call.1} parent=1 // pred_check_branch
      %50 = sbr.rel (0) target = $region57
    $region56: #{tpu_custom_call.1} parent=1 // pred_region
      _
    $region57: #{tpu_custom_call.1} parent=1 // pred_fallthru
      _
    // Predicated region
    $region58: #{tpu_custom_call.1} parent=1 // pred_check
      _
    $region59: #{tpu_custom_call.1} parent=1 // pred_check_branch
      %52 = sbr.rel (0) target = $region61
    $region60: #{tpu_custom_call.1} parent=1 // pred_region
      _
    $region61: #{tpu_custom_call.1} parent=1 // pred_fallthru
      _
    // Predicated region
    $region62: #{tpu_custom_call.1} parent=1 // pred_check
      _
    $region63: #{tpu_custom_call.1} parent=1 // pred_check_branch
      %54 = sbr.rel (0) target = $region65
    $region64: #{tpu_custom_call.1} parent=1 // pred_region
      _
    $region65: #{tpu_custom_call.1} parent=1 // pred_fallthru
      _
    // Predicated region
    $region66: #{tpu_custom_call.1} parent=1 // pred_check
      _
    $region67: #{tpu_custom_call.1} parent=1 // pred_check_branch
      %56 = sbr.rel (0) target = $region69
    $region68: #{tpu_custom_call.1} parent=1 // pred_region
      _
    $region69: #{tpu_custom_call.1} parent=1 // pred_fallthru
      _
    %v58 = vld [vmem:[%s0] sm:$0xf]
    %v59 = vld [vmem:[%s0 + $0x4] sm:$0xf]
    %v60 = vld [vmem:[%s0 + $0x8] sm:$0xf]
    %v61 = vld [vmem:[%s0 + $0xc] sm:$0xf]
    %v62 = vld [vmem:[%s0 + $0x10] sm:$0xf]
    %v63 = vld [vmem:[%s0 + $0x14] sm:$0xf]
    %v64 = vld [vmem:[%s0 + $0x18] sm:$0xf]
    %v65 = vld [vmem:[%s0 + $0x1c] sm:$0xf]
    %v66 = vld [vmem:[%s2] sm:$0xf]
    %v67 = vld [vmem:[%s2 + $0x4] sm:$0xf]
    %v68 = vld [vmem:[%s2 + $0x8] sm:$0xf]
    %v69 = vld [vmem:[%s2 + $0xc] sm:$0xf]
    %v70 = vld [vmem:[%s2 + $0x10] sm:$0xf]
    %v71 = vld [vmem:[%s2 + $0x14] sm:$0xf]
    %v72 = vld [vmem:[%s2 + $0x18] sm:$0xf]
    %v73 = vld [vmem:[%s2 + $0x1c] sm:$0xf]
    %v74 = vld [vmem:[%s2 + $0x20] sm:$0xf]
    %v75 = vld [vmem:[%s2 + $0x24] sm:$0xf]
    %v76 = vld [vmem:[%s2 + $0x28] sm:$0xf]
    %v77 = vld [vmem:[%s2 + $0x2c] sm:$0xf]
    %v78 = vld [vmem:[%s2 + $0x30] sm:$0xf]
    %v79 = vld [vmem:[%s2 + $0x34] sm:$0xf]
    %v80 = vld [vmem:[%s2 + $0x38] sm:$0xf]
    %v81 = vld [vmem:[%s2 + $0x3c] sm:$0xf]
    %v82 = vld [vmem:[%s3] sm:$0x1]
    %v84 = vlaneseq
    %v85 = vshrl.u32 %v84, 7
    %v86 = vsub.s32 0, %v85
    %v87 = vrot.slane %v82, %v86
    %v97 = vunpack.c.l.b16 %v58
    %v98 = vunpack.c.l.b16 %v59
    %v99 = vunpack.c.l.b16 %v60
    %v100 = vunpack.c.l.b16 %v61
    %v101 = vunpack.c.l.b16 %v62
    %v102 = vunpack.c.l.b16 %v63
    %v103 = vunpack.c.l.b16 %v64
    %v104 = vunpack.c.l.b16 %v65
    %v105 = vpack.c.b16 %v98, %v97
    %v106 = vpack.c.b16 %v100, %v99
    %v107 = vpack.c.b16 %v102, %v101
    %v108 = vpack.c.b16 %v104, %v103
    %v129 = vunpack.c.l.b16 %v66
    %v130 = vunpack.c.l.b16 %v67
    %v131 = vunpack.c.l.b16 %v68
    %v132 = vunpack.c.l.b16 %v69
    %v133 = vunpack.c.l.b16 %v70
    %v134 = vunpack.c.l.b16 %v71
    %v135 = vunpack.c.l.b16 %v72
    %v136 = vunpack.c.l.b16 %v73
    %v137 = vunpack.c.l.b16 %v74
    %v138 = vunpack.c.l.b16 %v75
    %v139 = vunpack.c.l.b16 %v76
    %v140 = vunpack.c.l.b16 %v77
    %v141 = vunpack.c.l.b16 %v78
    %v142 = vunpack.c.l.b16 %v79
    %v143 = vunpack.c.l.b16 %v80
    %v144 = vunpack.c.l.b16 %v81
    %v145 = vpack.c.b16 %v130, %v129
    %v146 = vpack.c.b16 %v132, %v131
    %v147 = vpack.c.b16 %v134, %v133
    %v148 = vpack.c.b16 %v136, %v135
    %v149 = vpack.c.b16 %v138, %v137
    %v150 = vpack.c.b16 %v140, %v139
    %v151 = vpack.c.b16 %v142, %v141
    %v152 = vpack.c.b16 %v144, %v143
    %161 = vmatprep.subr.bf16.mxu0 0
    %162 = vmatpush1.bf16.xpose.msra.mxu0 %v152
    %163 = vmatprep.subr.bf16.mxu0 0
    %164 = vmatpush1.bf16.xpose.msra.mxu0 %v151
    %165 = vmatprep.subr.bf16.mxu0 0
    %166 = vmatpush1.bf16.xpose.msra.mxu0 %v150
    %167 = vmatprep.subr.bf16.mxu0 0
    %168 = vmatpush1.bf16.xpose.msra.mxu0 %v149
    %169 = vmatprep.subr.bf16.mxu0 0
    %170 = vmatpush1.bf16.xpose.msra.mxu0 %v148
    %171 = vmatprep.subr.bf16.mxu0 0
    %172 = vmatpush1.bf16.xpose.msra.mxu0 %v147
    %173 = vmatprep.subr.bf16.mxu0 0
    %174 = vmatpush1.bf16.xpose.msra.mxu0 %v146
    %175 = vmatprep.subr.bf16.mxu0 0
    %176 = vmatpush1.bf16.xpose.msra.mxu0 %v145
    %177 = vmatprep.subr.bf16.mxu0 0
    %178 = vmatpush2.bf16.xpose.msra.mxu0 0
    %179 = vmatprep.subr.bf16.mxu0 0
    %180 = vmatpush2.bf16.xpose.msra.mxu0 0
    %181 = vmatprep.subr.bf16.mxu0 0
    %182 = vmatpush2.bf16.xpose.msra.mxu0 0
    %183 = vmatprep.subr.bf16.mxu0 0
    %184 = vmatpush2.bf16.xpose.msra.mxu0 0
    %185 = vmatprep.subr.bf16.mxu0 0
    %186 = vmatpush2.bf16.xpose.msra.mxu0 0
    %187 = vmatprep.subr.bf16.mxu0 0
    %188 = vmatpush2.bf16.xpose.msra.mxu0 0
    %189 = vmatprep.subr.bf16.mxu0 0
    %190 = vmatpush2.bf16.xpose.msra.mxu0 0
    %191 = vmatprep.subr.bf16.mxu0 0
    %192 = vmatpush2.bf16.xpose.msra.mxu0 0
    %193 = vmatprep.mubr.bf16.mxu0 0
    %194 = vmatmul.mubr.bf16.gmra.mxu0 %v105
    %v195 = vpop.f32.mrf.mxu0
    %v196 = vadd.f32 %v87, %v195
    %v197 = vpop.f32.mrf.mxu0
    %v198 = vpop.f32.mrf.mxu0
    %v199 = vadd.f32 %v87, %v198
    %v200 = vpop.f32.mrf.mxu0
    %201 = vmatprep.mubr.bf16.mxu0 0
    %202 = vmatmul.mubr.bf16.gmra.mxu0 %v106
    %v203 = vpop.f32.mrf.mxu0
    %v204 = vadd.f32 %v87, %v203
    %v205 = vpop.f32.mrf.mxu0
    %v206 = vpop.f32.mrf.mxu0
    %v207 = vadd.f32 %v87, %v206
    %v208 = vpop.f32.mrf.mxu0
    %209 = vmatprep.mubr.bf16.mxu0 0
    %210 = vmatmul.mubr.bf16.gmra.mxu0 %v107
    %v211 = vpop.f32.mrf.mxu0
    %v212 = vadd.f32 %v87, %v211
    %v213 = vpop.f32.mrf.mxu0
    %v214 = vpop.f32.mrf.mxu0
    %v215 = vadd.f32 %v87, %v214
    %v216 = vpop.f32.mrf.mxu0
    %217 = vmatprep.mubr.bf16.mxu0 0
    %218 = vmatmul.mubr.bf16.gmra.mxu0 %v108
    %v219 = vpop.f32.mrf.mxu0
    %v220 = vadd.f32 %v87, %v219
    %v221 = vpop.f32.mrf.mxu0
    %v222 = vpop.f32.mrf.mxu0
    %v223 = vadd.f32 %v87, %v222
    %v224 = vpop.f32.mrf.mxu0
    %225 = vdwg.mxu0
    %v226 = vld [vmem:[%s1] sm:$0xff]
    %v228 = vcombine.high %v226, %v226
    %v230 = vunpack.c.l.s4 1966171168
    %v231 = vunpack.c.0.s8 %v230
    %v232 = vlaneseq
    %v233 = vshrl.u32 %v232, 7
    %v234 = vsub.s32 %v231, %v233
    %v235 = vrot.slane %v226, %v234
    %v237 = vunpack.c.l.s4 1966171168
    %v238 = vunpack.c.0.s8 %v237
    %v239 = vlaneseq
    %v240 = vshrl.u32 %v239, 7
    %v241 = vsub.s32 %v238, %v240
    %v242 = vrot.slane %v228, %v241
    %v243 = vcombine.high %v235, %v235
    %v244 = vcombine.high %v242, %v242
    %v246 = vunpack.c.l.s4 1966171168
    %v247 = vunpack.c.0.s8 %v246
    %v248 = vlaneseq
    %v249 = vshrl.u32 %v248, 7
    %v250 = vsub.s32 %v247, %v249
    %v251 = vrot.slane %v235, %v250
    %v253 = vunpack.c.l.s4 1966171168
    %v254 = vunpack.c.0.s8 %v253
    %v255 = vlaneseq
    %v256 = vshrl.u32 %v255, 7
    %v257 = vsub.s32 %v254, %v256
    %v258 = vrot.slane %v242, %v257
    %v260 = vunpack.c.l.s4 1966171168
    %v261 = vunpack.c.0.s8 %v260
    %v262 = vlaneseq
    %v263 = vshrl.u32 %v262, 7
    %v264 = vsub.s32 %v261, %v263
    %v265 = vrot.slane %v243, %v264
    %v267 = vunpack.c.l.s4 1966171168
    %v268 = vunpack.c.0.s8 %v267
    %v269 = vlaneseq
    %v270 = vshrl.u32 %v269, 7
    %v271 = vsub.s32 %v268, %v270
    %v272 = vrot.slane %v244, %v271
    %v273 = vcombine.high %v251, %v251
    %v274 = vcombine.high %v258, %v258
    %v275 = vcombine.high %v265, %v265
    %v276 = vcombine.high %v272, %v272
    %v277 = vlaneseq
    %v278 = vshrl.u32 %v277, 7
    %v279 = vsub.s32 0, %v278
    %v280 = vrot.slane %v251, %v279
    %v281 = vlaneseq
    %v282 = vshrl.u32 %v281, 7
    %v283 = vsub.s32 0, %v282
    %v284 = vrot.slane %v265, %v283
    %v285 = vlaneseq
    %v286 = vshrl.u32 %v285, 7
    %v287 = vsub.s32 0, %v286
    %v288 = vrot.slane %v273, %v287
    %v289 = vlaneseq
    %v290 = vshrl.u32 %v289, 7
    %v291 = vsub.s32 0, %v290
    %v292 = vrot.slane %v275, %v291
    %v293 = vlaneseq
    %v294 = vshrl.u32 %v293, 7
    %v295 = vsub.s32 0, %v294
    %v296 = vrot.slane %v258, %v295
    %v297 = vlaneseq
    %v298 = vshrl.u32 %v297, 7
    %v299 = vsub.s32 0, %v298
    %v300 = vrot.slane %v272, %v299
    %v301 = vlaneseq
    %v302 = vshrl.u32 %v301, 7
    %v303 = vsub.s32 0, %v302
    %v304 = vrot.slane %v274, %v303
    %v305 = vlaneseq
    %v306 = vshrl.u32 %v305, 7
    %v307 = vsub.s32 0, %v306
    %v308 = vrot.slane %v276, %v307
    %v317 = vadd.f32 %v196, %v280
    %v318 = vadd.f32 %v199, %v284
    %v319 = vadd.f32 %v204, %v288
    %v320 = vadd.f32 %v207, %v292
    %v321 = vadd.f32 %v212, %v296
    %v322 = vadd.f32 %v215, %v300
    %v323 = vadd.f32 %v220, %v304
    %v324 = vadd.f32 %v223, %v308
    %v325 = vld [vmem:[%s4] sm:$0xf]
    %v326 = vld [vmem:[%s4 + $0x4] sm:$0xf]
    %v327 = vld [vmem:[%s4 + $0x8] sm:$0xf]
    %v328 = vld [vmem:[%s4 + $0xc] sm:$0xf]
    %v329 = vld [vmem:[%s4 + $0x10] sm:$0xf]
    %v330 = vld [vmem:[%s4 + $0x14] sm:$0xf]
    %v331 = vld [vmem:[%s4 + $0x18] sm:$0xf]
    %v332 = vld [vmem:[%s4 + $0x1c] sm:$0xf]
    %v333 = vld [vmem:[%s4 + $0x20] sm:$0xf]
    %v334 = vld [vmem:[%s4 + $0x24] sm:$0xf]
    %v335 = vld [vmem:[%s4 + $0x28] sm:$0xf]
    %v336 = vld [vmem:[%s4 + $0x2c] sm:$0xf]
    %v337 = vld [vmem:[%s4 + $0x30] sm:$0xf]
    %v338 = vld [vmem:[%s4 + $0x34] sm:$0xf]
    %v339 = vld [vmem:[%s4 + $0x38] sm:$0xf]
    %v340 = vld [vmem:[%s4 + $0x3c] sm:$0xf]
    %v341 = vld [vmem:[%s4 + $0x40] sm:$0xf]
    %v342 = vld [vmem:[%s4 + $0x44] sm:$0xf]
    %v343 = vld [vmem:[%s4 + $0x48] sm:$0xf]
    %v344 = vld [vmem:[%s4 + $0x4c] sm:$0xf]
    %v345 = vld [vmem:[%s4 + $0x50] sm:$0xf]
    %v346 = vld [vmem:[%s4 + $0x54] sm:$0xf]
    %v347 = vld [vmem:[%s4 + $0x58] sm:$0xf]
    %v348 = vld [vmem:[%s4 + $0x5c] sm:$0xf]
    %v349 = vld [vmem:[%s4 + $0x60] sm:$0xf]
    %v350 = vld [vmem:[%s4 + $0x64] sm:$0xf]
    %v351 = vld [vmem:[%s4 + $0x68] sm:$0xf]
    %v352 = vld [vmem:[%s4 + $0x6c] sm:$0xf]
    %v353 = vld [vmem:[%s4 + $0x70] sm:$0xf]
    %v354 = vld [vmem:[%s4 + $0x74] sm:$0xf]
    %v355 = vld [vmem:[%s4 + $0x78] sm:$0xf]
    %v356 = vld [vmem:[%s4 + $0x7c] sm:$0xf]
    %v357 = vld [vmem:[%s4 + $0x80] sm:$0xf]
    %v358 = vld [vmem:[%s4 + $0x84] sm:$0xf]
    %v359 = vld [vmem:[%s4 + $0x88] sm:$0xf]
    %v360 = vld [vmem:[%s4 + $0x8c] sm:$0xf]
    %v361 = vld [vmem:[%s4 + $0x90] sm:$0xf]
    %v362 = vld [vmem:[%s4 + $0x94] sm:$0xf]
    %v363 = vld [vmem:[%s4 + $0x98] sm:$0xf]
    %v364 = vld [vmem:[%s4 + $0x9c] sm:$0xf]
    %v365 = vld [vmem:[%s4 + $0xa0] sm:$0xf]
    %v366 = vld [vmem:[%s4 + $0xa4] sm:$0xf]
    %v367 = vld [vmem:[%s4 + $0xa8] sm:$0xf]
    %v368 = vld [vmem:[%s4 + $0xac] sm:$0xf]
    %v369 = vld [vmem:[%s4 + $0xb0] sm:$0xf]
    %v370 = vld [vmem:[%s4 + $0xb4] sm:$0xf]
    %v371 = vld [vmem:[%s4 + $0xb8] sm:$0xf]
    %v372 = vld [vmem:[%s4 + $0xbc] sm:$0xf]
    %v373 = vpack.c.bf16 %v318, %v317
    %v374 = vpack.c.bf16 %v320, %v319
    %v375 = vpack.c.bf16 %v322, %v321
    %v376 = vpack.c.bf16 %v324, %v323
    %v377 = vld [vmem:[%s5] ss:$2 sm:$0x7]
    %v379 = vlaneseq
    %v380 = vshrl.u32 %v379, 7
    %v381 = vsub.s32 0, %v380
    %v382 = vrot.slane %v377, %v381
    %v383 = vlaneseq
    %v384 = vshrl.u32 %v383, 7
    %v385 = vsub.s32 1, %v384
    %v386 = vrot.slane %v377, %v385
    %v387 = vlaneseq
    %v388 = vshrl.u32 %v387, 7
    %v389 = vsub.s32 2, %v388
    %v390 = vrot.slane %v377, %v389
    %v442 = vunpack.c.l.b16 %v325
    %v443 = vunpack.c.l.b16 %v326
    %v444 = vunpack.c.l.b16 %v327
    %v445 = vunpack.c.l.b16 %v328
    %v446 = vunpack.c.l.b16 %v329
    %v447 = vunpack.c.l.b16 %v330
    %v448 = vunpack.c.l.b16 %v331
    %v449 = vunpack.c.l.b16 %v332
    %v450 = vunpack.c.l.b16 %v333
    %v451 = vunpack.c.l.b16 %v334
    %v452 = vunpack.c.l.b16 %v335
    %v453 = vunpack.c.l.b16 %v336
    %v454 = vunpack.c.l.b16 %v337
    %v455 = vunpack.c.l.b16 %v338
    %v456 = vunpack.c.l.b16 %v339
    %v457 = vunpack.c.l.b16 %v340
    %v458 = vunpack.c.l.b16 %v341
    %v459 = vunpack.c.l.b16 %v342
    %v460 = vunpack.c.l.b16 %v343
    %v461 = vunpack.c.l.b16 %v344
    %v462 = vunpack.c.l.b16 %v345
    %v463 = vunpack.c.l.b16 %v346
    %v464 = vunpack.c.l.b16 %v347
    %v465 = vunpack.c.l.b16 %v348
    %v466 = vunpack.c.l.b16 %v349
    %v467 = vunpack.c.l.b16 %v350
    %v468 = vunpack.c.l.b16 %v351
    %v469 = vunpack.c.l.b16 %v352
    %v470 = vunpack.c.l.b16 %v353
    %v471 = vunpack.c.l.b16 %v354
    %v472 = vunpack.c.l.b16 %v355
    %v473 = vunpack.c.l.b16 %v356
    %v474 = vunpack.c.l.b16 %v357
    %v475 = vunpack.c.l.b16 %v358
    %v476 = vunpack.c.l.b16 %v359
    %v477 = vunpack.c.l.b16 %v360
    %v478 = vunpack.c.l.b16 %v361
    %v479 = vunpack.c.l.b16 %v362
    %v480 = vunpack.c.l.b16 %v363
    %v481 = vunpack.c.l.b16 %v364
    %v482 = vunpack.c.l.b16 %v365
    %v483 = vunpack.c.l.b16 %v366
    %v484 = vunpack.c.l.b16 %v367
    %v485 = vunpack.c.l.b16 %v368
    %v486 = vunpack.c.l.b16 %v369
    %v487 = vunpack.c.l.b16 %v370
    %v488 = vunpack.c.l.b16 %v371
    %v489 = vunpack.c.l.b16 %v372
    %v490 = vpack.c.b16 %v443, %v442
    %v491 = vpack.c.b16 %v445, %v444
    %v492 = vpack.c.b16 %v447, %v446
    %v493 = vpack.c.b16 %v449, %v448
    %v494 = vpack.c.b16 %v451, %v450
    %v495 = vpack.c.b16 %v453, %v452
    %v496 = vpack.c.b16 %v455, %v454
    %v497 = vpack.c.b16 %v457, %v456
    %v498 = vpack.c.b16 %v459, %v458
    %v499 = vpack.c.b16 %v461, %v460
    %v500 = vpack.c.b16 %v463, %v462
    %v501 = vpack.c.b16 %v465, %v464
    %v502 = vpack.c.b16 %v467, %v466
    %v503 = vpack.c.b16 %v469, %v468
    %v504 = vpack.c.b16 %v471, %v470
    %v505 = vpack.c.b16 %v473, %v472
    %v506 = vpack.c.b16 %v475, %v474
    %v507 = vpack.c.b16 %v477, %v476
    %v508 = vpack.c.b16 %v479, %v478
    %v509 = vpack.c.b16 %v481, %v480
    %v510 = vpack.c.b16 %v483, %v482
    %v511 = vpack.c.b16 %v485, %v484
    %v512 = vpack.c.b16 %v487, %v486
    %v513 = vpack.c.b16 %v489, %v488
    %538 = vmatprep.subr.bf16.mxu0 0
    %539 = vmatpush1.bf16.xpose.msra.mxu0 %v497
    %540 = vmatprep.subr.bf16.mxu0 0
    %541 = vmatpush1.bf16.xpose.msra.mxu0 %v496
    %542 = vmatprep.subr.bf16.mxu0 0
    %543 = vmatpush1.bf16.xpose.msra.mxu0 %v495
    %544 = vmatprep.subr.bf16.mxu0 0
    %545 = vmatpush1.bf16.xpose.msra.mxu0 %v494
    %546 = vmatprep.subr.bf16.mxu0 0
    %547 = vmatpush1.bf16.xpose.msra.mxu0 %v493
    %548 = vmatprep.subr.bf16.mxu0 0
    %549 = vmatpush1.bf16.xpose.msra.mxu0 %v492
    %550 = vmatprep.subr.bf16.mxu0 0
    %551 = vmatpush1.bf16.xpose.msra.mxu0 %v491
    %552 = vmatprep.subr.bf16.mxu0 0
    %553 = vmatpush1.bf16.xpose.msra.mxu0 %v490
    %554 = vmatprep.subr.bf16.mxu0 0
    %555 = vmatpush2.bf16.xpose.msra.mxu0 %v505
    %556 = vmatprep.subr.bf16.mxu0 0
    %557 = vmatpush2.bf16.xpose.msra.mxu0 %v504
    %558 = vmatprep.subr.bf16.mxu0 0
    %559 = vmatpush2.bf16.xpose.msra.mxu0 %v503
    %560 = vmatprep.subr.bf16.mxu0 0
    %561 = vmatpush2.bf16.xpose.msra.mxu0 %v502
    %562 = vmatprep.subr.bf16.mxu0 0
    %563 = vmatpush2.bf16.xpose.msra.mxu0 %v501
    %564 = vmatprep.subr.bf16.mxu0 0
    %565 = vmatpush2.bf16.xpose.msra.mxu0 %v500
    %566 = vmatprep.subr.bf16.mxu0 0
    %567 = vmatpush2.bf16.xpose.msra.mxu0 %v499
    %568 = vmatprep.subr.bf16.mxu0 0
    %569 = vmatpush2.bf16.xpose.msra.mxu0 %v498
    %570 = vmatprep.mubr.bf16.mxu0 0
    %571 = vmatmul.mubr.bf16.gmra.mxu0 %v373
    %v572 = vpop.f32.mrf.mxu0
    %v573 = vadd.f32 %v382, %v572
    %v574 = vpop.f32.mrf.mxu0
    %v575 = vadd.f32 %v386, %v574
    %v576 = vpop.f32.mrf.mxu0
    %v577 = vadd.f32 %v382, %v576
    %v578 = vpop.f32.mrf.mxu0
    %v579 = vadd.f32 %v386, %v578
    %580 = vmatprep.mubr.bf16.mxu0 0
    %581 = vmatmul.mubr.bf16.gmra.mxu0 %v374
    %v582 = vpop.f32.mrf.mxu0
    %v583 = vadd.f32 %v382, %v582
    %v584 = vpop.f32.mrf.mxu0
    %v585 = vadd.f32 %v386, %v584
    %v586 = vpop.f32.mrf.mxu0
    %v587 = vadd.f32 %v382, %v586
    %v588 = vpop.f32.mrf.mxu0
    %v589 = vadd.f32 %v386, %v588
    %590 = vmatprep.mubr.bf16.mxu0 0
    %591 = vmatmul.mubr.bf16.gmra.mxu0 %v375
    %v592 = vpop.f32.mrf.mxu0
    %v593 = vadd.f32 %v382, %v592
    %v594 = vpop.f32.mrf.mxu0
    %v595 = vadd.f32 %v386, %v594
    %v596 = vpop.f32.mrf.mxu0
    %v597 = vadd.f32 %v382, %v596
    %v598 = vpop.f32.mrf.mxu0
    %v599 = vadd.f32 %v386, %v598
    %600 = vmatprep.mubr.bf16.mxu0 0
    %601 = vmatmul.mubr.bf16.gmra.mxu0 %v376
    %v602 = vpop.f32.mrf.mxu0
    %v603 = vadd.f32 %v382, %v602
    %v604 = vpop.f32.mrf.mxu0
    %v605 = vadd.f32 %v386, %v604
    %v606 = vpop.f32.mrf.mxu0
    %v607 = vadd.f32 %v382, %v606
    %v608 = vpop.f32.mrf.mxu0
    %v609 = vadd.f32 %v386, %v608
    %610 = vdwg.mxu0
    %611 = vmatprep.subr.bf16.mxu0 0
    %612 = vmatpush1.bf16.xpose.msra.mxu0 %v513
    %613 = vmatprep.subr.bf16.mxu0 0
    %614 = vmatpush1.bf16.xpose.msra.mxu0 %v512
    %615 = vmatprep.subr.bf16.mxu0 0
    %616 = vmatpush1.bf16.xpose.msra.mxu0 %v511
    %617 = vmatprep.subr.bf16.mxu0 0
    %618 = vmatpush1.bf16.xpose.msra.mxu0 %v510
    %619 = vmatprep.subr.bf16.mxu0 0
    %620 = vmatpush1.bf16.xpose.msra.mxu0 %v509
    %621 = vmatprep.subr.bf16.mxu0 0
    %622 = vmatpush1.bf16.xpose.msra.mxu0 %v508
    %623 = vmatprep.subr.bf16.mxu0 0
    %624 = vmatpush1.bf16.xpose.msra.mxu0 %v507
    %625 = vmatprep.subr.bf16.mxu0 0
    %626 = vmatpush1.bf16.xpose.msra.mxu0 %v506
    %627 = vmatprep.subr.bf16.mxu0 0
    %628 = vmatpush2.bf16.xpose.msra.mxu0 0
    %629 = vmatprep.subr.bf16.mxu0 0
    %630 = vmatpush2.bf16.xpose.msra.mxu0 0
    %631 = vmatprep.subr.bf16.mxu0 0
    %632 = vmatpush2.bf16.xpose.msra.mxu0 0
    %633 = vmatprep.subr.bf16.mxu0 0
    %634 = vmatpush2.bf16.xpose.msra.mxu0 0
    %635 = vmatprep.subr.bf16.mxu0 0
    %636 = vmatpush2.bf16.xpose.msra.mxu0 0
    %637 = vmatprep.subr.bf16.mxu0 0
    %638 = vmatpush2.bf16.xpose.msra.mxu0 0
    %639 = vmatprep.subr.bf16.mxu0 0
    %640 = vmatpush2.bf16.xpose.msra.mxu0 0
    %641 = vmatprep.subr.bf16.mxu0 0
    %642 = vmatpush2.bf16.xpose.msra.mxu0 0
    %643 = vmatprep.mubr.bf16.mxu0 0
    %644 = vmatmul.mubr.bf16.gmra.mxu0 %v373
    %v645 = vpop.f32.mrf.mxu0
    %v646 = vadd.f32 %v390, %v645
    %v647 = vpop.f32.mrf.mxu0
    %v648 = vpop.f32.mrf.mxu0
    %v649 = vadd.f32 %v390, %v648
    %v650 = vpop.f32.mrf.mxu0
    %651 = vmatprep.mubr.bf16.mxu0 0
    %652 = vmatmul.mubr.bf16.gmra.mxu0 %v374
    %v653 = vpop.f32.mrf.mxu0
    %v654 = vadd.f32 %v390, %v653
    %v655 = vpop.f32.mrf.mxu0
    %v656 = vpop.f32.mrf.mxu0
    %v657 = vadd.f32 %v390, %v656
    %v658 = vpop.f32.mrf.mxu0
    %659 = vmatprep.mubr.bf16.mxu0 0
    %660 = vmatmul.mubr.bf16.gmra.mxu0 %v375
    %v661 = vpop.f32.mrf.mxu0
    %v662 = vadd.f32 %v390, %v661
    %v663 = vpop.f32.mrf.mxu0
    %v664 = vpop.f32.mrf.mxu0
    %v665 = vadd.f32 %v390, %v664
    %v666 = vpop.f32.mrf.mxu0
    %667 = vmatprep.mubr.bf16.mxu0 0
    %668 = vmatmul.mubr.bf16.gmra.mxu0 %v376
    %v669 = vpop.f32.mrf.mxu0
    %v670 = vadd.f32 %v390, %v669
    %v671 = vpop.f32.mrf.mxu0
    %v672 = vpop.f32.mrf.mxu0
    %v673 = vadd.f32 %v390, %v672
    %v674 = vpop.f32.mrf.mxu0
    %675 = vdwg.mxu0
    %v676 = vmul.f32 %v573, 0.17677669
    %v677 = vmul.f32 %v577, 0.17677669
    %v678 = vmul.f32 %v583, 0.17677669
    %v679 = vmul.f32 %v587, 0.17677669
    %v680 = vmul.f32 %v593, 0.17677669
    %v681 = vmul.f32 %v597, 0.17677669
    %v682 = vmul.f32 %v603, 0.17677669
    %v683 = vmul.f32 %v607, 0.17677669
    %v684 = vpack.c.bf16 %v676, %v676
    %v685 = vpack.c.bf16 %v677, %v677
    %v686 = vpack.c.bf16 %v678, %v678
    %v687 = vpack.c.bf16 %v679, %v679
    %v688 = vpack.c.bf16 %v680, %v680
    %v689 = vpack.c.bf16 %v681, %v681
    %v690 = vpack.c.bf16 %v682, %v682
    %v691 = vpack.c.bf16 %v683, %v683
    %v692 = vpack.c.bf16 %v575, %v575
    %v693 = vpack.c.bf16 %v579, %v579
    %v694 = vpack.c.bf16 %v585, %v585
    %v695 = vpack.c.bf16 %v589, %v589
    %v696 = vpack.c.bf16 %v595, %v595
    %v697 = vpack.c.bf16 %v599, %v599
    %v698 = vpack.c.bf16 %v605, %v605
    %v699 = vpack.c.bf16 %v609, %v609
    %v700 = vpack.c.bf16 %v646, %v646
    %v701 = vpack.c.bf16 %v649, %v649
    %v702 = vpack.c.bf16 %v654, %v654
    %v703 = vpack.c.bf16 %v657, %v657
    %v704 = vpack.c.bf16 %v662, %v662
    %v705 = vpack.c.bf16 %v665, %v665
    %v706 = vpack.c.bf16 %v670, %v670
    %v707 = vpack.c.bf16 %v673, %v673
    %vm708 = vcmask 261120
    %v710 = vsel %vm708, %v684, 0
    %v713 = vsel %vm708, %v692, 0
    %715 = vmatprep.subr.bf16.mxu0 0
    %716 = vmatpush1.bf16.xpose.msra.mxu0 0
    %717 = vmatprep.subr.bf16.mxu0 0
    %718 = vmatpush1.bf16.xpose.msra.mxu0 0
    %719 = vmatprep.subr.bf16.mxu0 0
    %720 = vmatpush1.bf16.xpose.msra.mxu0 0
    %721 = vmatprep.subr.bf16.mxu0 0
    %722 = vmatpush1.bf16.xpose.msra.mxu0 0
    %723 = vmatprep.subr.bf16.mxu0 0
    %724 = vmatpush1.bf16.xpose.msra.mxu0 0
    %725 = vmatprep.subr.bf16.mxu0 0
    %726 = vmatpush1.bf16.xpose.msra.mxu0 0
    %727 = vmatprep.subr.bf16.mxu0 0
    %728 = vmatpush1.bf16.xpose.msra.mxu0 0
    %729 = vmatprep.subr.bf16.mxu0 0
    %730 = vmatpush1.bf16.xpose.msra.mxu0 %v713
    %731 = vmatprep.subr.bf16.mxu0 0
    %732 = vmatpush2.bf16.xpose.msra.mxu0 0
    %733 = vmatprep.subr.bf16.mxu0 0
    %734 = vmatpush2.bf16.xpose.msra.mxu0 0
    %735 = vmatprep.subr.bf16.mxu0 0
    %736 = vmatpush2.bf16.xpose.msra.mxu0 0
    %737 = vmatprep.subr.bf16.mxu0 0
    %738 = vmatpush2.bf16.xpose.msra.mxu0 0
    %739 = vmatprep.subr.bf16.mxu0 0
    %740 = vmatpush2.bf16.xpose.msra.mxu0 0
    %741 = vmatprep.subr.bf16.mxu0 0
    %742 = vmatpush2.bf16.xpose.msra.mxu0 0
    %743 = vmatprep.subr.bf16.mxu0 0
    %744 = vmatpush2.bf16.xpose.msra.mxu0 0
    %745 = vmatprep.subr.bf16.mxu0 0
    %746 = vmatpush2.bf16.xpose.msra.mxu0 0
    %747 = vmatprep.mubr.bf16.mxu0 0
    %748 = vmatmul.mubr.bf16.gmra.mxu0 %v710
    %v749 = vpop.f32.mrf.mxu0
    %v750 = vadd.f32 0.0, %v749
    %v751 = vpop.f32.mrf.mxu0
    %v752 = vpop.f32.mrf.mxu0
    %v753 = vpop.f32.mrf.mxu0
    %754 = vdwg.mxu0
    %v756 = vsel %vm708, %v685, 0
    %v759 = vsel %vm708, %v693, 0
    %761 = vmatprep.subr.bf16.mxu0 0
    %762 = vmatpush1.bf16.xpose.msra.mxu0 0
    %763 = vmatprep.subr.bf16.mxu0 0
    %764 = vmatpush1.bf16.xpose.msra.mxu0 0
    %765 = vmatprep.subr.bf16.mxu0 0
    %766 = vmatpush1.bf16.xpose.msra.mxu0 0
    %767 = vmatprep.subr.bf16.mxu0 0
    %768 = vmatpush1.bf16.xpose.msra.mxu0 0
    %769 = vmatprep.subr.bf16.mxu0 0
    %770 = vmatpush1.bf16.xpose.msra.mxu0 0
    %771 = vmatprep.subr.bf16.mxu0 0
    %772 = vmatpush1.bf16.xpose.msra.mxu0 0
    %773 = vmatprep.subr.bf16.mxu0 0
    %774 = vmatpush1.bf16.xpose.msra.mxu0 0
    %775 = vmatprep.subr.bf16.mxu0 0
    %776 = vmatpush1.bf16.xpose.msra.mxu0 %v759
    %777 = vmatprep.subr.bf16.mxu0 0
    %778 = vmatpush2.bf16.xpose.msra.mxu0 0
    %779 = vmatprep.subr.bf16.mxu0 0
    %780 = vmatpush2.bf16.xpose.msra.mxu0 0
    %781 = vmatprep.subr.bf16.mxu0 0
    %782 = vmatpush2.bf16.xpose.msra.mxu0 0
    %783 = vmatprep.subr.bf16.mxu0 0
    %784 = vmatpush2.bf16.xpose.msra.mxu0 0
    %785 = vmatprep.subr.bf16.mxu0 0
    %786 = vmatpush2.bf16.xpose.msra.mxu0 0
    %787 = vmatprep.subr.bf16.mxu0 0
    %788 = vmatpush2.bf16.xpose.msra.mxu0 0
    %789 = vmatprep.subr.bf16.mxu0 0
    %790 = vmatpush2.bf16.xpose.msra.mxu0 0
    %791 = vmatprep.subr.bf16.mxu0 0
    %792 = vmatpush2.bf16.xpose.msra.mxu0 0
    %793 = vmatprep.mubr.bf16.mxu0 0
    %794 = vmatmul.mubr.bf16.gmra.mxu0 %v756
    %v795 = vpop.f32.mrf.mxu0
    %v796 = vadd.f32 0.0, %v795
    %v797 = vpop.f32.mrf.mxu0
    %v798 = vpop.f32.mrf.mxu0
    %v799 = vpop.f32.mrf.mxu0
    %800 = vdwg.mxu0
    %v802 = vsel %vm708, %v686, 0
    %v805 = vsel %vm708, %v694, 0
    %807 = vmatprep.subr.bf16.mxu0 0
    %808 = vmatpush1.bf16.xpose.msra.mxu0 0
    %809 = vmatprep.subr.bf16.mxu0 0
    %810 = vmatpush1.bf16.xpose.msra.mxu0 0
    %811 = vmatprep.subr.bf16.mxu0 0
    %812 = vmatpush1.bf16.xpose.msra.mxu0 0
    %813 = vmatprep.subr.bf16.mxu0 0
    %814 = vmatpush1.bf16.xpose.msra.mxu0 0
    %815 = vmatprep.subr.bf16.mxu0 0
    %816 = vmatpush1.bf16.xpose.msra.mxu0 0
    %817 = vmatprep.subr.bf16.mxu0 0
    %818 = vmatpush1.bf16.xpose.msra.mxu0 0
    %819 = vmatprep.subr.bf16.mxu0 0
    %820 = vmatpush1.bf16.xpose.msra.mxu0 0
    %821 = vmatprep.subr.bf16.mxu0 0
    %822 = vmatpush1.bf16.xpose.msra.mxu0 %v805
    %823 = vmatprep.subr.bf16.mxu0 0
    %824 = vmatpush2.bf16.xpose.msra.mxu0 0
    %825 = vmatprep.subr.bf16.mxu0 0
    %826 = vmatpush2.bf16.xpose.msra.mxu0 0
    %827 = vmatprep.subr.bf16.mxu0 0
    %828 = vmatpush2.bf16.xpose.msra.mxu0 0
    %829 = vmatprep.subr.bf16.mxu0 0
    %830 = vmatpush2.bf16.xpose.msra.mxu0 0
    %831 = vmatprep.subr.bf16.mxu0 0
    %832 = vmatpush2.bf16.xpose.msra.mxu0 0
    %833 = vmatprep.subr.bf16.mxu0 0
    %834 = vmatpush2.bf16.xpose.msra.mxu0 0
    %835 = vmatprep.subr.bf16.mxu0 0
    %836 = vmatpush2.bf16.xpose.msra.mxu0 0
    %837 = vmatprep.subr.bf16.mxu0 0
    %838 = vmatpush2.bf16.xpose.msra.mxu0 0
    %839 = vmatprep.mubr.bf16.mxu0 0
    %840 = vmatmul.mubr.bf16.gmra.mxu0 %v802
    %v841 = vpop.f32.mrf.mxu0
    %v842 = vadd.f32 0.0, %v841
    %v843 = vpop.f32.mrf.mxu0
    %v844 = vpop.f32.mrf.mxu0
    %v845 = vpop.f32.mrf.mxu0
    %846 = vdwg.mxu0
    %v848 = vsel %vm708, %v687, 0
    %v851 = vsel %vm708, %v695, 0
    %853 = vmatprep.subr.bf16.mxu0 0
    %854 = vmatpush1.bf16.xpose.msra.mxu0 0
    %855 = vmatprep.subr.bf16.mxu0 0
    %856 = vmatpush1.bf16.xpose.msra.mxu0 0
    %857 = vmatprep.subr.bf16.mxu0 0
    %858 = vmatpush1.bf16.xpose.msra.mxu0 0
    %859 = vmatprep.subr.bf16.mxu0 0
    %860 = vmatpush1.bf16.xpose.msra.mxu0 0
    %861 = vmatprep.subr.bf16.mxu0 0
    %862 = vmatpush1.bf16.xpose.msra.mxu0 0
    %863 = vmatprep.subr.bf16.mxu0 0
    %864 = vmatpush1.bf16.xpose.msra.mxu0 0
    %865 = vmatprep.subr.bf16.mxu0 0
    %866 = vmatpush1.bf16.xpose.msra.mxu0 0
    %867 = vmatprep.subr.bf16.mxu0 0
    %868 = vmatpush1.bf16.xpose.msra.mxu0 %v851
    %869 = vmatprep.subr.bf16.mxu0 0
    %870 = vmatpush2.bf16.xpose.msra.mxu0 0
    %871 = vmatprep.subr.bf16.mxu0 0
    %872 = vmatpush2.bf16.xpose.msra.mxu0 0
    %873 = vmatprep.subr.bf16.mxu0 0
    %874 = vmatpush2.bf16.xpose.msra.mxu0 0
    %875 = vmatprep.subr.bf16.mxu0 0
    %876 = vmatpush2.bf16.xpose.msra.mxu0 0
    %877 = vmatprep.subr.bf16.mxu0 0
    %878 = vmatpush2.bf16.xpose.msra.mxu0 0
    %879 = vmatprep.subr.bf16.mxu0 0
    %880 = vmatpush2.bf16.xpose.msra.mxu0 0
    %881 = vmatprep.subr.bf16.mxu0 0
    %882 = vmatpush2.bf16.xpose.msra.mxu0 0
    %883 = vmatprep.subr.bf16.mxu0 0
    %884 = vmatpush2.bf16.xpose.msra.mxu0 0
    %885 = vmatprep.mubr.bf16.mxu0 0
    %886 = vmatmul.mubr.bf16.gmra.mxu0 %v848
    %v887 = vpop.f32.mrf.mxu0
    %v888 = vadd.f32 0.0, %v887
    %v889 = vpop.f32.mrf.mxu0
    %v890 = vpop.f32.mrf.mxu0
    %v891 = vpop.f32.mrf.mxu0
    %892 = vdwg.mxu0
    %v894 = vsel %vm708, %v688, 0
    %v897 = vsel %vm708, %v696, 0
    %899 = vmatprep.subr.bf16.mxu0 0
    %900 = vmatpush1.bf16.xpose.msra.mxu0 0
    %901 = vmatprep.subr.bf16.mxu0 0
    %902 = vmatpush1.bf16.xpose.msra.mxu0 0
    %903 = vmatprep.subr.bf16.mxu0 0
    %904 = vmatpush1.bf16.xpose.msra.mxu0 0
    %905 = vmatprep.subr.bf16.mxu0 0
    %906 = vmatpush1.bf16.xpose.msra.mxu0 0
    %907 = vmatprep.subr.bf16.mxu0 0
    %908 = vmatpush1.bf16.xpose.msra.mxu0 0
    %909 = vmatprep.subr.bf16.mxu0 0
    %910 = vmatpush1.bf16.xpose.msra.mxu0 0
    %911 = vmatprep.subr.bf16.mxu0 0
    %912 = vmatpush1.bf16.xpose.msra.mxu0 0
    %913 = vmatprep.subr.bf16.mxu0 0
    %914 = vmatpush1.bf16.xpose.msra.mxu0 %v897
    %915 = vmatprep.subr.bf16.mxu0 0
    %916 = vmatpush2.bf16.xpose.msra.mxu0 0
    %917 = vmatprep.subr.bf16.mxu0 0
    %918 = vmatpush2.bf16.xpose.msra.mxu0 0
    %919 = vmatprep.subr.bf16.mxu0 0
    %920 = vmatpush2.bf16.xpose.msra.mxu0 0
    %921 = vmatprep.subr.bf16.mxu0 0
    %922 = vmatpush2.bf16.xpose.msra.mxu0 0
    %923 = vmatprep.subr.bf16.mxu0 0
    %924 = vmatpush2.bf16.xpose.msra.mxu0 0
    %925 = vmatprep.subr.bf16.mxu0 0
    %926 = vmatpush2.bf16.xpose.msra.mxu0 0
    %927 = vmatprep.subr.bf16.mxu0 0
    %928 = vmatpush2.bf16.xpose.msra.mxu0 0
    %929 = vmatprep.subr.bf16.mxu0 0
    %930 = vmatpush2.bf16.xpose.msra.mxu0 0
    %931 = vmatprep.mubr.bf16.mxu0 0
    %932 = vmatmul.mubr.bf16.gmra.mxu0 %v894
    %v933 = vpop.f32.mrf.mxu0
    %v934 = vadd.f32 0.0, %v933
    %v935 = vpop.f32.mrf.mxu0
    %v936 = vpop.f32.mrf.mxu0
    %v937 = vpop.f32.mrf.mxu0
    %938 = vdwg.mxu0
    %v940 = vsel %vm708, %v689, 0
    %v943 = vsel %vm708, %v697, 0
    %945 = vmatprep.subr.bf16.mxu0 0
    %946 = vmatpush1.bf16.xpose.msra.mxu0 0
    %947 = vmatprep.subr.bf16.mxu0 0
    %948 = vmatpush1.bf16.xpose.msra.mxu0 0
    %949 = vmatprep.subr.bf16.mxu0 0
    %950 = vmatpush1.bf16.xpose.msra.mxu0 0
    %951 = vmatprep.subr.bf16.mxu0 0
    %952 = vmatpush1.bf16.xpose.msra.mxu0 0
    %953 = vmatprep.subr.bf16.mxu0 0
    %954 = vmatpush1.bf16.xpose.msra.mxu0 0
    %955 = vmatprep.subr.bf16.mxu0 0
    %956 = vmatpush1.bf16.xpose.msra.mxu0 0
    %957 = vmatprep.subr.bf16.mxu0 0
    %958 = vmatpush1.bf16.xpose.msra.mxu0 0
    %959 = vmatprep.subr.bf16.mxu0 0
    %960 = vmatpush1.bf16.xpose.msra.mxu0 %v943
    %961 = vmatprep.subr.bf16.mxu0 0
    %962 = vmatpush2.bf16.xpose.msra.mxu0 0
    %963 = vmatprep.subr.bf16.mxu0 0
    %964 = vmatpush2.bf16.xpose.msra.mxu0 0
    %965 = vmatprep.subr.bf16.mxu0 0
    %966 = vmatpush2.bf16.xpose.msra.mxu0 0
    %967 = vmatprep.subr.bf16.mxu0 0
    %968 = vmatpush2.bf16.xpose.msra.mxu0 0
    %969 = vmatprep.subr.bf16.mxu0 0
    %970 = vmatpush2.bf16.xpose.msra.mxu0 0
    %971 = vmatprep.subr.bf16.mxu0 0
    %972 = vmatpush2.bf16.xpose.msra.mxu0 0
    %973 = vmatprep.subr.bf16.mxu0 0
    %974 = vmatpush2.bf16.xpose.msra.mxu0 0
    %975 = vmatprep.subr.bf16.mxu0 0
    %976 = vmatpush2.bf16.xpose.msra.mxu0 0
    %977 = vmatprep.mubr.bf16.mxu0 0
    %978 = vmatmul.mubr.bf16.gmra.mxu0 %v940
    %v979 = vpop.f32.mrf.mxu0
    %v980 = vadd.f32 0.0, %v979
    %v981 = vpop.f32.mrf.mxu0
    %v982 = vpop.f32.mrf.mxu0
    %v983 = vpop.f32.mrf.mxu0
    %984 = vdwg.mxu0
    %v986 = vsel %vm708, %v690, 0
    %v989 = vsel %vm708, %v698, 0
    %991 = vmatprep.subr.bf16.mxu0 0
    %992 = vmatpush1.bf16.xpose.msra.mxu0 0
    %993 = vmatprep.subr.bf16.mxu0 0
    %994 = vmatpush1.bf16.xpose.msra.mxu0 0
    %995 = vmatprep.subr.bf16.mxu0 0
    %996 = vmatpush1.bf16.xpose.msra.mxu0 0
    %997 = vmatprep.subr.bf16.mxu0 0
    %998 = vmatpush1.bf16.xpose.msra.mxu0 0
    %999 = vmatprep.subr.bf16.mxu0 0
    %1000 = vmatpush1.bf16.xpose.msra.mxu0 0
    %1001 = vmatprep.subr.bf16.mxu0 0
    %1002 = vmatpush1.bf16.xpose.msra.mxu0 0
    %1003 = vmatprep.subr.bf16.mxu0 0
    %1004 = vmatpush1.bf16.xpose.msra.mxu0 0
    %1005 = vmatprep.subr.bf16.mxu0 0
    %1006 = vmatpush1.bf16.xpose.msra.mxu0 %v989
    %1007 = vmatprep.subr.bf16.mxu0 0
    %1008 = vmatpush2.bf16.xpose.msra.mxu0 0
    %1009 = vmatprep.subr.bf16.mxu0 0
    %1010 = vmatpush2.bf16.xpose.msra.mxu0 0
    %1011 = vmatprep.subr.bf16.mxu0 0
    %1012 = vmatpush2.bf16.xpose.msra.mxu0 0
    %1013 = vmatprep.subr.bf16.mxu0 0
    %1014 = vmatpush2.bf16.xpose.msra.mxu0 0
    %1015 = vmatprep.subr.bf16.mxu0 0
    %1016 = vmatpush2.bf16.xpose.msra.mxu0 0
    %1017 = vmatprep.subr.bf16.mxu0 0
    %1018 = vmatpush2.bf16.xpose.msra.mxu0 0
    %1019 = vmatprep.subr.bf16.mxu0 0
    %1020 = vmatpush2.bf16.xpose.msra.mxu0 0
    %1021 = vmatprep.subr.bf16.mxu0 0
    %1022 = vmatpush2.bf16.xpose.msra.mxu0 0
    %1023 = vmatprep.mubr.bf16.mxu0 0
    %1024 = vmatmul.mubr.bf16.gmra.mxu0 %v986
    %v1025 = vpop.f32.mrf.mxu0
    %v1026 = vadd.f32 0.0, %v1025
    %v1027 = vpop.f32.mrf.mxu0
    %v1028 = vpop.f32.mrf.mxu0
    %v1029 = vpop.f32.mrf.mxu0
    %1030 = vdwg.mxu0
    %v1032 = vsel %vm708, %v691, 0
    %v1035 = vsel %vm708, %v699, 0
    %1037 = vmatprep.subr.bf16.mxu0 0
    %1038 = vmatpush1.bf16.xpose.msra.mxu0 0
    %1039 = vmatprep.subr.bf16.mxu0 0
    %1040 = vmatpush1.bf16.xpose.msra.mxu0 0
    %1041 = vmatprep.subr.bf16.mxu0 0
    %1042 = vmatpush1.bf16.xpose.msra.mxu0 0
    %1043 = vmatprep.subr.bf16.mxu0 0
    %1044 = vmatpush1.bf16.xpose.msra.mxu0 0
    %1045 = vmatprep.subr.bf16.mxu0 0
    %1046 = vmatpush1.bf16.xpose.msra.mxu0 0
    %1047 = vmatprep.subr.bf16.mxu0 0
    %1048 = vmatpush1.bf16.xpose.msra.mxu0 0
    %1049 = vmatprep.subr.bf16.mxu0 0
    %1050 = vmatpush1.bf16.xpose.msra.mxu0 0
    %1051 = vmatprep.subr.bf16.mxu0 0
    %1052 = vmatpush1.bf16.xpose.msra.mxu0 %v1035
    %1053 = vmatprep.subr.bf16.mxu0 0
    %1054 = vmatpush2.bf16.xpose.msra.mxu0 0
    %1055 = vmatprep.subr.bf16.mxu0 0
    %1056 = vmatpush2.bf16.xpose.msra.mxu0 0
    %1057 = vmatprep.subr.bf16.mxu0 0
    %1058 = vmatpush2.bf16.xpose.msra.mxu0 0
    %1059 = vmatprep.subr.bf16.mxu0 0
    %1060 = vmatpush2.bf16.xpose.msra.mxu0 0
    %1061 = vmatprep.subr.bf16.mxu0 0
    %1062 = vmatpush2.bf16.xpose.msra.mxu0 0
    %1063 = vmatprep.subr.bf16.mxu0 0
    %1064 = vmatpush2.bf16.xpose.msra.mxu0 0
    %1065 = vmatprep.subr.bf16.mxu0 0
    %1066 = vmatpush2.bf16.xpose.msra.mxu0 0
    %1067 = vmatprep.subr.bf16.mxu0 0
    %1068 = vmatpush2.bf16.xpose.msra.mxu0 0
    %1069 = vmatprep.mubr.bf16.mxu0 0
    %1070 = vmatmul.mubr.bf16.gmra.mxu0 %v1032
    %v1071 = vpop.f32.mrf.mxu0
    %v1072 = vadd.f32 0.0, %v1071
    %v1073 = vpop.f32.mrf.mxu0
    %v1074 = vpop.f32.mrf.mxu0
    %v1075 = vpop.f32.mrf.mxu0
    %1076 = vdwg.mxu0
    %vm1077 = vcmask 64512
    %v1078 = vsel %vm1077, %v750, -inf
    %1079 = vmax.xlane.f32.xlu0 %v1078
    %v1080 = vpop.xlane.xlu0 %1079
    %v1081 = vsel %vm1077, %v796, -inf
    %1082 = vmax.xlane.f32.xlu0 %v1081
    %v1083 = vpop.xlane.xlu0 %1082
    %v1084 = vsel %vm1077, %v842, -inf
    %1085 = vmax.xlane.f32.xlu0 %v1084
    %v1086 = vpop.xlane.xlu0 %1085
    %v1087 = vsel %vm1077, %v888, -inf
    %1088 = vmax.xlane.f32.xlu0 %v1087
    %v1089 = vpop.xlane.xlu0 %1088
    %v1090 = vsel %vm1077, %v934, -inf
    %1091 = vmax.xlane.f32.xlu0 %v1090
    %v1092 = vpop.xlane.xlu0 %1091
    %v1093 = vsel %vm1077, %v980, -inf
    %1094 = vmax.xlane.f32.xlu0 %v1093
    %v1095 = vpop.xlane.xlu0 %1094
    %v1096 = vsel %vm1077, %v1026, -inf
    %1097 = vmax.xlane.f32.xlu0 %v1096
    %v1098 = vpop.xlane.xlu0 %1097
    %v1099 = vsel %vm1077, %v1072, -inf
    %1100 = vmax.xlane.f32.xlu0 %v1099
    %v1101 = vpop.xlane.xlu0 %1100
    %v1102 = vsub.f32 %v750, %v1080
    %v1103 = vsub.f32 %v796, %v1083
    %v1104 = vsub.f32 %v842, %v1086
    %v1105 = vsub.f32 %v888, %v1089
    %v1106 = vsub.f32 %v934, %v1092
    %v1107 = vsub.f32 %v980, %v1095
    %v1108 = vsub.f32 %v1026, %v1098
    %v1109 = vsub.f32 %v1072, %v1101
    %v1110 = vmul.f32 %v1102, 1.442695
    %v1111 = vpow.pop %v1110
    %v1112 = vmul.f32 %v1103, 1.442695
    %v1113 = vpow.pop %v1112
    %v1114 = vmul.f32 %v1104, 1.442695
    %v1115 = vpow.pop %v1114
    %v1116 = vmul.f32 %v1105, 1.442695
    %v1117 = vpow.pop %v1116
    %v1118 = vmul.f32 %v1106, 1.442695
    %v1119 = vpow.pop %v1118
    %v1120 = vmul.f32 %v1107, 1.442695
    %v1121 = vpow.pop %v1120
    %v1122 = vmul.f32 %v1108, 1.442695
    %v1123 = vpow.pop %v1122
    %v1124 = vmul.f32 %v1109, 1.442695
    %v1125 = vpow.pop %v1124
    %v1126 = vsel %vm1077, %v1111, 0.0
    %1127 = vadd.xlane.f32.xlu0 %v1126
    %v1128 = vpop.xlane.xlu0 %1127
    %v1129 = vsel %vm1077, %v1113, 0.0
    %1130 = vadd.xlane.f32.xlu0 %v1129
    %v1131 = vpop.xlane.xlu0 %1130
    %v1132 = vsel %vm1077, %v1115, 0.0
    %1133 = vadd.xlane.f32.xlu0 %v1132
    %v1134 = vpop.xlane.xlu0 %1133
    %v1135 = vsel %vm1077, %v1117, 0.0
    %1136 = vadd.xlane.f32.xlu0 %v1135
    %v1137 = vpop.xlane.xlu0 %1136
    %v1138 = vsel %vm1077, %v1119, 0.0
    %1139 = vadd.xlane.f32.xlu0 %v1138
    %v1140 = vpop.xlane.xlu0 %1139
    %v1141 = vsel %vm1077, %v1121, 0.0
    %1142 = vadd.xlane.f32.xlu0 %v1141
    %v1143 = vpop.xlane.xlu0 %1142
    %v1144 = vsel %vm1077, %v1123, 0.0
    %1145 = vadd.xlane.f32.xlu0 %v1144
    %v1146 = vpop.xlane.xlu0 %1145
    %v1147 = vsel %vm1077, %v1125, 0.0
    %1148 = vadd.xlane.f32.xlu0 %v1147
    %v1149 = vpop.xlane.xlu0 %1148
    %v1150 = vrcp.pop %v1128
    %v1151 = vrcp.pop %v1131
    %v1152 = vrcp.pop %v1134
    %v1153 = vrcp.pop %v1137
    %v1154 = vrcp.pop %v1140
    %v1155 = vrcp.pop %v1143
    %v1156 = vrcp.pop %v1146
    %v1157 = vrcp.pop %v1149
    %v1158 = vmul.f32 %v1111, %v1150
    %v1159 = vmul.f32 %v1113, %v1151
    %v1160 = vmul.f32 %v1115, %v1152
    %v1161 = vmul.f32 %v1117, %v1153
    %v1162 = vmul.f32 %v1119, %v1154
    %v1163 = vmul.f32 %v1121, %v1155
    %v1164 = vmul.f32 %v1123, %v1156
    %v1165 = vmul.f32 %v1125, %v1157
    %v1166 = vpack.c.bf16 %v1158, %v1158
    %v1167 = vpack.c.bf16 %v1159, %v1159
    %v1168 = vpack.c.bf16 %v1160, %v1160
    %v1169 = vpack.c.bf16 %v1161, %v1161
    %v1170 = vpack.c.bf16 %v1162, %v1162
    %v1171 = vpack.c.bf16 %v1163, %v1163
    %v1172 = vpack.c.bf16 %v1164, %v1164
    %v1173 = vpack.c.bf16 %v1165, %v1165
    %v1175 = vsel %vm1077, %v1166, 0
    %vm1177 = vcmask 1043456
    %v1179 = vsel %vm1177, %v700, 0
    %1181 = vmatprep.subr.bf16.mxu0 0
    %1182 = vmatpush1.bf16.msra.mxu0 0
    %1183 = vmatprep.subr.bf16.mxu0 0
    %1184 = vmatpush1.bf16.msra.mxu0 0
    %1185 = vmatprep.subr.bf16.mxu0 0
    %1186 = vmatpush1.bf16.msra.mxu0 0
    %1187 = vmatprep.subr.bf16.mxu0 0
    %1188 = vmatpush1.bf16.msra.mxu0 0
    %1189 = vmatprep.subr.bf16.mxu0 0
    %1190 = vmatpush1.bf16.msra.mxu0 0
    %1191 = vmatprep.subr.bf16.mxu0 0
    %1192 = vmatpush1.bf16.msra.mxu0 0
    %1193 = vmatprep.subr.bf16.mxu0 0
    %1194 = vmatpush1.bf16.msra.mxu0 0
    %1195 = vmatprep.subr.bf16.mxu0 0
    %1196 = vmatpush1.bf16.msra.mxu0 %v1179
    %1197 = vmatprep.subr.bf16.mxu0 0
    %1198 = vmatpush2.bf16.msra.mxu0 0
    %1199 = vmatprep.subr.bf16.mxu0 0
    %1200 = vmatpush2.bf16.msra.mxu0 0
    %1201 = vmatprep.subr.bf16.mxu0 0
    %1202 = vmatpush2.bf16.msra.mxu0 0
    %1203 = vmatprep.subr.bf16.mxu0 0
    %1204 = vmatpush2.bf16.msra.mxu0 0
    %1205 = vmatprep.subr.bf16.mxu0 0
    %1206 = vmatpush2.bf16.msra.mxu0 0
    %1207 = vmatprep.subr.bf16.mxu0 0
    %1208 = vmatpush2.bf16.msra.mxu0 0
    %1209 = vmatprep.subr.bf16.mxu0 0
    %1210 = vmatpush2.bf16.msra.mxu0 0
    %1211 = vmatprep.subr.bf16.mxu0 0
    %1212 = vmatpush2.bf16.msra.mxu0 0
    %1213 = vmatprep.mubr.bf16.mxu0 0
    %1214 = vmatmul.mubr.bf16.gmra.mxu0 %v1175
    %v1215 = vpop.f32.mrf.mxu0
    %v1216 = vadd.f32 0.0, %v1215
    %v1217 = vpop.f32.mrf.mxu0
    %v1218 = vpop.f32.mrf.mxu0
    %v1219 = vpop.f32.mrf.mxu0
    %1220 = vdwg.mxu0
    %v1222 = vsel %vm1077, %v1167, 0
    %v1225 = vsel %vm1177, %v701, 0
    %1227 = vmatprep.subr.bf16.mxu0 0
    %1228 = vmatpush1.bf16.msra.mxu0 0
    %1229 = vmatprep.subr.bf16.mxu0 0
    %1230 = vmatpush1.bf16.msra.mxu0 0
    %1231 = vmatprep.subr.bf16.mxu0 0
    %1232 = vmatpush1.bf16.msra.mxu0 0
    %1233 = vmatprep.subr.bf16.mxu0 0
    %1234 = vmatpush1.bf16.msra.mxu0 0
    %1235 = vmatprep.subr.bf16.mxu0 0
    %1236 = vmatpush1.bf16.msra.mxu0 0
    %1237 = vmatprep.subr.bf16.mxu0 0
    %1238 = vmatpush1.bf16.msra.mxu0 0
    %1239 = vmatprep.subr.bf16.mxu0 0
    %1240 = vmatpush1.bf16.msra.mxu0 0
    %1241 = vmatprep.subr.bf16.mxu0 0
    %1242 = vmatpush1.bf16.msra.mxu0 %v1225
    %1243 = vmatprep.subr.bf16.mxu0 0
    %1244 = vmatpush2.bf16.msra.mxu0 0
    %1245 = vmatprep.subr.bf16.mxu0 0
    %1246 = vmatpush2.bf16.msra.mxu0 0
    %1247 = vmatprep.subr.bf16.mxu0 0
    %1248 = vmatpush2.bf16.msra.mxu0 0
    %1249 = vmatprep.subr.bf16.mxu0 0
    %1250 = vmatpush2.bf16.msra.mxu0 0
    %1251 = vmatprep.subr.bf16.mxu0 0
    %1252 = vmatpush2.bf16.msra.mxu0 0
    %1253 = vmatprep.subr.bf16.mxu0 0
    %1254 = vmatpush2.bf16.msra.mxu0 0
    %1255 = vmatprep.subr.bf16.mxu0 0
    %1256 = vmatpush2.bf16.msra.mxu0 0
    %1257 = vmatprep.subr.bf16.mxu0 0
    %1258 = vmatpush2.bf16.msra.mxu0 0
    %1259 = vmatprep.mubr.bf16.mxu0 0
    %1260 = vmatmul.mubr.bf16.gmra.mxu0 %v1222
    %v1261 = vpop.f32.mrf.mxu0
    %v1262 = vadd.f32 0.0, %v1261
    %v1263 = vpop.f32.mrf.mxu0
    %v1264 = vpop.f32.mrf.mxu0
    %v1265 = vpop.f32.mrf.mxu0
    %1266 = vdwg.mxu0
    %v1268 = vsel %vm1077, %v1168, 0
    %v1271 = vsel %vm1177, %v702, 0
    %1273 = vmatprep.subr.bf16.mxu0 0
    %1274 = vmatpush1.bf16.msra.mxu0 0
    %1275 = vmatprep.subr.bf16.mxu0 0
    %1276 = vmatpush1.bf16.msra.mxu0 0
    %1277 = vmatprep.subr.bf16.mxu0 0
    %1278 = vmatpush1.bf16.msra.mxu0 0
    %1279 = vmatprep.subr.bf16.mxu0 0
    %1280 = vmatpush1.bf16.msra.mxu0 0
    %1281 = vmatprep.subr.bf16.mxu0 0
    %1282 = vmatpush1.bf16.msra.mxu0 0
    %1283 = vmatprep.subr.bf16.mxu0 0
    %1284 = vmatpush1.bf16.msra.mxu0 0
    %1285 = vmatprep.subr.bf16.mxu0 0
    %1286 = vmatpush1.bf16.msra.mxu0 0
    %1287 = vmatprep.subr.bf16.mxu0 0
    %1288 = vmatpush1.bf16.msra.mxu0 %v1271
    %1289 = vmatprep.subr.bf16.mxu0 0
    %1290 = vmatpush2.bf16.msra.mxu0 0
    %1291 = vmatprep.subr.bf16.mxu0 0
    %1292 = vmatpush2.bf16.msra.mxu0 0
    %1293 = vmatprep.subr.bf16.mxu0 0
    %1294 = vmatpush2.bf16.msra.mxu0 0
    %1295 = vmatprep.subr.bf16.mxu0 0
    %1296 = vmatpush2.bf16.msra.mxu0 0
    %1297 = vmatprep.subr.bf16.mxu0 0
    %1298 = vmatpush2.bf16.msra.mxu0 0
    %1299 = vmatprep.subr.bf16.mxu0 0
    %1300 = vmatpush2.bf16.msra.mxu0 0
    %1301 = vmatprep.subr.bf16.mxu0 0
    %1302 = vmatpush2.bf16.msra.mxu0 0
    %1303 = vmatprep.subr.bf16.mxu0 0
    %1304 = vmatpush2.bf16.msra.mxu0 0
    %1305 = vmatprep.mubr.bf16.mxu0 0
    %1306 = vmatmul.mubr.bf16.gmra.mxu0 %v1268
    %v1307 = vpop.f32.mrf.mxu0
    %v1308 = vadd.f32 0.0, %v1307
    %v1309 = vpop.f32.mrf.mxu0
    %v1310 = vpop.f32.mrf.mxu0
    %v1311 = vpop.f32.mrf.mxu0
    %1312 = vdwg.mxu0
    %v1314 = vsel %vm1077, %v1169, 0
    %v1317 = vsel %vm1177, %v703, 0
    %1319 = vmatprep.subr.bf16.mxu0 0
    %1320 = vmatpush1.bf16.msra.mxu0 0
    %1321 = vmatprep.subr.bf16.mxu0 0
    %1322 = vmatpush1.bf16.msra.mxu0 0
    %1323 = vmatprep.subr.bf16.mxu0 0
    %1324 = vmatpush1.bf16.msra.mxu0 0
    %1325 = vmatprep.subr.bf16.mxu0 0
    %1326 = vmatpush1.bf16.msra.mxu0 0
    %1327 = vmatprep.subr.bf16.mxu0 0
    %1328 = vmatpush1.bf16.msra.mxu0 0
    %1329 = vmatprep.subr.bf16.mxu0 0
    %1330 = vmatpush1.bf16.msra.mxu0 0
    %1331 = vmatprep.subr.bf16.mxu0 0
    %1332 = vmatpush1.bf16.msra.mxu0 0
    %1333 = vmatprep.subr.bf16.mxu0 0
    %1334 = vmatpush1.bf16.msra.mxu0 %v1317
    %1335 = vmatprep.subr.bf16.mxu0 0
    %1336 = vmatpush2.bf16.msra.mxu0 0
    %1337 = vmatprep.subr.bf16.mxu0 0
    %1338 = vmatpush2.bf16.msra.mxu0 0
    %1339 = vmatprep.subr.bf16.mxu0 0
    %1340 = vmatpush2.bf16.msra.mxu0 0
    %1341 = vmatprep.subr.bf16.mxu0 0
    %1342 = vmatpush2.bf16.msra.mxu0 0
    %1343 = vmatprep.subr.bf16.mxu0 0
    %1344 = vmatpush2.bf16.msra.mxu0 0
    %1345 = vmatprep.subr.bf16.mxu0 0
    %1346 = vmatpush2.bf16.msra.mxu0 0
    %1347 = vmatprep.subr.bf16.mxu0 0
    %1348 = vmatpush2.bf16.msra.mxu0 0
    %1349 = vmatprep.subr.bf16.mxu0 0
    %1350 = vmatpush2.bf16.msra.mxu0 0
    %1351 = vmatprep.mubr.bf16.mxu0 0
    %1352 = vmatmul.mubr.bf16.gmra.mxu0 %v1314
    %v1353 = vpop.f32.mrf.mxu0
    %v1354 = vadd.f32 0.0, %v1353
    %v1355 = vpop.f32.mrf.mxu0
    %v1356 = vpop.f32.mrf.mxu0
    %v1357 = vpop.f32.mrf.mxu0
    %1358 = vdwg.mxu0
    %v1360 = vsel %vm1077, %v1170, 0
    %v1363 = vsel %vm1177, %v704, 0
    %1365 = vmatprep.subr.bf16.mxu0 0
    %1366 = vmatpush1.bf16.msra.mxu0 0
    %1367 = vmatprep.subr.bf16.mxu0 0
    %1368 = vmatpush1.bf16.msra.mxu0 0
    %1369 = vmatprep.subr.bf16.mxu0 0
    %1370 = vmatpush1.bf16.msra.mxu0 0
    %1371 = vmatprep.subr.bf16.mxu0 0
    %1372 = vmatpush1.bf16.msra.mxu0 0
    %1373 = vmatprep.subr.bf16.mxu0 0
    %1374 = vmatpush1.bf16.msra.mxu0 0
    %1375 = vmatprep.subr.bf16.mxu0 0
    %1376 = vmatpush1.bf16.msra.mxu0 0
    %1377 = vmatprep.subr.bf16.mxu0 0
    %1378 = vmatpush1.bf16.msra.mxu0 0
    %1379 = vmatprep.subr.bf16.mxu0 0
    %1380 = vmatpush1.bf16.msra.mxu0 %v1363
    %1381 = vmatprep.subr.bf16.mxu0 0
    %1382 = vmatpush2.bf16.msra.mxu0 0
    %1383 = vmatprep.subr.bf16.mxu0 0
    %1384 = vmatpush2.bf16.msra.mxu0 0
    %1385 = vmatprep.subr.bf16.mxu0 0
    %1386 = vmatpush2.bf16.msra.mxu0 0
    %1387 = vmatprep.subr.bf16.mxu0 0
    %1388 = vmatpush2.bf16.msra.mxu0 0
    %1389 = vmatprep.subr.bf16.mxu0 0
    %1390 = vmatpush2.bf16.msra.mxu0 0
    %1391 = vmatprep.subr.bf16.mxu0 0
    %1392 = vmatpush2.bf16.msra.mxu0 0
    %1393 = vmatprep.subr.bf16.mxu0 0
    %1394 = vmatpush2.bf16.msra.mxu0 0
    %1395 = vmatprep.subr.bf16.mxu0 0
    %1396 = vmatpush2.bf16.msra.mxu0 0
    %1397 = vmatprep.mubr.bf16.mxu0 0
    %1398 = vmatmul.mubr.bf16.gmra.mxu0 %v1360
    %v1399 = vpop.f32.mrf.mxu0
    %v1400 = vadd.f32 0.0, %v1399
    %v1401 = vpop.f32.mrf.mxu0
    %v1402 = vpop.f32.mrf.mxu0
    %v1403 = vpop.f32.mrf.mxu0
    %1404 = vdwg.mxu0
    %v1406 = vsel %vm1077, %v1171, 0
    %v1409 = vsel %vm1177, %v705, 0
    %1411 = vmatprep.subr.bf16.mxu0 0
    %1412 = vmatpush1.bf16.msra.mxu0 0
    %1413 = vmatprep.subr.bf16.mxu0 0
    %1414 = vmatpush1.bf16.msra.mxu0 0
    %1415 = vmatprep.subr.bf16.mxu0 0
    %1416 = vmatpush1.bf16.msra.mxu0 0
    %1417 = vmatprep.subr.bf16.mxu0 0
    %1418 = vmatpush1.bf16.msra.mxu0 0
    %1419 = vmatprep.subr.bf16.mxu0 0
    %1420 = vmatpush1.bf16.msra.mxu0 0
    %1421 = vmatprep.subr.bf16.mxu0 0
    %1422 = vmatpush1.bf16.msra.mxu0 0
    %1423 = vmatprep.subr.bf16.mxu0 0
    %1424 = vmatpush1.bf16.msra.mxu0 0
    %1425 = vmatprep.subr.bf16.mxu0 0
    %1426 = vmatpush1.bf16.msra.mxu0 %v1409
    %1427 = vmatprep.subr.bf16.mxu0 0
    %1428 = vmatpush2.bf16.msra.mxu0 0
    %1429 = vmatprep.subr.bf16.mxu0 0
    %1430 = vmatpush2.bf16.msra.mxu0 0
    %1431 = vmatprep.subr.bf16.mxu0 0
    %1432 = vmatpush2.bf16.msra.mxu0 0
    %1433 = vmatprep.subr.bf16.mxu0 0
    %1434 = vmatpush2.bf16.msra.mxu0 0
    %1435 = vmatprep.subr.bf16.mxu0 0
    %1436 = vmatpush2.bf16.msra.mxu0 0
    %1437 = vmatprep.subr.bf16.mxu0 0
    %1438 = vmatpush2.bf16.msra.mxu0 0
    %1439 = vmatprep.subr.bf16.mxu0 0
    %1440 = vmatpush2.bf16.msra.mxu0 0
    %1441 = vmatprep.subr.bf16.mxu0 0
    %1442 = vmatpush2.bf16.msra.mxu0 0
    %1443 = vmatprep.mubr.bf16.mxu0 0
    %1444 = vmatmul.mubr.bf16.gmra.mxu0 %v1406
    %v1445 = vpop.f32.mrf.mxu0
    %v1446 = vadd.f32 0.0, %v1445
    %v1447 = vpop.f32.mrf.mxu0
    %v1448 = vpop.f32.mrf.mxu0
    %v1449 = vpop.f32.mrf.mxu0
    %1450 = vdwg.mxu0
    %v1452 = vsel %vm1077, %v1172, 0
    %v1455 = vsel %vm1177, %v706, 0
    %1457 = vmatprep.subr.bf16.mxu0 0
    %1458 = vmatpush1.bf16.msra.mxu0 0
    %1459 = vmatprep.subr.bf16.mxu0 0
    %1460 = vmatpush1.bf16.msra.mxu0 0
    %1461 = vmatprep.subr.bf16.mxu0 0
    %1462 = vmatpush1.bf16.msra.mxu0 0
    %1463 = vmatprep.subr.bf16.mxu0 0
    %1464 = vmatpush1.bf16.msra.mxu0 0
    %1465 = vmatprep.subr.bf16.mxu0 0
    %1466 = vmatpush1.bf16.msra.mxu0 0
    %1467 = vmatprep.subr.bf16.mxu0 0
    %1468 = vmatpush1.bf16.msra.mxu0 0
    %1469 = vmatprep.subr.bf16.mxu0 0
    %1470 = vmatpush1.bf16.msra.mxu0 0
    %1471 = vmatprep.subr.bf16.mxu0 0
    %1472 = vmatpush1.bf16.msra.mxu0 %v1455
    %1473 = vmatprep.subr.bf16.mxu0 0
    %1474 = vmatpush2.bf16.msra.mxu0 0
    %1475 = vmatprep.subr.bf16.mxu0 0
    %1476 = vmatpush2.bf16.msra.mxu0 0
    %1477 = vmatprep.subr.bf16.mxu0 0
    %1478 = vmatpush2.bf16.msra.mxu0 0
    %1479 = vmatprep.subr.bf16.mxu0 0
    %1480 = vmatpush2.bf16.msra.mxu0 0
    %1481 = vmatprep.subr.bf16.mxu0 0
    %1482 = vmatpush2.bf16.msra.mxu0 0
    %1483 = vmatprep.subr.bf16.mxu0 0
    %1484 = vmatpush2.bf16.msra.mxu0 0
    %1485 = vmatprep.subr.bf16.mxu0 0
    %1486 = vmatpush2.bf16.msra.mxu0 0
    %1487 = vmatprep.subr.bf16.mxu0 0
    %1488 = vmatpush2.bf16.msra.mxu0 0
    %1489 = vmatprep.mubr.bf16.mxu0 0
    %1490 = vmatmul.mubr.bf16.gmra.mxu0 %v1452
    %v1491 = vpop.f32.mrf.mxu0
    %v1492 = vadd.f32 0.0, %v1491
    %v1493 = vpop.f32.mrf.mxu0
    %v1494 = vpop.f32.mrf.mxu0
    %v1495 = vpop.f32.mrf.mxu0
    %1496 = vdwg.mxu0
    %v1498 = vsel %vm1077, %v1173, 0
    %v1501 = vsel %vm1177, %v707, 0
    %1503 = vmatprep.subr.bf16.mxu0 0
    %1504 = vmatpush1.bf16.msra.mxu0 0
    %1505 = vmatprep.subr.bf16.mxu0 0
    %1506 = vmatpush1.bf16.msra.mxu0 0
    %1507 = vmatprep.subr.bf16.mxu0 0
    %1508 = vmatpush1.bf16.msra.mxu0 0
    %1509 = vmatprep.subr.bf16.mxu0 0
    %1510 = vmatpush1.bf16.msra.mxu0 0
    %1511 = vmatprep.subr.bf16.mxu0 0
    %1512 = vmatpush1.bf16.msra.mxu0 0
    %1513 = vmatprep.subr.bf16.mxu0 0
    %1514 = vmatpush1.bf16.msra.mxu0 0
    %1515 = vmatprep.subr.bf16.mxu0 0
    %1516 = vmatpush1.bf16.msra.mxu0 0
    %1517 = vmatprep.subr.bf16.mxu0 0
    %1518 = vmatpush1.bf16.msra.mxu0 %v1501
    %1519 = vmatprep.subr.bf16.mxu0 0
    %1520 = vmatpush2.bf16.msra.mxu0 0
    %1521 = vmatprep.subr.bf16.mxu0 0
    %1522 = vmatpush2.bf16.msra.mxu0 0
    %1523 = vmatprep.subr.bf16.mxu0 0
    %1524 = vmatpush2.bf16.msra.mxu0 0
    %1525 = vmatprep.subr.bf16.mxu0 0
    %1526 = vmatpush2.bf16.msra.mxu0 0
    %1527 = vmatprep.subr.bf16.mxu0 0
    %1528 = vmatpush2.bf16.msra.mxu0 0
    %1529 = vmatprep.subr.bf16.mxu0 0
    %1530 = vmatpush2.bf16.msra.mxu0 0
    %1531 = vmatprep.subr.bf16.mxu0 0
    %1532 = vmatpush2.bf16.msra.mxu0 0
    %1533 = vmatprep.subr.bf16.mxu0 0
    %1534 = vmatpush2.bf16.msra.mxu0 0
    %1535 = vmatprep.mubr.bf16.mxu0 0
    %1536 = vmatmul.mubr.bf16.gmra.mxu0 %v1498
    %v1537 = vpop.f32.mrf.mxu0
    %v1538 = vadd.f32 0.0, %v1537
    %v1539 = vpop.f32.mrf.mxu0
    %v1540 = vpop.f32.mrf.mxu0
    %v1541 = vpop.f32.mrf.mxu0
    %1542 = vdwg.mxu0
    %v1543 = vld [vmem:[%s6] sm:$0xf]
    %v1544 = vld [vmem:[%s6 + $0x4] sm:$0xf]
    %v1545 = vld [vmem:[%s6 + $0x8] sm:$0xf]
    %v1546 = vld [vmem:[%s6 + $0xc] sm:$0xf]
    %v1547 = vld [vmem:[%s6 + $0x10] sm:$0xf]
    %v1548 = vld [vmem:[%s6 + $0x14] sm:$0xf]
    %v1549 = vld [vmem:[%s6 + $0x18] sm:$0xf]
    %v1550 = vld [vmem:[%s6 + $0x1c] sm:$0xf]
    %v1551 = vld [vmem:[%s6 + $0x20] sm:$0xf]
    %v1552 = vld [vmem:[%s6 + $0x24] sm:$0xf]
    %v1553 = vld [vmem:[%s6 + $0x28] sm:$0xf]
    %v1554 = vld [vmem:[%s6 + $0x2c] sm:$0xf]
    %v1555 = vld [vmem:[%s6 + $0x30] sm:$0xf]
    %v1556 = vld [vmem:[%s6 + $0x34] sm:$0xf]
    %v1557 = vld [vmem:[%s6 + $0x38] sm:$0xf]
    %v1558 = vld [vmem:[%s6 + $0x3c] sm:$0xf]
    %v1559 = vpack.c.bf16 %v1262, %v1216
    %v1560 = vpack.c.bf16 %v1354, %v1308
    %v1561 = vpack.c.bf16 %v1446, %v1400
    %v1562 = vpack.c.bf16 %v1538, %v1492
    %1564 = vrot.lane.b32.xlu0 %v684, 96
    %v1565 = vpop.permute.xlu0 %1564
    %1567 = vrot.lane.b32.xlu0 %v692, 96
    %v1568 = vpop.permute.xlu0 %1567
    %v1570 = vsel %vm708, %v1565, 0
    %v1573 = vsel %vm708, %v1568, 0
    %1575 = vmatprep.subr.bf16.mxu0 0
    %1576 = vmatpush1.bf16.xpose.msra.mxu0 0
    %1577 = vmatprep.subr.bf16.mxu0 0
    %1578 = vmatpush1.bf16.xpose.msra.mxu0 0
    %1579 = vmatprep.subr.bf16.mxu0 0
    %1580 = vmatpush1.bf16.xpose.msra.mxu0 0
    %1581 = vmatprep.subr.bf16.mxu0 0
    %1582 = vmatpush1.bf16.xpose.msra.mxu0 0
    %1583 = vmatprep.subr.bf16.mxu0 0
    %1584 = vmatpush1.bf16.xpose.msra.mxu0 0
    %1585 = vmatprep.subr.bf16.mxu0 0
    %1586 = vmatpush1.bf16.xpose.msra.mxu0 0
    %1587 = vmatprep.subr.bf16.mxu0 0
    %1588 = vmatpush1.bf16.xpose.msra.mxu0 0
    %1589 = vmatprep.subr.bf16.mxu0 0
    %1590 = vmatpush1.bf16.xpose.msra.mxu0 %v1573
    %1591 = vmatprep.subr.bf16.mxu0 0
    %1592 = vmatpush2.bf16.xpose.msra.mxu0 0
    %1593 = vmatprep.subr.bf16.mxu0 0
    %1594 = vmatpush2.bf16.xpose.msra.mxu0 0
    %1595 = vmatprep.subr.bf16.mxu0 0
    %1596 = vmatpush2.bf16.xpose.msra.mxu0 0
    %1597 = vmatprep.subr.bf16.mxu0 0
    %1598 = vmatpush2.bf16.xpose.msra.mxu0 0
    %1599 = vmatprep.subr.bf16.mxu0 0
    %1600 = vmatpush2.bf16.xpose.msra.mxu0 0
    %1601 = vmatprep.subr.bf16.mxu0 0
    %1602 = vmatpush2.bf16.xpose.msra.mxu0 0
    %1603 = vmatprep.subr.bf16.mxu0 0
    %1604 = vmatpush2.bf16.xpose.msra.mxu0 0
    %1605 = vmatprep.subr.bf16.mxu0 0
    %1606 = vmatpush2.bf16.xpose.msra.mxu0 0
    %1607 = vmatprep.mubr.bf16.mxu0 0
    %1608 = vmatmul.mubr.bf16.gmra.mxu0 %v1570
    %v1609 = vpop.f32.mrf.mxu0
    %v1610 = vadd.f32 0.0, %v1609
    %v1611 = vpop.f32.mrf.mxu0
    %v1612 = vpop.f32.mrf.mxu0
    %v1613 = vpop.f32.mrf.mxu0
    %1614 = vdwg.mxu0
    %1616 = vrot.lane.b32.xlu0 %v685, 96
    %v1617 = vpop.permute.xlu0 %1616
    %1619 = vrot.lane.b32.xlu0 %v693, 96
    %v1620 = vpop.permute.xlu0 %1619
    %v1622 = vsel %vm708, %v1617, 0
    %v1625 = vsel %vm708, %v1620, 0
    %1627 = vmatprep.subr.bf16.mxu0 0
    %1628 = vmatpush1.bf16.xpose.msra.mxu0 0
    %1629 = vmatprep.subr.bf16.mxu0 0
    %1630 = vmatpush1.bf16.xpose.msra.mxu0 0
    %1631 = vmatprep.subr.bf16.mxu0 0
    %1632 = vmatpush1.bf16.xpose.msra.mxu0 0
    %1633 = vmatprep.subr.bf16.mxu0 0
    %1634 = vmatpush1.bf16.xpose.msra.mxu0 0
    %1635 = vmatprep.subr.bf16.mxu0 0
    %1636 = vmatpush1.bf16.xpose.msra.mxu0 0
    %1637 = vmatprep.subr.bf16.mxu0 0
    %1638 = vmatpush1.bf16.xpose.msra.mxu0 0
    %1639 = vmatprep.subr.bf16.mxu0 0
    %1640 = vmatpush1.bf16.xpose.msra.mxu0 0
    %1641 = vmatprep.subr.bf16.mxu0 0
    %1642 = vmatpush1.bf16.xpose.msra.mxu0 %v1625
    %1643 = vmatprep.subr.bf16.mxu0 0
    %1644 = vmatpush2.bf16.xpose.msra.mxu0 0
    %1645 = vmatprep.subr.bf16.mxu0 0
    %1646 = vmatpush2.bf16.xpose.msra.mxu0 0
    %1647 = vmatprep.subr.bf16.mxu0 0
    %1648 = vmatpush2.bf16.xpose.msra.mxu0 0
    %1649 = vmatprep.subr.bf16.mxu0 0
    %1650 = vmatpush2.bf16.xpose.msra.mxu0 0
    %1651 = vmatprep.subr.bf16.mxu0 0
    %1652 = vmatpush2.bf16.xpose.msra.mxu0 0
    %1653 = vmatprep.subr.bf16.mxu0 0
    %1654 = vmatpush2.bf16.xpose.msra.mxu0 0
    %1655 = vmatprep.subr.bf16.mxu0 0
    %1656 = vmatpush2.bf16.xpose.msra.mxu0 0
    %1657 = vmatprep.subr.bf16.mxu0 0
    %1658 = vmatpush2.bf16.xpose.msra.mxu0 0
    %1659 = vmatprep.mubr.bf16.mxu0 0
    %1660 = vmatmul.mubr.bf16.gmra.mxu0 %v1622
    %v1661 = vpop.f32.mrf.mxu0
    %v1662 = vadd.f32 0.0, %v1661
    %v1663 = vpop.f32.mrf.mxu0
    %v1664 = vpop.f32.mrf.mxu0
    %v1665 = vpop.f32.mrf.mxu0
    %1666 = vdwg.mxu0
    %1668 = vrot.lane.b32.xlu0 %v686, 96
    %v1669 = vpop.permute.xlu0 %1668
    %1671 = vrot.lane.b32.xlu0 %v694, 96
    %v1672 = vpop.permute.xlu0 %1671
    %v1674 = vsel %vm708, %v1669, 0
    %v1677 = vsel %vm708, %v1672, 0
    %1679 = vmatprep.subr.bf16.mxu0 0
    %1680 = vmatpush1.bf16.xpose.msra.mxu0 0
    %1681 = vmatprep.subr.bf16.mxu0 0
    %1682 = vmatpush1.bf16.xpose.msra.mxu0 0
    %1683 = vmatprep.subr.bf16.mxu0 0
    %1684 = vmatpush1.bf16.xpose.msra.mxu0 0
    %1685 = vmatprep.subr.bf16.mxu0 0
    %1686 = vmatpush1.bf16.xpose.msra.mxu0 0
    %1687 = vmatprep.subr.bf16.mxu0 0
    %1688 = vmatpush1.bf16.xpose.msra.mxu0 0
    %1689 = vmatprep.subr.bf16.mxu0 0
    %1690 = vmatpush1.bf16.xpose.msra.mxu0 0
    %1691 = vmatprep.subr.bf16.mxu0 0
    %1692 = vmatpush1.bf16.xpose.msra.mxu0 0
    %1693 = vmatprep.subr.bf16.mxu0 0
    %1694 = vmatpush1.bf16.xpose.msra.mxu0 %v1677
    %1695 = vmatprep.subr.bf16.mxu0 0
    %1696 = vmatpush2.bf16.xpose.msra.mxu0 0
    %1697 = vmatprep.subr.bf16.mxu0 0
    %1698 = vmatpush2.bf16.xpose.msra.mxu0 0
    %1699 = vmatprep.subr.bf16.mxu0 0
    %1700 = vmatpush2.bf16.xpose.msra.mxu0 0
    %1701 = vmatprep.subr.bf16.mxu0 0
    %1702 = vmatpush2.bf16.xpose.msra.mxu0 0
    %1703 = vmatprep.subr.bf16.mxu0 0
    %1704 = vmatpush2.bf16.xpose.msra.mxu0 0
    %1705 = vmatprep.subr.bf16.mxu0 0
    %1706 = vmatpush2.bf16.xpose.msra.mxu0 0
    %1707 = vmatprep.subr.bf16.mxu0 0
    %1708 = vmatpush2.bf16.xpose.msra.mxu0 0
    %1709 = vmatprep.subr.bf16.mxu0 0
    %1710 = vmatpush2.bf16.xpose.msra.mxu0 0
    %1711 = vmatprep.mubr.bf16.mxu0 0
    %1712 = vmatmul.mubr.bf16.gmra.mxu0 %v1674
    %v1713 = vpop.f32.mrf.mxu0
    %v1714 = vadd.f32 0.0, %v1713
    %v1715 = vpop.f32.mrf.mxu0
    %v1716 = vpop.f32.mrf.mxu0
    %v1717 = vpop.f32.mrf.mxu0
    %1718 = vdwg.mxu0
    %1720 = vrot.lane.b32.xlu0 %v687, 96
    %v1721 = vpop.permute.xlu0 %1720
    %1723 = vrot.lane.b32.xlu0 %v695, 96
    %v1724 = vpop.permute.xlu0 %1723
    %v1726 = vsel %vm708, %v1721, 0
    %v1729 = vsel %vm708, %v1724, 0
    %1731 = vmatprep.subr.bf16.mxu0 0
    %1732 = vmatpush1.bf16.xpose.msra.mxu0 0
    %1733 = vmatprep.subr.bf16.mxu0 0
    %1734 = vmatpush1.bf16.xpose.msra.mxu0 0
    %1735 = vmatprep.subr.bf16.mxu0 0
    %1736 = vmatpush1.bf16.xpose.msra.mxu0 0
    %1737 = vmatprep.subr.bf16.mxu0 0
    %1738 = vmatpush1.bf16.xpose.msra.mxu0 0
    %1739 = vmatprep.subr.bf16.mxu0 0
    %1740 = vmatpush1.bf16.xpose.msra.mxu0 0
    %1741 = vmatprep.subr.bf16.mxu0 0
    %1742 = vmatpush1.bf16.xpose.msra.mxu0 0
    %1743 = vmatprep.subr.bf16.mxu0 0
    %1744 = vmatpush1.bf16.xpose.msra.mxu0 0
    %1745 = vmatprep.subr.bf16.mxu0 0
    %1746 = vmatpush1.bf16.xpose.msra.mxu0 %v1729
    %1747 = vmatprep.subr.bf16.mxu0 0
    %1748 = vmatpush2.bf16.xpose.msra.mxu0 0
    %1749 = vmatprep.subr.bf16.mxu0 0
    %1750 = vmatpush2.bf16.xpose.msra.mxu0 0
    %1751 = vmatprep.subr.bf16.mxu0 0
    %1752 = vmatpush2.bf16.xpose.msra.mxu0 0
    %1753 = vmatprep.subr.bf16.mxu0 0
    %1754 = vmatpush2.bf16.xpose.msra.mxu0 0
    %1755 = vmatprep.subr.bf16.mxu0 0
    %1756 = vmatpush2.bf16.xpose.msra.mxu0 0
    %1757 = vmatprep.subr.bf16.mxu0 0
    %1758 = vmatpush2.bf16.xpose.msra.mxu0 0
    %1759 = vmatprep.subr.bf16.mxu0 0
    %1760 = vmatpush2.bf16.xpose.msra.mxu0 0
    %1761 = vmatprep.subr.bf16.mxu0 0
    %1762 = vmatpush2.bf16.xpose.msra.mxu0 0
    %1763 = vmatprep.mubr.bf16.mxu0 0
    %1764 = vmatmul.mubr.bf16.gmra.mxu0 %v1726
    %v1765 = vpop.f32.mrf.mxu0
    %v1766 = vadd.f32 0.0, %v1765
    %v1767 = vpop.f32.mrf.mxu0
    %v1768 = vpop.f32.mrf.mxu0
    %v1769 = vpop.f32.mrf.mxu0
    %1770 = vdwg.mxu0
    %1772 = vrot.lane.b32.xlu0 %v688, 96
    %v1773 = vpop.permute.xlu0 %1772
    %1775 = vrot.lane.b32.xlu0 %v696, 96
    %v1776 = vpop.permute.xlu0 %1775
    %v1778 = vsel %vm708, %v1773, 0
    %v1781 = vsel %vm708, %v1776, 0
    %1783 = vmatprep.subr.bf16.mxu0 0
    %1784 = vmatpush1.bf16.xpose.msra.mxu0 0
    %1785 = vmatprep.subr.bf16.mxu0 0
    %1786 = vmatpush1.bf16.xpose.msra.mxu0 0
    %1787 = vmatprep.subr.bf16.mxu0 0
    %1788 = vmatpush1.bf16.xpose.msra.mxu0 0
    %1789 = vmatprep.subr.bf16.mxu0 0
    %1790 = vmatpush1.bf16.xpose.msra.mxu0 0
    %1791 = vmatprep.subr.bf16.mxu0 0
    %1792 = vmatpush1.bf16.xpose.msra.mxu0 0
    %1793 = vmatprep.subr.bf16.mxu0 0
    %1794 = vmatpush1.bf16.xpose.msra.mxu0 0
    %1795 = vmatprep.subr.bf16.mxu0 0
    %1796 = vmatpush1.bf16.xpose.msra.mxu0 0
    %1797 = vmatprep.subr.bf16.mxu0 0
    %1798 = vmatpush1.bf16.xpose.msra.mxu0 %v1781
    %1799 = vmatprep.subr.bf16.mxu0 0
    %1800 = vmatpush2.bf16.xpose.msra.mxu0 0
    %1801 = vmatprep.subr.bf16.mxu0 0
    %1802 = vmatpush2.bf16.xpose.msra.mxu0 0
    %1803 = vmatprep.subr.bf16.mxu0 0
    %1804 = vmatpush2.bf16.xpose.msra.mxu0 0
    %1805 = vmatprep.subr.bf16.mxu0 0
    %1806 = vmatpush2.bf16.xpose.msra.mxu0 0
    %1807 = vmatprep.subr.bf16.mxu0 0
    %1808 = vmatpush2.bf16.xpose.msra.mxu0 0
    %1809 = vmatprep.subr.bf16.mxu0 0
    %1810 = vmatpush2.bf16.xpose.msra.mxu0 0
    %1811 = vmatprep.subr.bf16.mxu0 0
    %1812 = vmatpush2.bf16.xpose.msra.mxu0 0
    %1813 = vmatprep.subr.bf16.mxu0 0
    %1814 = vmatpush2.bf16.xpose.msra.mxu0 0
    %1815 = vmatprep.mubr.bf16.mxu0 0
    %1816 = vmatmul.mubr.bf16.gmra.mxu0 %v1778
    %v1817 = vpop.f32.mrf.mxu0
    %v1818 = vadd.f32 0.0, %v1817
    %v1819 = vpop.f32.mrf.mxu0
    %v1820 = vpop.f32.mrf.mxu0
    %v1821 = vpop.f32.mrf.mxu0
    %1822 = vdwg.mxu0
    %1824 = vrot.lane.b32.xlu0 %v689, 96
    %v1825 = vpop.permute.xlu0 %1824
    %1827 = vrot.lane.b32.xlu0 %v697, 96
    %v1828 = vpop.permute.xlu0 %1827
    %v1830 = vsel %vm708, %v1825, 0
    %v1833 = vsel %vm708, %v1828, 0
    %1835 = vmatprep.subr.bf16.mxu0 0
    %1836 = vmatpush1.bf16.xpose.msra.mxu0 0
    %1837 = vmatprep.subr.bf16.mxu0 0
    %1838 = vmatpush1.bf16.xpose.msra.mxu0 0
    %1839 = vmatprep.subr.bf16.mxu0 0
    %1840 = vmatpush1.bf16.xpose.msra.mxu0 0
    %1841 = vmatprep.subr.bf16.mxu0 0
    %1842 = vmatpush1.bf16.xpose.msra.mxu0 0
    %1843 = vmatprep.subr.bf16.mxu0 0
    %1844 = vmatpush1.bf16.xpose.msra.mxu0 0
    %1845 = vmatprep.subr.bf16.mxu0 0
    %1846 = vmatpush1.bf16.xpose.msra.mxu0 0
    %1847 = vmatprep.subr.bf16.mxu0 0
    %1848 = vmatpush1.bf16.xpose.msra.mxu0 0
    %1849 = vmatprep.subr.bf16.mxu0 0
    %1850 = vmatpush1.bf16.xpose.msra.mxu0 %v1833
    %1851 = vmatprep.subr.bf16.mxu0 0
    %1852 = vmatpush2.bf16.xpose.msra.mxu0 0
    %1853 = vmatprep.subr.bf16.mxu0 0
    %1854 = vmatpush2.bf16.xpose.msra.mxu0 0
    %1855 = vmatprep.subr.bf16.mxu0 0
    %1856 = vmatpush2.bf16.xpose.msra.mxu0 0
    %1857 = vmatprep.subr.bf16.mxu0 0
    %1858 = vmatpush2.bf16.xpose.msra.mxu0 0
    %1859 = vmatprep.subr.bf16.mxu0 0
    %1860 = vmatpush2.bf16.xpose.msra.mxu0 0
    %1861 = vmatprep.subr.bf16.mxu0 0
    %1862 = vmatpush2.bf16.xpose.msra.mxu0 0
    %1863 = vmatprep.subr.bf16.mxu0 0
    %1864 = vmatpush2.bf16.xpose.msra.mxu0 0
    %1865 = vmatprep.subr.bf16.mxu0 0
    %1866 = vmatpush2.bf16.xpose.msra.mxu0 0
    %1867 = vmatprep.mubr.bf16.mxu0 0
    %1868 = vmatmul.mubr.bf16.gmra.mxu0 %v1830
    %v1869 = vpop.f32.mrf.mxu0
    %v1870 = vadd.f32 0.0, %v1869
    %v1871 = vpop.f32.mrf.mxu0
    %v1872 = vpop.f32.mrf.mxu0
    %v1873 = vpop.f32.mrf.mxu0
    %1874 = vdwg.mxu0
    %1876 = vrot.lane.b32.xlu0 %v690, 96
    %v1877 = vpop.permute.xlu0 %1876
    %1879 = vrot.lane.b32.xlu0 %v698, 96
    %v1880 = vpop.permute.xlu0 %1879
    %v1882 = vsel %vm708, %v1877, 0
    %v1885 = vsel %vm708, %v1880, 0
    %1887 = vmatprep.subr.bf16.mxu0 0
    %1888 = vmatpush1.bf16.xpose.msra.mxu0 0
    %1889 = vmatprep.subr.bf16.mxu0 0
    %1890 = vmatpush1.bf16.xpose.msra.mxu0 0
    %1891 = vmatprep.subr.bf16.mxu0 0
    %1892 = vmatpush1.bf16.xpose.msra.mxu0 0
    %1893 = vmatprep.subr.bf16.mxu0 0
    %1894 = vmatpush1.bf16.xpose.msra.mxu0 0
    %1895 = vmatprep.subr.bf16.mxu0 0
    %1896 = vmatpush1.bf16.xpose.msra.mxu0 0
    %1897 = vmatprep.subr.bf16.mxu0 0
    %1898 = vmatpush1.bf16.xpose.msra.mxu0 0
    %1899 = vmatprep.subr.bf16.mxu0 0
    %1900 = vmatpush1.bf16.xpose.msra.mxu0 0
    %1901 = vmatprep.subr.bf16.mxu0 0
    %1902 = vmatpush1.bf16.xpose.msra.mxu0 %v1885
    %1903 = vmatprep.subr.bf16.mxu0 0
    %1904 = vmatpush2.bf16.xpose.msra.mxu0 0
    %1905 = vmatprep.subr.bf16.mxu0 0
    %1906 = vmatpush2.bf16.xpose.msra.mxu0 0
    %1907 = vmatprep.subr.bf16.mxu0 0
    %1908 = vmatpush2.bf16.xpose.msra.mxu0 0
    %1909 = vmatprep.subr.bf16.mxu0 0
    %1910 = vmatpush2.bf16.xpose.msra.mxu0 0
    %1911 = vmatprep.subr.bf16.mxu0 0
    %1912 = vmatpush2.bf16.xpose.msra.mxu0 0
    %1913 = vmatprep.subr.bf16.mxu0 0
    %1914 = vmatpush2.bf16.xpose.msra.mxu0 0
    %1915 = vmatprep.subr.bf16.mxu0 0
    %1916 = vmatpush2.bf16.xpose.msra.mxu0 0
    %1917 = vmatprep.subr.bf16.mxu0 0
    %1918 = vmatpush2.bf16.xpose.msra.mxu0 0
    %1919 = vmatprep.mubr.bf16.mxu0 0
    %1920 = vmatmul.mubr.bf16.gmra.mxu0 %v1882
    %v1921 = vpop.f32.mrf.mxu0
    %v1922 = vadd.f32 0.0, %v1921
    %v1923 = vpop.f32.mrf.mxu0
    %v1924 = vpop.f32.mrf.mxu0
    %v1925 = vpop.f32.mrf.mxu0
    %1926 = vdwg.mxu0
    %1928 = vrot.lane.b32.xlu0 %v691, 96
    %v1929 = vpop.permute.xlu0 %1928
    %1931 = vrot.lane.b32.xlu0 %v699, 96
    %v1932 = vpop.permute.xlu0 %1931
    %v1934 = vsel %vm708, %v1929, 0
    %v1937 = vsel %vm708, %v1932, 0
    %1939 = vmatprep.subr.bf16.mxu0 0
    %1940 = vmatpush1.bf16.xpose.msra.mxu0 0
    %1941 = vmatprep.subr.bf16.mxu0 0
    %1942 = vmatpush1.bf16.xpose.msra.mxu0 0
    %1943 = vmatprep.subr.bf16.mxu0 0
    %1944 = vmatpush1.bf16.xpose.msra.mxu0 0
    %1945 = vmatprep.subr.bf16.mxu0 0
    %1946 = vmatpush1.bf16.xpose.msra.mxu0 0
    %1947 = vmatprep.subr.bf16.mxu0 0
    %1948 = vmatpush1.bf16.xpose.msra.mxu0 0
    %1949 = vmatprep.subr.bf16.mxu0 0
    %1950 = vmatpush1.bf16.xpose.msra.mxu0 0
    %1951 = vmatprep.subr.bf16.mxu0 0
    %1952 = vmatpush1.bf16.xpose.msra.mxu0 0
    %1953 = vmatprep.subr.bf16.mxu0 0
    %1954 = vmatpush1.bf16.xpose.msra.mxu0 %v1937
    %1955 = vmatprep.subr.bf16.mxu0 0
    %1956 = vmatpush2.bf16.xpose.msra.mxu0 0
    %1957 = vmatprep.subr.bf16.mxu0 0
    %1958 = vmatpush2.bf16.xpose.msra.mxu0 0
    %1959 = vmatprep.subr.bf16.mxu0 0
    %1960 = vmatpush2.bf16.xpose.msra.mxu0 0
    %1961 = vmatprep.subr.bf16.mxu0 0
    %1962 = vmatpush2.bf16.xpose.msra.mxu0 0
    %1963 = vmatprep.subr.bf16.mxu0 0
    %1964 = vmatpush2.bf16.xpose.msra.mxu0 0
    %1965 = vmatprep.subr.bf16.mxu0 0
    %1966 = vmatpush2.bf16.xpose.msra.mxu0 0
    %1967 = vmatprep.subr.bf16.mxu0 0
    %1968 = vmatpush2.bf16.xpose.msra.mxu0 0
    %1969 = vmatprep.subr.bf16.mxu0 0
    %1970 = vmatpush2.bf16.xpose.msra.mxu0 0
    %1971 = vmatprep.mubr.bf16.mxu0 0
    %1972 = vmatmul.mubr.bf16.gmra.mxu0 %v1934
    %v1973 = vpop.f32.mrf.mxu0
    %v1974 = vadd.f32 0.0, %v1973
    %v1975 = vpop.f32.mrf.mxu0
    %v1976 = vpop.f32.mrf.mxu0
    %v1977 = vpop.f32.mrf.mxu0
    %1978 = vdwg.mxu0
    %v1979 = vsel %vm1077, %v1610, -inf
    %1980 = vmax.xlane.f32.xlu0 %v1979
    %v1981 = vpop.xlane.xlu0 %1980
    %v1982 = vsel %vm1077, %v1662, -inf
    %1983 = vmax.xlane.f32.xlu0 %v1982
    %v1984 = vpop.xlane.xlu0 %1983
    %v1985 = vsel %vm1077, %v1714, -inf
    %1986 = vmax.xlane.f32.xlu0 %v1985
    %v1987 = vpop.xlane.xlu0 %1986
    %v1988 = vsel %vm1077, %v1766, -inf
    %1989 = vmax.xlane.f32.xlu0 %v1988
    %v1990 = vpop.xlane.xlu0 %1989
    %v1991 = vsel %vm1077, %v1818, -inf
    %1992 = vmax.xlane.f32.xlu0 %v1991
    %v1993 = vpop.xlane.xlu0 %1992
    %v1994 = vsel %vm1077, %v1870, -inf
    %1995 = vmax.xlane.f32.xlu0 %v1994
    %v1996 = vpop.xlane.xlu0 %1995
    %v1997 = vsel %vm1077, %v1922, -inf
    %1998 = vmax.xlane.f32.xlu0 %v1997
    %v1999 = vpop.xlane.xlu0 %1998
    %v2000 = vsel %vm1077, %v1974, -inf
    %2001 = vmax.xlane.f32.xlu0 %v2000
    %v2002 = vpop.xlane.xlu0 %2001
    %v2003 = vsub.f32 %v1610, %v1981
    %v2004 = vsub.f32 %v1662, %v1984
    %v2005 = vsub.f32 %v1714, %v1987
    %v2006 = vsub.f32 %v1766, %v1990
    %v2007 = vsub.f32 %v1818, %v1993
    %v2008 = vsub.f32 %v1870, %v1996
    %v2009 = vsub.f32 %v1922, %v1999
    %v2010 = vsub.f32 %v1974, %v2002
    %v2011 = vmul.f32 %v2003, 1.442695
    %v2012 = vpow.pop %v2011
    %v2013 = vmul.f32 %v2004, 1.442695
    %v2014 = vpow.pop %v2013
    %v2015 = vmul.f32 %v2005, 1.442695
    %v2016 = vpow.pop %v2015
    %v2017 = vmul.f32 %v2006, 1.442695
    %v2018 = vpow.pop %v2017
    %v2019 = vmul.f32 %v2007, 1.442695
    %v2020 = vpow.pop %v2019
    %v2021 = vmul.f32 %v2008, 1.442695
    %v2022 = vpow.pop %v2021
    %v2023 = vmul.f32 %v2009, 1.442695
    %v2024 = vpow.pop %v2023
    %v2025 = vmul.f32 %v2010, 1.442695
    %v2026 = vpow.pop %v2025
    %v2027 = vsel %vm1077, %v2012, 0.0
    %2028 = vadd.xlane.f32.xlu0 %v2027
    %v2029 = vpop.xlane.xlu0 %2028
    %v2030 = vsel %vm1077, %v2014, 0.0
    %2031 = vadd.xlane.f32.xlu0 %v2030
    %v2032 = vpop.xlane.xlu0 %2031
    %v2033 = vsel %vm1077, %v2016, 0.0
    %2034 = vadd.xlane.f32.xlu0 %v2033
    %v2035 = vpop.xlane.xlu0 %2034
    %v2036 = vsel %vm1077, %v2018, 0.0
    %2037 = vadd.xlane.f32.xlu0 %v2036
    %v2038 = vpop.xlane.xlu0 %2037
    %v2039 = vsel %vm1077, %v2020, 0.0
    %2040 = vadd.xlane.f32.xlu0 %v2039
    %v2041 = vpop.xlane.xlu0 %2040
    %v2042 = vsel %vm1077, %v2022, 0.0
    %2043 = vadd.xlane.f32.xlu0 %v2042
    %v2044 = vpop.xlane.xlu0 %2043
    %v2045 = vsel %vm1077, %v2024, 0.0
    %2046 = vadd.xlane.f32.xlu0 %v2045
    %v2047 = vpop.xlane.xlu0 %2046
    %v2048 = vsel %vm1077, %v2026, 0.0
    %2049 = vadd.xlane.f32.xlu0 %v2048
    %v2050 = vpop.xlane.xlu0 %2049
    %v2051 = vrcp.pop %v2029
    %v2052 = vrcp.pop %v2032
    %v2053 = vrcp.pop %v2035
    %v2054 = vrcp.pop %v2038
    %v2055 = vrcp.pop %v2041
    %v2056 = vrcp.pop %v2044
    %v2057 = vrcp.pop %v2047
    %v2058 = vrcp.pop %v2050
    %v2059 = vmul.f32 %v2012, %v2051
    %v2060 = vmul.f32 %v2014, %v2052
    %v2061 = vmul.f32 %v2016, %v2053
    %v2062 = vmul.f32 %v2018, %v2054
    %v2063 = vmul.f32 %v2020, %v2055
    %v2064 = vmul.f32 %v2022, %v2056
    %v2065 = vmul.f32 %v2024, %v2057
    %v2066 = vmul.f32 %v2026, %v2058
    %v2067 = vpack.c.bf16 %v2059, %v2059
    %v2068 = vpack.c.bf16 %v2060, %v2060
    %v2069 = vpack.c.bf16 %v2061, %v2061
    %v2070 = vpack.c.bf16 %v2062, %v2062
    %v2071 = vpack.c.bf16 %v2063, %v2063
    %v2072 = vpack.c.bf16 %v2064, %v2064
    %v2073 = vpack.c.bf16 %v2065, %v2065
    %v2074 = vpack.c.bf16 %v2066, %v2066
    %2076 = vrot.lane.b32.xlu0 %v700, 96
    %v2077 = vpop.permute.xlu0 %2076
    %v2079 = vsel %vm1077, %v2067, 0
    %v2082 = vsel %vm1177, %v2077, 0
    %2084 = vmatprep.subr.bf16.mxu0 0
    %2085 = vmatpush1.bf16.msra.mxu0 0
    %2086 = vmatprep.subr.bf16.mxu0 0
    %2087 = vmatpush1.bf16.msra.mxu0 0
    %2088 = vmatprep.subr.bf16.mxu0 0
    %2089 = vmatpush1.bf16.msra.mxu0 0
    %2090 = vmatprep.subr.bf16.mxu0 0
    %2091 = vmatpush1.bf16.msra.mxu0 0
    %2092 = vmatprep.subr.bf16.mxu0 0
    %2093 = vmatpush1.bf16.msra.mxu0 0
    %2094 = vmatprep.subr.bf16.mxu0 0
    %2095 = vmatpush1.bf16.msra.mxu0 0
    %2096 = vmatprep.subr.bf16.mxu0 0
    %2097 = vmatpush1.bf16.msra.mxu0 0
    %2098 = vmatprep.subr.bf16.mxu0 0
    %2099 = vmatpush1.bf16.msra.mxu0 %v2082
    %2100 = vmatprep.subr.bf16.mxu0 0
    %2101 = vmatpush2.bf16.msra.mxu0 0
    %2102 = vmatprep.subr.bf16.mxu0 0
    %2103 = vmatpush2.bf16.msra.mxu0 0
    %2104 = vmatprep.subr.bf16.mxu0 0
    %2105 = vmatpush2.bf16.msra.mxu0 0
    %2106 = vmatprep.subr.bf16.mxu0 0
    %2107 = vmatpush2.bf16.msra.mxu0 0
    %2108 = vmatprep.subr.bf16.mxu0 0
    %2109 = vmatpush2.bf16.msra.mxu0 0
    %2110 = vmatprep.subr.bf16.mxu0 0
    %2111 = vmatpush2.bf16.msra.mxu0 0
    %2112 = vmatprep.subr.bf16.mxu0 0
    %2113 = vmatpush2.bf16.msra.mxu0 0
    %2114 = vmatprep.subr.bf16.mxu0 0
    %2115 = vmatpush2.bf16.msra.mxu0 0
    %2116 = vmatprep.mubr.bf16.mxu0 0
    %2117 = vmatmul.mubr.bf16.gmra.mxu0 %v2079
    %v2118 = vpop.f32.mrf.mxu0
    %v2119 = vadd.f32 0.0, %v2118
    %v2120 = vpop.f32.mrf.mxu0
    %v2121 = vpop.f32.mrf.mxu0
    %v2122 = vpop.f32.mrf.mxu0
    %2123 = vdwg.mxu0
    %2125 = vrot.lane.b32.xlu0 %v701, 96
    %v2126 = vpop.permute.xlu0 %2125
    %v2128 = vsel %vm1077, %v2068, 0
    %v2131 = vsel %vm1177, %v2126, 0
    %2133 = vmatprep.subr.bf16.mxu0 0
    %2134 = vmatpush1.bf16.msra.mxu0 0
    %2135 = vmatprep.subr.bf16.mxu0 0
    %2136 = vmatpush1.bf16.msra.mxu0 0
    %2137 = vmatprep.subr.bf16.mxu0 0
    %2138 = vmatpush1.bf16.msra.mxu0 0
    %2139 = vmatprep.subr.bf16.mxu0 0
    %2140 = vmatpush1.bf16.msra.mxu0 0
    %2141 = vmatprep.subr.bf16.mxu0 0
    %2142 = vmatpush1.bf16.msra.mxu0 0
    %2143 = vmatprep.subr.bf16.mxu0 0
    %2144 = vmatpush1.bf16.msra.mxu0 0
    %2145 = vmatprep.subr.bf16.mxu0 0
    %2146 = vmatpush1.bf16.msra.mxu0 0
    %2147 = vmatprep.subr.bf16.mxu0 0
    %2148 = vmatpush1.bf16.msra.mxu0 %v2131
    %2149 = vmatprep.subr.bf16.mxu0 0
    %2150 = vmatpush2.bf16.msra.mxu0 0
    %2151 = vmatprep.subr.bf16.mxu0 0
    %2152 = vmatpush2.bf16.msra.mxu0 0
    %2153 = vmatprep.subr.bf16.mxu0 0
    %2154 = vmatpush2.bf16.msra.mxu0 0
    %2155 = vmatprep.subr.bf16.mxu0 0
    %2156 = vmatpush2.bf16.msra.mxu0 0
    %2157 = vmatprep.subr.bf16.mxu0 0
    %2158 = vmatpush2.bf16.msra.mxu0 0
    %2159 = vmatprep.subr.bf16.mxu0 0
    %2160 = vmatpush2.bf16.msra.mxu0 0
    %2161 = vmatprep.subr.bf16.mxu0 0
    %2162 = vmatpush2.bf16.msra.mxu0 0
    %2163 = vmatprep.subr.bf16.mxu0 0
    %2164 = vmatpush2.bf16.msra.mxu0 0
    %2165 = vmatprep.mubr.bf16.mxu0 0
    %2166 = vmatmul.mubr.bf16.gmra.mxu0 %v2128
    %v2167 = vpop.f32.mrf.mxu0
    %v2168 = vadd.f32 0.0, %v2167
    %v2169 = vpop.f32.mrf.mxu0
    %v2170 = vpop.f32.mrf.mxu0
    %v2171 = vpop.f32.mrf.mxu0
    %2172 = vdwg.mxu0
    %2174 = vrot.lane.b32.xlu0 %v702, 96
    %v2175 = vpop.permute.xlu0 %2174
    %v2177 = vsel %vm1077, %v2069, 0
    %v2180 = vsel %vm1177, %v2175, 0
    %2182 = vmatprep.subr.bf16.mxu0 0
    %2183 = vmatpush1.bf16.msra.mxu0 0
    %2184 = vmatprep.subr.bf16.mxu0 0
    %2185 = vmatpush1.bf16.msra.mxu0 0
    %2186 = vmatprep.subr.bf16.mxu0 0
    %2187 = vmatpush1.bf16.msra.mxu0 0
    %2188 = vmatprep.subr.bf16.mxu0 0
    %2189 = vmatpush1.bf16.msra.mxu0 0
    %2190 = vmatprep.subr.bf16.mxu0 0
    %2191 = vmatpush1.bf16.msra.mxu0 0
    %2192 = vmatprep.subr.bf16.mxu0 0
    %2193 = vmatpush1.bf16.msra.mxu0 0
    %2194 = vmatprep.subr.bf16.mxu0 0
    %2195 = vmatpush1.bf16.msra.mxu0 0
    %2196 = vmatprep.subr.bf16.mxu0 0
    %2197 = vmatpush1.bf16.msra.mxu0 %v2180
    %2198 = vmatprep.subr.bf16.mxu0 0
    %2199 = vmatpush2.bf16.msra.mxu0 0
    %2200 = vmatprep.subr.bf16.mxu0 0
    %2201 = vmatpush2.bf16.msra.mxu0 0
    %2202 = vmatprep.subr.bf16.mxu0 0
    %2203 = vmatpush2.bf16.msra.mxu0 0
    %2204 = vmatprep.subr.bf16.mxu0 0
    %2205 = vmatpush2.bf16.msra.mxu0 0
    %2206 = vmatprep.subr.bf16.mxu0 0
    %2207 = vmatpush2.bf16.msra.mxu0 0
    %2208 = vmatprep.subr.bf16.mxu0 0
    %2209 = vmatpush2.bf16.msra.mxu0 0
    %2210 = vmatprep.subr.bf16.mxu0 0
    %2211 = vmatpush2.bf16.msra.mxu0 0
    %2212 = vmatprep.subr.bf16.mxu0 0
    %2213 = vmatpush2.bf16.msra.mxu0 0
    %2214 = vmatprep.mubr.bf16.mxu0 0
    %2215 = vmatmul.mubr.bf16.gmra.mxu0 %v2177
    %v2216 = vpop.f32.mrf.mxu0
    %v2217 = vadd.f32 0.0, %v2216
    %v2218 = vpop.f32.mrf.mxu0
    %v2219 = vpop.f32.mrf.mxu0
    %v2220 = vpop.f32.mrf.mxu0
    %2221 = vdwg.mxu0
    %2223 = vrot.lane.b32.xlu0 %v703, 96
    %v2224 = vpop.permute.xlu0 %2223
    %v2226 = vsel %vm1077, %v2070, 0
    %v2229 = vsel %vm1177, %v2224, 0
    %2231 = vmatprep.subr.bf16.mxu0 0
    %2232 = vmatpush1.bf16.msra.mxu0 0
    %2233 = vmatprep.subr.bf16.mxu0 0
    %2234 = vmatpush1.bf16.msra.mxu0 0
    %2235 = vmatprep.subr.bf16.mxu0 0
    %2236 = vmatpush1.bf16.msra.mxu0 0
    %2237 = vmatprep.subr.bf16.mxu0 0
    %2238 = vmatpush1.bf16.msra.mxu0 0
    %2239 = vmatprep.subr.bf16.mxu0 0
    %2240 = vmatpush1.bf16.msra.mxu0 0
    %2241 = vmatprep.subr.bf16.mxu0 0
    %2242 = vmatpush1.bf16.msra.mxu0 0
    %2243 = vmatprep.subr.bf16.mxu0 0
    %2244 = vmatpush1.bf16.msra.mxu0 0
    %2245 = vmatprep.subr.bf16.mxu0 0
    %2246 = vmatpush1.bf16.msra.mxu0 %v2229
    %2247 = vmatprep.subr.bf16.mxu0 0
    %2248 = vmatpush2.bf16.msra.mxu0 0
    %2249 = vmatprep.subr.bf16.mxu0 0
    %2250 = vmatpush2.bf16.msra.mxu0 0
    %2251 = vmatprep.subr.bf16.mxu0 0
    %2252 = vmatpush2.bf16.msra.mxu0 0
    %2253 = vmatprep.subr.bf16.mxu0 0
    %2254 = vmatpush2.bf16.msra.mxu0 0
    %2255 = vmatprep.subr.bf16.mxu0 0
    %2256 = vmatpush2.bf16.msra.mxu0 0
    %2257 = vmatprep.subr.bf16.mxu0 0
    %2258 = vmatpush2.bf16.msra.mxu0 0
    %2259 = vmatprep.subr.bf16.mxu0 0
    %2260 = vmatpush2.bf16.msra.mxu0 0
    %2261 = vmatprep.subr.bf16.mxu0 0
    %2262 = vmatpush2.bf16.msra.mxu0 0
    %2263 = vmatprep.mubr.bf16.mxu0 0
    %2264 = vmatmul.mubr.bf16.gmra.mxu0 %v2226
    %v2265 = vpop.f32.mrf.mxu0
    %v2266 = vadd.f32 0.0, %v2265
    %v2267 = vpop.f32.mrf.mxu0
    %v2268 = vpop.f32.mrf.mxu0
    %v2269 = vpop.f32.mrf.mxu0
    %2270 = vdwg.mxu0
    %2272 = vrot.lane.b32.xlu0 %v704, 96
    %v2273 = vpop.permute.xlu0 %2272
    %v2275 = vsel %vm1077, %v2071, 0
    %v2278 = vsel %vm1177, %v2273, 0
    %2280 = vmatprep.subr.bf16.mxu0 0
    %2281 = vmatpush1.bf16.msra.mxu0 0
    %2282 = vmatprep.subr.bf16.mxu0 0
    %2283 = vmatpush1.bf16.msra.mxu0 0
    %2284 = vmatprep.subr.bf16.mxu0 0
    %2285 = vmatpush1.bf16.msra.mxu0 0
    %2286 = vmatprep.subr.bf16.mxu0 0
    %2287 = vmatpush1.bf16.msra.mxu0 0
    %2288 = vmatprep.subr.bf16.mxu0 0
    %2289 = vmatpush1.bf16.msra.mxu0 0
    %2290 = vmatprep.subr.bf16.mxu0 0
    %2291 = vmatpush1.bf16.msra.mxu0 0
    %2292 = vmatprep.subr.bf16.mxu0 0
    %2293 = vmatpush1.bf16.msra.mxu0 0
    %2294 = vmatprep.subr.bf16.mxu0 0
    %2295 = vmatpush1.bf16.msra.mxu0 %v2278
    %2296 = vmatprep.subr.bf16.mxu0 0
    %2297 = vmatpush2.bf16.msra.mxu0 0
    %2298 = vmatprep.subr.bf16.mxu0 0
    %2299 = vmatpush2.bf16.msra.mxu0 0
    %2300 = vmatprep.subr.bf16.mxu0 0
    %2301 = vmatpush2.bf16.msra.mxu0 0
    %2302 = vmatprep.subr.bf16.mxu0 0
    %2303 = vmatpush2.bf16.msra.mxu0 0
    %2304 = vmatprep.subr.bf16.mxu0 0
    %2305 = vmatpush2.bf16.msra.mxu0 0
    %2306 = vmatprep.subr.bf16.mxu0 0
    %2307 = vmatpush2.bf16.msra.mxu0 0
    %2308 = vmatprep.subr.bf16.mxu0 0
    %2309 = vmatpush2.bf16.msra.mxu0 0
    %2310 = vmatprep.subr.bf16.mxu0 0
    %2311 = vmatpush2.bf16.msra.mxu0 0
    %2312 = vmatprep.mubr.bf16.mxu0 0
    %2313 = vmatmul.mubr.bf16.gmra.mxu0 %v2275
    %v2314 = vpop.f32.mrf.mxu0
    %v2315 = vadd.f32 0.0, %v2314
    %v2316 = vpop.f32.mrf.mxu0
    %v2317 = vpop.f32.mrf.mxu0
    %v2318 = vpop.f32.mrf.mxu0
    %2319 = vdwg.mxu0
    %2321 = vrot.lane.b32.xlu0 %v705, 96
    %v2322 = vpop.permute.xlu0 %2321
    %v2324 = vsel %vm1077, %v2072, 0
    %v2327 = vsel %vm1177, %v2322, 0
    %2329 = vmatprep.subr.bf16.mxu0 0
    %2330 = vmatpush1.bf16.msra.mxu0 0
    %2331 = vmatprep.subr.bf16.mxu0 0
    %2332 = vmatpush1.bf16.msra.mxu0 0
    %2333 = vmatprep.subr.bf16.mxu0 0
    %2334 = vmatpush1.bf16.msra.mxu0 0
    %2335 = vmatprep.subr.bf16.mxu0 0
    %2336 = vmatpush1.bf16.msra.mxu0 0
    %2337 = vmatprep.subr.bf16.mxu0 0
    %2338 = vmatpush1.bf16.msra.mxu0 0
    %2339 = vmatprep.subr.bf16.mxu0 0
    %2340 = vmatpush1.bf16.msra.mxu0 0
    %2341 = vmatprep.subr.bf16.mxu0 0
    %2342 = vmatpush1.bf16.msra.mxu0 0
    %2343 = vmatprep.subr.bf16.mxu0 0
    %2344 = vmatpush1.bf16.msra.mxu0 %v2327
    %2345 = vmatprep.subr.bf16.mxu0 0
    %2346 = vmatpush2.bf16.msra.mxu0 0
    %2347 = vmatprep.subr.bf16.mxu0 0
    %2348 = vmatpush2.bf16.msra.mxu0 0
    %2349 = vmatprep.subr.bf16.mxu0 0
    %2350 = vmatpush2.bf16.msra.mxu0 0
    %2351 = vmatprep.subr.bf16.mxu0 0
    %2352 = vmatpush2.bf16.msra.mxu0 0
    %2353 = vmatprep.subr.bf16.mxu0 0
    %2354 = vmatpush2.bf16.msra.mxu0 0
    %2355 = vmatprep.subr.bf16.mxu0 0
    %2356 = vmatpush2.bf16.msra.mxu0 0
    %2357 = vmatprep.subr.bf16.mxu0 0
    %2358 = vmatpush2.bf16.msra.mxu0 0
    %2359 = vmatprep.subr.bf16.mxu0 0
    %2360 = vmatpush2.bf16.msra.mxu0 0
    %2361 = vmatprep.mubr.bf16.mxu0 0
    %2362 = vmatmul.mubr.bf16.gmra.mxu0 %v2324
    %v2363 = vpop.f32.mrf.mxu0
    %v2364 = vadd.f32 0.0, %v2363
    %v2365 = vpop.f32.mrf.mxu0
    %v2366 = vpop.f32.mrf.mxu0
    %v2367 = vpop.f32.mrf.mxu0
    %2368 = vdwg.mxu0
    %2370 = vrot.lane.b32.xlu0 %v706, 96
    %v2371 = vpop.permute.xlu0 %2370
    %v2373 = vsel %vm1077, %v2073, 0
    %v2376 = vsel %vm1177, %v2371, 0
    %2378 = vmatprep.subr.bf16.mxu0 0
    %2379 = vmatpush1.bf16.msra.mxu0 0
    %2380 = vmatprep.subr.bf16.mxu0 0
    %2381 = vmatpush1.bf16.msra.mxu0 0
    %2382 = vmatprep.subr.bf16.mxu0 0
    %2383 = vmatpush1.bf16.msra.mxu0 0
    %2384 = vmatprep.subr.bf16.mxu0 0
    %2385 = vmatpush1.bf16.msra.mxu0 0
    %2386 = vmatprep.subr.bf16.mxu0 0
    %2387 = vmatpush1.bf16.msra.mxu0 0
    %2388 = vmatprep.subr.bf16.mxu0 0
    %2389 = vmatpush1.bf16.msra.mxu0 0
    %2390 = vmatprep.subr.bf16.mxu0 0
    %2391 = vmatpush1.bf16.msra.mxu0 0
    %2392 = vmatprep.subr.bf16.mxu0 0
    %2393 = vmatpush1.bf16.msra.mxu0 %v2376
    %2394 = vmatprep.subr.bf16.mxu0 0
    %2395 = vmatpush2.bf16.msra.mxu0 0
    %2396 = vmatprep.subr.bf16.mxu0 0
    %2397 = vmatpush2.bf16.msra.mxu0 0
    %2398 = vmatprep.subr.bf16.mxu0 0
    %2399 = vmatpush2.bf16.msra.mxu0 0
    %2400 = vmatprep.subr.bf16.mxu0 0
    %2401 = vmatpush2.bf16.msra.mxu0 0
    %2402 = vmatprep.subr.bf16.mxu0 0
    %2403 = vmatpush2.bf16.msra.mxu0 0
    %2404 = vmatprep.subr.bf16.mxu0 0
    %2405 = vmatpush2.bf16.msra.mxu0 0
    %2406 = vmatprep.subr.bf16.mxu0 0
    %2407 = vmatpush2.bf16.msra.mxu0 0
    %2408 = vmatprep.subr.bf16.mxu0 0
    %2409 = vmatpush2.bf16.msra.mxu0 0
    %2410 = vmatprep.mubr.bf16.mxu0 0
    %2411 = vmatmul.mubr.bf16.gmra.mxu0 %v2373
    %v2412 = vpop.f32.mrf.mxu0
    %v2413 = vadd.f32 0.0, %v2412
    %v2414 = vpop.f32.mrf.mxu0
    %v2415 = vpop.f32.mrf.mxu0
    %v2416 = vpop.f32.mrf.mxu0
    %2417 = vdwg.mxu0
    %2419 = vrot.lane.b32.xlu0 %v707, 96
    %v2420 = vpop.permute.xlu0 %2419
    %v2422 = vsel %vm1077, %v2074, 0
    %v2425 = vsel %vm1177, %v2420, 0
    %2427 = vmatprep.subr.bf16.mxu0 0
    %2428 = vmatpush1.bf16.msra.mxu0 0
    %2429 = vmatprep.subr.bf16.mxu0 0
    %2430 = vmatpush1.bf16.msra.mxu0 0
    %2431 = vmatprep.subr.bf16.mxu0 0
    %2432 = vmatpush1.bf16.msra.mxu0 0
    %2433 = vmatprep.subr.bf16.mxu0 0
    %2434 = vmatpush1.bf16.msra.mxu0 0
    %2435 = vmatprep.subr.bf16.mxu0 0
    %2436 = vmatpush1.bf16.msra.mxu0 0
    %2437 = vmatprep.subr.bf16.mxu0 0
    %2438 = vmatpush1.bf16.msra.mxu0 0
    %2439 = vmatprep.subr.bf16.mxu0 0
    %2440 = vmatpush1.bf16.msra.mxu0 0
    %2441 = vmatprep.subr.bf16.mxu0 0
    %2442 = vmatpush1.bf16.msra.mxu0 %v2425
    %2443 = vmatprep.subr.bf16.mxu0 0
    %2444 = vmatpush2.bf16.msra.mxu0 0
    %2445 = vmatprep.subr.bf16.mxu0 0
    %2446 = vmatpush2.bf16.msra.mxu0 0
    %2447 = vmatprep.subr.bf16.mxu0 0
    %2448 = vmatpush2.bf16.msra.mxu0 0
    %2449 = vmatprep.subr.bf16.mxu0 0
    %2450 = vmatpush2.bf16.msra.mxu0 0
    %2451 = vmatprep.subr.bf16.mxu0 0
    %2452 = vmatpush2.bf16.msra.mxu0 0
    %2453 = vmatprep.subr.bf16.mxu0 0
    %2454 = vmatpush2.bf16.msra.mxu0 0
    %2455 = vmatprep.subr.bf16.mxu0 0
    %2456 = vmatpush2.bf16.msra.mxu0 0
    %2457 = vmatprep.subr.bf16.mxu0 0
    %2458 = vmatpush2.bf16.msra.mxu0 0
    %2459 = vmatprep.mubr.bf16.mxu0 0
    %2460 = vmatmul.mubr.bf16.gmra.mxu0 %v2422
    %v2461 = vpop.f32.mrf.mxu0
    %v2462 = vadd.f32 0.0, %v2461
    %v2463 = vpop.f32.mrf.mxu0
    %v2464 = vpop.f32.mrf.mxu0
    %v2465 = vpop.f32.mrf.mxu0
    %2466 = vdwg.mxu0
    %s2467 = scalar_lea.vmem %s6, 64
    %v2468 = vld [vmem:[%s2467] sm:$0xf]
    %v2469 = vld [vmem:[%s2467 + $0x4] sm:$0xf]
    %v2470 = vld [vmem:[%s2467 + $0x8] sm:$0xf]
    %v2471 = vld [vmem:[%s2467 + $0xc] sm:$0xf]
    %v2472 = vld [vmem:[%s2467 + $0x10] sm:$0xf]
    %v2473 = vld [vmem:[%s2467 + $0x14] sm:$0xf]
    %v2474 = vld [vmem:[%s2467 + $0x18] sm:$0xf]
    %v2475 = vld [vmem:[%s2467 + $0x1c] sm:$0xf]
    %v2476 = vld [vmem:[%s2467 + $0x20] sm:$0xf]
    %v2477 = vld [vmem:[%s2467 + $0x24] sm:$0xf]
    %v2478 = vld [vmem:[%s2467 + $0x28] sm:$0xf]
    %v2479 = vld [vmem:[%s2467 + $0x2c] sm:$0xf]
    %v2480 = vld [vmem:[%s2467 + $0x30] sm:$0xf]
    %v2481 = vld [vmem:[%s2467 + $0x34] sm:$0xf]
    %v2482 = vld [vmem:[%s2467 + $0x38] sm:$0xf]
    %v2483 = vld [vmem:[%s2467 + $0x3c] sm:$0xf]
    %v2484 = vpack.c.bf16 %v2168, %v2119
    %v2485 = vpack.c.bf16 %v2266, %v2217
    %v2486 = vpack.c.bf16 %v2364, %v2315
    %v2487 = vpack.c.bf16 %v2462, %v2413
    %v2504 = vunpack.c.l.b16 %v2468
    %v2505 = vunpack.c.l.b16 %v2469
    %v2506 = vunpack.c.l.b16 %v2470
    %v2507 = vunpack.c.l.b16 %v2471
    %v2508 = vunpack.c.l.b16 %v2472
    %v2509 = vunpack.c.l.b16 %v2473
    %v2510 = vunpack.c.l.b16 %v2474
    %v2511 = vunpack.c.l.b16 %v2475
    %v2512 = vunpack.c.l.b16 %v2476
    %v2513 = vunpack.c.l.b16 %v2477
    %v2514 = vunpack.c.l.b16 %v2478
    %v2515 = vunpack.c.l.b16 %v2479
    %v2516 = vunpack.c.l.b16 %v2480
    %v2517 = vunpack.c.l.b16 %v2481
    %v2518 = vunpack.c.l.b16 %v2482
    %v2519 = vunpack.c.l.b16 %v2483
    %v2520 = vpack.c.b16 %v2505, %v2504
    %v2521 = vpack.c.b16 %v2507, %v2506
    %v2522 = vpack.c.b16 %v2509, %v2508
    %v2523 = vpack.c.b16 %v2511, %v2510
    %v2524 = vpack.c.b16 %v2513, %v2512
    %v2525 = vpack.c.b16 %v2515, %v2514
    %v2526 = vpack.c.b16 %v2517, %v2516
    %v2527 = vpack.c.b16 %v2519, %v2518
    %v2529 = vsel %vm708, %v2484, 0
    %v2532 = vsel %vm708, %v2485, 0
    %v2535 = vsel %vm708, %v2486, 0
    %v2538 = vsel %vm708, %v2487, 0
    %v2541 = vsel %vm708, %v2520, 0
    %v2544 = vsel %vm708, %v2521, 0
    %v2547 = vsel %vm708, %v2522, 0
    %v2550 = vsel %vm708, %v2523, 0
    %v2553 = vsel %vm708, %v2524, 0
    %v2556 = vsel %vm708, %v2525, 0
    %v2559 = vsel %vm708, %v2526, 0
    %v2562 = vsel %vm708, %v2527, 0
    %2564 = vmatprep.subr.bf16.mxu0 0
    %2565 = vmatpush1.bf16.xpose.msra.mxu0 %v2562
    %2566 = vmatprep.subr.bf16.mxu0 0
    %2567 = vmatpush1.bf16.xpose.msra.mxu0 %v2559
    %2568 = vmatprep.subr.bf16.mxu0 0
    %2569 = vmatpush1.bf16.xpose.msra.mxu0 %v2556
    %2570 = vmatprep.subr.bf16.mxu0 0
    %2571 = vmatpush1.bf16.xpose.msra.mxu0 %v2553
    %2572 = vmatprep.subr.bf16.mxu0 0
    %2573 = vmatpush1.bf16.xpose.msra.mxu0 %v2550
    %2574 = vmatprep.subr.bf16.mxu0 0
    %2575 = vmatpush1.bf16.xpose.msra.mxu0 %v2547
    %2576 = vmatprep.subr.bf16.mxu0 0
    %2577 = vmatpush1.bf16.xpose.msra.mxu0 %v2544
    %2578 = vmatprep.subr.bf16.mxu0 0
    %2579 = vmatpush1.bf16.xpose.msra.mxu0 %v2541
    %2580 = vmatprep.subr.bf16.mxu0 0
    %2581 = vmatpush2.bf16.xpose.msra.mxu0 0
    %2582 = vmatprep.subr.bf16.mxu0 0
    %2583 = vmatpush2.bf16.xpose.msra.mxu0 0
    %2584 = vmatprep.subr.bf16.mxu0 0
    %2585 = vmatpush2.bf16.xpose.msra.mxu0 0
    %2586 = vmatprep.subr.bf16.mxu0 0
    %2587 = vmatpush2.bf16.xpose.msra.mxu0 0
    %2588 = vmatprep.subr.bf16.mxu0 0
    %2589 = vmatpush2.bf16.xpose.msra.mxu0 0
    %2590 = vmatprep.subr.bf16.mxu0 0
    %2591 = vmatpush2.bf16.xpose.msra.mxu0 0
    %2592 = vmatprep.subr.bf16.mxu0 0
    %2593 = vmatpush2.bf16.xpose.msra.mxu0 0
    %2594 = vmatprep.subr.bf16.mxu0 0
    %2595 = vmatpush2.bf16.xpose.msra.mxu0 0
    %2596 = vmatprep.mubr.bf16.mxu0 0
    %2597 = vmatmul.mubr.bf16.gmra.mxu0 %v2529
    %v2598 = vpop.f32.mrf.mxu0
    %v2599 = vadd.f32 0.0, %v2598
    %v2600 = vpop.f32.mrf.mxu0
    %v2601 = vpop.f32.mrf.mxu0
    %v2602 = vadd.f32 0.0, %v2601
    %v2603 = vpop.f32.mrf.mxu0
    %2604 = vmatprep.mubr.bf16.mxu0 0
    %2605 = vmatmul.mubr.bf16.gmra.mxu0 %v2532
    %v2606 = vpop.f32.mrf.mxu0
    %v2607 = vadd.f32 0.0, %v2606
    %v2608 = vpop.f32.mrf.mxu0
    %v2609 = vpop.f32.mrf.mxu0
    %v2610 = vadd.f32 0.0, %v2609
    %v2611 = vpop.f32.mrf.mxu0
    %2612 = vmatprep.mubr.bf16.mxu0 0
    %2613 = vmatmul.mubr.bf16.gmra.mxu0 %v2535
    %v2614 = vpop.f32.mrf.mxu0
    %v2615 = vadd.f32 0.0, %v2614
    %v2616 = vpop.f32.mrf.mxu0
    %v2617 = vpop.f32.mrf.mxu0
    %v2618 = vadd.f32 0.0, %v2617
    %v2619 = vpop.f32.mrf.mxu0
    %2620 = vmatprep.mubr.bf16.mxu0 0
    %2621 = vmatmul.mubr.bf16.gmra.mxu0 %v2538
    %v2622 = vpop.f32.mrf.mxu0
    %v2623 = vadd.f32 0.0, %v2622
    %v2624 = vpop.f32.mrf.mxu0
    %v2625 = vpop.f32.mrf.mxu0
    %v2626 = vadd.f32 0.0, %v2625
    %v2627 = vpop.f32.mrf.mxu0
    %2628 = vdwg.mxu0
    %v2645 = vunpack.c.l.b16 %v1543
    %v2646 = vunpack.c.l.b16 %v1544
    %v2647 = vunpack.c.l.b16 %v1545
    %v2648 = vunpack.c.l.b16 %v1546
    %v2649 = vunpack.c.l.b16 %v1547
    %v2650 = vunpack.c.l.b16 %v1548
    %v2651 = vunpack.c.l.b16 %v1549
    %v2652 = vunpack.c.l.b16 %v1550
    %v2653 = vunpack.c.l.b16 %v1551
    %v2654 = vunpack.c.l.b16 %v1552
    %v2655 = vunpack.c.l.b16 %v1553
    %v2656 = vunpack.c.l.b16 %v1554
    %v2657 = vunpack.c.l.b16 %v1555
    %v2658 = vunpack.c.l.b16 %v1556
    %v2659 = vunpack.c.l.b16 %v1557
    %v2660 = vunpack.c.l.b16 %v1558
    %v2661 = vpack.c.b16 %v2646, %v2645
    %v2662 = vpack.c.b16 %v2648, %v2647
    %v2663 = vpack.c.b16 %v2650, %v2649
    %v2664 = vpack.c.b16 %v2652, %v2651
    %v2665 = vpack.c.b16 %v2654, %v2653
    %v2666 = vpack.c.b16 %v2656, %v2655
    %v2667 = vpack.c.b16 %v2658, %v2657
    %v2668 = vpack.c.b16 %v2660, %v2659
    %v2670 = vsel %vm708, %v1559, 0
    %v2673 = vsel %vm708, %v1560, 0
    %v2676 = vsel %vm708, %v1561, 0
    %v2679 = vsel %vm708, %v1562, 0
    %v2682 = vsel %vm708, %v2661, 0
    %v2685 = vsel %vm708, %v2662, 0
    %v2688 = vsel %vm708, %v2663, 0
    %v2691 = vsel %vm708, %v2664, 0
    %v2694 = vsel %vm708, %v2665, 0
    %v2697 = vsel %vm708, %v2666, 0
    %v2700 = vsel %vm708, %v2667, 0
    %v2703 = vsel %vm708, %v2668, 0
    %2705 = vmatprep.subr.bf16.mxu0 0
    %2706 = vmatpush1.bf16.xpose.msra.mxu0 %v2703
    %2707 = vmatprep.subr.bf16.mxu0 0
    %2708 = vmatpush1.bf16.xpose.msra.mxu0 %v2700
    %2709 = vmatprep.subr.bf16.mxu0 0
    %2710 = vmatpush1.bf16.xpose.msra.mxu0 %v2697
    %2711 = vmatprep.subr.bf16.mxu0 0
    %2712 = vmatpush1.bf16.xpose.msra.mxu0 %v2694
    %2713 = vmatprep.subr.bf16.mxu0 0
    %2714 = vmatpush1.bf16.xpose.msra.mxu0 %v2691
    %2715 = vmatprep.subr.bf16.mxu0 0
    %2716 = vmatpush1.bf16.xpose.msra.mxu0 %v2688
    %2717 = vmatprep.subr.bf16.mxu0 0
    %2718 = vmatpush1.bf16.xpose.msra.mxu0 %v2685
    %2719 = vmatprep.subr.bf16.mxu0 0
    %2720 = vmatpush1.bf16.xpose.msra.mxu0 %v2682
    %2721 = vmatprep.subr.bf16.mxu0 0
    %2722 = vmatpush2.bf16.xpose.msra.mxu0 0
    %2723 = vmatprep.subr.bf16.mxu0 0
    %2724 = vmatpush2.bf16.xpose.msra.mxu0 0
    %2725 = vmatprep.subr.bf16.mxu0 0
    %2726 = vmatpush2.bf16.xpose.msra.mxu0 0
    %2727 = vmatprep.subr.bf16.mxu0 0
    %2728 = vmatpush2.bf16.xpose.msra.mxu0 0
    %2729 = vmatprep.subr.bf16.mxu0 0
    %2730 = vmatpush2.bf16.xpose.msra.mxu0 0
    %2731 = vmatprep.subr.bf16.mxu0 0
    %2732 = vmatpush2.bf16.xpose.msra.mxu0 0
    %2733 = vmatprep.subr.bf16.mxu0 0
    %2734 = vmatpush2.bf16.xpose.msra.mxu0 0
    %2735 = vmatprep.subr.bf16.mxu0 0
    %2736 = vmatpush2.bf16.xpose.msra.mxu0 0
    %2737 = vmatprep.mubr.bf16.mxu0 0
    %2738 = vmatmul.mubr.bf16.gmra.mxu0 %v2670
    %v2739 = vpop.f32.mrf.mxu0
    %v2740 = vadd.f32 %v2599, %v2739
    %v2741 = vpop.f32.mrf.mxu0
    %v2742 = vpop.f32.mrf.mxu0
    %v2743 = vadd.f32 %v2602, %v2742
    %v2744 = vpop.f32.mrf.mxu0
    %2745 = vmatprep.mubr.bf16.mxu0 0
    %2746 = vmatmul.mubr.bf16.gmra.mxu0 %v2673
    %v2747 = vpop.f32.mrf.mxu0
    %v2748 = vadd.f32 %v2607, %v2747
    %v2749 = vpop.f32.mrf.mxu0
    %v2750 = vpop.f32.mrf.mxu0
    %v2751 = vadd.f32 %v2610, %v2750
    %v2752 = vpop.f32.mrf.mxu0
    %2753 = vmatprep.mubr.bf16.mxu0 0
    %2754 = vmatmul.mubr.bf16.gmra.mxu0 %v2676
    %v2755 = vpop.f32.mrf.mxu0
    %v2756 = vadd.f32 %v2615, %v2755
    %v2757 = vpop.f32.mrf.mxu0
    %v2758 = vpop.f32.mrf.mxu0
    %v2759 = vadd.f32 %v2618, %v2758
    %v2760 = vpop.f32.mrf.mxu0
    %2761 = vmatprep.mubr.bf16.mxu0 0
    %2762 = vmatmul.mubr.bf16.gmra.mxu0 %v2679
    %v2763 = vpop.f32.mrf.mxu0
    %v2764 = vadd.f32 %v2623, %v2763
    %v2765 = vpop.f32.mrf.mxu0
    %v2766 = vpop.f32.mrf.mxu0
    %v2767 = vadd.f32 %v2626, %v2766
    %v2768 = vpop.f32.mrf.mxu0
    %2769 = vdwg.mxu0
    %2770 = vrot.lane.b32.xlu0 %v684, 64
    %v2771 = vpop.permute.xlu0 %2770
    %2772 = vrot.lane.b32.xlu0 %v692, 64
    %v2773 = vpop.permute.xlu0 %2772
    %v2775 = vsel %vm708, %v2771, 0
    %v2778 = vsel %vm708, %v2773, 0
    %2780 = vmatprep.subr.bf16.mxu0 0
    %2781 = vmatpush1.bf16.xpose.msra.mxu0 0
    %2782 = vmatprep.subr.bf16.mxu0 0
    %2783 = vmatpush1.bf16.xpose.msra.mxu0 0
    %2784 = vmatprep.subr.bf16.mxu0 0
    %2785 = vmatpush1.bf16.xpose.msra.mxu0 0
    %2786 = vmatprep.subr.bf16.mxu0 0
    %2787 = vmatpush1.bf16.xpose.msra.mxu0 0
    %2788 = vmatprep.subr.bf16.mxu0 0
    %2789 = vmatpush1.bf16.xpose.msra.mxu0 0
    %2790 = vmatprep.subr.bf16.mxu0 0
    %2791 = vmatpush1.bf16.xpose.msra.mxu0 0
    %2792 = vmatprep.subr.bf16.mxu0 0
    %2793 = vmatpush1.bf16.xpose.msra.mxu0 0
    %2794 = vmatprep.subr.bf16.mxu0 0
    %2795 = vmatpush1.bf16.xpose.msra.mxu0 %v2778
    %2796 = vmatprep.subr.bf16.mxu0 0
    %2797 = vmatpush2.bf16.xpose.msra.mxu0 0
    %2798 = vmatprep.subr.bf16.mxu0 0
    %2799 = vmatpush2.bf16.xpose.msra.mxu0 0
    %2800 = vmatprep.subr.bf16.mxu0 0
    %2801 = vmatpush2.bf16.xpose.msra.mxu0 0
    %2802 = vmatprep.subr.bf16.mxu0 0
    %2803 = vmatpush2.bf16.xpose.msra.mxu0 0
    %2804 = vmatprep.subr.bf16.mxu0 0
    %2805 = vmatpush2.bf16.xpose.msra.mxu0 0
    %2806 = vmatprep.subr.bf16.mxu0 0
    %2807 = vmatpush2.bf16.xpose.msra.mxu0 0
    %2808 = vmatprep.subr.bf16.mxu0 0
    %2809 = vmatpush2.bf16.xpose.msra.mxu0 0
    %2810 = vmatprep.subr.bf16.mxu0 0
    %2811 = vmatpush2.bf16.xpose.msra.mxu0 0
    %2812 = vmatprep.mubr.bf16.mxu0 0
    %2813 = vmatmul.mubr.bf16.gmra.mxu0 %v2775
    %v2814 = vpop.f32.mrf.mxu0
    %v2815 = vadd.f32 0.0, %v2814
    %v2816 = vpop.f32.mrf.mxu0
    %v2817 = vpop.f32.mrf.mxu0
    %v2818 = vpop.f32.mrf.mxu0
    %2819 = vdwg.mxu0
    %2820 = vrot.lane.b32.xlu0 %v685, 64
    %v2821 = vpop.permute.xlu0 %2820
    %2822 = vrot.lane.b32.xlu0 %v693, 64
    %v2823 = vpop.permute.xlu0 %2822
    %v2825 = vsel %vm708, %v2821, 0
    %v2828 = vsel %vm708, %v2823, 0
    %2830 = vmatprep.subr.bf16.mxu0 0
    %2831 = vmatpush1.bf16.xpose.msra.mxu0 0
    %2832 = vmatprep.subr.bf16.mxu0 0
    %2833 = vmatpush1.bf16.xpose.msra.mxu0 0
    %2834 = vmatprep.subr.bf16.mxu0 0
    %2835 = vmatpush1.bf16.xpose.msra.mxu0 0
    %2836 = vmatprep.subr.bf16.mxu0 0
    %2837 = vmatpush1.bf16.xpose.msra.mxu0 0
    %2838 = vmatprep.subr.bf16.mxu0 0
    %2839 = vmatpush1.bf16.xpose.msra.mxu0 0
    %2840 = vmatprep.subr.bf16.mxu0 0
    %2841 = vmatpush1.bf16.xpose.msra.mxu0 0
    %2842 = vmatprep.subr.bf16.mxu0 0
    %2843 = vmatpush1.bf16.xpose.msra.mxu0 0
    %2844 = vmatprep.subr.bf16.mxu0 0
    %2845 = vmatpush1.bf16.xpose.msra.mxu0 %v2828
    %2846 = vmatprep.subr.bf16.mxu0 0
    %2847 = vmatpush2.bf16.xpose.msra.mxu0 0
    %2848 = vmatprep.subr.bf16.mxu0 0
    %2849 = vmatpush2.bf16.xpose.msra.mxu0 0
    %2850 = vmatprep.subr.bf16.mxu0 0
    %2851 = vmatpush2.bf16.xpose.msra.mxu0 0
    %2852 = vmatprep.subr.bf16.mxu0 0
    %2853 = vmatpush2.bf16.xpose.msra.mxu0 0
    %2854 = vmatprep.subr.bf16.mxu0 0
    %2855 = vmatpush2.bf16.xpose.msra.mxu0 0
    %2856 = vmatprep.subr.bf16.mxu0 0
    %2857 = vmatpush2.bf16.xpose.msra.mxu0 0
    %2858 = vmatprep.subr.bf16.mxu0 0
    %2859 = vmatpush2.bf16.xpose.msra.mxu0 0
    %2860 = vmatprep.subr.bf16.mxu0 0
    %2861 = vmatpush2.bf16.xpose.msra.mxu0 0
    %2862 = vmatprep.mubr.bf16.mxu0 0
    %2863 = vmatmul.mubr.bf16.gmra.mxu0 %v2825
    %v2864 = vpop.f32.mrf.mxu0
    %v2865 = vadd.f32 0.0, %v2864
    %v2866 = vpop.f32.mrf.mxu0
    %v2867 = vpop.f32.mrf.mxu0
    %v2868 = vpop.f32.mrf.mxu0
    %2869 = vdwg.mxu0
    %2870 = vrot.lane.b32.xlu0 %v686, 64
    %v2871 = vpop.permute.xlu0 %2870
    %2872 = vrot.lane.b32.xlu0 %v694, 64
    %v2873 = vpop.permute.xlu0 %2872
    %v2875 = vsel %vm708, %v2871, 0
    %v2878 = vsel %vm708, %v2873, 0
    %2880 = vmatprep.subr.bf16.mxu0 0
    %2881 = vmatpush1.bf16.xpose.msra.mxu0 0
    %2882 = vmatprep.subr.bf16.mxu0 0
    %2883 = vmatpush1.bf16.xpose.msra.mxu0 0
    %2884 = vmatprep.subr.bf16.mxu0 0
    %2885 = vmatpush1.bf16.xpose.msra.mxu0 0
    %2886 = vmatprep.subr.bf16.mxu0 0
    %2887 = vmatpush1.bf16.xpose.msra.mxu0 0
    %2888 = vmatprep.subr.bf16.mxu0 0
    %2889 = vmatpush1.bf16.xpose.msra.mxu0 0
    %2890 = vmatprep.subr.bf16.mxu0 0
    %2891 = vmatpush1.bf16.xpose.msra.mxu0 0
    %2892 = vmatprep.subr.bf16.mxu0 0
    %2893 = vmatpush1.bf16.xpose.msra.mxu0 0
    %2894 = vmatprep.subr.bf16.mxu0 0
    %2895 = vmatpush1.bf16.xpose.msra.mxu0 %v2878
    %2896 = vmatprep.subr.bf16.mxu0 0
    %2897 = vmatpush2.bf16.xpose.msra.mxu0 0
    %2898 = vmatprep.subr.bf16.mxu0 0
    %2899 = vmatpush2.bf16.xpose.msra.mxu0 0
    %2900 = vmatprep.subr.bf16.mxu0 0
    %2901 = vmatpush2.bf16.xpose.msra.mxu0 0
    %2902 = vmatprep.subr.bf16.mxu0 0
    %2903 = vmatpush2.bf16.xpose.msra.mxu0 0
    %2904 = vmatprep.subr.bf16.mxu0 0
    %2905 = vmatpush2.bf16.xpose.msra.mxu0 0
    %2906 = vmatprep.subr.bf16.mxu0 0
    %2907 = vmatpush2.bf16.xpose.msra.mxu0 0
    %2908 = vmatprep.subr.bf16.mxu0 0
    %2909 = vmatpush2.bf16.xpose.msra.mxu0 0
    %2910 = vmatprep.subr.bf16.mxu0 0
    %2911 = vmatpush2.bf16.xpose.msra.mxu0 0
    %2912 = vmatprep.mubr.bf16.mxu0 0
    %2913 = vmatmul.mubr.bf16.gmra.mxu0 %v2875
    %v2914 = vpop.f32.mrf.mxu0
    %v2915 = vadd.f32 0.0, %v2914
    %v2916 = vpop.f32.mrf.mxu0
    %v2917 = vpop.f32.mrf.mxu0
    %v2918 = vpop.f32.mrf.mxu0
    %2919 = vdwg.mxu0
    %2920 = vrot.lane.b32.xlu0 %v687, 64
    %v2921 = vpop.permute.xlu0 %2920
    %2922 = vrot.lane.b32.xlu0 %v695, 64
    %v2923 = vpop.permute.xlu0 %2922
    %v2925 = vsel %vm708, %v2921, 0
    %v2928 = vsel %vm708, %v2923, 0
    %2930 = vmatprep.subr.bf16.mxu0 0
    %2931 = vmatpush1.bf16.xpose.msra.mxu0 0
    %2932 = vmatprep.subr.bf16.mxu0 0
    %2933 = vmatpush1.bf16.xpose.msra.mxu0 0
    %2934 = vmatprep.subr.bf16.mxu0 0
    %2935 = vmatpush1.bf16.xpose.msra.mxu0 0
    %2936 = vmatprep.subr.bf16.mxu0 0
    %2937 = vmatpush1.bf16.xpose.msra.mxu0 0
    %2938 = vmatprep.subr.bf16.mxu0 0
    %2939 = vmatpush1.bf16.xpose.msra.mxu0 0
    %2940 = vmatprep.subr.bf16.mxu0 0
    %2941 = vmatpush1.bf16.xpose.msra.mxu0 0
    %2942 = vmatprep.subr.bf16.mxu0 0
    %2943 = vmatpush1.bf16.xpose.msra.mxu0 0
    %2944 = vmatprep.subr.bf16.mxu0 0
    %2945 = vmatpush1.bf16.xpose.msra.mxu0 %v2928
    %2946 = vmatprep.subr.bf16.mxu0 0
    %2947 = vmatpush2.bf16.xpose.msra.mxu0 0
    %2948 = vmatprep.subr.bf16.mxu0 0
    %2949 = vmatpush2.bf16.xpose.msra.mxu0 0
    %2950 = vmatprep.subr.bf16.mxu0 0
    %2951 = vmatpush2.bf16.xpose.msra.mxu0 0
    %2952 = vmatprep.subr.bf16.mxu0 0
    %2953 = vmatpush2.bf16.xpose.msra.mxu0 0
    %2954 = vmatprep.subr.bf16.mxu0 0
    %2955 = vmatpush2.bf16.xpose.msra.mxu0 0
    %2956 = vmatprep.subr.bf16.mxu0 0
    %2957 = vmatpush2.bf16.xpose.msra.mxu0 0
    %2958 = vmatprep.subr.bf16.mxu0 0
    %2959 = vmatpush2.bf16.xpose.msra.mxu0 0
    %2960 = vmatprep.subr.bf16.mxu0 0
    %2961 = vmatpush2.bf16.xpose.msra.mxu0 0
    %2962 = vmatprep.mubr.bf16.mxu0 0
    %2963 = vmatmul.mubr.bf16.gmra.mxu0 %v2925
    %v2964 = vpop.f32.mrf.mxu0
    %v2965 = vadd.f32 0.0, %v2964
    %v2966 = vpop.f32.mrf.mxu0
    %v2967 = vpop.f32.mrf.mxu0
    %v2968 = vpop.f32.mrf.mxu0
    %2969 = vdwg.mxu0
    %2970 = vrot.lane.b32.xlu0 %v688, 64
    %v2971 = vpop.permute.xlu0 %2970
    %2972 = vrot.lane.b32.xlu0 %v696, 64
    %v2973 = vpop.permute.xlu0 %2972
    %v2975 = vsel %vm708, %v2971, 0
    %v2978 = vsel %vm708, %v2973, 0
    %2980 = vmatprep.subr.bf16.mxu0 0
    %2981 = vmatpush1.bf16.xpose.msra.mxu0 0
    %2982 = vmatprep.subr.bf16.mxu0 0
    %2983 = vmatpush1.bf16.xpose.msra.mxu0 0
    %2984 = vmatprep.subr.bf16.mxu0 0
    %2985 = vmatpush1.bf16.xpose.msra.mxu0 0
    %2986 = vmatprep.subr.bf16.mxu0 0
    %2987 = vmatpush1.bf16.xpose.msra.mxu0 0
    %2988 = vmatprep.subr.bf16.mxu0 0
    %2989 = vmatpush1.bf16.xpose.msra.mxu0 0
    %2990 = vmatprep.subr.bf16.mxu0 0
    %2991 = vmatpush1.bf16.xpose.msra.mxu0 0
    %2992 = vmatprep.subr.bf16.mxu0 0
    %2993 = vmatpush1.bf16.xpose.msra.mxu0 0
    %2994 = vmatprep.subr.bf16.mxu0 0
    %2995 = vmatpush1.bf16.xpose.msra.mxu0 %v2978
    %2996 = vmatprep.subr.bf16.mxu0 0
    %2997 = vmatpush2.bf16.xpose.msra.mxu0 0
    %2998 = vmatprep.subr.bf16.mxu0 0
    %2999 = vmatpush2.bf16.xpose.msra.mxu0 0
    %3000 = vmatprep.subr.bf16.mxu0 0
    %3001 = vmatpush2.bf16.xpose.msra.mxu0 0
    %3002 = vmatprep.subr.bf16.mxu0 0
    %3003 = vmatpush2.bf16.xpose.msra.mxu0 0
    %3004 = vmatprep.subr.bf16.mxu0 0
    %3005 = vmatpush2.bf16.xpose.msra.mxu0 0
    %3006 = vmatprep.subr.bf16.mxu0 0
    %3007 = vmatpush2.bf16.xpose.msra.mxu0 0
    %3008 = vmatprep.subr.bf16.mxu0 0
    %3009 = vmatpush2.bf16.xpose.msra.mxu0 0
    %3010 = vmatprep.subr.bf16.mxu0 0
    %3011 = vmatpush2.bf16.xpose.msra.mxu0 0
    %3012 = vmatprep.mubr.bf16.mxu0 0
    %3013 = vmatmul.mubr.bf16.gmra.mxu0 %v2975
    %v3014 = vpop.f32.mrf.mxu0
    %v3015 = vadd.f32 0.0, %v3014
    %v3016 = vpop.f32.mrf.mxu0
    %v3017 = vpop.f32.mrf.mxu0
    %v3018 = vpop.f32.mrf.mxu0
    %3019 = vdwg.mxu0
    %3020 = vrot.lane.b32.xlu0 %v689, 64
    %v3021 = vpop.permute.xlu0 %3020
    %3022 = vrot.lane.b32.xlu0 %v697, 64
    %v3023 = vpop.permute.xlu0 %3022
    %v3025 = vsel %vm708, %v3021, 0
    %v3028 = vsel %vm708, %v3023, 0
    %3030 = vmatprep.subr.bf16.mxu0 0
    %3031 = vmatpush1.bf16.xpose.msra.mxu0 0
    %3032 = vmatprep.subr.bf16.mxu0 0
    %3033 = vmatpush1.bf16.xpose.msra.mxu0 0
    %3034 = vmatprep.subr.bf16.mxu0 0
    %3035 = vmatpush1.bf16.xpose.msra.mxu0 0
    %3036 = vmatprep.subr.bf16.mxu0 0
    %3037 = vmatpush1.bf16.xpose.msra.mxu0 0
    %3038 = vmatprep.subr.bf16.mxu0 0
    %3039 = vmatpush1.bf16.xpose.msra.mxu0 0
    %3040 = vmatprep.subr.bf16.mxu0 0
    %3041 = vmatpush1.bf16.xpose.msra.mxu0 0
    %3042 = vmatprep.subr.bf16.mxu0 0
    %3043 = vmatpush1.bf16.xpose.msra.mxu0 0
    %3044 = vmatprep.subr.bf16.mxu0 0
    %3045 = vmatpush1.bf16.xpose.msra.mxu0 %v3028
    %3046 = vmatprep.subr.bf16.mxu0 0
    %3047 = vmatpush2.bf16.xpose.msra.mxu0 0
    %3048 = vmatprep.subr.bf16.mxu0 0
    %3049 = vmatpush2.bf16.xpose.msra.mxu0 0
    %3050 = vmatprep.subr.bf16.mxu0 0
    %3051 = vmatpush2.bf16.xpose.msra.mxu0 0
    %3052 = vmatprep.subr.bf16.mxu0 0
    %3053 = vmatpush2.bf16.xpose.msra.mxu0 0
    %3054 = vmatprep.subr.bf16.mxu0 0
    %3055 = vmatpush2.bf16.xpose.msra.mxu0 0
    %3056 = vmatprep.subr.bf16.mxu0 0
    %3057 = vmatpush2.bf16.xpose.msra.mxu0 0
    %3058 = vmatprep.subr.bf16.mxu0 0
    %3059 = vmatpush2.bf16.xpose.msra.mxu0 0
    %3060 = vmatprep.subr.bf16.mxu0 0
    %3061 = vmatpush2.bf16.xpose.msra.mxu0 0
    %3062 = vmatprep.mubr.bf16.mxu0 0
    %3063 = vmatmul.mubr.bf16.gmra.mxu0 %v3025
    %v3064 = vpop.f32.mrf.mxu0
    %v3065 = vadd.f32 0.0, %v3064
    %v3066 = vpop.f32.mrf.mxu0
    %v3067 = vpop.f32.mrf.mxu0
    %v3068 = vpop.f32.mrf.mxu0
    %3069 = vdwg.mxu0
    %3070 = vrot.lane.b32.xlu0 %v690, 64
    %v3071 = vpop.permute.xlu0 %3070
    %3072 = vrot.lane.b32.xlu0 %v698, 64
    %v3073 = vpop.permute.xlu0 %3072
    %v3075 = vsel %vm708, %v3071, 0
    %v3078 = vsel %vm708, %v3073, 0
    %3080 = vmatprep.subr.bf16.mxu0 0
    %3081 = vmatpush1.bf16.xpose.msra.mxu0 0
    %3082 = vmatprep.subr.bf16.mxu0 0
    %3083 = vmatpush1.bf16.xpose.msra.mxu0 0
    %3084 = vmatprep.subr.bf16.mxu0 0
    %3085 = vmatpush1.bf16.xpose.msra.mxu0 0
    %3086 = vmatprep.subr.bf16.mxu0 0
    %3087 = vmatpush1.bf16.xpose.msra.mxu0 0
    %3088 = vmatprep.subr.bf16.mxu0 0
    %3089 = vmatpush1.bf16.xpose.msra.mxu0 0
    %3090 = vmatprep.subr.bf16.mxu0 0
    %3091 = vmatpush1.bf16.xpose.msra.mxu0 0
    %3092 = vmatprep.subr.bf16.mxu0 0
    %3093 = vmatpush1.bf16.xpose.msra.mxu0 0
    %3094 = vmatprep.subr.bf16.mxu0 0
    %3095 = vmatpush1.bf16.xpose.msra.mxu0 %v3078
    %3096 = vmatprep.subr.bf16.mxu0 0
    %3097 = vmatpush2.bf16.xpose.msra.mxu0 0
    %3098 = vmatprep.subr.bf16.mxu0 0
    %3099 = vmatpush2.bf16.xpose.msra.mxu0 0
    %3100 = vmatprep.subr.bf16.mxu0 0
    %3101 = vmatpush2.bf16.xpose.msra.mxu0 0
    %3102 = vmatprep.subr.bf16.mxu0 0
    %3103 = vmatpush2.bf16.xpose.msra.mxu0 0
    %3104 = vmatprep.subr.bf16.mxu0 0
    %3105 = vmatpush2.bf16.xpose.msra.mxu0 0
    %3106 = vmatprep.subr.bf16.mxu0 0
    %3107 = vmatpush2.bf16.xpose.msra.mxu0 0
    %3108 = vmatprep.subr.bf16.mxu0 0
    %3109 = vmatpush2.bf16.xpose.msra.mxu0 0
    %3110 = vmatprep.subr.bf16.mxu0 0
    %3111 = vmatpush2.bf16.xpose.msra.mxu0 0
    %3112 = vmatprep.mubr.bf16.mxu0 0
    %3113 = vmatmul.mubr.bf16.gmra.mxu0 %v3075
    %v3114 = vpop.f32.mrf.mxu0
    %v3115 = vadd.f32 0.0, %v3114
    %v3116 = vpop.f32.mrf.mxu0
    %v3117 = vpop.f32.mrf.mxu0
    %v3118 = vpop.f32.mrf.mxu0
    %3119 = vdwg.mxu0
    %3120 = vrot.lane.b32.xlu0 %v691, 64
    %v3121 = vpop.permute.xlu0 %3120
    %3122 = vrot.lane.b32.xlu0 %v699, 64
    %v3123 = vpop.permute.xlu0 %3122
    %v3125 = vsel %vm708, %v3121, 0
    %v3128 = vsel %vm708, %v3123, 0
    %3130 = vmatprep.subr.bf16.mxu0 0
    %3131 = vmatpush1.bf16.xpose.msra.mxu0 0
    %3132 = vmatprep.subr.bf16.mxu0 0
    %3133 = vmatpush1.bf16.xpose.msra.mxu0 0
    %3134 = vmatprep.subr.bf16.mxu0 0
    %3135 = vmatpush1.bf16.xpose.msra.mxu0 0
    %3136 = vmatprep.subr.bf16.mxu0 0
    %3137 = vmatpush1.bf16.xpose.msra.mxu0 0
    %3138 = vmatprep.subr.bf16.mxu0 0
    %3139 = vmatpush1.bf16.xpose.msra.mxu0 0
    %3140 = vmatprep.subr.bf16.mxu0 0
    %3141 = vmatpush1.bf16.xpose.msra.mxu0 0
    %3142 = vmatprep.subr.bf16.mxu0 0
    %3143 = vmatpush1.bf16.xpose.msra.mxu0 0
    %3144 = vmatprep.subr.bf16.mxu0 0
    %3145 = vmatpush1.bf16.xpose.msra.mxu0 %v3128
    %3146 = vmatprep.subr.bf16.mxu0 0
    %3147 = vmatpush2.bf16.xpose.msra.mxu0 0
    %3148 = vmatprep.subr.bf16.mxu0 0
    %3149 = vmatpush2.bf16.xpose.msra.mxu0 0
    %3150 = vmatprep.subr.bf16.mxu0 0
    %3151 = vmatpush2.bf16.xpose.msra.mxu0 0
    %3152 = vmatprep.subr.bf16.mxu0 0
    %3153 = vmatpush2.bf16.xpose.msra.mxu0 0
    %3154 = vmatprep.subr.bf16.mxu0 0
    %3155 = vmatpush2.bf16.xpose.msra.mxu0 0
    %3156 = vmatprep.subr.bf16.mxu0 0
    %3157 = vmatpush2.bf16.xpose.msra.mxu0 0
    %3158 = vmatprep.subr.bf16.mxu0 0
    %3159 = vmatpush2.bf16.xpose.msra.mxu0 0
    %3160 = vmatprep.subr.bf16.mxu0 0
    %3161 = vmatpush2.bf16.xpose.msra.mxu0 0
    %3162 = vmatprep.mubr.bf16.mxu0 0
    %3163 = vmatmul.mubr.bf16.gmra.mxu0 %v3125
    %v3164 = vpop.f32.mrf.mxu0
    %v3165 = vadd.f32 0.0, %v3164
    %v3166 = vpop.f32.mrf.mxu0
    %v3167 = vpop.f32.mrf.mxu0
    %v3168 = vpop.f32.mrf.mxu0
    %3169 = vdwg.mxu0
    %v3170 = vsel %vm1077, %v2815, -inf
    %3171 = vmax.xlane.f32.xlu0 %v3170
    %v3172 = vpop.xlane.xlu0 %3171
    %v3173 = vsel %vm1077, %v2865, -inf
    %3174 = vmax.xlane.f32.xlu0 %v3173
    %v3175 = vpop.xlane.xlu0 %3174
    %v3176 = vsel %vm1077, %v2915, -inf
    %3177 = vmax.xlane.f32.xlu0 %v3176
    %v3178 = vpop.xlane.xlu0 %3177
    %v3179 = vsel %vm1077, %v2965, -inf
    %3180 = vmax.xlane.f32.xlu0 %v3179
    %v3181 = vpop.xlane.xlu0 %3180
    %v3182 = vsel %vm1077, %v3015, -inf
    %3183 = vmax.xlane.f32.xlu0 %v3182
    %v3184 = vpop.xlane.xlu0 %3183
    %v3185 = vsel %vm1077, %v3065, -inf
    %3186 = vmax.xlane.f32.xlu0 %v3185
    %v3187 = vpop.xlane.xlu0 %3186
    %v3188 = vsel %vm1077, %v3115, -inf
    %3189 = vmax.xlane.f32.xlu0 %v3188
    %v3190 = vpop.xlane.xlu0 %3189
    %v3191 = vsel %vm1077, %v3165, -inf
    %3192 = vmax.xlane.f32.xlu0 %v3191
    %v3193 = vpop.xlane.xlu0 %3192
    %v3194 = vsub.f32 %v2815, %v3172
    %v3195 = vsub.f32 %v2865, %v3175
    %v3196 = vsub.f32 %v2915, %v3178
    %v3197 = vsub.f32 %v2965, %v3181
    %v3198 = vsub.f32 %v3015, %v3184
    %v3199 = vsub.f32 %v3065, %v3187
    %v3200 = vsub.f32 %v3115, %v3190
    %v3201 = vsub.f32 %v3165, %v3193
    %v3202 = vmul.f32 %v3194, 1.442695
    %v3203 = vpow.pop %v3202
    %v3204 = vmul.f32 %v3195, 1.442695
    %v3205 = vpow.pop %v3204
    %v3206 = vmul.f32 %v3196, 1.442695
    %v3207 = vpow.pop %v3206
    %v3208 = vmul.f32 %v3197, 1.442695
    %v3209 = vpow.pop %v3208
    %v3210 = vmul.f32 %v3198, 1.442695
    %v3211 = vpow.pop %v3210
    %v3212 = vmul.f32 %v3199, 1.442695
    %v3213 = vpow.pop %v3212
    %v3214 = vmul.f32 %v3200, 1.442695
    %v3215 = vpow.pop %v3214
    %v3216 = vmul.f32 %v3201, 1.442695
    %v3217 = vpow.pop %v3216
    %v3218 = vsel %vm1077, %v3203, 0.0
    %3219 = vadd.xlane.f32.xlu0 %v3218
    %v3220 = vpop.xlane.xlu0 %3219
    %v3221 = vsel %vm1077, %v3205, 0.0
    %3222 = vadd.xlane.f32.xlu0 %v3221
    %v3223 = vpop.xlane.xlu0 %3222
    %v3224 = vsel %vm1077, %v3207, 0.0
    %3225 = vadd.xlane.f32.xlu0 %v3224
    %v3226 = vpop.xlane.xlu0 %3225
    %v3227 = vsel %vm1077, %v3209, 0.0
    %3228 = vadd.xlane.f32.xlu0 %v3227
    %v3229 = vpop.xlane.xlu0 %3228
    %v3230 = vsel %vm1077, %v3211, 0.0
    %3231 = vadd.xlane.f32.xlu0 %v3230
    %v3232 = vpop.xlane.xlu0 %3231
    %v3233 = vsel %vm1077, %v3213, 0.0
    %3234 = vadd.xlane.f32.xlu0 %v3233
    %v3235 = vpop.xlane.xlu0 %3234
    %v3236 = vsel %vm1077, %v3215, 0.0
    %3237 = vadd.xlane.f32.xlu0 %v3236
    %v3238 = vpop.xlane.xlu0 %3237
    %v3239 = vsel %vm1077, %v3217, 0.0
    %3240 = vadd.xlane.f32.xlu0 %v3239
    %v3241 = vpop.xlane.xlu0 %3240
    %v3242 = vrcp.pop %v3220
    %v3243 = vrcp.pop %v3223
    %v3244 = vrcp.pop %v3226
    %v3245 = vrcp.pop %v3229
    %v3246 = vrcp.pop %v3232
    %v3247 = vrcp.pop %v3235
    %v3248 = vrcp.pop %v3238
    %v3249 = vrcp.pop %v3241
    %v3250 = vmul.f32 %v3203, %v3242
    %v3251 = vmul.f32 %v3205, %v3243
    %v3252 = vmul.f32 %v3207, %v3244
    %v3253 = vmul.f32 %v3209, %v3245
    %v3254 = vmul.f32 %v3211, %v3246
    %v3255 = vmul.f32 %v3213, %v3247
    %v3256 = vmul.f32 %v3215, %v3248
    %v3257 = vmul.f32 %v3217, %v3249
    %v3258 = vpack.c.bf16 %v3250, %v3250
    %v3259 = vpack.c.bf16 %v3251, %v3251
    %v3260 = vpack.c.bf16 %v3252, %v3252
    %v3261 = vpack.c.bf16 %v3253, %v3253
    %v3262 = vpack.c.bf16 %v3254, %v3254
    %v3263 = vpack.c.bf16 %v3255, %v3255
    %v3264 = vpack.c.bf16 %v3256, %v3256
    %v3265 = vpack.c.bf16 %v3257, %v3257
    %3266 = vrot.lane.b32.xlu0 %v700, 64
    %v3267 = vpop.permute.xlu0 %3266
    %v3269 = vsel %vm1077, %v3258, 0
    %v3272 = vsel %vm1177, %v3267, 0
    %3274 = vmatprep.subr.bf16.mxu0 0
    %3275 = vmatpush1.bf16.msra.mxu0 0
    %3276 = vmatprep.subr.bf16.mxu0 0
    %3277 = vmatpush1.bf16.msra.mxu0 0
    %3278 = vmatprep.subr.bf16.mxu0 0
    %3279 = vmatpush1.bf16.msra.mxu0 0
    %3280 = vmatprep.subr.bf16.mxu0 0
    %3281 = vmatpush1.bf16.msra.mxu0 0
    %3282 = vmatprep.subr.bf16.mxu0 0
    %3283 = vmatpush1.bf16.msra.mxu0 0
    %3284 = vmatprep.subr.bf16.mxu0 0
    %3285 = vmatpush1.bf16.msra.mxu0 0
    %3286 = vmatprep.subr.bf16.mxu0 0
    %3287 = vmatpush1.bf16.msra.mxu0 0
    %3288 = vmatprep.subr.bf16.mxu0 0
    %3289 = vmatpush1.bf16.msra.mxu0 %v3272
    %3290 = vmatprep.subr.bf16.mxu0 0
    %3291 = vmatpush2.bf16.msra.mxu0 0
    %3292 = vmatprep.subr.bf16.mxu0 0
    %3293 = vmatpush2.bf16.msra.mxu0 0
    %3294 = vmatprep.subr.bf16.mxu0 0
    %3295 = vmatpush2.bf16.msra.mxu0 0
    %3296 = vmatprep.subr.bf16.mxu0 0
    %3297 = vmatpush2.bf16.msra.mxu0 0
    %3298 = vmatprep.subr.bf16.mxu0 0
    %3299 = vmatpush2.bf16.msra.mxu0 0
    %3300 = vmatprep.subr.bf16.mxu0 0
    %3301 = vmatpush2.bf16.msra.mxu0 0
    %3302 = vmatprep.subr.bf16.mxu0 0
    %3303 = vmatpush2.bf16.msra.mxu0 0
    %3304 = vmatprep.subr.bf16.mxu0 0
    %3305 = vmatpush2.bf16.msra.mxu0 0
    %3306 = vmatprep.mubr.bf16.mxu0 0
    %3307 = vmatmul.mubr.bf16.gmra.mxu0 %v3269
    %v3308 = vpop.f32.mrf.mxu0
    %v3309 = vadd.f32 0.0, %v3308
    %v3310 = vpop.f32.mrf.mxu0
    %v3311 = vpop.f32.mrf.mxu0
    %v3312 = vpop.f32.mrf.mxu0
    %3313 = vdwg.mxu0
    %3314 = vrot.lane.b32.xlu0 %v701, 64
    %v3315 = vpop.permute.xlu0 %3314
    %v3317 = vsel %vm1077, %v3259, 0
    %v3320 = vsel %vm1177, %v3315, 0
    %3322 = vmatprep.subr.bf16.mxu0 0
    %3323 = vmatpush1.bf16.msra.mxu0 0
    %3324 = vmatprep.subr.bf16.mxu0 0
    %3325 = vmatpush1.bf16.msra.mxu0 0
    %3326 = vmatprep.subr.bf16.mxu0 0
    %3327 = vmatpush1.bf16.msra.mxu0 0
    %3328 = vmatprep.subr.bf16.mxu0 0
    %3329 = vmatpush1.bf16.msra.mxu0 0
    %3330 = vmatprep.subr.bf16.mxu0 0
    %3331 = vmatpush1.bf16.msra.mxu0 0
    %3332 = vmatprep.subr.bf16.mxu0 0
    %3333 = vmatpush1.bf16.msra.mxu0 0
    %3334 = vmatprep.subr.bf16.mxu0 0
    %3335 = vmatpush1.bf16.msra.mxu0 0
    %3336 = vmatprep.subr.bf16.mxu0 0
    %3337 = vmatpush1.bf16.msra.mxu0 %v3320
    %3338 = vmatprep.subr.bf16.mxu0 0
    %3339 = vmatpush2.bf16.msra.mxu0 0
    %3340 = vmatprep.subr.bf16.mxu0 0
    %3341 = vmatpush2.bf16.msra.mxu0 0
    %3342 = vmatprep.subr.bf16.mxu0 0
    %3343 = vmatpush2.bf16.msra.mxu0 0
    %3344 = vmatprep.subr.bf16.mxu0 0
    %3345 = vmatpush2.bf16.msra.mxu0 0
    %3346 = vmatprep.subr.bf16.mxu0 0
    %3347 = vmatpush2.bf16.msra.mxu0 0
    %3348 = vmatprep.subr.bf16.mxu0 0
    %3349 = vmatpush2.bf16.msra.mxu0 0
    %3350 = vmatprep.subr.bf16.mxu0 0
    %3351 = vmatpush2.bf16.msra.mxu0 0
    %3352 = vmatprep.subr.bf16.mxu0 0
    %3353 = vmatpush2.bf16.msra.mxu0 0
    %3354 = vmatprep.mubr.bf16.mxu0 0
    %3355 = vmatmul.mubr.bf16.gmra.mxu0 %v3317
    %v3356 = vpop.f32.mrf.mxu0
    %v3357 = vadd.f32 0.0, %v3356
    %v3358 = vpop.f32.mrf.mxu0
    %v3359 = vpop.f32.mrf.mxu0
    %v3360 = vpop.f32.mrf.mxu0
    %3361 = vdwg.mxu0
    %3362 = vrot.lane.b32.xlu0 %v702, 64
    %v3363 = vpop.permute.xlu0 %3362
    %v3365 = vsel %vm1077, %v3260, 0
    %v3368 = vsel %vm1177, %v3363, 0
    %3370 = vmatprep.subr.bf16.mxu0 0
    %3371 = vmatpush1.bf16.msra.mxu0 0
    %3372 = vmatprep.subr.bf16.mxu0 0
    %3373 = vmatpush1.bf16.msra.mxu0 0
    %3374 = vmatprep.subr.bf16.mxu0 0
    %3375 = vmatpush1.bf16.msra.mxu0 0
    %3376 = vmatprep.subr.bf16.mxu0 0
    %3377 = vmatpush1.bf16.msra.mxu0 0
    %3378 = vmatprep.subr.bf16.mxu0 0
    %3379 = vmatpush1.bf16.msra.mxu0 0
    %3380 = vmatprep.subr.bf16.mxu0 0
    %3381 = vmatpush1.bf16.msra.mxu0 0
    %3382 = vmatprep.subr.bf16.mxu0 0
    %3383 = vmatpush1.bf16.msra.mxu0 0
    %3384 = vmatprep.subr.bf16.mxu0 0
    %3385 = vmatpush1.bf16.msra.mxu0 %v3368
    %3386 = vmatprep.subr.bf16.mxu0 0
    %3387 = vmatpush2.bf16.msra.mxu0 0
    %3388 = vmatprep.subr.bf16.mxu0 0
    %3389 = vmatpush2.bf16.msra.mxu0 0
    %3390 = vmatprep.subr.bf16.mxu0 0
    %3391 = vmatpush2.bf16.msra.mxu0 0
    %3392 = vmatprep.subr.bf16.mxu0 0
    %3393 = vmatpush2.bf16.msra.mxu0 0
    %3394 = vmatprep.subr.bf16.mxu0 0
    %3395 = vmatpush2.bf16.msra.mxu0 0
    %3396 = vmatprep.subr.bf16.mxu0 0
    %3397 = vmatpush2.bf16.msra.mxu0 0
    %3398 = vmatprep.subr.bf16.mxu0 0
    %3399 = vmatpush2.bf16.msra.mxu0 0
    %3400 = vmatprep.subr.bf16.mxu0 0
    %3401 = vmatpush2.bf16.msra.mxu0 0
    %3402 = vmatprep.mubr.bf16.mxu0 0
    %3403 = vmatmul.mubr.bf16.gmra.mxu0 %v3365
    %v3404 = vpop.f32.mrf.mxu0
    %v3405 = vadd.f32 0.0, %v3404
    %v3406 = vpop.f32.mrf.mxu0
    %v3407 = vpop.f32.mrf.mxu0
    %v3408 = vpop.f32.mrf.mxu0
    %3409 = vdwg.mxu0
    %3410 = vrot.lane.b32.xlu0 %v703, 64
    %v3411 = vpop.permute.xlu0 %3410
    %v3413 = vsel %vm1077, %v3261, 0
    %v3416 = vsel %vm1177, %v3411, 0
    %3418 = vmatprep.subr.bf16.mxu0 0
    %3419 = vmatpush1.bf16.msra.mxu0 0
    %3420 = vmatprep.subr.bf16.mxu0 0
    %3421 = vmatpush1.bf16.msra.mxu0 0
    %3422 = vmatprep.subr.bf16.mxu0 0
    %3423 = vmatpush1.bf16.msra.mxu0 0
    %3424 = vmatprep.subr.bf16.mxu0 0
    %3425 = vmatpush1.bf16.msra.mxu0 0
    %3426 = vmatprep.subr.bf16.mxu0 0
    %3427 = vmatpush1.bf16.msra.mxu0 0
    %3428 = vmatprep.subr.bf16.mxu0 0
    %3429 = vmatpush1.bf16.msra.mxu0 0
    %3430 = vmatprep.subr.bf16.mxu0 0
    %3431 = vmatpush1.bf16.msra.mxu0 0
    %3432 = vmatprep.subr.bf16.mxu0 0
    %3433 = vmatpush1.bf16.msra.mxu0 %v3416
    %3434 = vmatprep.subr.bf16.mxu0 0
    %3435 = vmatpush2.bf16.msra.mxu0 0
    %3436 = vmatprep.subr.bf16.mxu0 0
    %3437 = vmatpush2.bf16.msra.mxu0 0
    %3438 = vmatprep.subr.bf16.mxu0 0
    %3439 = vmatpush2.bf16.msra.mxu0 0
    %3440 = vmatprep.subr.bf16.mxu0 0
    %3441 = vmatpush2.bf16.msra.mxu0 0
    %3442 = vmatprep.subr.bf16.mxu0 0
    %3443 = vmatpush2.bf16.msra.mxu0 0
    %3444 = vmatprep.subr.bf16.mxu0 0
    %3445 = vmatpush2.bf16.msra.mxu0 0
    %3446 = vmatprep.subr.bf16.mxu0 0
    %3447 = vmatpush2.bf16.msra.mxu0 0
    %3448 = vmatprep.subr.bf16.mxu0 0
    %3449 = vmatpush2.bf16.msra.mxu0 0
    %3450 = vmatprep.mubr.bf16.mxu0 0
    %3451 = vmatmul.mubr.bf16.gmra.mxu0 %v3413
    %v3452 = vpop.f32.mrf.mxu0
    %v3453 = vadd.f32 0.0, %v3452
    %v3454 = vpop.f32.mrf.mxu0
    %v3455 = vpop.f32.mrf.mxu0
    %v3456 = vpop.f32.mrf.mxu0
    %3457 = vdwg.mxu0
    %3458 = vrot.lane.b32.xlu0 %v704, 64
    %v3459 = vpop.permute.xlu0 %3458
    %v3461 = vsel %vm1077, %v3262, 0
    %v3464 = vsel %vm1177, %v3459, 0
    %3466 = vmatprep.subr.bf16.mxu0 0
    %3467 = vmatpush1.bf16.msra.mxu0 0
    %3468 = vmatprep.subr.bf16.mxu0 0
    %3469 = vmatpush1.bf16.msra.mxu0 0
    %3470 = vmatprep.subr.bf16.mxu0 0
    %3471 = vmatpush1.bf16.msra.mxu0 0
    %3472 = vmatprep.subr.bf16.mxu0 0
    %3473 = vmatpush1.bf16.msra.mxu0 0
    %3474 = vmatprep.subr.bf16.mxu0 0
    %3475 = vmatpush1.bf16.msra.mxu0 0
    %3476 = vmatprep.subr.bf16.mxu0 0
    %3477 = vmatpush1.bf16.msra.mxu0 0
    %3478 = vmatprep.subr.bf16.mxu0 0
    %3479 = vmatpush1.bf16.msra.mxu0 0
    %3480 = vmatprep.subr.bf16.mxu0 0
    %3481 = vmatpush1.bf16.msra.mxu0 %v3464
    %3482 = vmatprep.subr.bf16.mxu0 0
    %3483 = vmatpush2.bf16.msra.mxu0 0
    %3484 = vmatprep.subr.bf16.mxu0 0
    %3485 = vmatpush2.bf16.msra.mxu0 0
    %3486 = vmatprep.subr.bf16.mxu0 0
    %3487 = vmatpush2.bf16.msra.mxu0 0
    %3488 = vmatprep.subr.bf16.mxu0 0
    %3489 = vmatpush2.bf16.msra.mxu0 0
    %3490 = vmatprep.subr.bf16.mxu0 0
    %3491 = vmatpush2.bf16.msra.mxu0 0
    %3492 = vmatprep.subr.bf16.mxu0 0
    %3493 = vmatpush2.bf16.msra.mxu0 0
    %3494 = vmatprep.subr.bf16.mxu0 0
    %3495 = vmatpush2.bf16.msra.mxu0 0
    %3496 = vmatprep.subr.bf16.mxu0 0
    %3497 = vmatpush2.bf16.msra.mxu0 0
    %3498 = vmatprep.mubr.bf16.mxu0 0
    %3499 = vmatmul.mubr.bf16.gmra.mxu0 %v3461
    %v3500 = vpop.f32.mrf.mxu0
    %v3501 = vadd.f32 0.0, %v3500
    %v3502 = vpop.f32.mrf.mxu0
    %v3503 = vpop.f32.mrf.mxu0
    %v3504 = vpop.f32.mrf.mxu0
    %3505 = vdwg.mxu0
    %3506 = vrot.lane.b32.xlu0 %v705, 64
    %v3507 = vpop.permute.xlu0 %3506
    %v3509 = vsel %vm1077, %v3263, 0
    %v3512 = vsel %vm1177, %v3507, 0
    %3514 = vmatprep.subr.bf16.mxu0 0
    %3515 = vmatpush1.bf16.msra.mxu0 0
    %3516 = vmatprep.subr.bf16.mxu0 0
    %3517 = vmatpush1.bf16.msra.mxu0 0
    %3518 = vmatprep.subr.bf16.mxu0 0
    %3519 = vmatpush1.bf16.msra.mxu0 0
    %3520 = vmatprep.subr.bf16.mxu0 0
    %3521 = vmatpush1.bf16.msra.mxu0 0
    %3522 = vmatprep.subr.bf16.mxu0 0
    %3523 = vmatpush1.bf16.msra.mxu0 0
    %3524 = vmatprep.subr.bf16.mxu0 0
    %3525 = vmatpush1.bf16.msra.mxu0 0
    %3526 = vmatprep.subr.bf16.mxu0 0
    %3527 = vmatpush1.bf16.msra.mxu0 0
    %3528 = vmatprep.subr.bf16.mxu0 0
    %3529 = vmatpush1.bf16.msra.mxu0 %v3512
    %3530 = vmatprep.subr.bf16.mxu0 0
    %3531 = vmatpush2.bf16.msra.mxu0 0
    %3532 = vmatprep.subr.bf16.mxu0 0
    %3533 = vmatpush2.bf16.msra.mxu0 0
    %3534 = vmatprep.subr.bf16.mxu0 0
    %3535 = vmatpush2.bf16.msra.mxu0 0
    %3536 = vmatprep.subr.bf16.mxu0 0
    %3537 = vmatpush2.bf16.msra.mxu0 0
    %3538 = vmatprep.subr.bf16.mxu0 0
    %3539 = vmatpush2.bf16.msra.mxu0 0
    %3540 = vmatprep.subr.bf16.mxu0 0
    %3541 = vmatpush2.bf16.msra.mxu0 0
    %3542 = vmatprep.subr.bf16.mxu0 0
    %3543 = vmatpush2.bf16.msra.mxu0 0
    %3544 = vmatprep.subr.bf16.mxu0 0
    %3545 = vmatpush2.bf16.msra.mxu0 0
    %3546 = vmatprep.mubr.bf16.mxu0 0
    %3547 = vmatmul.mubr.bf16.gmra.mxu0 %v3509
    %v3548 = vpop.f32.mrf.mxu0
    %v3549 = vadd.f32 0.0, %v3548
    %v3550 = vpop.f32.mrf.mxu0
    %v3551 = vpop.f32.mrf.mxu0
    %v3552 = vpop.f32.mrf.mxu0
    %3553 = vdwg.mxu0
    %3554 = vrot.lane.b32.xlu0 %v706, 64
    %v3555 = vpop.permute.xlu0 %3554
    %v3557 = vsel %vm1077, %v3264, 0
    %v3560 = vsel %vm1177, %v3555, 0
    %3562 = vmatprep.subr.bf16.mxu0 0
    %3563 = vmatpush1.bf16.msra.mxu0 0
    %3564 = vmatprep.subr.bf16.mxu0 0
    %3565 = vmatpush1.bf16.msra.mxu0 0
    %3566 = vmatprep.subr.bf16.mxu0 0
    %3567 = vmatpush1.bf16.msra.mxu0 0
    %3568 = vmatprep.subr.bf16.mxu0 0
    %3569 = vmatpush1.bf16.msra.mxu0 0
    %3570 = vmatprep.subr.bf16.mxu0 0
    %3571 = vmatpush1.bf16.msra.mxu0 0
    %3572 = vmatprep.subr.bf16.mxu0 0
    %3573 = vmatpush1.bf16.msra.mxu0 0
    %3574 = vmatprep.subr.bf16.mxu0 0
    %3575 = vmatpush1.bf16.msra.mxu0 0
    %3576 = vmatprep.subr.bf16.mxu0 0
    %3577 = vmatpush1.bf16.msra.mxu0 %v3560
    %3578 = vmatprep.subr.bf16.mxu0 0
    %3579 = vmatpush2.bf16.msra.mxu0 0
    %3580 = vmatprep.subr.bf16.mxu0 0
    %3581 = vmatpush2.bf16.msra.mxu0 0
    %3582 = vmatprep.subr.bf16.mxu0 0
    %3583 = vmatpush2.bf16.msra.mxu0 0
    %3584 = vmatprep.subr.bf16.mxu0 0
    %3585 = vmatpush2.bf16.msra.mxu0 0
    %3586 = vmatprep.subr.bf16.mxu0 0
    %3587 = vmatpush2.bf16.msra.mxu0 0
    %3588 = vmatprep.subr.bf16.mxu0 0
    %3589 = vmatpush2.bf16.msra.mxu0 0
    %3590 = vmatprep.subr.bf16.mxu0 0
    %3591 = vmatpush2.bf16.msra.mxu0 0
    %3592 = vmatprep.subr.bf16.mxu0 0
    %3593 = vmatpush2.bf16.msra.mxu0 0
    %3594 = vmatprep.mubr.bf16.mxu0 0
    %3595 = vmatmul.mubr.bf16.gmra.mxu0 %v3557
    %v3596 = vpop.f32.mrf.mxu0
    %v3597 = vadd.f32 0.0, %v3596
    %v3598 = vpop.f32.mrf.mxu0
    %v3599 = vpop.f32.mrf.mxu0
    %v3600 = vpop.f32.mrf.mxu0
    %3601 = vdwg.mxu0
    %3602 = vrot.lane.b32.xlu0 %v707, 64
    %v3603 = vpop.permute.xlu0 %3602
    %v3605 = vsel %vm1077, %v3265, 0
    %v3608 = vsel %vm1177, %v3603, 0
    %3610 = vmatprep.subr.bf16.mxu0 0
    %3611 = vmatpush1.bf16.msra.mxu0 0
    %3612 = vmatprep.subr.bf16.mxu0 0
    %3613 = vmatpush1.bf16.msra.mxu0 0
    %3614 = vmatprep.subr.bf16.mxu0 0
    %3615 = vmatpush1.bf16.msra.mxu0 0
    %3616 = vmatprep.subr.bf16.mxu0 0
    %3617 = vmatpush1.bf16.msra.mxu0 0
    %3618 = vmatprep.subr.bf16.mxu0 0
    %3619 = vmatpush1.bf16.msra.mxu0 0
    %3620 = vmatprep.subr.bf16.mxu0 0
    %3621 = vmatpush1.bf16.msra.mxu0 0
    %3622 = vmatprep.subr.bf16.mxu0 0
    %3623 = vmatpush1.bf16.msra.mxu0 0
    %3624 = vmatprep.subr.bf16.mxu0 0
    %3625 = vmatpush1.bf16.msra.mxu0 %v3608
    %3626 = vmatprep.subr.bf16.mxu0 0
    %3627 = vmatpush2.bf16.msra.mxu0 0
    %3628 = vmatprep.subr.bf16.mxu0 0
    %3629 = vmatpush2.bf16.msra.mxu0 0
    %3630 = vmatprep.subr.bf16.mxu0 0
    %3631 = vmatpush2.bf16.msra.mxu0 0
    %3632 = vmatprep.subr.bf16.mxu0 0
    %3633 = vmatpush2.bf16.msra.mxu0 0
    %3634 = vmatprep.subr.bf16.mxu0 0
    %3635 = vmatpush2.bf16.msra.mxu0 0
    %3636 = vmatprep.subr.bf16.mxu0 0
    %3637 = vmatpush2.bf16.msra.mxu0 0
    %3638 = vmatprep.subr.bf16.mxu0 0
    %3639 = vmatpush2.bf16.msra.mxu0 0
    %3640 = vmatprep.subr.bf16.mxu0 0
    %3641 = vmatpush2.bf16.msra.mxu0 0
    %3642 = vmatprep.mubr.bf16.mxu0 0
    %3643 = vmatmul.mubr.bf16.gmra.mxu0 %v3605
    %v3644 = vpop.f32.mrf.mxu0
    %v3645 = vadd.f32 0.0, %v3644
    %v3646 = vpop.f32.mrf.mxu0
    %v3647 = vpop.f32.mrf.mxu0
    %v3648 = vpop.f32.mrf.mxu0
    %3649 = vdwg.mxu0
    %s3650 = scalar_lea.vmem %s6, 128
    %v3651 = vld [vmem:[%s3650] sm:$0xf]
    %v3652 = vld [vmem:[%s3650 + $0x4] sm:$0xf]
    %v3653 = vld [vmem:[%s3650 + $0x8] sm:$0xf]
    %v3654 = vld [vmem:[%s3650 + $0xc] sm:$0xf]
    %v3655 = vld [vmem:[%s3650 + $0x10] sm:$0xf]
    %v3656 = vld [vmem:[%s3650 + $0x14] sm:$0xf]
    %v3657 = vld [vmem:[%s3650 + $0x18] sm:$0xf]
    %v3658 = vld [vmem:[%s3650 + $0x1c] sm:$0xf]
    %v3659 = vld [vmem:[%s3650 + $0x20] sm:$0xf]
    %v3660 = vld [vmem:[%s3650 + $0x24] sm:$0xf]
    %v3661 = vld [vmem:[%s3650 + $0x28] sm:$0xf]
    %v3662 = vld [vmem:[%s3650 + $0x2c] sm:$0xf]
    %v3663 = vld [vmem:[%s3650 + $0x30] sm:$0xf]
    %v3664 = vld [vmem:[%s3650 + $0x34] sm:$0xf]
    %v3665 = vld [vmem:[%s3650 + $0x38] sm:$0xf]
    %v3666 = vld [vmem:[%s3650 + $0x3c] sm:$0xf]
    %v3667 = vpack.c.bf16 %v3357, %v3309
    %v3668 = vpack.c.bf16 %v3453, %v3405
    %v3669 = vpack.c.bf16 %v3549, %v3501
    %v3670 = vpack.c.bf16 %v3645, %v3597
    %v3687 = vunpack.c.l.b16 %v3651
    %v3688 = vunpack.c.l.b16 %v3652
    %v3689 = vunpack.c.l.b16 %v3653
    %v3690 = vunpack.c.l.b16 %v3654
    %v3691 = vunpack.c.l.b16 %v3655
    %v3692 = vunpack.c.l.b16 %v3656
    %v3693 = vunpack.c.l.b16 %v3657
    %v3694 = vunpack.c.l.b16 %v3658
    %v3695 = vunpack.c.l.b16 %v3659
    %v3696 = vunpack.c.l.b16 %v3660
    %v3697 = vunpack.c.l.b16 %v3661
    %v3698 = vunpack.c.l.b16 %v3662
    %v3699 = vunpack.c.l.b16 %v3663
    %v3700 = vunpack.c.l.b16 %v3664
    %v3701 = vunpack.c.l.b16 %v3665
    %v3702 = vunpack.c.l.b16 %v3666
    %v3703 = vpack.c.b16 %v3688, %v3687
    %v3704 = vpack.c.b16 %v3690, %v3689
    %v3705 = vpack.c.b16 %v3692, %v3691
    %v3706 = vpack.c.b16 %v3694, %v3693
    %v3707 = vpack.c.b16 %v3696, %v3695
    %v3708 = vpack.c.b16 %v3698, %v3697
    %v3709 = vpack.c.b16 %v3700, %v3699
    %v3710 = vpack.c.b16 %v3702, %v3701
    %v3712 = vsel %vm708, %v3667, 0
    %v3715 = vsel %vm708, %v3668, 0
    %v3718 = vsel %vm708, %v3669, 0
    %v3721 = vsel %vm708, %v3670, 0
    %v3724 = vsel %vm708, %v3703, 0
    %v3727 = vsel %vm708, %v3704, 0
    %v3730 = vsel %vm708, %v3705, 0
    %v3733 = vsel %vm708, %v3706, 0
    %v3736 = vsel %vm708, %v3707, 0
    %v3739 = vsel %vm708, %v3708, 0
    %v3742 = vsel %vm708, %v3709, 0
    %v3745 = vsel %vm708, %v3710, 0
    %3747 = vmatprep.subr.bf16.mxu0 0
    %3748 = vmatpush1.bf16.xpose.msra.mxu0 %v3745
    %3749 = vmatprep.subr.bf16.mxu0 0
    %3750 = vmatpush1.bf16.xpose.msra.mxu0 %v3742
    %3751 = vmatprep.subr.bf16.mxu0 0
    %3752 = vmatpush1.bf16.xpose.msra.mxu0 %v3739
    %3753 = vmatprep.subr.bf16.mxu0 0
    %3754 = vmatpush1.bf16.xpose.msra.mxu0 %v3736
    %3755 = vmatprep.subr.bf16.mxu0 0
    %3756 = vmatpush1.bf16.xpose.msra.mxu0 %v3733
    %3757 = vmatprep.subr.bf16.mxu0 0
    %3758 = vmatpush1.bf16.xpose.msra.mxu0 %v3730
    %3759 = vmatprep.subr.bf16.mxu0 0
    %3760 = vmatpush1.bf16.xpose.msra.mxu0 %v3727
    %3761 = vmatprep.subr.bf16.mxu0 0
    %3762 = vmatpush1.bf16.xpose.msra.mxu0 %v3724
    %3763 = vmatprep.subr.bf16.mxu0 0
    %3764 = vmatpush2.bf16.xpose.msra.mxu0 0
    %3765 = vmatprep.subr.bf16.mxu0 0
    %3766 = vmatpush2.bf16.xpose.msra.mxu0 0
    %3767 = vmatprep.subr.bf16.mxu0 0
    %3768 = vmatpush2.bf16.xpose.msra.mxu0 0
    %3769 = vmatprep.subr.bf16.mxu0 0
    %3770 = vmatpush2.bf16.xpose.msra.mxu0 0
    %3771 = vmatprep.subr.bf16.mxu0 0
    %3772 = vmatpush2.bf16.xpose.msra.mxu0 0
    %3773 = vmatprep.subr.bf16.mxu0 0
    %3774 = vmatpush2.bf16.xpose.msra.mxu0 0
    %3775 = vmatprep.subr.bf16.mxu0 0
    %3776 = vmatpush2.bf16.xpose.msra.mxu0 0
    %3777 = vmatprep.subr.bf16.mxu0 0
    %3778 = vmatpush2.bf16.xpose.msra.mxu0 0
    %3779 = vmatprep.mubr.bf16.mxu0 0
    %3780 = vmatmul.mubr.bf16.gmra.mxu0 %v3712
    %v3781 = vpop.f32.mrf.mxu0
    %v3782 = vadd.f32 0.0, %v3781
    %v3783 = vpop.f32.mrf.mxu0
    %v3784 = vpop.f32.mrf.mxu0
    %v3785 = vadd.f32 0.0, %v3784
    %v3786 = vpop.f32.mrf.mxu0
    %3787 = vmatprep.mubr.bf16.mxu0 0
    %3788 = vmatmul.mubr.bf16.gmra.mxu0 %v3715
    %v3789 = vpop.f32.mrf.mxu0
    %v3790 = vadd.f32 0.0, %v3789
    %v3791 = vpop.f32.mrf.mxu0
    %v3792 = vpop.f32.mrf.mxu0
    %v3793 = vadd.f32 0.0, %v3792
    %v3794 = vpop.f32.mrf.mxu0
    %3795 = vmatprep.mubr.bf16.mxu0 0
    %3796 = vmatmul.mubr.bf16.gmra.mxu0 %v3718
    %v3797 = vpop.f32.mrf.mxu0
    %v3798 = vadd.f32 0.0, %v3797
    %v3799 = vpop.f32.mrf.mxu0
    %v3800 = vpop.f32.mrf.mxu0
    %v3801 = vadd.f32 0.0, %v3800
    %v3802 = vpop.f32.mrf.mxu0
    %3803 = vmatprep.mubr.bf16.mxu0 0
    %3804 = vmatmul.mubr.bf16.gmra.mxu0 %v3721
    %v3805 = vpop.f32.mrf.mxu0
    %v3806 = vadd.f32 0.0, %v3805
    %v3807 = vpop.f32.mrf.mxu0
    %v3808 = vpop.f32.mrf.mxu0
    %v3809 = vadd.f32 0.0, %v3808
    %v3810 = vpop.f32.mrf.mxu0
    %3811 = vdwg.mxu0
    %v3812 = vadd.f32 %v2740, %v3782
    %v3813 = vadd.f32 %v2743, %v3785
    %v3814 = vadd.f32 %v2748, %v3790
    %v3815 = vadd.f32 %v2751, %v3793
    %v3816 = vadd.f32 %v2756, %v3798
    %v3817 = vadd.f32 %v2759, %v3801
    %v3818 = vadd.f32 %v2764, %v3806
    %v3819 = vadd.f32 %v2767, %v3809
    %3820 = vrot.lane.b32.xlu0 %v684, 32
    %v3821 = vpop.permute.xlu0 %3820
    %3822 = vrot.lane.b32.xlu0 %v692, 32
    %v3823 = vpop.permute.xlu0 %3822
    %v3825 = vsel %vm708, %v3821, 0
    %v3828 = vsel %vm708, %v3823, 0
    %3830 = vmatprep.subr.bf16.mxu0 0
    %3831 = vmatpush1.bf16.xpose.msra.mxu0 0
    %3832 = vmatprep.subr.bf16.mxu0 0
    %3833 = vmatpush1.bf16.xpose.msra.mxu0 0
    %3834 = vmatprep.subr.bf16.mxu0 0
    %3835 = vmatpush1.bf16.xpose.msra.mxu0 0
    %3836 = vmatprep.subr.bf16.mxu0 0
    %3837 = vmatpush1.bf16.xpose.msra.mxu0 0
    %3838 = vmatprep.subr.bf16.mxu0 0
    %3839 = vmatpush1.bf16.xpose.msra.mxu0 0
    %3840 = vmatprep.subr.bf16.mxu0 0
    %3841 = vmatpush1.bf16.xpose.msra.mxu0 0
    %3842 = vmatprep.subr.bf16.mxu0 0
    %3843 = vmatpush1.bf16.xpose.msra.mxu0 0
    %3844 = vmatprep.subr.bf16.mxu0 0
    %3845 = vmatpush1.bf16.xpose.msra.mxu0 %v3828
    %3846 = vmatprep.subr.bf16.mxu0 0
    %3847 = vmatpush2.bf16.xpose.msra.mxu0 0
    %3848 = vmatprep.subr.bf16.mxu0 0
    %3849 = vmatpush2.bf16.xpose.msra.mxu0 0
    %3850 = vmatprep.subr.bf16.mxu0 0
    %3851 = vmatpush2.bf16.xpose.msra.mxu0 0
    %3852 = vmatprep.subr.bf16.mxu0 0
    %3853 = vmatpush2.bf16.xpose.msra.mxu0 0
    %3854 = vmatprep.subr.bf16.mxu0 0
    %3855 = vmatpush2.bf16.xpose.msra.mxu0 0
    %3856 = vmatprep.subr.bf16.mxu0 0
    %3857 = vmatpush2.bf16.xpose.msra.mxu0 0
    %3858 = vmatprep.subr.bf16.mxu0 0
    %3859 = vmatpush2.bf16.xpose.msra.mxu0 0
    %3860 = vmatprep.subr.bf16.mxu0 0
    %3861 = vmatpush2.bf16.xpose.msra.mxu0 0
    %3862 = vmatprep.mubr.bf16.mxu0 0
    %3863 = vmatmul.mubr.bf16.gmra.mxu0 %v3825
    %v3864 = vpop.f32.mrf.mxu0
    %v3865 = vadd.f32 0.0, %v3864
    %v3866 = vpop.f32.mrf.mxu0
    %v3867 = vpop.f32.mrf.mxu0
    %v3868 = vpop.f32.mrf.mxu0
    %3869 = vdwg.mxu0
    %3870 = vrot.lane.b32.xlu0 %v685, 32
    %v3871 = vpop.permute.xlu0 %3870
    %3872 = vrot.lane.b32.xlu0 %v693, 32
    %v3873 = vpop.permute.xlu0 %3872
    %v3875 = vsel %vm708, %v3871, 0
    %v3878 = vsel %vm708, %v3873, 0
    %3880 = vmatprep.subr.bf16.mxu0 0
    %3881 = vmatpush1.bf16.xpose.msra.mxu0 0
    %3882 = vmatprep.subr.bf16.mxu0 0
    %3883 = vmatpush1.bf16.xpose.msra.mxu0 0
    %3884 = vmatprep.subr.bf16.mxu0 0
    %3885 = vmatpush1.bf16.xpose.msra.mxu0 0
    %3886 = vmatprep.subr.bf16.mxu0 0
    %3887 = vmatpush1.bf16.xpose.msra.mxu0 0
    %3888 = vmatprep.subr.bf16.mxu0 0
    %3889 = vmatpush1.bf16.xpose.msra.mxu0 0
    %3890 = vmatprep.subr.bf16.mxu0 0
    %3891 = vmatpush1.bf16.xpose.msra.mxu0 0
    %3892 = vmatprep.subr.bf16.mxu0 0
    %3893 = vmatpush1.bf16.xpose.msra.mxu0 0
    %3894 = vmatprep.subr.bf16.mxu0 0
    %3895 = vmatpush1.bf16.xpose.msra.mxu0 %v3878
    %3896 = vmatprep.subr.bf16.mxu0 0
    %3897 = vmatpush2.bf16.xpose.msra.mxu0 0
    %3898 = vmatprep.subr.bf16.mxu0 0
    %3899 = vmatpush2.bf16.xpose.msra.mxu0 0
    %3900 = vmatprep.subr.bf16.mxu0 0
    %3901 = vmatpush2.bf16.xpose.msra.mxu0 0
    %3902 = vmatprep.subr.bf16.mxu0 0
    %3903 = vmatpush2.bf16.xpose.msra.mxu0 0
    %3904 = vmatprep.subr.bf16.mxu0 0
    %3905 = vmatpush2.bf16.xpose.msra.mxu0 0
    %3906 = vmatprep.subr.bf16.mxu0 0
    %3907 = vmatpush2.bf16.xpose.msra.mxu0 0
    %3908 = vmatprep.subr.bf16.mxu0 0
    %3909 = vmatpush2.bf16.xpose.msra.mxu0 0
    %3910 = vmatprep.subr.bf16.mxu0 0
    %3911 = vmatpush2.bf16.xpose.msra.mxu0 0
    %3912 = vmatprep.mubr.bf16.mxu0 0
    %3913 = vmatmul.mubr.bf16.gmra.mxu0 %v3875
    %v3914 = vpop.f32.mrf.mxu0
    %v3915 = vadd.f32 0.0, %v3914
    %v3916 = vpop.f32.mrf.mxu0
    %v3917 = vpop.f32.mrf.mxu0
    %v3918 = vpop.f32.mrf.mxu0
    %3919 = vdwg.mxu0
    %3920 = vrot.lane.b32.xlu0 %v686, 32
    %v3921 = vpop.permute.xlu0 %3920
    %3922 = vrot.lane.b32.xlu0 %v694, 32
    %v3923 = vpop.permute.xlu0 %3922
    %v3925 = vsel %vm708, %v3921, 0
    %v3928 = vsel %vm708, %v3923, 0
    %3930 = vmatprep.subr.bf16.mxu0 0
    %3931 = vmatpush1.bf16.xpose.msra.mxu0 0
    %3932 = vmatprep.subr.bf16.mxu0 0
    %3933 = vmatpush1.bf16.xpose.msra.mxu0 0
    %3934 = vmatprep.subr.bf16.mxu0 0
    %3935 = vmatpush1.bf16.xpose.msra.mxu0 0
    %3936 = vmatprep.subr.bf16.mxu0 0
    %3937 = vmatpush1.bf16.xpose.msra.mxu0 0
    %3938 = vmatprep.subr.bf16.mxu0 0
    %3939 = vmatpush1.bf16.xpose.msra.mxu0 0
    %3940 = vmatprep.subr.bf16.mxu0 0
    %3941 = vmatpush1.bf16.xpose.msra.mxu0 0
    %3942 = vmatprep.subr.bf16.mxu0 0
    %3943 = vmatpush1.bf16.xpose.msra.mxu0 0
    %3944 = vmatprep.subr.bf16.mxu0 0
    %3945 = vmatpush1.bf16.xpose.msra.mxu0 %v3928
    %3946 = vmatprep.subr.bf16.mxu0 0
    %3947 = vmatpush2.bf16.xpose.msra.mxu0 0
    %3948 = vmatprep.subr.bf16.mxu0 0
    %3949 = vmatpush2.bf16.xpose.msra.mxu0 0
    %3950 = vmatprep.subr.bf16.mxu0 0
    %3951 = vmatpush2.bf16.xpose.msra.mxu0 0
    %3952 = vmatprep.subr.bf16.mxu0 0
    %3953 = vmatpush2.bf16.xpose.msra.mxu0 0
    %3954 = vmatprep.subr.bf16.mxu0 0
    %3955 = vmatpush2.bf16.xpose.msra.mxu0 0
    %3956 = vmatprep.subr.bf16.mxu0 0
    %3957 = vmatpush2.bf16.xpose.msra.mxu0 0
    %3958 = vmatprep.subr.bf16.mxu0 0
    %3959 = vmatpush2.bf16.xpose.msra.mxu0 0
    %3960 = vmatprep.subr.bf16.mxu0 0
    %3961 = vmatpush2.bf16.xpose.msra.mxu0 0
    %3962 = vmatprep.mubr.bf16.mxu0 0
    %3963 = vmatmul.mubr.bf16.gmra.mxu0 %v3925
    %v3964 = vpop.f32.mrf.mxu0
    %v3965 = vadd.f32 0.0, %v3964
    %v3966 = vpop.f32.mrf.mxu0
    %v3967 = vpop.f32.mrf.mxu0
    %v3968 = vpop.f32.mrf.mxu0
    %3969 = vdwg.mxu0
    %3970 = vrot.lane.b32.xlu0 %v687, 32
    %v3971 = vpop.permute.xlu0 %3970
    %3972 = vrot.lane.b32.xlu0 %v695, 32
    %v3973 = vpop.permute.xlu0 %3972
    %v3975 = vsel %vm708, %v3971, 0
    %v3978 = vsel %vm708, %v3973, 0
    %3980 = vmatprep.subr.bf16.mxu0 0
    %3981 = vmatpush1.bf16.xpose.msra.mxu0 0
    %3982 = vmatprep.subr.bf16.mxu0 0
    %3983 = vmatpush1.bf16.xpose.msra.mxu0 0
    %3984 = vmatprep.subr.bf16.mxu0 0
    %3985 = vmatpush1.bf16.xpose.msra.mxu0 0
    %3986 = vmatprep.subr.bf16.mxu0 0
    %3987 = vmatpush1.bf16.xpose.msra.mxu0 0
    %3988 = vmatprep.subr.bf16.mxu0 0
    %3989 = vmatpush1.bf16.xpose.msra.mxu0 0
    %3990 = vmatprep.subr.bf16.mxu0 0
    %3991 = vmatpush1.bf16.xpose.msra.mxu0 0
    %3992 = vmatprep.subr.bf16.mxu0 0
    %3993 = vmatpush1.bf16.xpose.msra.mxu0 0
    %3994 = vmatprep.subr.bf16.mxu0 0
    %3995 = vmatpush1.bf16.xpose.msra.mxu0 %v3978
    %3996 = vmatprep.subr.bf16.mxu0 0
    %3997 = vmatpush2.bf16.xpose.msra.mxu0 0
    %3998 = vmatprep.subr.bf16.mxu0 0
    %3999 = vmatpush2.bf16.xpose.msra.mxu0 0
    %4000 = vmatprep.subr.bf16.mxu0 0
    %4001 = vmatpush2.bf16.xpose.msra.mxu0 0
    %4002 = vmatprep.subr.bf16.mxu0 0
    %4003 = vmatpush2.bf16.xpose.msra.mxu0 0
    %4004 = vmatprep.subr.bf16.mxu0 0
    %4005 = vmatpush2.bf16.xpose.msra.mxu0 0
    %4006 = vmatprep.subr.bf16.mxu0 0
    %4007 = vmatpush2.bf16.xpose.msra.mxu0 0
    %4008 = vmatprep.subr.bf16.mxu0 0
    %4009 = vmatpush2.bf16.xpose.msra.mxu0 0
    %4010 = vmatprep.subr.bf16.mxu0 0
    %4011 = vmatpush2.bf16.xpose.msra.mxu0 0
    %4012 = vmatprep.mubr.bf16.mxu0 0
    %4013 = vmatmul.mubr.bf16.gmra.mxu0 %v3975
    %v4014 = vpop.f32.mrf.mxu0
    %v4015 = vadd.f32 0.0, %v4014
    %v4016 = vpop.f32.mrf.mxu0
    %v4017 = vpop.f32.mrf.mxu0
    %v4018 = vpop.f32.mrf.mxu0
    %4019 = vdwg.mxu0
    %4020 = vrot.lane.b32.xlu0 %v688, 32
    %v4021 = vpop.permute.xlu0 %4020
    %4022 = vrot.lane.b32.xlu0 %v696, 32
    %v4023 = vpop.permute.xlu0 %4022
    %v4025 = vsel %vm708, %v4021, 0
    %v4028 = vsel %vm708, %v4023, 0
    %4030 = vmatprep.subr.bf16.mxu0 0
    %4031 = vmatpush1.bf16.xpose.msra.mxu0 0
    %4032 = vmatprep.subr.bf16.mxu0 0
    %4033 = vmatpush1.bf16.xpose.msra.mxu0 0
    %4034 = vmatprep.subr.bf16.mxu0 0
    %4035 = vmatpush1.bf16.xpose.msra.mxu0 0
    %4036 = vmatprep.subr.bf16.mxu0 0
    %4037 = vmatpush1.bf16.xpose.msra.mxu0 0
    %4038 = vmatprep.subr.bf16.mxu0 0
    %4039 = vmatpush1.bf16.xpose.msra.mxu0 0
    %4040 = vmatprep.subr.bf16.mxu0 0
    %4041 = vmatpush1.bf16.xpose.msra.mxu0 0
    %4042 = vmatprep.subr.bf16.mxu0 0
    %4043 = vmatpush1.bf16.xpose.msra.mxu0 0
    %4044 = vmatprep.subr.bf16.mxu0 0
    %4045 = vmatpush1.bf16.xpose.msra.mxu0 %v4028
    %4046 = vmatprep.subr.bf16.mxu0 0
    %4047 = vmatpush2.bf16.xpose.msra.mxu0 0
    %4048 = vmatprep.subr.bf16.mxu0 0
    %4049 = vmatpush2.bf16.xpose.msra.mxu0 0
    %4050 = vmatprep.subr.bf16.mxu0 0
    %4051 = vmatpush2.bf16.xpose.msra.mxu0 0
    %4052 = vmatprep.subr.bf16.mxu0 0
    %4053 = vmatpush2.bf16.xpose.msra.mxu0 0
    %4054 = vmatprep.subr.bf16.mxu0 0
    %4055 = vmatpush2.bf16.xpose.msra.mxu0 0
    %4056 = vmatprep.subr.bf16.mxu0 0
    %4057 = vmatpush2.bf16.xpose.msra.mxu0 0
    %4058 = vmatprep.subr.bf16.mxu0 0
    %4059 = vmatpush2.bf16.xpose.msra.mxu0 0
    %4060 = vmatprep.subr.bf16.mxu0 0
    %4061 = vmatpush2.bf16.xpose.msra.mxu0 0
    %4062 = vmatprep.mubr.bf16.mxu0 0
    %4063 = vmatmul.mubr.bf16.gmra.mxu0 %v4025
    %v4064 = vpop.f32.mrf.mxu0
    %v4065 = vadd.f32 0.0, %v4064
    %v4066 = vpop.f32.mrf.mxu0
    %v4067 = vpop.f32.mrf.mxu0
    %v4068 = vpop.f32.mrf.mxu0
    %4069 = vdwg.mxu0
    %4070 = vrot.lane.b32.xlu0 %v689, 32
    %v4071 = vpop.permute.xlu0 %4070
    %4072 = vrot.lane.b32.xlu0 %v697, 32
    %v4073 = vpop.permute.xlu0 %4072
    %v4075 = vsel %vm708, %v4071, 0
    %v4078 = vsel %vm708, %v4073, 0
    %4080 = vmatprep.subr.bf16.mxu0 0
    %4081 = vmatpush1.bf16.xpose.msra.mxu0 0
    %4082 = vmatprep.subr.bf16.mxu0 0
    %4083 = vmatpush1.bf16.xpose.msra.mxu0 0
    %4084 = vmatprep.subr.bf16.mxu0 0
    %4085 = vmatpush1.bf16.xpose.msra.mxu0 0
    %4086 = vmatprep.subr.bf16.mxu0 0
    %4087 = vmatpush1.bf16.xpose.msra.mxu0 0
    %4088 = vmatprep.subr.bf16.mxu0 0
    %4089 = vmatpush1.bf16.xpose.msra.mxu0 0
    %4090 = vmatprep.subr.bf16.mxu0 0
    %4091 = vmatpush1.bf16.xpose.msra.mxu0 0
    %4092 = vmatprep.subr.bf16.mxu0 0
    %4093 = vmatpush1.bf16.xpose.msra.mxu0 0
    %4094 = vmatprep.subr.bf16.mxu0 0
    %4095 = vmatpush1.bf16.xpose.msra.mxu0 %v4078
    %4096 = vmatprep.subr.bf16.mxu0 0
    %4097 = vmatpush2.bf16.xpose.msra.mxu0 0
    %4098 = vmatprep.subr.bf16.mxu0 0
    %4099 = vmatpush2.bf16.xpose.msra.mxu0 0
    %4100 = vmatprep.subr.bf16.mxu0 0
    %4101 = vmatpush2.bf16.xpose.msra.mxu0 0
    %4102 = vmatprep.subr.bf16.mxu0 0
    %4103 = vmatpush2.bf16.xpose.msra.mxu0 0
    %4104 = vmatprep.subr.bf16.mxu0 0
    %4105 = vmatpush2.bf16.xpose.msra.mxu0 0
    %4106 = vmatprep.subr.bf16.mxu0 0
    %4107 = vmatpush2.bf16.xpose.msra.mxu0 0
    %4108 = vmatprep.subr.bf16.mxu0 0
    %4109 = vmatpush2.bf16.xpose.msra.mxu0 0
    %4110 = vmatprep.subr.bf16.mxu0 0
    %4111 = vmatpush2.bf16.xpose.msra.mxu0 0
    %4112 = vmatprep.mubr.bf16.mxu0 0
    %4113 = vmatmul.mubr.bf16.gmra.mxu0 %v4075
    %v4114 = vpop.f32.mrf.mxu0
    %v4115 = vadd.f32 0.0, %v4114
    %v4116 = vpop.f32.mrf.mxu0
    %v4117 = vpop.f32.mrf.mxu0
    %v4118 = vpop.f32.mrf.mxu0
    %4119 = vdwg.mxu0
    %4120 = vrot.lane.b32.xlu0 %v690, 32
    %v4121 = vpop.permute.xlu0 %4120
    %4122 = vrot.lane.b32.xlu0 %v698, 32
    %v4123 = vpop.permute.xlu0 %4122
    %v4125 = vsel %vm708, %v4121, 0
    %v4128 = vsel %vm708, %v4123, 0
    %4130 = vmatprep.subr.bf16.mxu0 0
    %4131 = vmatpush1.bf16.xpose.msra.mxu0 0
    %4132 = vmatprep.subr.bf16.mxu0 0
    %4133 = vmatpush1.bf16.xpose.msra.mxu0 0
    %4134 = vmatprep.subr.bf16.mxu0 0
    %4135 = vmatpush1.bf16.xpose.msra.mxu0 0
    %4136 = vmatprep.subr.bf16.mxu0 0
    %4137 = vmatpush1.bf16.xpose.msra.mxu0 0
    %4138 = vmatprep.subr.bf16.mxu0 0
    %4139 = vmatpush1.bf16.xpose.msra.mxu0 0
    %4140 = vmatprep.subr.bf16.mxu0 0
    %4141 = vmatpush1.bf16.xpose.msra.mxu0 0
    %4142 = vmatprep.subr.bf16.mxu0 0
    %4143 = vmatpush1.bf16.xpose.msra.mxu0 0
    %4144 = vmatprep.subr.bf16.mxu0 0
    %4145 = vmatpush1.bf16.xpose.msra.mxu0 %v4128
    %4146 = vmatprep.subr.bf16.mxu0 0
    %4147 = vmatpush2.bf16.xpose.msra.mxu0 0
    %4148 = vmatprep.subr.bf16.mxu0 0
    %4149 = vmatpush2.bf16.xpose.msra.mxu0 0
    %4150 = vmatprep.subr.bf16.mxu0 0
    %4151 = vmatpush2.bf16.xpose.msra.mxu0 0
    %4152 = vmatprep.subr.bf16.mxu0 0
    %4153 = vmatpush2.bf16.xpose.msra.mxu0 0
    %4154 = vmatprep.subr.bf16.mxu0 0
    %4155 = vmatpush2.bf16.xpose.msra.mxu0 0
    %4156 = vmatprep.subr.bf16.mxu0 0
    %4157 = vmatpush2.bf16.xpose.msra.mxu0 0
    %4158 = vmatprep.subr.bf16.mxu0 0
    %4159 = vmatpush2.bf16.xpose.msra.mxu0 0
    %4160 = vmatprep.subr.bf16.mxu0 0
    %4161 = vmatpush2.bf16.xpose.msra.mxu0 0
    %4162 = vmatprep.mubr.bf16.mxu0 0
    %4163 = vmatmul.mubr.bf16.gmra.mxu0 %v4125
    %v4164 = vpop.f32.mrf.mxu0
    %v4165 = vadd.f32 0.0, %v4164
    %v4166 = vpop.f32.mrf.mxu0
    %v4167 = vpop.f32.mrf.mxu0
    %v4168 = vpop.f32.mrf.mxu0
    %4169 = vdwg.mxu0
    %4170 = vrot.lane.b32.xlu0 %v691, 32
    %v4171 = vpop.permute.xlu0 %4170
    %4172 = vrot.lane.b32.xlu0 %v699, 32
    %v4173 = vpop.permute.xlu0 %4172
    %v4175 = vsel %vm708, %v4171, 0
    %v4178 = vsel %vm708, %v4173, 0
    %4180 = vmatprep.subr.bf16.mxu0 0
    %4181 = vmatpush1.bf16.xpose.msra.mxu0 0
    %4182 = vmatprep.subr.bf16.mxu0 0
    %4183 = vmatpush1.bf16.xpose.msra.mxu0 0
    %4184 = vmatprep.subr.bf16.mxu0 0
    %4185 = vmatpush1.bf16.xpose.msra.mxu0 0
    %4186 = vmatprep.subr.bf16.mxu0 0
    %4187 = vmatpush1.bf16.xpose.msra.mxu0 0
    %4188 = vmatprep.subr.bf16.mxu0 0
    %4189 = vmatpush1.bf16.xpose.msra.mxu0 0
    %4190 = vmatprep.subr.bf16.mxu0 0
    %4191 = vmatpush1.bf16.xpose.msra.mxu0 0
    %4192 = vmatprep.subr.bf16.mxu0 0
    %4193 = vmatpush1.bf16.xpose.msra.mxu0 0
    %4194 = vmatprep.subr.bf16.mxu0 0
    %4195 = vmatpush1.bf16.xpose.msra.mxu0 %v4178
    %4196 = vmatprep.subr.bf16.mxu0 0
    %4197 = vmatpush2.bf16.xpose.msra.mxu0 0
    %4198 = vmatprep.subr.bf16.mxu0 0
    %4199 = vmatpush2.bf16.xpose.msra.mxu0 0
    %4200 = vmatprep.subr.bf16.mxu0 0
    %4201 = vmatpush2.bf16.xpose.msra.mxu0 0
    %4202 = vmatprep.subr.bf16.mxu0 0
    %4203 = vmatpush2.bf16.xpose.msra.mxu0 0
    %4204 = vmatprep.subr.bf16.mxu0 0
    %4205 = vmatpush2.bf16.xpose.msra.mxu0 0
    %4206 = vmatprep.subr.bf16.mxu0 0
    %4207 = vmatpush2.bf16.xpose.msra.mxu0 0
    %4208 = vmatprep.subr.bf16.mxu0 0
    %4209 = vmatpush2.bf16.xpose.msra.mxu0 0
    %4210 = vmatprep.subr.bf16.mxu0 0
    %4211 = vmatpush2.bf16.xpose.msra.mxu0 0
    %4212 = vmatprep.mubr.bf16.mxu0 0
    %4213 = vmatmul.mubr.bf16.gmra.mxu0 %v4175
    %v4214 = vpop.f32.mrf.mxu0
    %v4215 = vadd.f32 0.0, %v4214
    %v4216 = vpop.f32.mrf.mxu0
    %v4217 = vpop.f32.mrf.mxu0
    %v4218 = vpop.f32.mrf.mxu0
    %4219 = vdwg.mxu0
    %v4220 = vsel %vm1077, %v3865, -inf
    %4221 = vmax.xlane.f32.xlu0 %v4220
    %v4222 = vpop.xlane.xlu0 %4221
    %v4223 = vsel %vm1077, %v3915, -inf
    %4224 = vmax.xlane.f32.xlu0 %v4223
    %v4225 = vpop.xlane.xlu0 %4224
    %v4226 = vsel %vm1077, %v3965, -inf
    %4227 = vmax.xlane.f32.xlu0 %v4226
    %v4228 = vpop.xlane.xlu0 %4227
    %v4229 = vsel %vm1077, %v4015, -inf
    %4230 = vmax.xlane.f32.xlu0 %v4229
    %v4231 = vpop.xlane.xlu0 %4230
    %v4232 = vsel %vm1077, %v4065, -inf
    %4233 = vmax.xlane.f32.xlu0 %v4232
    %v4234 = vpop.xlane.xlu0 %4233
    %v4235 = vsel %vm1077, %v4115, -inf
    %4236 = vmax.xlane.f32.xlu0 %v4235
    %v4237 = vpop.xlane.xlu0 %4236
    %v4238 = vsel %vm1077, %v4165, -inf
    %4239 = vmax.xlane.f32.xlu0 %v4238
    %v4240 = vpop.xlane.xlu0 %4239
    %v4241 = vsel %vm1077, %v4215, -inf
    %4242 = vmax.xlane.f32.xlu0 %v4241
    %v4243 = vpop.xlane.xlu0 %4242
    %v4244 = vsub.f32 %v3865, %v4222
    %v4245 = vsub.f32 %v3915, %v4225
    %v4246 = vsub.f32 %v3965, %v4228
    %v4247 = vsub.f32 %v4015, %v4231
    %v4248 = vsub.f32 %v4065, %v4234
    %v4249 = vsub.f32 %v4115, %v4237
    %v4250 = vsub.f32 %v4165, %v4240
    %v4251 = vsub.f32 %v4215, %v4243
    %v4252 = vmul.f32 %v4244, 1.442695
    %v4253 = vpow.pop %v4252
    %v4254 = vmul.f32 %v4245, 1.442695
    %v4255 = vpow.pop %v4254
    %v4256 = vmul.f32 %v4246, 1.442695
    %v4257 = vpow.pop %v4256
    %v4258 = vmul.f32 %v4247, 1.442695
    %v4259 = vpow.pop %v4258
    %v4260 = vmul.f32 %v4248, 1.442695
    %v4261 = vpow.pop %v4260
    %v4262 = vmul.f32 %v4249, 1.442695
    %v4263 = vpow.pop %v4262
    %v4264 = vmul.f32 %v4250, 1.442695
    %v4265 = vpow.pop %v4264
    %v4266 = vmul.f32 %v4251, 1.442695
    %v4267 = vpow.pop %v4266
    %v4268 = vsel %vm1077, %v4253, 0.0
    %4269 = vadd.xlane.f32.xlu0 %v4268
    %v4270 = vpop.xlane.xlu0 %4269
    %v4271 = vsel %vm1077, %v4255, 0.0
    %4272 = vadd.xlane.f32.xlu0 %v4271
    %v4273 = vpop.xlane.xlu0 %4272
    %v4274 = vsel %vm1077, %v4257, 0.0
    %4275 = vadd.xlane.f32.xlu0 %v4274
    %v4276 = vpop.xlane.xlu0 %4275
    %v4277 = vsel %vm1077, %v4259, 0.0
    %4278 = vadd.xlane.f32.xlu0 %v4277
    %v4279 = vpop.xlane.xlu0 %4278
    %v4280 = vsel %vm1077, %v4261, 0.0
    %4281 = vadd.xlane.f32.xlu0 %v4280
    %v4282 = vpop.xlane.xlu0 %4281
    %v4283 = vsel %vm1077, %v4263, 0.0
    %4284 = vadd.xlane.f32.xlu0 %v4283
    %v4285 = vpop.xlane.xlu0 %4284
    %v4286 = vsel %vm1077, %v4265, 0.0
    %4287 = vadd.xlane.f32.xlu0 %v4286
    %v4288 = vpop.xlane.xlu0 %4287
    %v4289 = vsel %vm1077, %v4267, 0.0
    %4290 = vadd.xlane.f32.xlu0 %v4289
    %v4291 = vpop.xlane.xlu0 %4290
    %v4292 = vrcp.pop %v4270
    %v4293 = vrcp.pop %v4273
    %v4294 = vrcp.pop %v4276
    %v4295 = vrcp.pop %v4279
    %v4296 = vrcp.pop %v4282
    %v4297 = vrcp.pop %v4285
    %v4298 = vrcp.pop %v4288
    %v4299 = vrcp.pop %v4291
    %v4300 = vmul.f32 %v4253, %v4292
    %v4301 = vmul.f32 %v4255, %v4293
    %v4302 = vmul.f32 %v4257, %v4294
    %v4303 = vmul.f32 %v4259, %v4295
    %v4304 = vmul.f32 %v4261, %v4296
    %v4305 = vmul.f32 %v4263, %v4297
    %v4306 = vmul.f32 %v4265, %v4298
    %v4307 = vmul.f32 %v4267, %v4299
    %v4308 = vpack.c.bf16 %v4300, %v4300
    %v4309 = vpack.c.bf16 %v4301, %v4301
    %v4310 = vpack.c.bf16 %v4302, %v4302
    %v4311 = vpack.c.bf16 %v4303, %v4303
    %v4312 = vpack.c.bf16 %v4304, %v4304
    %v4313 = vpack.c.bf16 %v4305, %v4305
    %v4314 = vpack.c.bf16 %v4306, %v4306
    %v4315 = vpack.c.bf16 %v4307, %v4307
    %4316 = vrot.lane.b32.xlu0 %v700, 32
    %v4317 = vpop.permute.xlu0 %4316
    %v4319 = vsel %vm1077, %v4308, 0
    %v4322 = vsel %vm1177, %v4317, 0
    %4324 = vmatprep.subr.bf16.mxu0 0
    %4325 = vmatpush1.bf16.msra.mxu0 0
    %4326 = vmatprep.subr.bf16.mxu0 0
    %4327 = vmatpush1.bf16.msra.mxu0 0
    %4328 = vmatprep.subr.bf16.mxu0 0
    %4329 = vmatpush1.bf16.msra.mxu0 0
    %4330 = vmatprep.subr.bf16.mxu0 0
    %4331 = vmatpush1.bf16.msra.mxu0 0
    %4332 = vmatprep.subr.bf16.mxu0 0
    %4333 = vmatpush1.bf16.msra.mxu0 0
    %4334 = vmatprep.subr.bf16.mxu0 0
    %4335 = vmatpush1.bf16.msra.mxu0 0
    %4336 = vmatprep.subr.bf16.mxu0 0
    %4337 = vmatpush1.bf16.msra.mxu0 0
    %4338 = vmatprep.subr.bf16.mxu0 0
    %4339 = vmatpush1.bf16.msra.mxu0 %v4322
    %4340 = vmatprep.subr.bf16.mxu0 0
    %4341 = vmatpush2.bf16.msra.mxu0 0
    %4342 = vmatprep.subr.bf16.mxu0 0
    %4343 = vmatpush2.bf16.msra.mxu0 0
    %4344 = vmatprep.subr.bf16.mxu0 0
    %4345 = vmatpush2.bf16.msra.mxu0 0
    %4346 = vmatprep.subr.bf16.mxu0 0
    %4347 = vmatpush2.bf16.msra.mxu0 0
    %4348 = vmatprep.subr.bf16.mxu0 0
    %4349 = vmatpush2.bf16.msra.mxu0 0
    %4350 = vmatprep.subr.bf16.mxu0 0
    %4351 = vmatpush2.bf16.msra.mxu0 0
    %4352 = vmatprep.subr.bf16.mxu0 0
    %4353 = vmatpush2.bf16.msra.mxu0 0
    %4354 = vmatprep.subr.bf16.mxu0 0
    %4355 = vmatpush2.bf16.msra.mxu0 0
    %4356 = vmatprep.mubr.bf16.mxu0 0
    %4357 = vmatmul.mubr.bf16.gmra.mxu0 %v4319
    %v4358 = vpop.f32.mrf.mxu0
    %v4359 = vadd.f32 0.0, %v4358
    %v4360 = vpop.f32.mrf.mxu0
    %v4361 = vpop.f32.mrf.mxu0
    %v4362 = vpop.f32.mrf.mxu0
    %4363 = vdwg.mxu0
    %4364 = vrot.lane.b32.xlu0 %v701, 32
    %v4365 = vpop.permute.xlu0 %4364
    %v4367 = vsel %vm1077, %v4309, 0
    %v4370 = vsel %vm1177, %v4365, 0
    %4372 = vmatprep.subr.bf16.mxu0 0
    %4373 = vmatpush1.bf16.msra.mxu0 0
    %4374 = vmatprep.subr.bf16.mxu0 0
    %4375 = vmatpush1.bf16.msra.mxu0 0
    %4376 = vmatprep.subr.bf16.mxu0 0
    %4377 = vmatpush1.bf16.msra.mxu0 0
    %4378 = vmatprep.subr.bf16.mxu0 0
    %4379 = vmatpush1.bf16.msra.mxu0 0
    %4380 = vmatprep.subr.bf16.mxu0 0
    %4381 = vmatpush1.bf16.msra.mxu0 0
    %4382 = vmatprep.subr.bf16.mxu0 0
    %4383 = vmatpush1.bf16.msra.mxu0 0
    %4384 = vmatprep.subr.bf16.mxu0 0
    %4385 = vmatpush1.bf16.msra.mxu0 0
    %4386 = vmatprep.subr.bf16.mxu0 0
    %4387 = vmatpush1.bf16.msra.mxu0 %v4370
    %4388 = vmatprep.subr.bf16.mxu0 0
    %4389 = vmatpush2.bf16.msra.mxu0 0
    %4390 = vmatprep.subr.bf16.mxu0 0
    %4391 = vmatpush2.bf16.msra.mxu0 0
    %4392 = vmatprep.subr.bf16.mxu0 0
    %4393 = vmatpush2.bf16.msra.mxu0 0
    %4394 = vmatprep.subr.bf16.mxu0 0
    %4395 = vmatpush2.bf16.msra.mxu0 0
    %4396 = vmatprep.subr.bf16.mxu0 0
    %4397 = vmatpush2.bf16.msra.mxu0 0
    %4398 = vmatprep.subr.bf16.mxu0 0
    %4399 = vmatpush2.bf16.msra.mxu0 0
    %4400 = vmatprep.subr.bf16.mxu0 0
    %4401 = vmatpush2.bf16.msra.mxu0 0
    %4402 = vmatprep.subr.bf16.mxu0 0
    %4403 = vmatpush2.bf16.msra.mxu0 0
    %4404 = vmatprep.mubr.bf16.mxu0 0
    %4405 = vmatmul.mubr.bf16.gmra.mxu0 %v4367
    %v4406 = vpop.f32.mrf.mxu0
    %v4407 = vadd.f32 0.0, %v4406
    %v4408 = vpop.f32.mrf.mxu0
    %v4409 = vpop.f32.mrf.mxu0
    %v4410 = vpop.f32.mrf.mxu0
    %4411 = vdwg.mxu0
    %4412 = vrot.lane.b32.xlu0 %v702, 32
    %v4413 = vpop.permute.xlu0 %4412
    %v4415 = vsel %vm1077, %v4310, 0
    %v4418 = vsel %vm1177, %v4413, 0
    %4420 = vmatprep.subr.bf16.mxu0 0
    %4421 = vmatpush1.bf16.msra.mxu0 0
    %4422 = vmatprep.subr.bf16.mxu0 0
    %4423 = vmatpush1.bf16.msra.mxu0 0
    %4424 = vmatprep.subr.bf16.mxu0 0
    %4425 = vmatpush1.bf16.msra.mxu0 0
    %4426 = vmatprep.subr.bf16.mxu0 0
    %4427 = vmatpush1.bf16.msra.mxu0 0
    %4428 = vmatprep.subr.bf16.mxu0 0
    %4429 = vmatpush1.bf16.msra.mxu0 0
    %4430 = vmatprep.subr.bf16.mxu0 0
    %4431 = vmatpush1.bf16.msra.mxu0 0
    %4432 = vmatprep.subr.bf16.mxu0 0
    %4433 = vmatpush1.bf16.msra.mxu0 0
    %4434 = vmatprep.subr.bf16.mxu0 0
    %4435 = vmatpush1.bf16.msra.mxu0 %v4418
    %4436 = vmatprep.subr.bf16.mxu0 0
    %4437 = vmatpush2.bf16.msra.mxu0 0
    %4438 = vmatprep.subr.bf16.mxu0 0
    %4439 = vmatpush2.bf16.msra.mxu0 0
    %4440 = vmatprep.subr.bf16.mxu0 0
    %4441 = vmatpush2.bf16.msra.mxu0 0
    %4442 = vmatprep.subr.bf16.mxu0 0
    %4443 = vmatpush2.bf16.msra.mxu0 0
    %4444 = vmatprep.subr.bf16.mxu0 0
    %4445 = vmatpush2.bf16.msra.mxu0 0
    %4446 = vmatprep.subr.bf16.mxu0 0
    %4447 = vmatpush2.bf16.msra.mxu0 0
    %4448 = vmatprep.subr.bf16.mxu0 0
    %4449 = vmatpush2.bf16.msra.mxu0 0
    %4450 = vmatprep.subr.bf16.mxu0 0
    %4451 = vmatpush2.bf16.msra.mxu0 0
    %4452 = vmatprep.mubr.bf16.mxu0 0
    %4453 = vmatmul.mubr.bf16.gmra.mxu0 %v4415
    %v4454 = vpop.f32.mrf.mxu0
    %v4455 = vadd.f32 0.0, %v4454
    %v4456 = vpop.f32.mrf.mxu0
    %v4457 = vpop.f32.mrf.mxu0
    %v4458 = vpop.f32.mrf.mxu0
    %4459 = vdwg.mxu0
    %4460 = vrot.lane.b32.xlu0 %v703, 32
    %v4461 = vpop.permute.xlu0 %4460
    %v4463 = vsel %vm1077, %v4311, 0
    %v4466 = vsel %vm1177, %v4461, 0
    %4468 = vmatprep.subr.bf16.mxu0 0
    %4469 = vmatpush1.bf16.msra.mxu0 0
    %4470 = vmatprep.subr.bf16.mxu0 0
    %4471 = vmatpush1.bf16.msra.mxu0 0
    %4472 = vmatprep.subr.bf16.mxu0 0
    %4473 = vmatpush1.bf16.msra.mxu0 0
    %4474 = vmatprep.subr.bf16.mxu0 0
    %4475 = vmatpush1.bf16.msra.mxu0 0
    %4476 = vmatprep.subr.bf16.mxu0 0
    %4477 = vmatpush1.bf16.msra.mxu0 0
    %4478 = vmatprep.subr.bf16.mxu0 0
    %4479 = vmatpush1.bf16.msra.mxu0 0
    %4480 = vmatprep.subr.bf16.mxu0 0
    %4481 = vmatpush1.bf16.msra.mxu0 0
    %4482 = vmatprep.subr.bf16.mxu0 0
    %4483 = vmatpush1.bf16.msra.mxu0 %v4466
    %4484 = vmatprep.subr.bf16.mxu0 0
    %4485 = vmatpush2.bf16.msra.mxu0 0
    %4486 = vmatprep.subr.bf16.mxu0 0
    %4487 = vmatpush2.bf16.msra.mxu0 0
    %4488 = vmatprep.subr.bf16.mxu0 0
    %4489 = vmatpush2.bf16.msra.mxu0 0
    %4490 = vmatprep.subr.bf16.mxu0 0
    %4491 = vmatpush2.bf16.msra.mxu0 0
    %4492 = vmatprep.subr.bf16.mxu0 0
    %4493 = vmatpush2.bf16.msra.mxu0 0
    %4494 = vmatprep.subr.bf16.mxu0 0
    %4495 = vmatpush2.bf16.msra.mxu0 0
    %4496 = vmatprep.subr.bf16.mxu0 0
    %4497 = vmatpush2.bf16.msra.mxu0 0
    %4498 = vmatprep.subr.bf16.mxu0 0
    %4499 = vmatpush2.bf16.msra.mxu0 0
    %4500 = vmatprep.mubr.bf16.mxu0 0
    %4501 = vmatmul.mubr.bf16.gmra.mxu0 %v4463
    %v4502 = vpop.f32.mrf.mxu0
    %v4503 = vadd.f32 0.0, %v4502
    %v4504 = vpop.f32.mrf.mxu0
    %v4505 = vpop.f32.mrf.mxu0
    %v4506 = vpop.f32.mrf.mxu0
    %4507 = vdwg.mxu0
    %4508 = vrot.lane.b32.xlu0 %v704, 32
    %v4509 = vpop.permute.xlu0 %4508
    %v4511 = vsel %vm1077, %v4312, 0
    %v4514 = vsel %vm1177, %v4509, 0
    %4516 = vmatprep.subr.bf16.mxu0 0
    %4517 = vmatpush1.bf16.msra.mxu0 0
    %4518 = vmatprep.subr.bf16.mxu0 0
    %4519 = vmatpush1.bf16.msra.mxu0 0
    %4520 = vmatprep.subr.bf16.mxu0 0
    %4521 = vmatpush1.bf16.msra.mxu0 0
    %4522 = vmatprep.subr.bf16.mxu0 0
    %4523 = vmatpush1.bf16.msra.mxu0 0
    %4524 = vmatprep.subr.bf16.mxu0 0
    %4525 = vmatpush1.bf16.msra.mxu0 0
    %4526 = vmatprep.subr.bf16.mxu0 0
    %4527 = vmatpush1.bf16.msra.mxu0 0
    %4528 = vmatprep.subr.bf16.mxu0 0
    %4529 = vmatpush1.bf16.msra.mxu0 0
    %4530 = vmatprep.subr.bf16.mxu0 0
    %4531 = vmatpush1.bf16.msra.mxu0 %v4514
    %4532 = vmatprep.subr.bf16.mxu0 0
    %4533 = vmatpush2.bf16.msra.mxu0 0
    %4534 = vmatprep.subr.bf16.mxu0 0
    %4535 = vmatpush2.bf16.msra.mxu0 0
    %4536 = vmatprep.subr.bf16.mxu0 0
    %4537 = vmatpush2.bf16.msra.mxu0 0
    %4538 = vmatprep.subr.bf16.mxu0 0
    %4539 = vmatpush2.bf16.msra.mxu0 0
    %4540 = vmatprep.subr.bf16.mxu0 0
    %4541 = vmatpush2.bf16.msra.mxu0 0
    %4542 = vmatprep.subr.bf16.mxu0 0
    %4543 = vmatpush2.bf16.msra.mxu0 0
    %4544 = vmatprep.subr.bf16.mxu0 0
    %4545 = vmatpush2.bf16.msra.mxu0 0
    %4546 = vmatprep.subr.bf16.mxu0 0
    %4547 = vmatpush2.bf16.msra.mxu0 0
    %4548 = vmatprep.mubr.bf16.mxu0 0
    %4549 = vmatmul.mubr.bf16.gmra.mxu0 %v4511
    %v4550 = vpop.f32.mrf.mxu0
    %v4551 = vadd.f32 0.0, %v4550
    %v4552 = vpop.f32.mrf.mxu0
    %v4553 = vpop.f32.mrf.mxu0
    %v4554 = vpop.f32.mrf.mxu0
    %4555 = vdwg.mxu0
    %4556 = vrot.lane.b32.xlu0 %v705, 32
    %v4557 = vpop.permute.xlu0 %4556
    %v4559 = vsel %vm1077, %v4313, 0
    %v4562 = vsel %vm1177, %v4557, 0
    %4564 = vmatprep.subr.bf16.mxu0 0
    %4565 = vmatpush1.bf16.msra.mxu0 0
    %4566 = vmatprep.subr.bf16.mxu0 0
    %4567 = vmatpush1.bf16.msra.mxu0 0
    %4568 = vmatprep.subr.bf16.mxu0 0
    %4569 = vmatpush1.bf16.msra.mxu0 0
    %4570 = vmatprep.subr.bf16.mxu0 0
    %4571 = vmatpush1.bf16.msra.mxu0 0
    %4572 = vmatprep.subr.bf16.mxu0 0
    %4573 = vmatpush1.bf16.msra.mxu0 0
    %4574 = vmatprep.subr.bf16.mxu0 0
    %4575 = vmatpush1.bf16.msra.mxu0 0
    %4576 = vmatprep.subr.bf16.mxu0 0
    %4577 = vmatpush1.bf16.msra.mxu0 0
    %4578 = vmatprep.subr.bf16.mxu0 0
    %4579 = vmatpush1.bf16.msra.mxu0 %v4562
    %4580 = vmatprep.subr.bf16.mxu0 0
    %4581 = vmatpush2.bf16.msra.mxu0 0
    %4582 = vmatprep.subr.bf16.mxu0 0
    %4583 = vmatpush2.bf16.msra.mxu0 0
    %4584 = vmatprep.subr.bf16.mxu0 0
    %4585 = vmatpush2.bf16.msra.mxu0 0
    %4586 = vmatprep.subr.bf16.mxu0 0
    %4587 = vmatpush2.bf16.msra.mxu0 0
    %4588 = vmatprep.subr.bf16.mxu0 0
    %4589 = vmatpush2.bf16.msra.mxu0 0
    %4590 = vmatprep.subr.bf16.mxu0 0
    %4591 = vmatpush2.bf16.msra.mxu0 0
    %4592 = vmatprep.subr.bf16.mxu0 0
    %4593 = vmatpush2.bf16.msra.mxu0 0
    %4594 = vmatprep.subr.bf16.mxu0 0
    %4595 = vmatpush2.bf16.msra.mxu0 0
    %4596 = vmatprep.mubr.bf16.mxu0 0
    %4597 = vmatmul.mubr.bf16.gmra.mxu0 %v4559
    %v4598 = vpop.f32.mrf.mxu0
    %v4599 = vadd.f32 0.0, %v4598
    %v4600 = vpop.f32.mrf.mxu0
    %v4601 = vpop.f32.mrf.mxu0
    %v4602 = vpop.f32.mrf.mxu0
    %4603 = vdwg.mxu0
    %4604 = vrot.lane.b32.xlu0 %v706, 32
    %v4605 = vpop.permute.xlu0 %4604
    %v4607 = vsel %vm1077, %v4314, 0
    %v4610 = vsel %vm1177, %v4605, 0
    %4612 = vmatprep.subr.bf16.mxu0 0
    %4613 = vmatpush1.bf16.msra.mxu0 0
    %4614 = vmatprep.subr.bf16.mxu0 0
    %4615 = vmatpush1.bf16.msra.mxu0 0
    %4616 = vmatprep.subr.bf16.mxu0 0
    %4617 = vmatpush1.bf16.msra.mxu0 0
    %4618 = vmatprep.subr.bf16.mxu0 0
    %4619 = vmatpush1.bf16.msra.mxu0 0
    %4620 = vmatprep.subr.bf16.mxu0 0
    %4621 = vmatpush1.bf16.msra.mxu0 0
    %4622 = vmatprep.subr.bf16.mxu0 0
    %4623 = vmatpush1.bf16.msra.mxu0 0
    %4624 = vmatprep.subr.bf16.mxu0 0
    %4625 = vmatpush1.bf16.msra.mxu0 0
    %4626 = vmatprep.subr.bf16.mxu0 0
    %4627 = vmatpush1.bf16.msra.mxu0 %v4610
    %4628 = vmatprep.subr.bf16.mxu0 0
    %4629 = vmatpush2.bf16.msra.mxu0 0
    %4630 = vmatprep.subr.bf16.mxu0 0
    %4631 = vmatpush2.bf16.msra.mxu0 0
    %4632 = vmatprep.subr.bf16.mxu0 0
    %4633 = vmatpush2.bf16.msra.mxu0 0
    %4634 = vmatprep.subr.bf16.mxu0 0
    %4635 = vmatpush2.bf16.msra.mxu0 0
    %4636 = vmatprep.subr.bf16.mxu0 0
    %4637 = vmatpush2.bf16.msra.mxu0 0
    %4638 = vmatprep.subr.bf16.mxu0 0
    %4639 = vmatpush2.bf16.msra.mxu0 0
    %4640 = vmatprep.subr.bf16.mxu0 0
    %4641 = vmatpush2.bf16.msra.mxu0 0
    %4642 = vmatprep.subr.bf16.mxu0 0
    %4643 = vmatpush2.bf16.msra.mxu0 0
    %4644 = vmatprep.mubr.bf16.mxu0 0
    %4645 = vmatmul.mubr.bf16.gmra.mxu0 %v4607
    %v4646 = vpop.f32.mrf.mxu0
    %v4647 = vadd.f32 0.0, %v4646
    %v4648 = vpop.f32.mrf.mxu0
    %v4649 = vpop.f32.mrf.mxu0
    %v4650 = vpop.f32.mrf.mxu0
    %4651 = vdwg.mxu0
    %4652 = vrot.lane.b32.xlu0 %v707, 32
    %v4653 = vpop.permute.xlu0 %4652
    %v4655 = vsel %vm1077, %v4315, 0
    %v4658 = vsel %vm1177, %v4653, 0
    %4660 = vmatprep.subr.bf16.mxu0 0
    %4661 = vmatpush1.bf16.msra.mxu0 0
    %4662 = vmatprep.subr.bf16.mxu0 0
    %4663 = vmatpush1.bf16.msra.mxu0 0
    %4664 = vmatprep.subr.bf16.mxu0 0
    %4665 = vmatpush1.bf16.msra.mxu0 0
    %4666 = vmatprep.subr.bf16.mxu0 0
    %4667 = vmatpush1.bf16.msra.mxu0 0
    %4668 = vmatprep.subr.bf16.mxu0 0
    %4669 = vmatpush1.bf16.msra.mxu0 0
    %4670 = vmatprep.subr.bf16.mxu0 0
    %4671 = vmatpush1.bf16.msra.mxu0 0
    %4672 = vmatprep.subr.bf16.mxu0 0
    %4673 = vmatpush1.bf16.msra.mxu0 0
    %4674 = vmatprep.subr.bf16.mxu0 0
    %4675 = vmatpush1.bf16.msra.mxu0 %v4658
    %4676 = vmatprep.subr.bf16.mxu0 0
    %4677 = vmatpush2.bf16.msra.mxu0 0
    %4678 = vmatprep.subr.bf16.mxu0 0
    %4679 = vmatpush2.bf16.msra.mxu0 0
    %4680 = vmatprep.subr.bf16.mxu0 0
    %4681 = vmatpush2.bf16.msra.mxu0 0
    %4682 = vmatprep.subr.bf16.mxu0 0
    %4683 = vmatpush2.bf16.msra.mxu0 0
    %4684 = vmatprep.subr.bf16.mxu0 0
    %4685 = vmatpush2.bf16.msra.mxu0 0
    %4686 = vmatprep.subr.bf16.mxu0 0
    %4687 = vmatpush2.bf16.msra.mxu0 0
    %4688 = vmatprep.subr.bf16.mxu0 0
    %4689 = vmatpush2.bf16.msra.mxu0 0
    %4690 = vmatprep.subr.bf16.mxu0 0
    %4691 = vmatpush2.bf16.msra.mxu0 0
    %4692 = vmatprep.mubr.bf16.mxu0 0
    %4693 = vmatmul.mubr.bf16.gmra.mxu0 %v4655
    %v4694 = vpop.f32.mrf.mxu0
    %v4695 = vadd.f32 0.0, %v4694
    %v4696 = vpop.f32.mrf.mxu0
    %v4697 = vpop.f32.mrf.mxu0
    %v4698 = vpop.f32.mrf.mxu0
    %4699 = vdwg.mxu0
    %s4700 = scalar_lea.vmem %s6, 192
    %v4701 = vld [vmem:[%s4700] sm:$0xf]
    %v4702 = vld [vmem:[%s4700 + $0x4] sm:$0xf]
    %v4703 = vld [vmem:[%s4700 + $0x8] sm:$0xf]
    %v4704 = vld [vmem:[%s4700 + $0xc] sm:$0xf]
    %v4705 = vld [vmem:[%s4700 + $0x10] sm:$0xf]
    %v4706 = vld [vmem:[%s4700 + $0x14] sm:$0xf]
    %v4707 = vld [vmem:[%s4700 + $0x18] sm:$0xf]
    %v4708 = vld [vmem:[%s4700 + $0x1c] sm:$0xf]
    %v4709 = vld [vmem:[%s4700 + $0x20] sm:$0xf]
    %v4710 = vld [vmem:[%s4700 + $0x24] sm:$0xf]
    %v4711 = vld [vmem:[%s4700 + $0x28] sm:$0xf]
    %v4712 = vld [vmem:[%s4700 + $0x2c] sm:$0xf]
    %v4713 = vld [vmem:[%s4700 + $0x30] sm:$0xf]
    %v4714 = vld [vmem:[%s4700 + $0x34] sm:$0xf]
    %v4715 = vld [vmem:[%s4700 + $0x38] sm:$0xf]
    %v4716 = vld [vmem:[%s4700 + $0x3c] sm:$0xf]
    %v4717 = vpack.c.bf16 %v4407, %v4359
    %v4718 = vpack.c.bf16 %v4503, %v4455
    %v4719 = vpack.c.bf16 %v4599, %v4551
    %v4720 = vpack.c.bf16 %v4695, %v4647
    %v4737 = vunpack.c.l.b16 %v4701
    %v4738 = vunpack.c.l.b16 %v4702
    %v4739 = vunpack.c.l.b16 %v4703
    %v4740 = vunpack.c.l.b16 %v4704
    %v4741 = vunpack.c.l.b16 %v4705
    %v4742 = vunpack.c.l.b16 %v4706
    %v4743 = vunpack.c.l.b16 %v4707
    %v4744 = vunpack.c.l.b16 %v4708
    %v4745 = vunpack.c.l.b16 %v4709
    %v4746 = vunpack.c.l.b16 %v4710
    %v4747 = vunpack.c.l.b16 %v4711
    %v4748 = vunpack.c.l.b16 %v4712
    %v4749 = vunpack.c.l.b16 %v4713
    %v4750 = vunpack.c.l.b16 %v4714
    %v4751 = vunpack.c.l.b16 %v4715
    %v4752 = vunpack.c.l.b16 %v4716
    %v4753 = vpack.c.b16 %v4738, %v4737
    %v4754 = vpack.c.b16 %v4740, %v4739
    %v4755 = vpack.c.b16 %v4742, %v4741
    %v4756 = vpack.c.b16 %v4744, %v4743
    %v4757 = vpack.c.b16 %v4746, %v4745
    %v4758 = vpack.c.b16 %v4748, %v4747
    %v4759 = vpack.c.b16 %v4750, %v4749
    %v4760 = vpack.c.b16 %v4752, %v4751
    %v4762 = vsel %vm708, %v4717, 0
    %v4765 = vsel %vm708, %v4718, 0
    %v4768 = vsel %vm708, %v4719, 0
    %v4771 = vsel %vm708, %v4720, 0
    %v4774 = vsel %vm708, %v4753, 0
    %v4777 = vsel %vm708, %v4754, 0
    %v4780 = vsel %vm708, %v4755, 0
    %v4783 = vsel %vm708, %v4756, 0
    %v4786 = vsel %vm708, %v4757, 0
    %v4789 = vsel %vm708, %v4758, 0
    %v4792 = vsel %vm708, %v4759, 0
    %v4795 = vsel %vm708, %v4760, 0
    %4797 = vmatprep.subr.bf16.mxu0 0
    %4798 = vmatpush1.bf16.xpose.msra.mxu0 %v4795
    %4799 = vmatprep.subr.bf16.mxu0 0
    %4800 = vmatpush1.bf16.xpose.msra.mxu0 %v4792
    %4801 = vmatprep.subr.bf16.mxu0 0
    %4802 = vmatpush1.bf16.xpose.msra.mxu0 %v4789
    %4803 = vmatprep.subr.bf16.mxu0 0
    %4804 = vmatpush1.bf16.xpose.msra.mxu0 %v4786
    %4805 = vmatprep.subr.bf16.mxu0 0
    %4806 = vmatpush1.bf16.xpose.msra.mxu0 %v4783
    %4807 = vmatprep.subr.bf16.mxu0 0
    %4808 = vmatpush1.bf16.xpose.msra.mxu0 %v4780
    %4809 = vmatprep.subr.bf16.mxu0 0
    %4810 = vmatpush1.bf16.xpose.msra.mxu0 %v4777
    %4811 = vmatprep.subr.bf16.mxu0 0
    %4812 = vmatpush1.bf16.xpose.msra.mxu0 %v4774
    %4813 = vmatprep.subr.bf16.mxu0 0
    %4814 = vmatpush2.bf16.xpose.msra.mxu0 0
    %4815 = vmatprep.subr.bf16.mxu0 0
    %4816 = vmatpush2.bf16.xpose.msra.mxu0 0
    %4817 = vmatprep.subr.bf16.mxu0 0
    %4818 = vmatpush2.bf16.xpose.msra.mxu0 0
    %4819 = vmatprep.subr.bf16.mxu0 0
    %4820 = vmatpush2.bf16.xpose.msra.mxu0 0
    %4821 = vmatprep.subr.bf16.mxu0 0
    %4822 = vmatpush2.bf16.xpose.msra.mxu0 0
    %4823 = vmatprep.subr.bf16.mxu0 0
    %4824 = vmatpush2.bf16.xpose.msra.mxu0 0
    %4825 = vmatprep.subr.bf16.mxu0 0
    %4826 = vmatpush2.bf16.xpose.msra.mxu0 0
    %4827 = vmatprep.subr.bf16.mxu0 0
    %4828 = vmatpush2.bf16.xpose.msra.mxu0 0
    %4829 = vmatprep.mubr.bf16.mxu0 0
    %4830 = vmatmul.mubr.bf16.gmra.mxu0 %v4762
    %v4831 = vpop.f32.mrf.mxu0
    %v4832 = vadd.f32 0.0, %v4831
    %v4833 = vpop.f32.mrf.mxu0
    %v4834 = vpop.f32.mrf.mxu0
    %v4835 = vadd.f32 0.0, %v4834
    %v4836 = vpop.f32.mrf.mxu0
    %4837 = vmatprep.mubr.bf16.mxu0 0
    %4838 = vmatmul.mubr.bf16.gmra.mxu0 %v4765
    %v4839 = vpop.f32.mrf.mxu0
    %v4840 = vadd.f32 0.0, %v4839
    %v4841 = vpop.f32.mrf.mxu0
    %v4842 = vpop.f32.mrf.mxu0
    %v4843 = vadd.f32 0.0, %v4842
    %v4844 = vpop.f32.mrf.mxu0
    %4845 = vmatprep.mubr.bf16.mxu0 0
    %4846 = vmatmul.mubr.bf16.gmra.mxu0 %v4768
    %v4847 = vpop.f32.mrf.mxu0
    %v4848 = vadd.f32 0.0, %v4847
    %v4849 = vpop.f32.mrf.mxu0
    %v4850 = vpop.f32.mrf.mxu0
    %v4851 = vadd.f32 0.0, %v4850
    %v4852 = vpop.f32.mrf.mxu0
    %4853 = vmatprep.mubr.bf16.mxu0 0
    %4854 = vmatmul.mubr.bf16.gmra.mxu0 %v4771
    %v4855 = vpop.f32.mrf.mxu0
    %v4856 = vadd.f32 0.0, %v4855
    %v4857 = vpop.f32.mrf.mxu0
    %v4858 = vpop.f32.mrf.mxu0
    %v4859 = vadd.f32 0.0, %v4858
    %v4860 = vpop.f32.mrf.mxu0
    %4861 = vdwg.mxu0
    %v4862 = vadd.f32 %v3812, %v4832
    %v4863 = vadd.f32 %v3813, %v4835
    %v4864 = vadd.f32 %v3814, %v4840
    %v4865 = vadd.f32 %v3815, %v4843
    %v4866 = vadd.f32 %v3816, %v4848
    %v4867 = vadd.f32 %v3817, %v4851
    %v4868 = vadd.f32 %v3818, %v4856
    %v4869 = vadd.f32 %v3819, %v4859
    %v4870 = vld [vmem:[%s7] sm:$0x1]
    %v4871 = vlaneseq
    %v4872 = vshrl.u32 %v4871, 7
    %v4873 = vsub.s32 0, %v4872
    %v4874 = vrot.slane %v4870, %v4873
    %v4875 = vadd.f32 %v4862, %v4874
    %v4876 = vadd.f32 %v4863, %v4874
    %v4877 = vadd.f32 %v4864, %v4874
    %v4878 = vadd.f32 %v4865, %v4874
    %v4879 = vadd.f32 %v4866, %v4874
    %v4880 = vadd.f32 %v4867, %v4874
    %v4881 = vadd.f32 %v4868, %v4874
    %v4882 = vadd.f32 %v4869, %v4874
    %v4883 = vadd.f32 %v317, %v4875
    %v4884 = vadd.f32 %v318, %v4876
    %v4885 = vadd.f32 %v319, %v4877
    %v4886 = vadd.f32 %v320, %v4878
    %v4887 = vadd.f32 %v321, %v4879
    %v4888 = vadd.f32 %v322, %v4880
    %v4889 = vadd.f32 %v323, %v4881
    %v4890 = vadd.f32 %v324, %v4882
    %v4891 = vld [vmem:[%s12] sm:$0x1]
    %v4892 = vld [vmem:[%s13] sm:$0x1]
    %4893 = vadd.xlane.f32.xlu0 %v4883
    %v4894 = vpop.xlane.xlu0 %4893
    %4895 = vadd.xlane.f32.xlu0 %v4884
    %v4896 = vpop.xlane.xlu0 %4895
    %4897 = vadd.xlane.f32.xlu0 %v4885
    %v4898 = vpop.xlane.xlu0 %4897
    %4899 = vadd.xlane.f32.xlu0 %v4886
    %v4900 = vpop.xlane.xlu0 %4899
    %4901 = vadd.xlane.f32.xlu0 %v4887
    %v4902 = vpop.xlane.xlu0 %4901
    %4903 = vadd.xlane.f32.xlu0 %v4888
    %v4904 = vpop.xlane.xlu0 %4903
    %4905 = vadd.xlane.f32.xlu0 %v4889
    %v4906 = vpop.xlane.xlu0 %4905
    %4907 = vadd.xlane.f32.xlu0 %v4890
    %v4908 = vpop.xlane.xlu0 %4907
    %v4909 = vrcp.pop 128.0
    %v4910 = vmul.f32 %v4894, %v4909
    %v4911 = vmul.f32 %v4896, %v4909
    %v4912 = vmul.f32 %v4898, %v4909
    %v4913 = vmul.f32 %v4900, %v4909
    %v4914 = vmul.f32 %v4902, %v4909
    %v4915 = vmul.f32 %v4904, %v4909
    %v4916 = vmul.f32 %v4906, %v4909
    %v4917 = vmul.f32 %v4908, %v4909
    %v4918 = vsub.f32 %v4883, %v4910
    %v4919 = vsub.f32 %v4884, %v4911
    %v4920 = vsub.f32 %v4885, %v4912
    %v4921 = vsub.f32 %v4886, %v4913
    %v4922 = vsub.f32 %v4887, %v4914
    %v4923 = vsub.f32 %v4888, %v4915
    %v4924 = vsub.f32 %v4889, %v4916
    %v4925 = vsub.f32 %v4890, %v4917
    %v4926 = vmul.f32 %v4918, %v4918
    %v4927 = vmul.f32 %v4919, %v4919
    %v4928 = vmul.f32 %v4920, %v4920
    %v4929 = vmul.f32 %v4921, %v4921
    %v4930 = vmul.f32 %v4922, %v4922
    %v4931 = vmul.f32 %v4923, %v4923
    %v4932 = vmul.f32 %v4924, %v4924
    %v4933 = vmul.f32 %v4925, %v4925
    %4934 = vadd.xlane.f32.xlu0 %v4926
    %v4935 = vpop.xlane.xlu0 %4934
    %4936 = vadd.xlane.f32.xlu0 %v4927
    %v4937 = vpop.xlane.xlu0 %4936
    %4938 = vadd.xlane.f32.xlu0 %v4928
    %v4939 = vpop.xlane.xlu0 %4938
    %4940 = vadd.xlane.f32.xlu0 %v4929
    %v4941 = vpop.xlane.xlu0 %4940
    %4942 = vadd.xlane.f32.xlu0 %v4930
    %v4943 = vpop.xlane.xlu0 %4942
    %4944 = vadd.xlane.f32.xlu0 %v4931
    %v4945 = vpop.xlane.xlu0 %4944
    %4946 = vadd.xlane.f32.xlu0 %v4932
    %v4947 = vpop.xlane.xlu0 %4946
    %4948 = vadd.xlane.f32.xlu0 %v4933
    %v4949 = vpop.xlane.xlu0 %4948
    %v4950 = vmul.f32 %v4935, %v4909
    %v4951 = vmul.f32 %v4937, %v4909
    %v4952 = vmul.f32 %v4939, %v4909
    %v4953 = vmul.f32 %v4941, %v4909
    %v4954 = vmul.f32 %v4943, %v4909
    %v4955 = vmul.f32 %v4945, %v4909
    %v4956 = vmul.f32 %v4947, %v4909
    %v4957 = vmul.f32 %v4949, %v4909
    %v4958 = vadd.f32 %v4950, 1e-05
    %v4959 = vadd.f32 %v4951, 1e-05
    %v4960 = vadd.f32 %v4952, 1e-05
    %v4961 = vadd.f32 %v4953, 1e-05
    %v4962 = vadd.f32 %v4954, 1e-05
    %v4963 = vadd.f32 %v4955, 1e-05
    %v4964 = vadd.f32 %v4956, 1e-05
    %v4965 = vadd.f32 %v4957, 1e-05
    %v4966 = vrsqrt.pop %v4958
    %v4967 = vrsqrt.pop %v4959
    %v4968 = vrsqrt.pop %v4960
    %v4969 = vrsqrt.pop %v4961
    %v4970 = vrsqrt.pop %v4962
    %v4971 = vrsqrt.pop %v4963
    %v4972 = vrsqrt.pop %v4964
    %v4973 = vrsqrt.pop %v4965
    %v4974 = vmul.f32 %v4918, %v4966
    %v4975 = vmul.f32 %v4919, %v4967
    %v4976 = vmul.f32 %v4920, %v4968
    %v4977 = vmul.f32 %v4921, %v4969
    %v4978 = vmul.f32 %v4922, %v4970
    %v4979 = vmul.f32 %v4923, %v4971
    %v4980 = vmul.f32 %v4924, %v4972
    %v4981 = vmul.f32 %v4925, %v4973
    %v4982 = vlaneseq
    %v4983 = vshrl.u32 %v4982, 7
    %v4984 = vsub.s32 0, %v4983
    %v4985 = vrot.slane %v4891, %v4984
    %v4986 = vmul.f32 %v4974, %v4985
    %v4987 = vmul.f32 %v4975, %v4985
    %v4988 = vmul.f32 %v4976, %v4985
    %v4989 = vmul.f32 %v4977, %v4985
    %v4990 = vmul.f32 %v4978, %v4985
    %v4991 = vmul.f32 %v4979, %v4985
    %v4992 = vmul.f32 %v4980, %v4985
    %v4993 = vmul.f32 %v4981, %v4985
    %v4994 = vlaneseq
    %v4995 = vshrl.u32 %v4994, 7
    %v4996 = vsub.s32 0, %v4995
    %v4997 = vrot.slane %v4892, %v4996
    %v4998 = vadd.f32 %v4986, %v4997
    %v4999 = vadd.f32 %v4987, %v4997
    %v5000 = vadd.f32 %v4988, %v4997
    %v5001 = vadd.f32 %v4989, %v4997
    %v5002 = vadd.f32 %v4990, %v4997
    %v5003 = vadd.f32 %v4991, %v4997
    %v5004 = vadd.f32 %v4992, %v4997
    %v5005 = vadd.f32 %v4993, %v4997
    %v5006 = vld [vmem:[%s8] sm:$0xf]
    %v5007 = vld [vmem:[%s8 + $0x4] sm:$0xf]
    %v5008 = vld [vmem:[%s8 + $0x8] sm:$0xf]
    %v5009 = vld [vmem:[%s8 + $0xc] sm:$0xf]
    %v5010 = vpack.c.bf16 %v4999, %v4998
    %v5011 = vpack.c.bf16 %v5001, %v5000
    %v5012 = vpack.c.bf16 %v5003, %v5002
    %v5013 = vpack.c.bf16 %v5005, %v5004
    %v5014 = vld [vmem:[%s9] sm:$0x1]
    %v5015 = vlaneseq
    %v5016 = vshrl.u32 %v5015, 7
    %v5017 = vsub.s32 0, %v5016
    %v5018 = vrot.slane %v5014, %v5017
    %v5023 = vunpack.c.l.b16 %v5006
    %v5024 = vunpack.c.l.b16 %v5007
    %v5025 = vunpack.c.l.b16 %v5008
    %v5026 = vunpack.c.l.b16 %v5009
    %v5027 = vpack.c.b16 %v5024, %v5023
    %v5028 = vpack.c.b16 %v5026, %v5025
    %5031 = vmatprep.subr.bf16.mxu0 0
    %5032 = vmatpush1.bf16.xpose.msra.mxu0 0
    %5033 = vmatprep.subr.bf16.mxu0 0
    %5034 = vmatpush1.bf16.xpose.msra.mxu0 0
    %5035 = vmatprep.subr.bf16.mxu0 0
    %5036 = vmatpush1.bf16.xpose.msra.mxu0 0
    %5037 = vmatprep.subr.bf16.mxu0 0
    %5038 = vmatpush1.bf16.xpose.msra.mxu0 0
    %5039 = vmatprep.subr.bf16.mxu0 0
    %5040 = vmatpush1.bf16.xpose.msra.mxu0 0
    %5041 = vmatprep.subr.bf16.mxu0 0
    %5042 = vmatpush1.bf16.xpose.msra.mxu0 0
    %5043 = vmatprep.subr.bf16.mxu0 0
    %5044 = vmatpush1.bf16.xpose.msra.mxu0 %v5028
    %5045 = vmatprep.subr.bf16.mxu0 0
    %5046 = vmatpush1.bf16.xpose.msra.mxu0 %v5027
    %5047 = vmatprep.subr.bf16.mxu0 0
    %5048 = vmatpush2.bf16.xpose.msra.mxu0 0
    %5049 = vmatprep.subr.bf16.mxu0 0
    %5050 = vmatpush2.bf16.xpose.msra.mxu0 0
    %5051 = vmatprep.subr.bf16.mxu0 0
    %5052 = vmatpush2.bf16.xpose.msra.mxu0 0
    %5053 = vmatprep.subr.bf16.mxu0 0
    %5054 = vmatpush2.bf16.xpose.msra.mxu0 0
    %5055 = vmatprep.subr.bf16.mxu0 0
    %5056 = vmatpush2.bf16.xpose.msra.mxu0 0
    %5057 = vmatprep.subr.bf16.mxu0 0
    %5058 = vmatpush2.bf16.xpose.msra.mxu0 0
    %5059 = vmatprep.subr.bf16.mxu0 0
    %5060 = vmatpush2.bf16.xpose.msra.mxu0 0
    %5061 = vmatprep.subr.bf16.mxu0 0
    %5062 = vmatpush2.bf16.xpose.msra.mxu0 0
    %5063 = vmatprep.mubr.bf16.mxu0 0
    %5064 = vmatmul.mubr.bf16.gmra.mxu0 %v5010
    %v5065 = vpop.f32.mrf.mxu0
    %v5066 = vadd.f32 %v5018, %v5065
    %v5067 = vpop.f32.mrf.mxu0
    %v5068 = vpop.f32.mrf.mxu0
    %v5069 = vadd.f32 %v5018, %v5068
    %v5070 = vpop.f32.mrf.mxu0
    %5071 = vmatprep.mubr.bf16.mxu0 0
    %5072 = vmatmul.mubr.bf16.gmra.mxu0 %v5011
    %v5073 = vpop.f32.mrf.mxu0
    %v5074 = vadd.f32 %v5018, %v5073
    %v5075 = vpop.f32.mrf.mxu0
    %v5076 = vpop.f32.mrf.mxu0
    %v5077 = vadd.f32 %v5018, %v5076
    %v5078 = vpop.f32.mrf.mxu0
    %5079 = vmatprep.mubr.bf16.mxu0 0
    %5080 = vmatmul.mubr.bf16.gmra.mxu0 %v5012
    %v5081 = vpop.f32.mrf.mxu0
    %v5082 = vadd.f32 %v5018, %v5081
    %v5083 = vpop.f32.mrf.mxu0
    %v5084 = vpop.f32.mrf.mxu0
    %v5085 = vadd.f32 %v5018, %v5084
    %v5086 = vpop.f32.mrf.mxu0
    %5087 = vmatprep.mubr.bf16.mxu0 0
    %5088 = vmatmul.mubr.bf16.gmra.mxu0 %v5013
    %v5089 = vpop.f32.mrf.mxu0
    %v5090 = vadd.f32 %v5018, %v5089
    %v5091 = vpop.f32.mrf.mxu0
    %v5092 = vpop.f32.mrf.mxu0
    %v5093 = vadd.f32 %v5018, %v5092
    %v5094 = vpop.f32.mrf.mxu0
    %5095 = vdwg.mxu0
    %v5096 = vmax.f32 %v5066, 0.0
    %v5097 = vmax.f32 %v5069, 0.0
    %v5098 = vmax.f32 %v5074, 0.0
    %v5099 = vmax.f32 %v5077, 0.0
    %v5100 = vmax.f32 %v5082, 0.0
    %v5101 = vmax.f32 %v5085, 0.0
    %v5102 = vmax.f32 %v5090, 0.0
    %v5103 = vmax.f32 %v5093, 0.0
    %v5104 = vld [vmem:[%s10] sm:$0xf]
    %v5105 = vld [vmem:[%s10 + $0x4] sm:$0xf]
    %v5106 = vld [vmem:[%s10 + $0x8] sm:$0xf]
    %v5107 = vld [vmem:[%s10 + $0xc] sm:$0xf]
    %v5108 = vld [vmem:[%s10 + $0x10] sm:$0xf]
    %v5109 = vld [vmem:[%s10 + $0x14] sm:$0xf]
    %v5110 = vld [vmem:[%s10 + $0x18] sm:$0xf]
    %v5111 = vld [vmem:[%s10 + $0x1c] sm:$0xf]
    %v5112 = vld [vmem:[%s10 + $0x20] sm:$0xf]
    %v5113 = vld [vmem:[%s10 + $0x24] sm:$0xf]
    %v5114 = vld [vmem:[%s10 + $0x28] sm:$0xf]
    %v5115 = vld [vmem:[%s10 + $0x2c] sm:$0xf]
    %v5116 = vld [vmem:[%s10 + $0x30] sm:$0xf]
    %v5117 = vld [vmem:[%s10 + $0x34] sm:$0xf]
    %v5118 = vld [vmem:[%s10 + $0x38] sm:$0xf]
    %v5119 = vld [vmem:[%s10 + $0x3c] sm:$0xf]
    %v5120 = vpack.c.bf16 %v5097, %v5096
    %v5121 = vpack.c.bf16 %v5099, %v5098
    %v5122 = vpack.c.bf16 %v5101, %v5100
    %v5123 = vpack.c.bf16 %v5103, %v5102
    %v5124 = vld [vmem:[%s11] sm:$0x1]
    %v5125 = vlaneseq
    %v5126 = vshrl.u32 %v5125, 7
    %v5127 = vsub.s32 0, %v5126
    %v5128 = vrot.slane %v5124, %v5127
    %v5145 = vunpack.c.l.b16 %v5104
    %v5146 = vunpack.c.l.b16 %v5105
    %v5147 = vunpack.c.l.b16 %v5106
    %v5148 = vunpack.c.l.b16 %v5107
    %v5149 = vunpack.c.l.b16 %v5108
    %v5150 = vunpack.c.l.b16 %v5109
    %v5151 = vunpack.c.l.b16 %v5110
    %v5152 = vunpack.c.l.b16 %v5111
    %v5153 = vunpack.c.l.b16 %v5112
    %v5154 = vunpack.c.l.b16 %v5113
    %v5155 = vunpack.c.l.b16 %v5114
    %v5156 = vunpack.c.l.b16 %v5115
    %v5157 = vunpack.c.l.b16 %v5116
    %v5158 = vunpack.c.l.b16 %v5117
    %v5159 = vunpack.c.l.b16 %v5118
    %v5160 = vunpack.c.l.b16 %v5119
    %v5161 = vpack.c.b16 %v5146, %v5145
    %v5162 = vpack.c.b16 %v5148, %v5147
    %v5163 = vpack.c.b16 %v5150, %v5149
    %v5164 = vpack.c.b16 %v5152, %v5151
    %v5165 = vpack.c.b16 %v5154, %v5153
    %v5166 = vpack.c.b16 %v5156, %v5155
    %v5167 = vpack.c.b16 %v5158, %v5157
    %v5168 = vpack.c.b16 %v5160, %v5159
    %v5170 = vsel %vm708, %v5120, 0
    %v5173 = vsel %vm708, %v5121, 0
    %v5176 = vsel %vm708, %v5122, 0
    %v5179 = vsel %vm708, %v5123, 0
    %v5182 = vsel %vm708, %v5161, 0
    %v5185 = vsel %vm708, %v5162, 0
    %v5188 = vsel %vm708, %v5163, 0
    %v5191 = vsel %vm708, %v5164, 0
    %v5194 = vsel %vm708, %v5165, 0
    %v5197 = vsel %vm708, %v5166, 0
    %v5200 = vsel %vm708, %v5167, 0
    %v5203 = vsel %vm708, %v5168, 0
    %5205 = vmatprep.subr.bf16.mxu0 0
    %5206 = vmatpush1.bf16.xpose.msra.mxu0 %v5203
    %5207 = vmatprep.subr.bf16.mxu0 0
    %5208 = vmatpush1.bf16.xpose.msra.mxu0 %v5200
    %5209 = vmatprep.subr.bf16.mxu0 0
    %5210 = vmatpush1.bf16.xpose.msra.mxu0 %v5197
    %5211 = vmatprep.subr.bf16.mxu0 0
    %5212 = vmatpush1.bf16.xpose.msra.mxu0 %v5194
    %5213 = vmatprep.subr.bf16.mxu0 0
    %5214 = vmatpush1.bf16.xpose.msra.mxu0 %v5191
    %5215 = vmatprep.subr.bf16.mxu0 0
    %5216 = vmatpush1.bf16.xpose.msra.mxu0 %v5188
    %5217 = vmatprep.subr.bf16.mxu0 0
    %5218 = vmatpush1.bf16.xpose.msra.mxu0 %v5185
    %5219 = vmatprep.subr.bf16.mxu0 0
    %5220 = vmatpush1.bf16.xpose.msra.mxu0 %v5182
    %5221 = vmatprep.subr.bf16.mxu0 0
    %5222 = vmatpush2.bf16.xpose.msra.mxu0 0
    %5223 = vmatprep.subr.bf16.mxu0 0
    %5224 = vmatpush2.bf16.xpose.msra.mxu0 0
    %5225 = vmatprep.subr.bf16.mxu0 0
    %5226 = vmatpush2.bf16.xpose.msra.mxu0 0
    %5227 = vmatprep.subr.bf16.mxu0 0
    %5228 = vmatpush2.bf16.xpose.msra.mxu0 0
    %5229 = vmatprep.subr.bf16.mxu0 0
    %5230 = vmatpush2.bf16.xpose.msra.mxu0 0
    %5231 = vmatprep.subr.bf16.mxu0 0
    %5232 = vmatpush2.bf16.xpose.msra.mxu0 0
    %5233 = vmatprep.subr.bf16.mxu0 0
    %5234 = vmatpush2.bf16.xpose.msra.mxu0 0
    %5235 = vmatprep.subr.bf16.mxu0 0
    %5236 = vmatpush2.bf16.xpose.msra.mxu0 0
    %5237 = vmatprep.mubr.bf16.mxu0 0
    %5238 = vmatmul.mubr.bf16.gmra.mxu0 %v5170
    %v5239 = vpop.f32.mrf.mxu0
    %v5240 = vadd.f32 %v5128, %v5239
    %v5241 = vpop.f32.mrf.mxu0
    %v5242 = vpop.f32.mrf.mxu0
    %v5243 = vadd.f32 %v5128, %v5242
    %v5244 = vpop.f32.mrf.mxu0
    %5245 = vmatprep.mubr.bf16.mxu0 0
    %5246 = vmatmul.mubr.bf16.gmra.mxu0 %v5173
    %v5247 = vpop.f32.mrf.mxu0
    %v5248 = vadd.f32 %v5128, %v5247
    %v5249 = vpop.f32.mrf.mxu0
    %v5250 = vpop.f32.mrf.mxu0
    %v5251 = vadd.f32 %v5128, %v5250
    %v5252 = vpop.f32.mrf.mxu0
    %5253 = vmatprep.mubr.bf16.mxu0 0
    %5254 = vmatmul.mubr.bf16.gmra.mxu0 %v5176
    %v5255 = vpop.f32.mrf.mxu0
    %v5256 = vadd.f32 %v5128, %v5255
    %v5257 = vpop.f32.mrf.mxu0
    %v5258 = vpop.f32.mrf.mxu0
    %v5259 = vadd.f32 %v5128, %v5258
    %v5260 = vpop.f32.mrf.mxu0
    %5261 = vmatprep.mubr.bf16.mxu0 0
    %5262 = vmatmul.mubr.bf16.gmra.mxu0 %v5179
    %v5263 = vpop.f32.mrf.mxu0
    %v5264 = vadd.f32 %v5128, %v5263
    %v5265 = vpop.f32.mrf.mxu0
    %v5266 = vpop.f32.mrf.mxu0
    %v5267 = vadd.f32 %v5128, %v5266
    %v5268 = vpop.f32.mrf.mxu0
    %5269 = vdwg.mxu0
    %v5270 = vadd.f32 %v4998, %v5240
    %v5271 = vadd.f32 %v4999, %v5243
    %v5272 = vadd.f32 %v5000, %v5248
    %v5273 = vadd.f32 %v5001, %v5251
    %v5274 = vadd.f32 %v5002, %v5256
    %v5275 = vadd.f32 %v5003, %v5259
    %v5276 = vadd.f32 %v5004, %v5264
    %v5277 = vadd.f32 %v5005, %v5267
    %v5278 = vld [vmem:[%s14] sm:$0x1]
    %v5279 = vld [vmem:[%s15] sm:$0x1]
    %5280 = vadd.xlane.f32.xlu0 %v5270
    %v5281 = vpop.xlane.xlu0 %5280
    %5282 = vadd.xlane.f32.xlu0 %v5271
    %v5283 = vpop.xlane.xlu0 %5282
    %5284 = vadd.xlane.f32.xlu0 %v5272
    %v5285 = vpop.xlane.xlu0 %5284
    %5286 = vadd.xlane.f32.xlu0 %v5273
    %v5287 = vpop.xlane.xlu0 %5286
    %5288 = vadd.xlane.f32.xlu0 %v5274
    %v5289 = vpop.xlane.xlu0 %5288
    %5290 = vadd.xlane.f32.xlu0 %v5275
    %v5291 = vpop.xlane.xlu0 %5290
    %5292 = vadd.xlane.f32.xlu0 %v5276
    %v5293 = vpop.xlane.xlu0 %5292
    %5294 = vadd.xlane.f32.xlu0 %v5277
    %v5295 = vpop.xlane.xlu0 %5294
    %v5296 = vmul.f32 %v5281, %v4909
    %v5297 = vmul.f32 %v5283, %v4909
    %v5298 = vmul.f32 %v5285, %v4909
    %v5299 = vmul.f32 %v5287, %v4909
    %v5300 = vmul.f32 %v5289, %v4909
    %v5301 = vmul.f32 %v5291, %v4909
    %v5302 = vmul.f32 %v5293, %v4909
    %v5303 = vmul.f32 %v5295, %v4909
    %v5304 = vsub.f32 %v5270, %v5296
    %v5305 = vsub.f32 %v5271, %v5297
    %v5306 = vsub.f32 %v5272, %v5298
    %v5307 = vsub.f32 %v5273, %v5299
    %v5308 = vsub.f32 %v5274, %v5300
    %v5309 = vsub.f32 %v5275, %v5301
    %v5310 = vsub.f32 %v5276, %v5302
    %v5311 = vsub.f32 %v5277, %v5303
    %v5312 = vmul.f32 %v5304, %v5304
    %v5313 = vmul.f32 %v5305, %v5305
    %v5314 = vmul.f32 %v5306, %v5306
    %v5315 = vmul.f32 %v5307, %v5307
    %v5316 = vmul.f32 %v5308, %v5308
    %v5317 = vmul.f32 %v5309, %v5309
    %v5318 = vmul.f32 %v5310, %v5310
    %v5319 = vmul.f32 %v5311, %v5311
    %5320 = vadd.xlane.f32.xlu0 %v5312
    %v5321 = vpop.xlane.xlu0 %5320
    %5322 = vadd.xlane.f32.xlu0 %v5313
    %v5323 = vpop.xlane.xlu0 %5322
    %5324 = vadd.xlane.f32.xlu0 %v5314
    %v5325 = vpop.xlane.xlu0 %5324
    %5326 = vadd.xlane.f32.xlu0 %v5315
    %v5327 = vpop.xlane.xlu0 %5326
    %5328 = vadd.xlane.f32.xlu0 %v5316
    %v5329 = vpop.xlane.xlu0 %5328
    %5330 = vadd.xlane.f32.xlu0 %v5317
    %v5331 = vpop.xlane.xlu0 %5330
    %5332 = vadd.xlane.f32.xlu0 %v5318
    %v5333 = vpop.xlane.xlu0 %5332
    %5334 = vadd.xlane.f32.xlu0 %v5319
    %v5335 = vpop.xlane.xlu0 %5334
    %v5336 = vmul.f32 %v5321, %v4909
    %v5337 = vmul.f32 %v5323, %v4909
    %v5338 = vmul.f32 %v5325, %v4909
    %v5339 = vmul.f32 %v5327, %v4909
    %v5340 = vmul.f32 %v5329, %v4909
    %v5341 = vmul.f32 %v5331, %v4909
    %v5342 = vmul.f32 %v5333, %v4909
    %v5343 = vmul.f32 %v5335, %v4909
    %v5344 = vadd.f32 %v5336, 1e-05
    %v5345 = vadd.f32 %v5337, 1e-05
    %v5346 = vadd.f32 %v5338, 1e-05
    %v5347 = vadd.f32 %v5339, 1e-05
    %v5348 = vadd.f32 %v5340, 1e-05
    %v5349 = vadd.f32 %v5341, 1e-05
    %v5350 = vadd.f32 %v5342, 1e-05
    %v5351 = vadd.f32 %v5343, 1e-05
    %v5352 = vrsqrt.pop %v5344
    %v5353 = vrsqrt.pop %v5345
    %v5354 = vrsqrt.pop %v5346
    %v5355 = vrsqrt.pop %v5347
    %v5356 = vrsqrt.pop %v5348
    %v5357 = vrsqrt.pop %v5349
    %v5358 = vrsqrt.pop %v5350
    %v5359 = vrsqrt.pop %v5351
    %v5360 = vmul.f32 %v5304, %v5352
    %v5361 = vmul.f32 %v5305, %v5353
    %v5362 = vmul.f32 %v5306, %v5354
    %v5363 = vmul.f32 %v5307, %v5355
    %v5364 = vmul.f32 %v5308, %v5356
    %v5365 = vmul.f32 %v5309, %v5357
    %v5366 = vmul.f32 %v5310, %v5358
    %v5367 = vmul.f32 %v5311, %v5359
    %v5368 = vlaneseq
    %v5369 = vshrl.u32 %v5368, 7
    %v5370 = vsub.s32 0, %v5369
    %v5371 = vrot.slane %v5278, %v5370
    %v5372 = vmul.f32 %v5360, %v5371
    %v5373 = vmul.f32 %v5361, %v5371
    %v5374 = vmul.f32 %v5362, %v5371
    %v5375 = vmul.f32 %v5363, %v5371
    %v5376 = vmul.f32 %v5364, %v5371
    %v5377 = vmul.f32 %v5365, %v5371
    %v5378 = vmul.f32 %v5366, %v5371
    %v5379 = vmul.f32 %v5367, %v5371
    %v5380 = vlaneseq
    %v5381 = vshrl.u32 %v5380, 7
    %v5382 = vsub.s32 0, %v5381
    %v5383 = vrot.slane %v5279, %v5382
    %v5384 = vadd.f32 %v5372, %v5383
    %v5385 = vadd.f32 %v5373, %v5383
    %v5386 = vadd.f32 %v5374, %v5383
    %v5387 = vadd.f32 %v5375, %v5383
    %v5388 = vadd.f32 %v5376, %v5383
    %v5389 = vadd.f32 %v5377, %v5383
    %v5390 = vadd.f32 %v5378, %v5383
    %v5391 = vadd.f32 %v5379, %v5383
    %s5392 = scalar_lea.vmem %s4, 192
    %v5393 = vld [vmem:[%s5392] sm:$0xf]
    %v5394 = vld [vmem:[%s5392 + $0x4] sm:$0xf]
    %v5395 = vld [vmem:[%s5392 + $0x8] sm:$0xf]
    %v5396 = vld [vmem:[%s5392 + $0xc] sm:$0xf]
    %v5397 = vld [vmem:[%s5392 + $0x10] sm:$0xf]
    %v5398 = vld [vmem:[%s5392 + $0x14] sm:$0xf]
    %v5399 = vld [vmem:[%s5392 + $0x18] sm:$0xf]
    %v5400 = vld [vmem:[%s5392 + $0x1c] sm:$0xf]
    %v5401 = vld [vmem:[%s5392 + $0x20] sm:$0xf]
    %v5402 = vld [vmem:[%s5392 + $0x24] sm:$0xf]
    %v5403 = vld [vmem:[%s5392 + $0x28] sm:$0xf]
    %v5404 = vld [vmem:[%s5392 + $0x2c] sm:$0xf]
    %v5405 = vld [vmem:[%s5392 + $0x30] sm:$0xf]
    %v5406 = vld [vmem:[%s5392 + $0x34] sm:$0xf]
    %v5407 = vld [vmem:[%s5392 + $0x38] sm:$0xf]
    %v5408 = vld [vmem:[%s5392 + $0x3c] sm:$0xf]
    %v5409 = vld [vmem:[%s5392 + $0x40] sm:$0xf]
    %v5410 = vld [vmem:[%s5392 + $0x44] sm:$0xf]
    %v5411 = vld [vmem:[%s5392 + $0x48] sm:$0xf]
    %v5412 = vld [vmem:[%s5392 + $0x4c] sm:$0xf]
    %v5413 = vld [vmem:[%s5392 + $0x50] sm:$0xf]
    %v5414 = vld [vmem:[%s5392 + $0x54] sm:$0xf]
    %v5415 = vld [vmem:[%s5392 + $0x58] sm:$0xf]
    %v5416 = vld [vmem:[%s5392 + $0x5c] sm:$0xf]
    %v5417 = vld [vmem:[%s5392 + $0x60] sm:$0xf]
    %v5418 = vld [vmem:[%s5392 + $0x64] sm:$0xf]
    %v5419 = vld [vmem:[%s5392 + $0x68] sm:$0xf]
    %v5420 = vld [vmem:[%s5392 + $0x6c] sm:$0xf]
    %v5421 = vld [vmem:[%s5392 + $0x70] sm:$0xf]
    %v5422 = vld [vmem:[%s5392 + $0x74] sm:$0xf]
    %v5423 = vld [vmem:[%s5392 + $0x78] sm:$0xf]
    %v5424 = vld [vmem:[%s5392 + $0x7c] sm:$0xf]
    %v5425 = vld [vmem:[%s5392 + $0x80] sm:$0xf]
    %v5426 = vld [vmem:[%s5392 + $0x84] sm:$0xf]
    %v5427 = vld [vmem:[%s5392 + $0x88] sm:$0xf]
    %v5428 = vld [vmem:[%s5392 + $0x8c] sm:$0xf]
    %v5429 = vld [vmem:[%s5392 + $0x90] sm:$0xf]
    %v5430 = vld [vmem:[%s5392 + $0x94] sm:$0xf]
    %v5431 = vld [vmem:[%s5392 + $0x98] sm:$0xf]
    %v5432 = vld [vmem:[%s5392 + $0x9c] sm:$0xf]
    %v5433 = vld [vmem:[%s5392 + $0xa0] sm:$0xf]
    %v5434 = vld [vmem:[%s5392 + $0xa4] sm:$0xf]
    %v5435 = vld [vmem:[%s5392 + $0xa8] sm:$0xf]
    %v5436 = vld [vmem:[%s5392 + $0xac] sm:$0xf]
    %v5437 = vld [vmem:[%s5392 + $0xb0] sm:$0xf]
    %v5438 = vld [vmem:[%s5392 + $0xb4] sm:$0xf]
    %v5439 = vld [vmem:[%s5392 + $0xb8] sm:$0xf]
    %v5440 = vld [vmem:[%s5392 + $0xbc] sm:$0xf]
    %v5441 = vpack.c.bf16 %v5385, %v5384
    %v5442 = vpack.c.bf16 %v5387, %v5386
    %v5443 = vpack.c.bf16 %v5389, %v5388
    %v5444 = vpack.c.bf16 %v5391, %v5390
    %s5445 = scalar_lea.vmem %s5, 1
    %v5446 = vld [vmem:[%s5445] ss:$2 sm:$0x7]
    %v5448 = vlaneseq
    %v5449 = vshrl.u32 %v5448, 7
    %v5450 = vsub.s32 0, %v5449
    %v5451 = vrot.slane %v5446, %v5450
    %v5452 = vlaneseq
    %v5453 = vshrl.u32 %v5452, 7
    %v5454 = vsub.s32 1, %v5453
    %v5455 = vrot.slane %v5446, %v5454
    %v5456 = vlaneseq
    %v5457 = vshrl.u32 %v5456, 7
    %v5458 = vsub.s32 2, %v5457
    %v5459 = vrot.slane %v5446, %v5458
    %v5511 = vunpack.c.l.b16 %v5393
    %v5512 = vunpack.c.l.b16 %v5394
    %v5513 = vunpack.c.l.b16 %v5395
    %v5514 = vunpack.c.l.b16 %v5396
    %v5515 = vunpack.c.l.b16 %v5397
    %v5516 = vunpack.c.l.b16 %v5398
    %v5517 = vunpack.c.l.b16 %v5399
    %v5518 = vunpack.c.l.b16 %v5400
    %v5519 = vunpack.c.l.b16 %v5401
    %v5520 = vunpack.c.l.b16 %v5402
    %v5521 = vunpack.c.l.b16 %v5403
    %v5522 = vunpack.c.l.b16 %v5404
    %v5523 = vunpack.c.l.b16 %v5405
    %v5524 = vunpack.c.l.b16 %v5406
    %v5525 = vunpack.c.l.b16 %v5407
    %v5526 = vunpack.c.l.b16 %v5408
    %v5527 = vunpack.c.l.b16 %v5409
    %v5528 = vunpack.c.l.b16 %v5410
    %v5529 = vunpack.c.l.b16 %v5411
    %v5530 = vunpack.c.l.b16 %v5412
    %v5531 = vunpack.c.l.b16 %v5413
    %v5532 = vunpack.c.l.b16 %v5414
    %v5533 = vunpack.c.l.b16 %v5415
    %v5534 = vunpack.c.l.b16 %v5416
    %v5535 = vunpack.c.l.b16 %v5417
    %v5536 = vunpack.c.l.b16 %v5418
    %v5537 = vunpack.c.l.b16 %v5419
    %v5538 = vunpack.c.l.b16 %v5420
    %v5539 = vunpack.c.l.b16 %v5421
    %v5540 = vunpack.c.l.b16 %v5422
    %v5541 = vunpack.c.l.b16 %v5423
    %v5542 = vunpack.c.l.b16 %v5424
    %v5543 = vunpack.c.l.b16 %v5425
    %v5544 = vunpack.c.l.b16 %v5426
    %v5545 = vunpack.c.l.b16 %v5427
    %v5546 = vunpack.c.l.b16 %v5428
    %v5547 = vunpack.c.l.b16 %v5429
    %v5548 = vunpack.c.l.b16 %v5430
    %v5549 = vunpack.c.l.b16 %v5431
    %v5550 = vunpack.c.l.b16 %v5432
    %v5551 = vunpack.c.l.b16 %v5433
    %v5552 = vunpack.c.l.b16 %v5434
    %v5553 = vunpack.c.l.b16 %v5435
    %v5554 = vunpack.c.l.b16 %v5436
    %v5555 = vunpack.c.l.b16 %v5437
    %v5556 = vunpack.c.l.b16 %v5438
    %v5557 = vunpack.c.l.b16 %v5439
    %v5558 = vunpack.c.l.b16 %v5440
    %v5559 = vpack.c.b16 %v5512, %v5511
    %v5560 = vpack.c.b16 %v5514, %v5513
    %v5561 = vpack.c.b16 %v5516, %v5515
    %v5562 = vpack.c.b16 %v5518, %v5517
    %v5563 = vpack.c.b16 %v5520, %v5519
    %v5564 = vpack.c.b16 %v5522, %v5521
    %v5565 = vpack.c.b16 %v5524, %v5523
    %v5566 = vpack.c.b16 %v5526, %v5525
    %v5567 = vpack.c.b16 %v5528, %v5527
    %v5568 = vpack.c.b16 %v5530, %v5529
    %v5569 = vpack.c.b16 %v5532, %v5531
    %v5570 = vpack.c.b16 %v5534, %v5533
    %v5571 = vpack.c.b16 %v5536, %v5535
    %v5572 = vpack.c.b16 %v5538, %v5537
    %v5573 = vpack.c.b16 %v5540, %v5539
    %v5574 = vpack.c.b16 %v5542, %v5541
    %v5575 = vpack.c.b16 %v5544, %v5543
    %v5576 = vpack.c.b16 %v5546, %v5545
    %v5577 = vpack.c.b16 %v5548, %v5547
    %v5578 = vpack.c.b16 %v5550, %v5549
    %v5579 = vpack.c.b16 %v5552, %v5551
    %v5580 = vpack.c.b16 %v5554, %v5553
    %v5581 = vpack.c.b16 %v5556, %v5555
    %v5582 = vpack.c.b16 %v5558, %v5557
    %5607 = vmatprep.subr.bf16.mxu0 0
    %5608 = vmatpush1.bf16.xpose.msra.mxu0 %v5566
    %5609 = vmatprep.subr.bf16.mxu0 0
    %5610 = vmatpush1.bf16.xpose.msra.mxu0 %v5565
    %5611 = vmatprep.subr.bf16.mxu0 0
    %5612 = vmatpush1.bf16.xpose.msra.mxu0 %v5564
    %5613 = vmatprep.subr.bf16.mxu0 0
    %5614 = vmatpush1.bf16.xpose.msra.mxu0 %v5563
    %5615 = vmatprep.subr.bf16.mxu0 0
    %5616 = vmatpush1.bf16.xpose.msra.mxu0 %v5562
    %5617 = vmatprep.subr.bf16.mxu0 0
    %5618 = vmatpush1.bf16.xpose.msra.mxu0 %v5561
    %5619 = vmatprep.subr.bf16.mxu0 0
    %5620 = vmatpush1.bf16.xpose.msra.mxu0 %v5560
    %5621 = vmatprep.subr.bf16.mxu0 0
    %5622 = vmatpush1.bf16.xpose.msra.mxu0 %v5559
    %5623 = vmatprep.subr.bf16.mxu0 0
    %5624 = vmatpush2.bf16.xpose.msra.mxu0 %v5574
    %5625 = vmatprep.subr.bf16.mxu0 0
    %5626 = vmatpush2.bf16.xpose.msra.mxu0 %v5573
    %5627 = vmatprep.subr.bf16.mxu0 0
    %5628 = vmatpush2.bf16.xpose.msra.mxu0 %v5572
    %5629 = vmatprep.subr.bf16.mxu0 0
    %5630 = vmatpush2.bf16.xpose.msra.mxu0 %v5571
    %5631 = vmatprep.subr.bf16.mxu0 0
    %5632 = vmatpush2.bf16.xpose.msra.mxu0 %v5570
    %5633 = vmatprep.subr.bf16.mxu0 0
    %5634 = vmatpush2.bf16.xpose.msra.mxu0 %v5569
    %5635 = vmatprep.subr.bf16.mxu0 0
    %5636 = vmatpush2.bf16.xpose.msra.mxu0 %v5568
    %5637 = vmatprep.subr.bf16.mxu0 0
    %5638 = vmatpush2.bf16.xpose.msra.mxu0 %v5567
    %5639 = vmatprep.mubr.bf16.mxu0 0
    %5640 = vmatmul.mubr.bf16.gmra.mxu0 %v5441
    %v5641 = vpop.f32.mrf.mxu0
    %v5642 = vadd.f32 %v5451, %v5641
    %v5643 = vpop.f32.mrf.mxu0
    %v5644 = vadd.f32 %v5455, %v5643
    %v5645 = vpop.f32.mrf.mxu0
    %v5646 = vadd.f32 %v5451, %v5645
    %v5647 = vpop.f32.mrf.mxu0
    %v5648 = vadd.f32 %v5455, %v5647
    %5649 = vmatprep.mubr.bf16.mxu0 0
    %5650 = vmatmul.mubr.bf16.gmra.mxu0 %v5442
    %v5651 = vpop.f32.mrf.mxu0
    %v5652 = vadd.f32 %v5451, %v5651
    %v5653 = vpop.f32.mrf.mxu0
    %v5654 = vadd.f32 %v5455, %v5653
    %v5655 = vpop.f32.mrf.mxu0
    %v5656 = vadd.f32 %v5451, %v5655
    %v5657 = vpop.f32.mrf.mxu0
    %v5658 = vadd.f32 %v5455, %v5657
    %5659 = vmatprep.mubr.bf16.mxu0 0
    %5660 = vmatmul.mubr.bf16.gmra.mxu0 %v5443
    %v5661 = vpop.f32.mrf.mxu0
    %v5662 = vadd.f32 %v5451, %v5661
    %v5663 = vpop.f32.mrf.mxu0
    %v5664 = vadd.f32 %v5455, %v5663
    %v5665 = vpop.f32.mrf.mxu0
    %v5666 = vadd.f32 %v5451, %v5665
    %v5667 = vpop.f32.mrf.mxu0
    %v5668 = vadd.f32 %v5455, %v5667
    %5669 = vmatprep.mubr.bf16.mxu0 0
    %5670 = vmatmul.mubr.bf16.gmra.mxu0 %v5444
    %v5671 = vpop.f32.mrf.mxu0
    %v5672 = vadd.f32 %v5451, %v5671
    %v5673 = vpop.f32.mrf.mxu0
    %v5674 = vadd.f32 %v5455, %v5673
    %v5675 = vpop.f32.mrf.mxu0
    %v5676 = vadd.f32 %v5451, %v5675
    %v5677 = vpop.f32.mrf.mxu0
    %v5678 = vadd.f32 %v5455, %v5677
    %5679 = vdwg.mxu0
    %5680 = vmatprep.subr.bf16.mxu0 0
    %5681 = vmatpush1.bf16.xpose.msra.mxu0 %v5582
    %5682 = vmatprep.subr.bf16.mxu0 0
    %5683 = vmatpush1.bf16.xpose.msra.mxu0 %v5581
    %5684 = vmatprep.subr.bf16.mxu0 0
    %5685 = vmatpush1.bf16.xpose.msra.mxu0 %v5580
    %5686 = vmatprep.subr.bf16.mxu0 0
    %5687 = vmatpush1.bf16.xpose.msra.mxu0 %v5579
    %5688 = vmatprep.subr.bf16.mxu0 0
    %5689 = vmatpush1.bf16.xpose.msra.mxu0 %v5578
    %5690 = vmatprep.subr.bf16.mxu0 0
    %5691 = vmatpush1.bf16.xpose.msra.mxu0 %v5577
    %5692 = vmatprep.subr.bf16.mxu0 0
    %5693 = vmatpush1.bf16.xpose.msra.mxu0 %v5576
    %5694 = vmatprep.subr.bf16.mxu0 0
    %5695 = vmatpush1.bf16.xpose.msra.mxu0 %v5575
    %5696 = vmatprep.subr.bf16.mxu0 0
    %5697 = vmatpush2.bf16.xpose.msra.mxu0 0
    %5698 = vmatprep.subr.bf16.mxu0 0
    %5699 = vmatpush2.bf16.xpose.msra.mxu0 0
    %5700 = vmatprep.subr.bf16.mxu0 0
    %5701 = vmatpush2.bf16.xpose.msra.mxu0 0
    %5702 = vmatprep.subr.bf16.mxu0 0
    %5703 = vmatpush2.bf16.xpose.msra.mxu0 0
    %5704 = vmatprep.subr.bf16.mxu0 0
    %5705 = vmatpush2.bf16.xpose.msra.mxu0 0
    %5706 = vmatprep.subr.bf16.mxu0 0
    %5707 = vmatpush2.bf16.xpose.msra.mxu0 0
    %5708 = vmatprep.subr.bf16.mxu0 0
    %5709 = vmatpush2.bf16.xpose.msra.mxu0 0
    %5710 = vmatprep.subr.bf16.mxu0 0
    %5711 = vmatpush2.bf16.xpose.msra.mxu0 0
    %5712 = vmatprep.mubr.bf16.mxu0 0
    %5713 = vmatmul.mubr.bf16.gmra.mxu0 %v5441
    %v5714 = vpop.f32.mrf.mxu0
    %v5715 = vadd.f32 %v5459, %v5714
    %v5716 = vpop.f32.mrf.mxu0
    %v5717 = vpop.f32.mrf.mxu0
    %v5718 = vadd.f32 %v5459, %v5717
    %v5719 = vpop.f32.mrf.mxu0
    %5720 = vmatprep.mubr.bf16.mxu0 0
    %5721 = vmatmul.mubr.bf16.gmra.mxu0 %v5442
    %v5722 = vpop.f32.mrf.mxu0
    %v5723 = vadd.f32 %v5459, %v5722
    %v5724 = vpop.f32.mrf.mxu0
    %v5725 = vpop.f32.mrf.mxu0
    %v5726 = vadd.f32 %v5459, %v5725
    %v5727 = vpop.f32.mrf.mxu0
    %5728 = vmatprep.mubr.bf16.mxu0 0
    %5729 = vmatmul.mubr.bf16.gmra.mxu0 %v5443
    %v5730 = vpop.f32.mrf.mxu0
    %v5731 = vadd.f32 %v5459, %v5730
    %v5732 = vpop.f32.mrf.mxu0
    %v5733 = vpop.f32.mrf.mxu0
    %v5734 = vadd.f32 %v5459, %v5733
    %v5735 = vpop.f32.mrf.mxu0
    %5736 = vmatprep.mubr.bf16.mxu0 0
    %5737 = vmatmul.mubr.bf16.gmra.mxu0 %v5444
    %v5738 = vpop.f32.mrf.mxu0
    %v5739 = vadd.f32 %v5459, %v5738
    %v5740 = vpop.f32.mrf.mxu0
    %v5741 = vpop.f32.mrf.mxu0
    %v5742 = vadd.f32 %v5459, %v5741
    %v5743 = vpop.f32.mrf.mxu0
    %5744 = vdwg.mxu0
    %v5745 = vmul.f32 %v5642, 0.17677669
    %v5746 = vmul.f32 %v5646, 0.17677669
    %v5747 = vmul.f32 %v5652, 0.17677669
    %v5748 = vmul.f32 %v5656, 0.17677669
    %v5749 = vmul.f32 %v5662, 0.17677669
    %v5750 = vmul.f32 %v5666, 0.17677669
    %v5751 = vmul.f32 %v5672, 0.17677669
    %v5752 = vmul.f32 %v5676, 0.17677669
    %v5753 = vpack.c.bf16 %v5745, %v5745
    %v5754 = vpack.c.bf16 %v5746, %v5746
    %v5755 = vpack.c.bf16 %v5747, %v5747
    %v5756 = vpack.c.bf16 %v5748, %v5748
    %v5757 = vpack.c.bf16 %v5749, %v5749
    %v5758 = vpack.c.bf16 %v5750, %v5750
    %v5759 = vpack.c.bf16 %v5751, %v5751
    %v5760 = vpack.c.bf16 %v5752, %v5752
    %v5761 = vpack.c.bf16 %v5644, %v5644
    %v5762 = vpack.c.bf16 %v5648, %v5648
    %v5763 = vpack.c.bf16 %v5654, %v5654
    %v5764 = vpack.c.bf16 %v5658, %v5658
    %v5765 = vpack.c.bf16 %v5664, %v5664
    %v5766 = vpack.c.bf16 %v5668, %v5668
    %v5767 = vpack.c.bf16 %v5674, %v5674
    %v5768 = vpack.c.bf16 %v5678, %v5678
    %v5769 = vpack.c.bf16 %v5715, %v5715
    %v5770 = vpack.c.bf16 %v5718, %v5718
    %v5771 = vpack.c.bf16 %v5723, %v5723
    %v5772 = vpack.c.bf16 %v5726, %v5726
    %v5773 = vpack.c.bf16 %v5731, %v5731
    %v5774 = vpack.c.bf16 %v5734, %v5734
    %v5775 = vpack.c.bf16 %v5739, %v5739
    %v5776 = vpack.c.bf16 %v5742, %v5742
    %v5778 = vsel %vm708, %v5753, 0
    %v5781 = vsel %vm708, %v5761, 0
    %5783 = vmatprep.subr.bf16.mxu0 0
    %5784 = vmatpush1.bf16.xpose.msra.mxu0 0
    %5785 = vmatprep.subr.bf16.mxu0 0
    %5786 = vmatpush1.bf16.xpose.msra.mxu0 0
    %5787 = vmatprep.subr.bf16.mxu0 0
    %5788 = vmatpush1.bf16.xpose.msra.mxu0 0
    %5789 = vmatprep.subr.bf16.mxu0 0
    %5790 = vmatpush1.bf16.xpose.msra.mxu0 0
    %5791 = vmatprep.subr.bf16.mxu0 0
    %5792 = vmatpush1.bf16.xpose.msra.mxu0 0
    %5793 = vmatprep.subr.bf16.mxu0 0
    %5794 = vmatpush1.bf16.xpose.msra.mxu0 0
    %5795 = vmatprep.subr.bf16.mxu0 0
    %5796 = vmatpush1.bf16.xpose.msra.mxu0 0
    %5797 = vmatprep.subr.bf16.mxu0 0
    %5798 = vmatpush1.bf16.xpose.msra.mxu0 %v5781
    %5799 = vmatprep.subr.bf16.mxu0 0
    %5800 = vmatpush2.bf16.xpose.msra.mxu0 0
    %5801 = vmatprep.subr.bf16.mxu0 0
    %5802 = vmatpush2.bf16.xpose.msra.mxu0 0
    %5803 = vmatprep.subr.bf16.mxu0 0
    %5804 = vmatpush2.bf16.xpose.msra.mxu0 0
    %5805 = vmatprep.subr.bf16.mxu0 0
    %5806 = vmatpush2.bf16.xpose.msra.mxu0 0
    %5807 = vmatprep.subr.bf16.mxu0 0
    %5808 = vmatpush2.bf16.xpose.msra.mxu0 0
    %5809 = vmatprep.subr.bf16.mxu0 0
    %5810 = vmatpush2.bf16.xpose.msra.mxu0 0
    %5811 = vmatprep.subr.bf16.mxu0 0
    %5812 = vmatpush2.bf16.xpose.msra.mxu0 0
    %5813 = vmatprep.subr.bf16.mxu0 0
    %5814 = vmatpush2.bf16.xpose.msra.mxu0 0
    %5815 = vmatprep.mubr.bf16.mxu0 0
    %5816 = vmatmul.mubr.bf16.gmra.mxu0 %v5778
    %v5817 = vpop.f32.mrf.mxu0
    %v5818 = vadd.f32 0.0, %v5817
    %v5819 = vpop.f32.mrf.mxu0
    %v5820 = vpop.f32.mrf.mxu0
    %v5821 = vpop.f32.mrf.mxu0
    %5822 = vdwg.mxu0
    %v5824 = vsel %vm708, %v5754, 0
    %v5827 = vsel %vm708, %v5762, 0
    %5829 = vmatprep.subr.bf16.mxu0 0
    %5830 = vmatpush1.bf16.xpose.msra.mxu0 0
    %5831 = vmatprep.subr.bf16.mxu0 0
    %5832 = vmatpush1.bf16.xpose.msra.mxu0 0
    %5833 = vmatprep.subr.bf16.mxu0 0
    %5834 = vmatpush1.bf16.xpose.msra.mxu0 0
    %5835 = vmatprep.subr.bf16.mxu0 0
    %5836 = vmatpush1.bf16.xpose.msra.mxu0 0
    %5837 = vmatprep.subr.bf16.mxu0 0
    %5838 = vmatpush1.bf16.xpose.msra.mxu0 0
    %5839 = vmatprep.subr.bf16.mxu0 0
    %5840 = vmatpush1.bf16.xpose.msra.mxu0 0
    %5841 = vmatprep.subr.bf16.mxu0 0
    %5842 = vmatpush1.bf16.xpose.msra.mxu0 0
    %5843 = vmatprep.subr.bf16.mxu0 0
    %5844 = vmatpush1.bf16.xpose.msra.mxu0 %v5827
    %5845 = vmatprep.subr.bf16.mxu0 0
    %5846 = vmatpush2.bf16.xpose.msra.mxu0 0
    %5847 = vmatprep.subr.bf16.mxu0 0
    %5848 = vmatpush2.bf16.xpose.msra.mxu0 0
    %5849 = vmatprep.subr.bf16.mxu0 0
    %5850 = vmatpush2.bf16.xpose.msra.mxu0 0
    %5851 = vmatprep.subr.bf16.mxu0 0
    %5852 = vmatpush2.bf16.xpose.msra.mxu0 0
    %5853 = vmatprep.subr.bf16.mxu0 0
    %5854 = vmatpush2.bf16.xpose.msra.mxu0 0
    %5855 = vmatprep.subr.bf16.mxu0 0
    %5856 = vmatpush2.bf16.xpose.msra.mxu0 0
    %5857 = vmatprep.subr.bf16.mxu0 0
    %5858 = vmatpush2.bf16.xpose.msra.mxu0 0
    %5859 = vmatprep.subr.bf16.mxu0 0
    %5860 = vmatpush2.bf16.xpose.msra.mxu0 0
    %5861 = vmatprep.mubr.bf16.mxu0 0
    %5862 = vmatmul.mubr.bf16.gmra.mxu0 %v5824
    %v5863 = vpop.f32.mrf.mxu0
    %v5864 = vadd.f32 0.0, %v5863
    %v5865 = vpop.f32.mrf.mxu0
    %v5866 = vpop.f32.mrf.mxu0
    %v5867 = vpop.f32.mrf.mxu0
    %5868 = vdwg.mxu0
    %v5870 = vsel %vm708, %v5755, 0
    %v5873 = vsel %vm708, %v5763, 0
    %5875 = vmatprep.subr.bf16.mxu0 0
    %5876 = vmatpush1.bf16.xpose.msra.mxu0 0
    %5877 = vmatprep.subr.bf16.mxu0 0
    %5878 = vmatpush1.bf16.xpose.msra.mxu0 0
    %5879 = vmatprep.subr.bf16.mxu0 0
    %5880 = vmatpush1.bf16.xpose.msra.mxu0 0
    %5881 = vmatprep.subr.bf16.mxu0 0
    %5882 = vmatpush1.bf16.xpose.msra.mxu0 0
    %5883 = vmatprep.subr.bf16.mxu0 0
    %5884 = vmatpush1.bf16.xpose.msra.mxu0 0
    %5885 = vmatprep.subr.bf16.mxu0 0
    %5886 = vmatpush1.bf16.xpose.msra.mxu0 0
    %5887 = vmatprep.subr.bf16.mxu0 0
    %5888 = vmatpush1.bf16.xpose.msra.mxu0 0
    %5889 = vmatprep.subr.bf16.mxu0 0
    %5890 = vmatpush1.bf16.xpose.msra.mxu0 %v5873
    %5891 = vmatprep.subr.bf16.mxu0 0
    %5892 = vmatpush2.bf16.xpose.msra.mxu0 0
    %5893 = vmatprep.subr.bf16.mxu0 0
    %5894 = vmatpush2.bf16.xpose.msra.mxu0 0
    %5895 = vmatprep.subr.bf16.mxu0 0
    %5896 = vmatpush2.bf16.xpose.msra.mxu0 0
    %5897 = vmatprep.subr.bf16.mxu0 0
    %5898 = vmatpush2.bf16.xpose.msra.mxu0 0
    %5899 = vmatprep.subr.bf16.mxu0 0
    %5900 = vmatpush2.bf16.xpose.msra.mxu0 0
    %5901 = vmatprep.subr.bf16.mxu0 0
    %5902 = vmatpush2.bf16.xpose.msra.mxu0 0
    %5903 = vmatprep.subr.bf16.mxu0 0
    %5904 = vmatpush2.bf16.xpose.msra.mxu0 0
    %5905 = vmatprep.subr.bf16.mxu0 0
    %5906 = vmatpush2.bf16.xpose.msra.mxu0 0
    %5907 = vmatprep.mubr.bf16.mxu0 0
    %5908 = vmatmul.mubr.bf16.gmra.mxu0 %v5870
    %v5909 = vpop.f32.mrf.mxu0
    %v5910 = vadd.f32 0.0, %v5909
    %v5911 = vpop.f32.mrf.mxu0
    %v5912 = vpop.f32.mrf.mxu0
    %v5913 = vpop.f32.mrf.mxu0
    %5914 = vdwg.mxu0
    %v5916 = vsel %vm708, %v5756, 0
    %v5919 = vsel %vm708, %v5764, 0
    %5921 = vmatprep.subr.bf16.mxu0 0
    %5922 = vmatpush1.bf16.xpose.msra.mxu0 0
    %5923 = vmatprep.subr.bf16.mxu0 0
    %5924 = vmatpush1.bf16.xpose.msra.mxu0 0
    %5925 = vmatprep.subr.bf16.mxu0 0
    %5926 = vmatpush1.bf16.xpose.msra.mxu0 0
    %5927 = vmatprep.subr.bf16.mxu0 0
    %5928 = vmatpush1.bf16.xpose.msra.mxu0 0
    %5929 = vmatprep.subr.bf16.mxu0 0
    %5930 = vmatpush1.bf16.xpose.msra.mxu0 0
    %5931 = vmatprep.subr.bf16.mxu0 0
    %5932 = vmatpush1.bf16.xpose.msra.mxu0 0
    %5933 = vmatprep.subr.bf16.mxu0 0
    %5934 = vmatpush1.bf16.xpose.msra.mxu0 0
    %5935 = vmatprep.subr.bf16.mxu0 0
    %5936 = vmatpush1.bf16.xpose.msra.mxu0 %v5919
    %5937 = vmatprep.subr.bf16.mxu0 0
    %5938 = vmatpush2.bf16.xpose.msra.mxu0 0
    %5939 = vmatprep.subr.bf16.mxu0 0
    %5940 = vmatpush2.bf16.xpose.msra.mxu0 0
    %5941 = vmatprep.subr.bf16.mxu0 0
    %5942 = vmatpush2.bf16.xpose.msra.mxu0 0
    %5943 = vmatprep.subr.bf16.mxu0 0
    %5944 = vmatpush2.bf16.xpose.msra.mxu0 0
    %5945 = vmatprep.subr.bf16.mxu0 0
    %5946 = vmatpush2.bf16.xpose.msra.mxu0 0
    %5947 = vmatprep.subr.bf16.mxu0 0
    %5948 = vmatpush2.bf16.xpose.msra.mxu0 0
    %5949 = vmatprep.subr.bf16.mxu0 0
    %5950 = vmatpush2.bf16.xpose.msra.mxu0 0
    %5951 = vmatprep.subr.bf16.mxu0 0
    %5952 = vmatpush2.bf16.xpose.msra.mxu0 0
    %5953 = vmatprep.mubr.bf16.mxu0 0
    %5954 = vmatmul.mubr.bf16.gmra.mxu0 %v5916
    %v5955 = vpop.f32.mrf.mxu0
    %v5956 = vadd.f32 0.0, %v5955
    %v5957 = vpop.f32.mrf.mxu0
    %v5958 = vpop.f32.mrf.mxu0
    %v5959 = vpop.f32.mrf.mxu0
    %5960 = vdwg.mxu0
    %v5962 = vsel %vm708, %v5757, 0
    %v5965 = vsel %vm708, %v5765, 0
    %5967 = vmatprep.subr.bf16.mxu0 0
    %5968 = vmatpush1.bf16.xpose.msra.mxu0 0
    %5969 = vmatprep.subr.bf16.mxu0 0
    %5970 = vmatpush1.bf16.xpose.msra.mxu0 0
    %5971 = vmatprep.subr.bf16.mxu0 0
    %5972 = vmatpush1.bf16.xpose.msra.mxu0 0
    %5973 = vmatprep.subr.bf16.mxu0 0
    %5974 = vmatpush1.bf16.xpose.msra.mxu0 0
    %5975 = vmatprep.subr.bf16.mxu0 0
    %5976 = vmatpush1.bf16.xpose.msra.mxu0 0
    %5977 = vmatprep.subr.bf16.mxu0 0
    %5978 = vmatpush1.bf16.xpose.msra.mxu0 0
    %5979 = vmatprep.subr.bf16.mxu0 0
    %5980 = vmatpush1.bf16.xpose.msra.mxu0 0
    %5981 = vmatprep.subr.bf16.mxu0 0
    %5982 = vmatpush1.bf16.xpose.msra.mxu0 %v5965
    %5983 = vmatprep.subr.bf16.mxu0 0
    %5984 = vmatpush2.bf16.xpose.msra.mxu0 0
    %5985 = vmatprep.subr.bf16.mxu0 0
    %5986 = vmatpush2.bf16.xpose.msra.mxu0 0
    %5987 = vmatprep.subr.bf16.mxu0 0
    %5988 = vmatpush2.bf16.xpose.msra.mxu0 0
    %5989 = vmatprep.subr.bf16.mxu0 0
    %5990 = vmatpush2.bf16.xpose.msra.mxu0 0
    %5991 = vmatprep.subr.bf16.mxu0 0
    %5992 = vmatpush2.bf16.xpose.msra.mxu0 0
    %5993 = vmatprep.subr.bf16.mxu0 0
    %5994 = vmatpush2.bf16.xpose.msra.mxu0 0
    %5995 = vmatprep.subr.bf16.mxu0 0
    %5996 = vmatpush2.bf16.xpose.msra.mxu0 0
    %5997 = vmatprep.subr.bf16.mxu0 0
    %5998 = vmatpush2.bf16.xpose.msra.mxu0 0
    %5999 = vmatprep.mubr.bf16.mxu0 0
    %6000 = vmatmul.mubr.bf16.gmra.mxu0 %v5962
    %v6001 = vpop.f32.mrf.mxu0
    %v6002 = vadd.f32 0.0, %v6001
    %v6003 = vpop.f32.mrf.mxu0
    %v6004 = vpop.f32.mrf.mxu0
    %v6005 = vpop.f32.mrf.mxu0
    %6006 = vdwg.mxu0
    %v6008 = vsel %vm708, %v5758, 0
    %v6011 = vsel %vm708, %v5766, 0
    %6013 = vmatprep.subr.bf16.mxu0 0
    %6014 = vmatpush1.bf16.xpose.msra.mxu0 0
    %6015 = vmatprep.subr.bf16.mxu0 0
    %6016 = vmatpush1.bf16.xpose.msra.mxu0 0
    %6017 = vmatprep.subr.bf16.mxu0 0
    %6018 = vmatpush1.bf16.xpose.msra.mxu0 0
    %6019 = vmatprep.subr.bf16.mxu0 0
    %6020 = vmatpush1.bf16.xpose.msra.mxu0 0
    %6021 = vmatprep.subr.bf16.mxu0 0
    %6022 = vmatpush1.bf16.xpose.msra.mxu0 0
    %6023 = vmatprep.subr.bf16.mxu0 0
    %6024 = vmatpush1.bf16.xpose.msra.mxu0 0
    %6025 = vmatprep.subr.bf16.mxu0 0
    %6026 = vmatpush1.bf16.xpose.msra.mxu0 0
    %6027 = vmatprep.subr.bf16.mxu0 0
    %6028 = vmatpush1.bf16.xpose.msra.mxu0 %v6011
    %6029 = vmatprep.subr.bf16.mxu0 0
    %6030 = vmatpush2.bf16.xpose.msra.mxu0 0
    %6031 = vmatprep.subr.bf16.mxu0 0
    %6032 = vmatpush2.bf16.xpose.msra.mxu0 0
    %6033 = vmatprep.subr.bf16.mxu0 0
    %6034 = vmatpush2.bf16.xpose.msra.mxu0 0
    %6035 = vmatprep.subr.bf16.mxu0 0
    %6036 = vmatpush2.bf16.xpose.msra.mxu0 0
    %6037 = vmatprep.subr.bf16.mxu0 0
    %6038 = vmatpush2.bf16.xpose.msra.mxu0 0
    %6039 = vmatprep.subr.bf16.mxu0 0
    %6040 = vmatpush2.bf16.xpose.msra.mxu0 0
    %6041 = vmatprep.subr.bf16.mxu0 0
    %6042 = vmatpush2.bf16.xpose.msra.mxu0 0
    %6043 = vmatprep.subr.bf16.mxu0 0
    %6044 = vmatpush2.bf16.xpose.msra.mxu0 0
    %6045 = vmatprep.mubr.bf16.mxu0 0
    %6046 = vmatmul.mubr.bf16.gmra.mxu0 %v6008
    %v6047 = vpop.f32.mrf.mxu0
    %v6048 = vadd.f32 0.0, %v6047
    %v6049 = vpop.f32.mrf.mxu0
    %v6050 = vpop.f32.mrf.mxu0
    %v6051 = vpop.f32.mrf.mxu0
    %6052 = vdwg.mxu0
    %v6054 = vsel %vm708, %v5759, 0
    %v6057 = vsel %vm708, %v5767, 0
    %6059 = vmatprep.subr.bf16.mxu0 0
    %6060 = vmatpush1.bf16.xpose.msra.mxu0 0
    %6061 = vmatprep.subr.bf16.mxu0 0
    %6062 = vmatpush1.bf16.xpose.msra.mxu0 0
    %6063 = vmatprep.subr.bf16.mxu0 0
    %6064 = vmatpush1.bf16.xpose.msra.mxu0 0
    %6065 = vmatprep.subr.bf16.mxu0 0
    %6066 = vmatpush1.bf16.xpose.msra.mxu0 0
    %6067 = vmatprep.subr.bf16.mxu0 0
    %6068 = vmatpush1.bf16.xpose.msra.mxu0 0
    %6069 = vmatprep.subr.bf16.mxu0 0
    %6070 = vmatpush1.bf16.xpose.msra.mxu0 0
    %6071 = vmatprep.subr.bf16.mxu0 0
    %6072 = vmatpush1.bf16.xpose.msra.mxu0 0
    %6073 = vmatprep.subr.bf16.mxu0 0
    %6074 = vmatpush1.bf16.xpose.msra.mxu0 %v6057
    %6075 = vmatprep.subr.bf16.mxu0 0
    %6076 = vmatpush2.bf16.xpose.msra.mxu0 0
    %6077 = vmatprep.subr.bf16.mxu0 0
    %6078 = vmatpush2.bf16.xpose.msra.mxu0 0
    %6079 = vmatprep.subr.bf16.mxu0 0
    %6080 = vmatpush2.bf16.xpose.msra.mxu0 0
    %6081 = vmatprep.subr.bf16.mxu0 0
    %6082 = vmatpush2.bf16.xpose.msra.mxu0 0
    %6083 = vmatprep.subr.bf16.mxu0 0
    %6084 = vmatpush2.bf16.xpose.msra.mxu0 0
    %6085 = vmatprep.subr.bf16.mxu0 0
    %6086 = vmatpush2.bf16.xpose.msra.mxu0 0
    %6087 = vmatprep.subr.bf16.mxu0 0
    %6088 = vmatpush2.bf16.xpose.msra.mxu0 0
    %6089 = vmatprep.subr.bf16.mxu0 0
    %6090 = vmatpush2.bf16.xpose.msra.mxu0 0
    %6091 = vmatprep.mubr.bf16.mxu0 0
    %6092 = vmatmul.mubr.bf16.gmra.mxu0 %v6054
    %v6093 = vpop.f32.mrf.mxu0
    %v6094 = vadd.f32 0.0, %v6093
    %v6095 = vpop.f32.mrf.mxu0
    %v6096 = vpop.f32.mrf.mxu0
    %v6097 = vpop.f32.mrf.mxu0
    %6098 = vdwg.mxu0
    %v6100 = vsel %vm708, %v5760, 0
    %v6103 = vsel %vm708, %v5768, 0
    %6105 = vmatprep.subr.bf16.mxu0 0
    %6106 = vmatpush1.bf16.xpose.msra.mxu0 0
    %6107 = vmatprep.subr.bf16.mxu0 0
    %6108 = vmatpush1.bf16.xpose.msra.mxu0 0
    %6109 = vmatprep.subr.bf16.mxu0 0
    %6110 = vmatpush1.bf16.xpose.msra.mxu0 0
    %6111 = vmatprep.subr.bf16.mxu0 0
    %6112 = vmatpush1.bf16.xpose.msra.mxu0 0
    %6113 = vmatprep.subr.bf16.mxu0 0
    %6114 = vmatpush1.bf16.xpose.msra.mxu0 0
    %6115 = vmatprep.subr.bf16.mxu0 0
    %6116 = vmatpush1.bf16.xpose.msra.mxu0 0
    %6117 = vmatprep.subr.bf16.mxu0 0
    %6118 = vmatpush1.bf16.xpose.msra.mxu0 0
    %6119 = vmatprep.subr.bf16.mxu0 0
    %6120 = vmatpush1.bf16.xpose.msra.mxu0 %v6103
    %6121 = vmatprep.subr.bf16.mxu0 0
    %6122 = vmatpush2.bf16.xpose.msra.mxu0 0
    %6123 = vmatprep.subr.bf16.mxu0 0
    %6124 = vmatpush2.bf16.xpose.msra.mxu0 0
    %6125 = vmatprep.subr.bf16.mxu0 0
    %6126 = vmatpush2.bf16.xpose.msra.mxu0 0
    %6127 = vmatprep.subr.bf16.mxu0 0
    %6128 = vmatpush2.bf16.xpose.msra.mxu0 0
    %6129 = vmatprep.subr.bf16.mxu0 0
    %6130 = vmatpush2.bf16.xpose.msra.mxu0 0
    %6131 = vmatprep.subr.bf16.mxu0 0
    %6132 = vmatpush2.bf16.xpose.msra.mxu0 0
    %6133 = vmatprep.subr.bf16.mxu0 0
    %6134 = vmatpush2.bf16.xpose.msra.mxu0 0
    %6135 = vmatprep.subr.bf16.mxu0 0
    %6136 = vmatpush2.bf16.xpose.msra.mxu0 0
    %6137 = vmatprep.mubr.bf16.mxu0 0
    %6138 = vmatmul.mubr.bf16.gmra.mxu0 %v6100
    %v6139 = vpop.f32.mrf.mxu0
    %v6140 = vadd.f32 0.0, %v6139
    %v6141 = vpop.f32.mrf.mxu0
    %v6142 = vpop.f32.mrf.mxu0
    %v6143 = vpop.f32.mrf.mxu0
    %6144 = vdwg.mxu0
    %v6145 = vsel %vm1077, %v5818, -inf
    %6146 = vmax.xlane.f32.xlu0 %v6145
    %v6147 = vpop.xlane.xlu0 %6146
    %v6148 = vsel %vm1077, %v5864, -inf
    %6149 = vmax.xlane.f32.xlu0 %v6148
    %v6150 = vpop.xlane.xlu0 %6149
    %v6151 = vsel %vm1077, %v5910, -inf
    %6152 = vmax.xlane.f32.xlu0 %v6151
    %v6153 = vpop.xlane.xlu0 %6152
    %v6154 = vsel %vm1077, %v5956, -inf
    %6155 = vmax.xlane.f32.xlu0 %v6154
    %v6156 = vpop.xlane.xlu0 %6155
    %v6157 = vsel %vm1077, %v6002, -inf
    %6158 = vmax.xlane.f32.xlu0 %v6157
    %v6159 = vpop.xlane.xlu0 %6158
    %v6160 = vsel %vm1077, %v6048, -inf
    %6161 = vmax.xlane.f32.xlu0 %v6160
    %v6162 = vpop.xlane.xlu0 %6161
    %v6163 = vsel %vm1077, %v6094, -inf
    %6164 = vmax.xlane.f32.xlu0 %v6163
    %v6165 = vpop.xlane.xlu0 %6164
    %v6166 = vsel %vm1077, %v6140, -inf
    %6167 = vmax.xlane.f32.xlu0 %v6166
    %v6168 = vpop.xlane.xlu0 %6167
    %v6169 = vsub.f32 %v5818, %v6147
    %v6170 = vsub.f32 %v5864, %v6150
    %v6171 = vsub.f32 %v5910, %v6153
    %v6172 = vsub.f32 %v5956, %v6156
    %v6173 = vsub.f32 %v6002, %v6159
    %v6174 = vsub.f32 %v6048, %v6162
    %v6175 = vsub.f32 %v6094, %v6165
    %v6176 = vsub.f32 %v6140, %v6168
    %v6177 = vmul.f32 %v6169, 1.442695
    %v6178 = vpow.pop %v6177
    %v6179 = vmul.f32 %v6170, 1.442695
    %v6180 = vpow.pop %v6179
    %v6181 = vmul.f32 %v6171, 1.442695
    %v6182 = vpow.pop %v6181
    %v6183 = vmul.f32 %v6172, 1.442695
    %v6184 = vpow.pop %v6183
    %v6185 = vmul.f32 %v6173, 1.442695
    %v6186 = vpow.pop %v6185
    %v6187 = vmul.f32 %v6174, 1.442695
    %v6188 = vpow.pop %v6187
    %v6189 = vmul.f32 %v6175, 1.442695
    %v6190 = vpow.pop %v6189
    %v6191 = vmul.f32 %v6176, 1.442695
    %v6192 = vpow.pop %v6191
    %v6193 = vsel %vm1077, %v6178, 0.0
    %6194 = vadd.xlane.f32.xlu0 %v6193
    %v6195 = vpop.xlane.xlu0 %6194
    %v6196 = vsel %vm1077, %v6180, 0.0
    %6197 = vadd.xlane.f32.xlu0 %v6196
    %v6198 = vpop.xlane.xlu0 %6197
    %v6199 = vsel %vm1077, %v6182, 0.0
    %6200 = vadd.xlane.f32.xlu0 %v6199
    %v6201 = vpop.xlane.xlu0 %6200
    %v6202 = vsel %vm1077, %v6184, 0.0
    %6203 = vadd.xlane.f32.xlu0 %v6202
    %v6204 = vpop.xlane.xlu0 %6203
    %v6205 = vsel %vm1077, %v6186, 0.0
    %6206 = vadd.xlane.f32.xlu0 %v6205
    %v6207 = vpop.xlane.xlu0 %6206
    %v6208 = vsel %vm1077, %v6188, 0.0
    %6209 = vadd.xlane.f32.xlu0 %v6208
    %v6210 = vpop.xlane.xlu0 %6209
    %v6211 = vsel %vm1077, %v6190, 0.0
    %6212 = vadd.xlane.f32.xlu0 %v6211
    %v6213 = vpop.xlane.xlu0 %6212
    %v6214 = vsel %vm1077, %v6192, 0.0
    %6215 = vadd.xlane.f32.xlu0 %v6214
    %v6216 = vpop.xlane.xlu0 %6215
    %v6217 = vrcp.pop %v6195
    %v6218 = vrcp.pop %v6198
    %v6219 = vrcp.pop %v6201
    %v6220 = vrcp.pop %v6204
    %v6221 = vrcp.pop %v6207
    %v6222 = vrcp.pop %v6210
    %v6223 = vrcp.pop %v6213
    %v6224 = vrcp.pop %v6216
    %v6225 = vmul.f32 %v6178, %v6217
    %v6226 = vmul.f32 %v6180, %v6218
    %v6227 = vmul.f32 %v6182, %v6219
    %v6228 = vmul.f32 %v6184, %v6220
    %v6229 = vmul.f32 %v6186, %v6221
    %v6230 = vmul.f32 %v6188, %v6222
    %v6231 = vmul.f32 %v6190, %v6223
    %v6232 = vmul.f32 %v6192, %v6224
    %v6233 = vpack.c.bf16 %v6225, %v6225
    %v6234 = vpack.c.bf16 %v6226, %v6226
    %v6235 = vpack.c.bf16 %v6227, %v6227
    %v6236 = vpack.c.bf16 %v6228, %v6228
    %v6237 = vpack.c.bf16 %v6229, %v6229
    %v6238 = vpack.c.bf16 %v6230, %v6230
    %v6239 = vpack.c.bf16 %v6231, %v6231
    %v6240 = vpack.c.bf16 %v6232, %v6232
    %v6242 = vsel %vm1077, %v6233, 0
    %v6245 = vsel %vm1177, %v5769, 0
    %6247 = vmatprep.subr.bf16.mxu0 0
    %6248 = vmatpush1.bf16.msra.mxu0 0
    %6249 = vmatprep.subr.bf16.mxu0 0
    %6250 = vmatpush1.bf16.msra.mxu0 0
    %6251 = vmatprep.subr.bf16.mxu0 0
    %6252 = vmatpush1.bf16.msra.mxu0 0
    %6253 = vmatprep.subr.bf16.mxu0 0
    %6254 = vmatpush1.bf16.msra.mxu0 0
    %6255 = vmatprep.subr.bf16.mxu0 0
    %6256 = vmatpush1.bf16.msra.mxu0 0
    %6257 = vmatprep.subr.bf16.mxu0 0
    %6258 = vmatpush1.bf16.msra.mxu0 0
    %6259 = vmatprep.subr.bf16.mxu0 0
    %6260 = vmatpush1.bf16.msra.mxu0 0
    %6261 = vmatprep.subr.bf16.mxu0 0
    %6262 = vmatpush1.bf16.msra.mxu0 %v6245
    %6263 = vmatprep.subr.bf16.mxu0 0
    %6264 = vmatpush2.bf16.msra.mxu0 0
    %6265 = vmatprep.subr.bf16.mxu0 0
    %6266 = vmatpush2.bf16.msra.mxu0 0
    %6267 = vmatprep.subr.bf16.mxu0 0
    %6268 = vmatpush2.bf16.msra.mxu0 0
    %6269 = vmatprep.subr.bf16.mxu0 0
    %6270 = vmatpush2.bf16.msra.mxu0 0
    %6271 = vmatprep.subr.bf16.mxu0 0
    %6272 = vmatpush2.bf16.msra.mxu0 0
    %6273 = vmatprep.subr.bf16.mxu0 0
    %6274 = vmatpush2.bf16.msra.mxu0 0
    %6275 = vmatprep.subr.bf16.mxu0 0
    %6276 = vmatpush2.bf16.msra.mxu0 0
    %6277 = vmatprep.subr.bf16.mxu0 0
    %6278 = vmatpush2.bf16.msra.mxu0 0
    %6279 = vmatprep.mubr.bf16.mxu0 0
    %6280 = vmatmul.mubr.bf16.gmra.mxu0 %v6242
    %v6281 = vpop.f32.mrf.mxu0
    %v6282 = vadd.f32 0.0, %v6281
    %v6283 = vpop.f32.mrf.mxu0
    %v6284 = vpop.f32.mrf.mxu0
    %v6285 = vpop.f32.mrf.mxu0
    %6286 = vdwg.mxu0
    %v6288 = vsel %vm1077, %v6234, 0
    %v6291 = vsel %vm1177, %v5770, 0
    %6293 = vmatprep.subr.bf16.mxu0 0
    %6294 = vmatpush1.bf16.msra.mxu0 0
    %6295 = vmatprep.subr.bf16.mxu0 0
    %6296 = vmatpush1.bf16.msra.mxu0 0
    %6297 = vmatprep.subr.bf16.mxu0 0
    %6298 = vmatpush1.bf16.msra.mxu0 0
    %6299 = vmatprep.subr.bf16.mxu0 0
    %6300 = vmatpush1.bf16.msra.mxu0 0
    %6301 = vmatprep.subr.bf16.mxu0 0
    %6302 = vmatpush1.bf16.msra.mxu0 0
    %6303 = vmatprep.subr.bf16.mxu0 0
    %6304 = vmatpush1.bf16.msra.mxu0 0
    %6305 = vmatprep.subr.bf16.mxu0 0
    %6306 = vmatpush1.bf16.msra.mxu0 0
    %6307 = vmatprep.subr.bf16.mxu0 0
    %6308 = vmatpush1.bf16.msra.mxu0 %v6291
    %6309 = vmatprep.subr.bf16.mxu0 0
    %6310 = vmatpush2.bf16.msra.mxu0 0
    %6311 = vmatprep.subr.bf16.mxu0 0
    %6312 = vmatpush2.bf16.msra.mxu0 0
    %6313 = vmatprep.subr.bf16.mxu0 0
    %6314 = vmatpush2.bf16.msra.mxu0 0
    %6315 = vmatprep.subr.bf16.mxu0 0
    %6316 = vmatpush2.bf16.msra.mxu0 0
    %6317 = vmatprep.subr.bf16.mxu0 0
    %6318 = vmatpush2.bf16.msra.mxu0 0
    %6319 = vmatprep.subr.bf16.mxu0 0
    %6320 = vmatpush2.bf16.msra.mxu0 0
    %6321 = vmatprep.subr.bf16.mxu0 0
    %6322 = vmatpush2.bf16.msra.mxu0 0
    %6323 = vmatprep.subr.bf16.mxu0 0
    %6324 = vmatpush2.bf16.msra.mxu0 0
    %6325 = vmatprep.mubr.bf16.mxu0 0
    %6326 = vmatmul.mubr.bf16.gmra.mxu0 %v6288
    %v6327 = vpop.f32.mrf.mxu0
    %v6328 = vadd.f32 0.0, %v6327
    %v6329 = vpop.f32.mrf.mxu0
    %v6330 = vpop.f32.mrf.mxu0
    %v6331 = vpop.f32.mrf.mxu0
    %6332 = vdwg.mxu0
    %v6334 = vsel %vm1077, %v6235, 0
    %v6337 = vsel %vm1177, %v5771, 0
    %6339 = vmatprep.subr.bf16.mxu0 0
    %6340 = vmatpush1.bf16.msra.mxu0 0
    %6341 = vmatprep.subr.bf16.mxu0 0
    %6342 = vmatpush1.bf16.msra.mxu0 0
    %6343 = vmatprep.subr.bf16.mxu0 0
    %6344 = vmatpush1.bf16.msra.mxu0 0
    %6345 = vmatprep.subr.bf16.mxu0 0
    %6346 = vmatpush1.bf16.msra.mxu0 0
    %6347 = vmatprep.subr.bf16.mxu0 0
    %6348 = vmatpush1.bf16.msra.mxu0 0
    %6349 = vmatprep.subr.bf16.mxu0 0
    %6350 = vmatpush1.bf16.msra.mxu0 0
    %6351 = vmatprep.subr.bf16.mxu0 0
    %6352 = vmatpush1.bf16.msra.mxu0 0
    %6353 = vmatprep.subr.bf16.mxu0 0
    %6354 = vmatpush1.bf16.msra.mxu0 %v6337
    %6355 = vmatprep.subr.bf16.mxu0 0
    %6356 = vmatpush2.bf16.msra.mxu0 0
    %6357 = vmatprep.subr.bf16.mxu0 0
    %6358 = vmatpush2.bf16.msra.mxu0 0
    %6359 = vmatprep.subr.bf16.mxu0 0
    %6360 = vmatpush2.bf16.msra.mxu0 0
    %6361 = vmatprep.subr.bf16.mxu0 0
    %6362 = vmatpush2.bf16.msra.mxu0 0
    %6363 = vmatprep.subr.bf16.mxu0 0
    %6364 = vmatpush2.bf16.msra.mxu0 0
    %6365 = vmatprep.subr.bf16.mxu0 0
    %6366 = vmatpush2.bf16.msra.mxu0 0
    %6367 = vmatprep.subr.bf16.mxu0 0
    %6368 = vmatpush2.bf16.msra.mxu0 0
    %6369 = vmatprep.subr.bf16.mxu0 0
    %6370 = vmatpush2.bf16.msra.mxu0 0
    %6371 = vmatprep.mubr.bf16.mxu0 0
    %6372 = vmatmul.mubr.bf16.gmra.mxu0 %v6334
    %v6373 = vpop.f32.mrf.mxu0
    %v6374 = vadd.f32 0.0, %v6373
    %v6375 = vpop.f32.mrf.mxu0
    %v6376 = vpop.f32.mrf.mxu0
    %v6377 = vpop.f32.mrf.mxu0
    %6378 = vdwg.mxu0
    %v6380 = vsel %vm1077, %v6236, 0
    %v6383 = vsel %vm1177, %v5772, 0
    %6385 = vmatprep.subr.bf16.mxu0 0
    %6386 = vmatpush1.bf16.msra.mxu0 0
    %6387 = vmatprep.subr.bf16.mxu0 0
    %6388 = vmatpush1.bf16.msra.mxu0 0
    %6389 = vmatprep.subr.bf16.mxu0 0
    %6390 = vmatpush1.bf16.msra.mxu0 0
    %6391 = vmatprep.subr.bf16.mxu0 0
    %6392 = vmatpush1.bf16.msra.mxu0 0
    %6393 = vmatprep.subr.bf16.mxu0 0
    %6394 = vmatpush1.bf16.msra.mxu0 0
    %6395 = vmatprep.subr.bf16.mxu0 0
    %6396 = vmatpush1.bf16.msra.mxu0 0
    %6397 = vmatprep.subr.bf16.mxu0 0
    %6398 = vmatpush1.bf16.msra.mxu0 0
    %6399 = vmatprep.subr.bf16.mxu0 0
    %6400 = vmatpush1.bf16.msra.mxu0 %v6383
    %6401 = vmatprep.subr.bf16.mxu0 0
    %6402 = vmatpush2.bf16.msra.mxu0 0
    %6403 = vmatprep.subr.bf16.mxu0 0
    %6404 = vmatpush2.bf16.msra.mxu0 0
    %6405 = vmatprep.subr.bf16.mxu0 0
    %6406 = vmatpush2.bf16.msra.mxu0 0
    %6407 = vmatprep.subr.bf16.mxu0 0
    %6408 = vmatpush2.bf16.msra.mxu0 0
    %6409 = vmatprep.subr.bf16.mxu0 0
    %6410 = vmatpush2.bf16.msra.mxu0 0
    %6411 = vmatprep.subr.bf16.mxu0 0
    %6412 = vmatpush2.bf16.msra.mxu0 0
    %6413 = vmatprep.subr.bf16.mxu0 0
    %6414 = vmatpush2.bf16.msra.mxu0 0
    %6415 = vmatprep.subr.bf16.mxu0 0
    %6416 = vmatpush2.bf16.msra.mxu0 0
    %6417 = vmatprep.mubr.bf16.mxu0 0
    %6418 = vmatmul.mubr.bf16.gmra.mxu0 %v6380
    %v6419 = vpop.f32.mrf.mxu0
    %v6420 = vadd.f32 0.0, %v6419
    %v6421 = vpop.f32.mrf.mxu0
    %v6422 = vpop.f32.mrf.mxu0
    %v6423 = vpop.f32.mrf.mxu0
    %6424 = vdwg.mxu0
    %v6426 = vsel %vm1077, %v6237, 0
    %v6429 = vsel %vm1177, %v5773, 0
    %6431 = vmatprep.subr.bf16.mxu0 0
    %6432 = vmatpush1.bf16.msra.mxu0 0
    %6433 = vmatprep.subr.bf16.mxu0 0
    %6434 = vmatpush1.bf16.msra.mxu0 0
    %6435 = vmatprep.subr.bf16.mxu0 0
    %6436 = vmatpush1.bf16.msra.mxu0 0
    %6437 = vmatprep.subr.bf16.mxu0 0
    %6438 = vmatpush1.bf16.msra.mxu0 0
    %6439 = vmatprep.subr.bf16.mxu0 0
    %6440 = vmatpush1.bf16.msra.mxu0 0
    %6441 = vmatprep.subr.bf16.mxu0 0
    %6442 = vmatpush1.bf16.msra.mxu0 0
    %6443 = vmatprep.subr.bf16.mxu0 0
    %6444 = vmatpush1.bf16.msra.mxu0 0
    %6445 = vmatprep.subr.bf16.mxu0 0
    %6446 = vmatpush1.bf16.msra.mxu0 %v6429
    %6447 = vmatprep.subr.bf16.mxu0 0
    %6448 = vmatpush2.bf16.msra.mxu0 0
    %6449 = vmatprep.subr.bf16.mxu0 0
    %6450 = vmatpush2.bf16.msra.mxu0 0
    %6451 = vmatprep.subr.bf16.mxu0 0
    %6452 = vmatpush2.bf16.msra.mxu0 0
    %6453 = vmatprep.subr.bf16.mxu0 0
    %6454 = vmatpush2.bf16.msra.mxu0 0
    %6455 = vmatprep.subr.bf16.mxu0 0
    %6456 = vmatpush2.bf16.msra.mxu0 0
    %6457 = vmatprep.subr.bf16.mxu0 0
    %6458 = vmatpush2.bf16.msra.mxu0 0
    %6459 = vmatprep.subr.bf16.mxu0 0
    %6460 = vmatpush2.bf16.msra.mxu0 0
    %6461 = vmatprep.subr.bf16.mxu0 0
    %6462 = vmatpush2.bf16.msra.mxu0 0
    %6463 = vmatprep.mubr.bf16.mxu0 0
    %6464 = vmatmul.mubr.bf16.gmra.mxu0 %v6426
    %v6465 = vpop.f32.mrf.mxu0
    %v6466 = vadd.f32 0.0, %v6465
    %v6467 = vpop.f32.mrf.mxu0
    %v6468 = vpop.f32.mrf.mxu0
    %v6469 = vpop.f32.mrf.mxu0
    %6470 = vdwg.mxu0
    %v6472 = vsel %vm1077, %v6238, 0
    %v6475 = vsel %vm1177, %v5774, 0
    %6477 = vmatprep.subr.bf16.mxu0 0
    %6478 = vmatpush1.bf16.msra.mxu0 0
    %6479 = vmatprep.subr.bf16.mxu0 0
    %6480 = vmatpush1.bf16.msra.mxu0 0
    %6481 = vmatprep.subr.bf16.mxu0 0
    %6482 = vmatpush1.bf16.msra.mxu0 0
    %6483 = vmatprep.subr.bf16.mxu0 0
    %6484 = vmatpush1.bf16.msra.mxu0 0
    %6485 = vmatprep.subr.bf16.mxu0 0
    %6486 = vmatpush1.bf16.msra.mxu0 0
    %6487 = vmatprep.subr.bf16.mxu0 0
    %6488 = vmatpush1.bf16.msra.mxu0 0
    %6489 = vmatprep.subr.bf16.mxu0 0
    %6490 = vmatpush1.bf16.msra.mxu0 0
    %6491 = vmatprep.subr.bf16.mxu0 0
    %6492 = vmatpush1.bf16.msra.mxu0 %v6475
    %6493 = vmatprep.subr.bf16.mxu0 0
    %6494 = vmatpush2.bf16.msra.mxu0 0
    %6495 = vmatprep.subr.bf16.mxu0 0
    %6496 = vmatpush2.bf16.msra.mxu0 0
    %6497 = vmatprep.subr.bf16.mxu0 0
    %6498 = vmatpush2.bf16.msra.mxu0 0
    %6499 = vmatprep.subr.bf16.mxu0 0
    %6500 = vmatpush2.bf16.msra.mxu0 0
    %6501 = vmatprep.subr.bf16.mxu0 0
    %6502 = vmatpush2.bf16.msra.mxu0 0
    %6503 = vmatprep.subr.bf16.mxu0 0
    %6504 = vmatpush2.bf16.msra.mxu0 0
    %6505 = vmatprep.subr.bf16.mxu0 0
    %6506 = vmatpush2.bf16.msra.mxu0 0
    %6507 = vmatprep.subr.bf16.mxu0 0
    %6508 = vmatpush2.bf16.msra.mxu0 0
    %6509 = vmatprep.mubr.bf16.mxu0 0
    %6510 = vmatmul.mubr.bf16.gmra.mxu0 %v6472
    %v6511 = vpop.f32.mrf.mxu0
    %v6512 = vadd.f32 0.0, %v6511
    %v6513 = vpop.f32.mrf.mxu0
    %v6514 = vpop.f32.mrf.mxu0
    %v6515 = vpop.f32.mrf.mxu0
    %6516 = vdwg.mxu0
    %v6518 = vsel %vm1077, %v6239, 0
    %v6521 = vsel %vm1177, %v5775, 0
    %6523 = vmatprep.subr.bf16.mxu0 0
    %6524 = vmatpush1.bf16.msra.mxu0 0
    %6525 = vmatprep.subr.bf16.mxu0 0
    %6526 = vmatpush1.bf16.msra.mxu0 0
    %6527 = vmatprep.subr.bf16.mxu0 0
    %6528 = vmatpush1.bf16.msra.mxu0 0
    %6529 = vmatprep.subr.bf16.mxu0 0
    %6530 = vmatpush1.bf16.msra.mxu0 0
    %6531 = vmatprep.subr.bf16.mxu0 0
    %6532 = vmatpush1.bf16.msra.mxu0 0
    %6533 = vmatprep.subr.bf16.mxu0 0
    %6534 = vmatpush1.bf16.msra.mxu0 0
    %6535 = vmatprep.subr.bf16.mxu0 0
    %6536 = vmatpush1.bf16.msra.mxu0 0
    %6537 = vmatprep.subr.bf16.mxu0 0
    %6538 = vmatpush1.bf16.msra.mxu0 %v6521
    %6539 = vmatprep.subr.bf16.mxu0 0
    %6540 = vmatpush2.bf16.msra.mxu0 0
    %6541 = vmatprep.subr.bf16.mxu0 0
    %6542 = vmatpush2.bf16.msra.mxu0 0
    %6543 = vmatprep.subr.bf16.mxu0 0
    %6544 = vmatpush2.bf16.msra.mxu0 0
    %6545 = vmatprep.subr.bf16.mxu0 0
    %6546 = vmatpush2.bf16.msra.mxu0 0
    %6547 = vmatprep.subr.bf16.mxu0 0
    %6548 = vmatpush2.bf16.msra.mxu0 0
    %6549 = vmatprep.subr.bf16.mxu0 0
    %6550 = vmatpush2.bf16.msra.mxu0 0
    %6551 = vmatprep.subr.bf16.mxu0 0
    %6552 = vmatpush2.bf16.msra.mxu0 0
    %6553 = vmatprep.subr.bf16.mxu0 0
    %6554 = vmatpush2.bf16.msra.mxu0 0
    %6555 = vmatprep.mubr.bf16.mxu0 0
    %6556 = vmatmul.mubr.bf16.gmra.mxu0 %v6518
    %v6557 = vpop.f32.mrf.mxu0
    %v6558 = vadd.f32 0.0, %v6557
    %v6559 = vpop.f32.mrf.mxu0
    %v6560 = vpop.f32.mrf.mxu0
    %v6561 = vpop.f32.mrf.mxu0
    %6562 = vdwg.mxu0
    %v6564 = vsel %vm1077, %v6240, 0
    %v6567 = vsel %vm1177, %v5776, 0
    %6569 = vmatprep.subr.bf16.mxu0 0
    %6570 = vmatpush1.bf16.msra.mxu0 0
    %6571 = vmatprep.subr.bf16.mxu0 0
    %6572 = vmatpush1.bf16.msra.mxu0 0
    %6573 = vmatprep.subr.bf16.mxu0 0
    %6574 = vmatpush1.bf16.msra.mxu0 0
    %6575 = vmatprep.subr.bf16.mxu0 0
    %6576 = vmatpush1.bf16.msra.mxu0 0
    %6577 = vmatprep.subr.bf16.mxu0 0
    %6578 = vmatpush1.bf16.msra.mxu0 0
    %6579 = vmatprep.subr.bf16.mxu0 0
    %6580 = vmatpush1.bf16.msra.mxu0 0
    %6581 = vmatprep.subr.bf16.mxu0 0
    %6582 = vmatpush1.bf16.msra.mxu0 0
    %6583 = vmatprep.subr.bf16.mxu0 0
    %6584 = vmatpush1.bf16.msra.mxu0 %v6567
    %6585 = vmatprep.subr.bf16.mxu0 0
    %6586 = vmatpush2.bf16.msra.mxu0 0
    %6587 = vmatprep.subr.bf16.mxu0 0
    %6588 = vmatpush2.bf16.msra.mxu0 0
    %6589 = vmatprep.subr.bf16.mxu0 0
    %6590 = vmatpush2.bf16.msra.mxu0 0
    %6591 = vmatprep.subr.bf16.mxu0 0
    %6592 = vmatpush2.bf16.msra.mxu0 0
    %6593 = vmatprep.subr.bf16.mxu0 0
    %6594 = vmatpush2.bf16.msra.mxu0 0
    %6595 = vmatprep.subr.bf16.mxu0 0
    %6596 = vmatpush2.bf16.msra.mxu0 0
    %6597 = vmatprep.subr.bf16.mxu0 0
    %6598 = vmatpush2.bf16.msra.mxu0 0
    %6599 = vmatprep.subr.bf16.mxu0 0
    %6600 = vmatpush2.bf16.msra.mxu0 0
    %6601 = vmatprep.mubr.bf16.mxu0 0
    %6602 = vmatmul.mubr.bf16.gmra.mxu0 %v6564
    %v6603 = vpop.f32.mrf.mxu0
    %v6604 = vadd.f32 0.0, %v6603
    %v6605 = vpop.f32.mrf.mxu0
    %v6606 = vpop.f32.mrf.mxu0
    %v6607 = vpop.f32.mrf.mxu0
    %6608 = vdwg.mxu0
    %s6609 = scalar_lea.vmem %s6, 256
    %v6610 = vld [vmem:[%s6609] sm:$0xf]
    %v6611 = vld [vmem:[%s6609 + $0x4] sm:$0xf]
    %v6612 = vld [vmem:[%s6609 + $0x8] sm:$0xf]
    %v6613 = vld [vmem:[%s6609 + $0xc] sm:$0xf]
    %v6614 = vld [vmem:[%s6609 + $0x10] sm:$0xf]
    %v6615 = vld [vmem:[%s6609 + $0x14] sm:$0xf]
    %v6616 = vld [vmem:[%s6609 + $0x18] sm:$0xf]
    %v6617 = vld [vmem:[%s6609 + $0x1c] sm:$0xf]
    %v6618 = vld [vmem:[%s6609 + $0x20] sm:$0xf]
    %v6619 = vld [vmem:[%s6609 + $0x24] sm:$0xf]
    %v6620 = vld [vmem:[%s6609 + $0x28] sm:$0xf]
    %v6621 = vld [vmem:[%s6609 + $0x2c] sm:$0xf]
    %v6622 = vld [vmem:[%s6609 + $0x30] sm:$0xf]
    %v6623 = vld [vmem:[%s6609 + $0x34] sm:$0xf]
    %v6624 = vld [vmem:[%s6609 + $0x38] sm:$0xf]
    %v6625 = vld [vmem:[%s6609 + $0x3c] sm:$0xf]
    %v6626 = vpack.c.bf16 %v6328, %v6282
    %v6627 = vpack.c.bf16 %v6420, %v6374
    %v6628 = vpack.c.bf16 %v6512, %v6466
    %v6629 = vpack.c.bf16 %v6604, %v6558
    %6631 = vrot.lane.b32.xlu0 %v5753, 96
    %v6632 = vpop.permute.xlu0 %6631
    %6634 = vrot.lane.b32.xlu0 %v5761, 96
    %v6635 = vpop.permute.xlu0 %6634
    %v6637 = vsel %vm708, %v6632, 0
    %v6640 = vsel %vm708, %v6635, 0
    %6642 = vmatprep.subr.bf16.mxu0 0
    %6643 = vmatpush1.bf16.xpose.msra.mxu0 0
    %6644 = vmatprep.subr.bf16.mxu0 0
    %6645 = vmatpush1.bf16.xpose.msra.mxu0 0
    %6646 = vmatprep.subr.bf16.mxu0 0
    %6647 = vmatpush1.bf16.xpose.msra.mxu0 0
    %6648 = vmatprep.subr.bf16.mxu0 0
    %6649 = vmatpush1.bf16.xpose.msra.mxu0 0
    %6650 = vmatprep.subr.bf16.mxu0 0
    %6651 = vmatpush1.bf16.xpose.msra.mxu0 0
    %6652 = vmatprep.subr.bf16.mxu0 0
    %6653 = vmatpush1.bf16.xpose.msra.mxu0 0
    %6654 = vmatprep.subr.bf16.mxu0 0
    %6655 = vmatpush1.bf16.xpose.msra.mxu0 0
    %6656 = vmatprep.subr.bf16.mxu0 0
    %6657 = vmatpush1.bf16.xpose.msra.mxu0 %v6640
    %6658 = vmatprep.subr.bf16.mxu0 0
    %6659 = vmatpush2.bf16.xpose.msra.mxu0 0
    %6660 = vmatprep.subr.bf16.mxu0 0
    %6661 = vmatpush2.bf16.xpose.msra.mxu0 0
    %6662 = vmatprep.subr.bf16.mxu0 0
    %6663 = vmatpush2.bf16.xpose.msra.mxu0 0
    %6664 = vmatprep.subr.bf16.mxu0 0
    %6665 = vmatpush2.bf16.xpose.msra.mxu0 0
    %6666 = vmatprep.subr.bf16.mxu0 0
    %6667 = vmatpush2.bf16.xpose.msra.mxu0 0
    %6668 = vmatprep.subr.bf16.mxu0 0
    %6669 = vmatpush2.bf16.xpose.msra.mxu0 0
    %6670 = vmatprep.subr.bf16.mxu0 0
    %6671 = vmatpush2.bf16.xpose.msra.mxu0 0
    %6672 = vmatprep.subr.bf16.mxu0 0
    %6673 = vmatpush2.bf16.xpose.msra.mxu0 0
    %6674 = vmatprep.mubr.bf16.mxu0 0
    %6675 = vmatmul.mubr.bf16.gmra.mxu0 %v6637
    %v6676 = vpop.f32.mrf.mxu0
    %v6677 = vadd.f32 0.0, %v6676
    %v6678 = vpop.f32.mrf.mxu0
    %v6679 = vpop.f32.mrf.mxu0
    %v6680 = vpop.f32.mrf.mxu0
    %6681 = vdwg.mxu0
    %6683 = vrot.lane.b32.xlu0 %v5754, 96
    %v6684 = vpop.permute.xlu0 %6683
    %6686 = vrot.lane.b32.xlu0 %v5762, 96
    %v6687 = vpop.permute.xlu0 %6686
    %v6689 = vsel %vm708, %v6684, 0
    %v6692 = vsel %vm708, %v6687, 0
    %6694 = vmatprep.subr.bf16.mxu0 0
    %6695 = vmatpush1.bf16.xpose.msra.mxu0 0
    %6696 = vmatprep.subr.bf16.mxu0 0
    %6697 = vmatpush1.bf16.xpose.msra.mxu0 0
    %6698 = vmatprep.subr.bf16.mxu0 0
    %6699 = vmatpush1.bf16.xpose.msra.mxu0 0
    %6700 = vmatprep.subr.bf16.mxu0 0
    %6701 = vmatpush1.bf16.xpose.msra.mxu0 0
    %6702 = vmatprep.subr.bf16.mxu0 0
    %6703 = vmatpush1.bf16.xpose.msra.mxu0 0
    %6704 = vmatprep.subr.bf16.mxu0 0
    %6705 = vmatpush1.bf16.xpose.msra.mxu0 0
    %6706 = vmatprep.subr.bf16.mxu0 0
    %6707 = vmatpush1.bf16.xpose.msra.mxu0 0
    %6708 = vmatprep.subr.bf16.mxu0 0
    %6709 = vmatpush1.bf16.xpose.msra.mxu0 %v6692
    %6710 = vmatprep.subr.bf16.mxu0 0
    %6711 = vmatpush2.bf16.xpose.msra.mxu0 0
    %6712 = vmatprep.subr.bf16.mxu0 0
    %6713 = vmatpush2.bf16.xpose.msra.mxu0 0
    %6714 = vmatprep.subr.bf16.mxu0 0
    %6715 = vmatpush2.bf16.xpose.msra.mxu0 0
    %6716 = vmatprep.subr.bf16.mxu0 0
    %6717 = vmatpush2.bf16.xpose.msra.mxu0 0
    %6718 = vmatprep.subr.bf16.mxu0 0
    %6719 = vmatpush2.bf16.xpose.msra.mxu0 0
    %6720 = vmatprep.subr.bf16.mxu0 0
    %6721 = vmatpush2.bf16.xpose.msra.mxu0 0
    %6722 = vmatprep.subr.bf16.mxu0 0
    %6723 = vmatpush2.bf16.xpose.msra.mxu0 0
    %6724 = vmatprep.subr.bf16.mxu0 0
    %6725 = vmatpush2.bf16.xpose.msra.mxu0 0
    %6726 = vmatprep.mubr.bf16.mxu0 0
    %6727 = vmatmul.mubr.bf16.gmra.mxu0 %v6689
    %v6728 = vpop.f32.mrf.mxu0
    %v6729 = vadd.f32 0.0, %v6728
    %v6730 = vpop.f32.mrf.mxu0
    %v6731 = vpop.f32.mrf.mxu0
    %v6732 = vpop.f32.mrf.mxu0
    %6733 = vdwg.mxu0
    %6735 = vrot.lane.b32.xlu0 %v5755, 96
    %v6736 = vpop.permute.xlu0 %6735
    %6738 = vrot.lane.b32.xlu0 %v5763, 96
    %v6739 = vpop.permute.xlu0 %6738
    %v6741 = vsel %vm708, %v6736, 0
    %v6744 = vsel %vm708, %v6739, 0
    %6746 = vmatprep.subr.bf16.mxu0 0
    %6747 = vmatpush1.bf16.xpose.msra.mxu0 0
    %6748 = vmatprep.subr.bf16.mxu0 0
    %6749 = vmatpush1.bf16.xpose.msra.mxu0 0
    %6750 = vmatprep.subr.bf16.mxu0 0
    %6751 = vmatpush1.bf16.xpose.msra.mxu0 0
    %6752 = vmatprep.subr.bf16.mxu0 0
    %6753 = vmatpush1.bf16.xpose.msra.mxu0 0
    %6754 = vmatprep.subr.bf16.mxu0 0
    %6755 = vmatpush1.bf16.xpose.msra.mxu0 0
    %6756 = vmatprep.subr.bf16.mxu0 0
    %6757 = vmatpush1.bf16.xpose.msra.mxu0 0
    %6758 = vmatprep.subr.bf16.mxu0 0
    %6759 = vmatpush1.bf16.xpose.msra.mxu0 0
    %6760 = vmatprep.subr.bf16.mxu0 0
    %6761 = vmatpush1.bf16.xpose.msra.mxu0 %v6744
    %6762 = vmatprep.subr.bf16.mxu0 0
    %6763 = vmatpush2.bf16.xpose.msra.mxu0 0
    %6764 = vmatprep.subr.bf16.mxu0 0
    %6765 = vmatpush2.bf16.xpose.msra.mxu0 0
    %6766 = vmatprep.subr.bf16.mxu0 0
    %6767 = vmatpush2.bf16.xpose.msra.mxu0 0
    %6768 = vmatprep.subr.bf16.mxu0 0
    %6769 = vmatpush2.bf16.xpose.msra.mxu0 0
    %6770 = vmatprep.subr.bf16.mxu0 0
    %6771 = vmatpush2.bf16.xpose.msra.mxu0 0
    %6772 = vmatprep.subr.bf16.mxu0 0
    %6773 = vmatpush2.bf16.xpose.msra.mxu0 0
    %6774 = vmatprep.subr.bf16.mxu0 0
    %6775 = vmatpush2.bf16.xpose.msra.mxu0 0
    %6776 = vmatprep.subr.bf16.mxu0 0
    %6777 = vmatpush2.bf16.xpose.msra.mxu0 0
    %6778 = vmatprep.mubr.bf16.mxu0 0
    %6779 = vmatmul.mubr.bf16.gmra.mxu0 %v6741
    %v6780 = vpop.f32.mrf.mxu0
    %v6781 = vadd.f32 0.0, %v6780
    %v6782 = vpop.f32.mrf.mxu0
    %v6783 = vpop.f32.mrf.mxu0
    %v6784 = vpop.f32.mrf.mxu0
    %6785 = vdwg.mxu0
    %6787 = vrot.lane.b32.xlu0 %v5756, 96
    %v6788 = vpop.permute.xlu0 %6787
    %6790 = vrot.lane.b32.xlu0 %v5764, 96
    %v6791 = vpop.permute.xlu0 %6790
    %v6793 = vsel %vm708, %v6788, 0
    %v6796 = vsel %vm708, %v6791, 0
    %6798 = vmatprep.subr.bf16.mxu0 0
    %6799 = vmatpush1.bf16.xpose.msra.mxu0 0
    %6800 = vmatprep.subr.bf16.mxu0 0
    %6801 = vmatpush1.bf16.xpose.msra.mxu0 0
    %6802 = vmatprep.subr.bf16.mxu0 0
    %6803 = vmatpush1.bf16.xpose.msra.mxu0 0
    %6804 = vmatprep.subr.bf16.mxu0 0
    %6805 = vmatpush1.bf16.xpose.msra.mxu0 0
    %6806 = vmatprep.subr.bf16.mxu0 0
    %6807 = vmatpush1.bf16.xpose.msra.mxu0 0
    %6808 = vmatprep.subr.bf16.mxu0 0
    %6809 = vmatpush1.bf16.xpose.msra.mxu0 0
    %6810 = vmatprep.subr.bf16.mxu0 0
    %6811 = vmatpush1.bf16.xpose.msra.mxu0 0
    %6812 = vmatprep.subr.bf16.mxu0 0
    %6813 = vmatpush1.bf16.xpose.msra.mxu0 %v6796
    %6814 = vmatprep.subr.bf16.mxu0 0
    %6815 = vmatpush2.bf16.xpose.msra.mxu0 0
    %6816 = vmatprep.subr.bf16.mxu0 0
    %6817 = vmatpush2.bf16.xpose.msra.mxu0 0
    %6818 = vmatprep.subr.bf16.mxu0 0
    %6819 = vmatpush2.bf16.xpose.msra.mxu0 0
    %6820 = vmatprep.subr.bf16.mxu0 0
    %6821 = vmatpush2.bf16.xpose.msra.mxu0 0
    %6822 = vmatprep.subr.bf16.mxu0 0
    %6823 = vmatpush2.bf16.xpose.msra.mxu0 0
    %6824 = vmatprep.subr.bf16.mxu0 0
    %6825 = vmatpush2.bf16.xpose.msra.mxu0 0
    %6826 = vmatprep.subr.bf16.mxu0 0
    %6827 = vmatpush2.bf16.xpose.msra.mxu0 0
    %6828 = vmatprep.subr.bf16.mxu0 0
    %6829 = vmatpush2.bf16.xpose.msra.mxu0 0
    %6830 = vmatprep.mubr.bf16.mxu0 0
    %6831 = vmatmul.mubr.bf16.gmra.mxu0 %v6793
    %v6832 = vpop.f32.mrf.mxu0
    %v6833 = vadd.f32 0.0, %v6832
    %v6834 = vpop.f32.mrf.mxu0
    %v6835 = vpop.f32.mrf.mxu0
    %v6836 = vpop.f32.mrf.mxu0
    %6837 = vdwg.mxu0
    %6839 = vrot.lane.b32.xlu0 %v5757, 96
    %v6840 = vpop.permute.xlu0 %6839
    %6842 = vrot.lane.b32.xlu0 %v5765, 96
    %v6843 = vpop.permute.xlu0 %6842
    %v6845 = vsel %vm708, %v6840, 0
    %v6848 = vsel %vm708, %v6843, 0
    %6850 = vmatprep.subr.bf16.mxu0 0
    %6851 = vmatpush1.bf16.xpose.msra.mxu0 0
    %6852 = vmatprep.subr.bf16.mxu0 0
    %6853 = vmatpush1.bf16.xpose.msra.mxu0 0
    %6854 = vmatprep.subr.bf16.mxu0 0
    %6855 = vmatpush1.bf16.xpose.msra.mxu0 0
    %6856 = vmatprep.subr.bf16.mxu0 0
    %6857 = vmatpush1.bf16.xpose.msra.mxu0 0
    %6858 = vmatprep.subr.bf16.mxu0 0
    %6859 = vmatpush1.bf16.xpose.msra.mxu0 0
    %6860 = vmatprep.subr.bf16.mxu0 0
    %6861 = vmatpush1.bf16.xpose.msra.mxu0 0
    %6862 = vmatprep.subr.bf16.mxu0 0
    %6863 = vmatpush1.bf16.xpose.msra.mxu0 0
    %6864 = vmatprep.subr.bf16.mxu0 0
    %6865 = vmatpush1.bf16.xpose.msra.mxu0 %v6848
    %6866 = vmatprep.subr.bf16.mxu0 0
    %6867 = vmatpush2.bf16.xpose.msra.mxu0 0
    %6868 = vmatprep.subr.bf16.mxu0 0
    %6869 = vmatpush2.bf16.xpose.msra.mxu0 0
    %6870 = vmatprep.subr.bf16.mxu0 0
    %6871 = vmatpush2.bf16.xpose.msra.mxu0 0
    %6872 = vmatprep.subr.bf16.mxu0 0
    %6873 = vmatpush2.bf16.xpose.msra.mxu0 0
    %6874 = vmatprep.subr.bf16.mxu0 0
    %6875 = vmatpush2.bf16.xpose.msra.mxu0 0
    %6876 = vmatprep.subr.bf16.mxu0 0
    %6877 = vmatpush2.bf16.xpose.msra.mxu0 0
    %6878 = vmatprep.subr.bf16.mxu0 0
    %6879 = vmatpush2.bf16.xpose.msra.mxu0 0
    %6880 = vmatprep.subr.bf16.mxu0 0
    %6881 = vmatpush2.bf16.xpose.msra.mxu0 0
    %6882 = vmatprep.mubr.bf16.mxu0 0
    %6883 = vmatmul.mubr.bf16.gmra.mxu0 %v6845
    %v6884 = vpop.f32.mrf.mxu0
    %v6885 = vadd.f32 0.0, %v6884
    %v6886 = vpop.f32.mrf.mxu0
    %v6887 = vpop.f32.mrf.mxu0
    %v6888 = vpop.f32.mrf.mxu0
    %6889 = vdwg.mxu0
    %6891 = vrot.lane.b32.xlu0 %v5758, 96
    %v6892 = vpop.permute.xlu0 %6891
    %6894 = vrot.lane.b32.xlu0 %v5766, 96
    %v6895 = vpop.permute.xlu0 %6894
    %v6897 = vsel %vm708, %v6892, 0
    %v6900 = vsel %vm708, %v6895, 0
    %6902 = vmatprep.subr.bf16.mxu0 0
    %6903 = vmatpush1.bf16.xpose.msra.mxu0 0
    %6904 = vmatprep.subr.bf16.mxu0 0
    %6905 = vmatpush1.bf16.xpose.msra.mxu0 0
    %6906 = vmatprep.subr.bf16.mxu0 0
    %6907 = vmatpush1.bf16.xpose.msra.mxu0 0
    %6908 = vmatprep.subr.bf16.mxu0 0
    %6909 = vmatpush1.bf16.xpose.msra.mxu0 0
    %6910 = vmatprep.subr.bf16.mxu0 0
    %6911 = vmatpush1.bf16.xpose.msra.mxu0 0
    %6912 = vmatprep.subr.bf16.mxu0 0
    %6913 = vmatpush1.bf16.xpose.msra.mxu0 0
    %6914 = vmatprep.subr.bf16.mxu0 0
    %6915 = vmatpush1.bf16.xpose.msra.mxu0 0
    %6916 = vmatprep.subr.bf16.mxu0 0
    %6917 = vmatpush1.bf16.xpose.msra.mxu0 %v6900
    %6918 = vmatprep.subr.bf16.mxu0 0
    %6919 = vmatpush2.bf16.xpose.msra.mxu0 0
    %6920 = vmatprep.subr.bf16.mxu0 0
    %6921 = vmatpush2.bf16.xpose.msra.mxu0 0
    %6922 = vmatprep.subr.bf16.mxu0 0
    %6923 = vmatpush2.bf16.xpose.msra.mxu0 0
    %6924 = vmatprep.subr.bf16.mxu0 0
    %6925 = vmatpush2.bf16.xpose.msra.mxu0 0
    %6926 = vmatprep.subr.bf16.mxu0 0
    %6927 = vmatpush2.bf16.xpose.msra.mxu0 0
    %6928 = vmatprep.subr.bf16.mxu0 0
    %6929 = vmatpush2.bf16.xpose.msra.mxu0 0
    %6930 = vmatprep.subr.bf16.mxu0 0
    %6931 = vmatpush2.bf16.xpose.msra.mxu0 0
    %6932 = vmatprep.subr.bf16.mxu0 0
    %6933 = vmatpush2.bf16.xpose.msra.mxu0 0
    %6934 = vmatprep.mubr.bf16.mxu0 0
    %6935 = vmatmul.mubr.bf16.gmra.mxu0 %v6897
    %v6936 = vpop.f32.mrf.mxu0
    %v6937 = vadd.f32 0.0, %v6936
    %v6938 = vpop.f32.mrf.mxu0
    %v6939 = vpop.f32.mrf.mxu0
    %v6940 = vpop.f32.mrf.mxu0
    %6941 = vdwg.mxu0
    %6943 = vrot.lane.b32.xlu0 %v5759, 96
    %v6944 = vpop.permute.xlu0 %6943
    %6946 = vrot.lane.b32.xlu0 %v5767, 96
    %v6947 = vpop.permute.xlu0 %6946
    %v6949 = vsel %vm708, %v6944, 0
    %v6952 = vsel %vm708, %v6947, 0
    %6954 = vmatprep.subr.bf16.mxu0 0
    %6955 = vmatpush1.bf16.xpose.msra.mxu0 0
    %6956 = vmatprep.subr.bf16.mxu0 0
    %6957 = vmatpush1.bf16.xpose.msra.mxu0 0
    %6958 = vmatprep.subr.bf16.mxu0 0
    %6959 = vmatpush1.bf16.xpose.msra.mxu0 0
    %6960 = vmatprep.subr.bf16.mxu0 0
    %6961 = vmatpush1.bf16.xpose.msra.mxu0 0
    %6962 = vmatprep.subr.bf16.mxu0 0
    %6963 = vmatpush1.bf16.xpose.msra.mxu0 0
    %6964 = vmatprep.subr.bf16.mxu0 0
    %6965 = vmatpush1.bf16.xpose.msra.mxu0 0
    %6966 = vmatprep.subr.bf16.mxu0 0
    %6967 = vmatpush1.bf16.xpose.msra.mxu0 0
    %6968 = vmatprep.subr.bf16.mxu0 0
    %6969 = vmatpush1.bf16.xpose.msra.mxu0 %v6952
    %6970 = vmatprep.subr.bf16.mxu0 0
    %6971 = vmatpush2.bf16.xpose.msra.mxu0 0
    %6972 = vmatprep.subr.bf16.mxu0 0
    %6973 = vmatpush2.bf16.xpose.msra.mxu0 0
    %6974 = vmatprep.subr.bf16.mxu0 0
    %6975 = vmatpush2.bf16.xpose.msra.mxu0 0
    %6976 = vmatprep.subr.bf16.mxu0 0
    %6977 = vmatpush2.bf16.xpose.msra.mxu0 0
    %6978 = vmatprep.subr.bf16.mxu0 0
    %6979 = vmatpush2.bf16.xpose.msra.mxu0 0
    %6980 = vmatprep.subr.bf16.mxu0 0
    %6981 = vmatpush2.bf16.xpose.msra.mxu0 0
    %6982 = vmatprep.subr.bf16.mxu0 0
    %6983 = vmatpush2.bf16.xpose.msra.mxu0 0
    %6984 = vmatprep.subr.bf16.mxu0 0
    %6985 = vmatpush2.bf16.xpose.msra.mxu0 0
    %6986 = vmatprep.mubr.bf16.mxu0 0
    %6987 = vmatmul.mubr.bf16.gmra.mxu0 %v6949
    %v6988 = vpop.f32.mrf.mxu0
    %v6989 = vadd.f32 0.0, %v6988
    %v6990 = vpop.f32.mrf.mxu0
    %v6991 = vpop.f32.mrf.mxu0
    %v6992 = vpop.f32.mrf.mxu0
    %6993 = vdwg.mxu0
    %6995 = vrot.lane.b32.xlu0 %v5760, 96
    %v6996 = vpop.permute.xlu0 %6995
    %6998 = vrot.lane.b32.xlu0 %v5768, 96
    %v6999 = vpop.permute.xlu0 %6998
    %v7001 = vsel %vm708, %v6996, 0
    %v7004 = vsel %vm708, %v6999, 0
    %7006 = vmatprep.subr.bf16.mxu0 0
    %7007 = vmatpush1.bf16.xpose.msra.mxu0 0
    %7008 = vmatprep.subr.bf16.mxu0 0
    %7009 = vmatpush1.bf16.xpose.msra.mxu0 0
    %7010 = vmatprep.subr.bf16.mxu0 0
    %7011 = vmatpush1.bf16.xpose.msra.mxu0 0
    %7012 = vmatprep.subr.bf16.mxu0 0
    %7013 = vmatpush1.bf16.xpose.msra.mxu0 0
    %7014 = vmatprep.subr.bf16.mxu0 0
    %7015 = vmatpush1.bf16.xpose.msra.mxu0 0
    %7016 = vmatprep.subr.bf16.mxu0 0
    %7017 = vmatpush1.bf16.xpose.msra.mxu0 0
    %7018 = vmatprep.subr.bf16.mxu0 0
    %7019 = vmatpush1.bf16.xpose.msra.mxu0 0
    %7020 = vmatprep.subr.bf16.mxu0 0
    %7021 = vmatpush1.bf16.xpose.msra.mxu0 %v7004
    %7022 = vmatprep.subr.bf16.mxu0 0
    %7023 = vmatpush2.bf16.xpose.msra.mxu0 0
    %7024 = vmatprep.subr.bf16.mxu0 0
    %7025 = vmatpush2.bf16.xpose.msra.mxu0 0
    %7026 = vmatprep.subr.bf16.mxu0 0
    %7027 = vmatpush2.bf16.xpose.msra.mxu0 0
    %7028 = vmatprep.subr.bf16.mxu0 0
    %7029 = vmatpush2.bf16.xpose.msra.mxu0 0
    %7030 = vmatprep.subr.bf16.mxu0 0
    %7031 = vmatpush2.bf16.xpose.msra.mxu0 0
    %7032 = vmatprep.subr.bf16.mxu0 0
    %7033 = vmatpush2.bf16.xpose.msra.mxu0 0
    %7034 = vmatprep.subr.bf16.mxu0 0
    %7035 = vmatpush2.bf16.xpose.msra.mxu0 0
    %7036 = vmatprep.subr.bf16.mxu0 0
    %7037 = vmatpush2.bf16.xpose.msra.mxu0 0
    %7038 = vmatprep.mubr.bf16.mxu0 0
    %7039 = vmatmul.mubr.bf16.gmra.mxu0 %v7001
    %v7040 = vpop.f32.mrf.mxu0
    %v7041 = vadd.f32 0.0, %v7040
    %v7042 = vpop.f32.mrf.mxu0
    %v7043 = vpop.f32.mrf.mxu0
    %v7044 = vpop.f32.mrf.mxu0
    %7045 = vdwg.mxu0
    %v7046 = vsel %vm1077, %v6677, -inf
    %7047 = vmax.xlane.f32.xlu0 %v7046
    %v7048 = vpop.xlane.xlu0 %7047
    %v7049 = vsel %vm1077, %v6729, -inf
    %7050 = vmax.xlane.f32.xlu0 %v7049
    %v7051 = vpop.xlane.xlu0 %7050
    %v7052 = vsel %vm1077, %v6781, -inf
    %7053 = vmax.xlane.f32.xlu0 %v7052
    %v7054 = vpop.xlane.xlu0 %7053
    %v7055 = vsel %vm1077, %v6833, -inf
    %7056 = vmax.xlane.f32.xlu0 %v7055
    %v7057 = vpop.xlane.xlu0 %7056
    %v7058 = vsel %vm1077, %v6885, -inf
    %7059 = vmax.xlane.f32.xlu0 %v7058
    %v7060 = vpop.xlane.xlu0 %7059
    %v7061 = vsel %vm1077, %v6937, -inf
    %7062 = vmax.xlane.f32.xlu0 %v7061
    %v7063 = vpop.xlane.xlu0 %7062
    %v7064 = vsel %vm1077, %v6989, -inf
    %7065 = vmax.xlane.f32.xlu0 %v7064
    %v7066 = vpop.xlane.xlu0 %7065
    %v7067 = vsel %vm1077, %v7041, -inf
    %7068 = vmax.xlane.f32.xlu0 %v7067
    %v7069 = vpop.xlane.xlu0 %7068
    %v7070 = vsub.f32 %v6677, %v7048
    %v7071 = vsub.f32 %v6729, %v7051
    %v7072 = vsub.f32 %v6781, %v7054
    %v7073 = vsub.f32 %v6833, %v7057
    %v7074 = vsub.f32 %v6885, %v7060
    %v7075 = vsub.f32 %v6937, %v7063
    %v7076 = vsub.f32 %v6989, %v7066
    %v7077 = vsub.f32 %v7041, %v7069
    %v7078 = vmul.f32 %v7070, 1.442695
    %v7079 = vpow.pop %v7078
    %v7080 = vmul.f32 %v7071, 1.442695
    %v7081 = vpow.pop %v7080
    %v7082 = vmul.f32 %v7072, 1.442695
    %v7083 = vpow.pop %v7082
    %v7084 = vmul.f32 %v7073, 1.442695
    %v7085 = vpow.pop %v7084
    %v7086 = vmul.f32 %v7074, 1.442695
    %v7087 = vpow.pop %v7086
    %v7088 = vmul.f32 %v7075, 1.442695
    %v7089 = vpow.pop %v7088
    %v7090 = vmul.f32 %v7076, 1.442695
    %v7091 = vpow.pop %v7090
    %v7092 = vmul.f32 %v7077, 1.442695
    %v7093 = vpow.pop %v7092
    %v7094 = vsel %vm1077, %v7079, 0.0
    %7095 = vadd.xlane.f32.xlu0 %v7094
    %v7096 = vpop.xlane.xlu0 %7095
    %v7097 = vsel %vm1077, %v7081, 0.0
    %7098 = vadd.xlane.f32.xlu0 %v7097
    %v7099 = vpop.xlane.xlu0 %7098
    %v7100 = vsel %vm1077, %v7083, 0.0
    %7101 = vadd.xlane.f32.xlu0 %v7100
    %v7102 = vpop.xlane.xlu0 %7101
    %v7103 = vsel %vm1077, %v7085, 0.0
    %7104 = vadd.xlane.f32.xlu0 %v7103
    %v7105 = vpop.xlane.xlu0 %7104
    %v7106 = vsel %vm1077, %v7087, 0.0
    %7107 = vadd.xlane.f32.xlu0 %v7106
    %v7108 = vpop.xlane.xlu0 %7107
    %v7109 = vsel %vm1077, %v7089, 0.0
    %7110 = vadd.xlane.f32.xlu0 %v7109
    %v7111 = vpop.xlane.xlu0 %7110
    %v7112 = vsel %vm1077, %v7091, 0.0
    %7113 = vadd.xlane.f32.xlu0 %v7112
    %v7114 = vpop.xlane.xlu0 %7113
    %v7115 = vsel %vm1077, %v7093, 0.0
    %7116 = vadd.xlane.f32.xlu0 %v7115
    %v7117 = vpop.xlane.xlu0 %7116
    %v7118 = vrcp.pop %v7096
    %v7119 = vrcp.pop %v7099
    %v7120 = vrcp.pop %v7102
    %v7121 = vrcp.pop %v7105
    %v7122 = vrcp.pop %v7108
    %v7123 = vrcp.pop %v7111
    %v7124 = vrcp.pop %v7114
    %v7125 = vrcp.pop %v7117
    %v7126 = vmul.f32 %v7079, %v7118
    %v7127 = vmul.f32 %v7081, %v7119
    %v7128 = vmul.f32 %v7083, %v7120
    %v7129 = vmul.f32 %v7085, %v7121
    %v7130 = vmul.f32 %v7087, %v7122
    %v7131 = vmul.f32 %v7089, %v7123
    %v7132 = vmul.f32 %v7091, %v7124
    %v7133 = vmul.f32 %v7093, %v7125
    %v7134 = vpack.c.bf16 %v7126, %v7126
    %v7135 = vpack.c.bf16 %v7127, %v7127
    %v7136 = vpack.c.bf16 %v7128, %v7128
    %v7137 = vpack.c.bf16 %v7129, %v7129
    %v7138 = vpack.c.bf16 %v7130, %v7130
    %v7139 = vpack.c.bf16 %v7131, %v7131
    %v7140 = vpack.c.bf16 %v7132, %v7132
    %v7141 = vpack.c.bf16 %v7133, %v7133
    %7143 = vrot.lane.b32.xlu0 %v5769, 96
    %v7144 = vpop.permute.xlu0 %7143
    %v7146 = vsel %vm1077, %v7134, 0
    %v7149 = vsel %vm1177, %v7144, 0
    %7151 = vmatprep.subr.bf16.mxu0 0
    %7152 = vmatpush1.bf16.msra.mxu0 0
    %7153 = vmatprep.subr.bf16.mxu0 0
    %7154 = vmatpush1.bf16.msra.mxu0 0
    %7155 = vmatprep.subr.bf16.mxu0 0
    %7156 = vmatpush1.bf16.msra.mxu0 0
    %7157 = vmatprep.subr.bf16.mxu0 0
    %7158 = vmatpush1.bf16.msra.mxu0 0
    %7159 = vmatprep.subr.bf16.mxu0 0
    %7160 = vmatpush1.bf16.msra.mxu0 0
    %7161 = vmatprep.subr.bf16.mxu0 0
    %7162 = vmatpush1.bf16.msra.mxu0 0
    %7163 = vmatprep.subr.bf16.mxu0 0
    %7164 = vmatpush1.bf16.msra.mxu0 0
    %7165 = vmatprep.subr.bf16.mxu0 0
    %7166 = vmatpush1.bf16.msra.mxu0 %v7149
    %7167 = vmatprep.subr.bf16.mxu0 0
    %7168 = vmatpush2.bf16.msra.mxu0 0
    %7169 = vmatprep.subr.bf16.mxu0 0
    %7170 = vmatpush2.bf16.msra.mxu0 0
    %7171 = vmatprep.subr.bf16.mxu0 0
    %7172 = vmatpush2.bf16.msra.mxu0 0
    %7173 = vmatprep.subr.bf16.mxu0 0
    %7174 = vmatpush2.bf16.msra.mxu0 0
    %7175 = vmatprep.subr.bf16.mxu0 0
    %7176 = vmatpush2.bf16.msra.mxu0 0
    %7177 = vmatprep.subr.bf16.mxu0 0
    %7178 = vmatpush2.bf16.msra.mxu0 0
    %7179 = vmatprep.subr.bf16.mxu0 0
    %7180 = vmatpush2.bf16.msra.mxu0 0
    %7181 = vmatprep.subr.bf16.mxu0 0
    %7182 = vmatpush2.bf16.msra.mxu0 0
    %7183 = vmatprep.mubr.bf16.mxu0 0
    %7184 = vmatmul.mubr.bf16.gmra.mxu0 %v7146
    %v7185 = vpop.f32.mrf.mxu0
    %v7186 = vadd.f32 0.0, %v7185
    %v7187 = vpop.f32.mrf.mxu0
    %v7188 = vpop.f32.mrf.mxu0
    %v7189 = vpop.f32.mrf.mxu0
    %7190 = vdwg.mxu0
    %7192 = vrot.lane.b32.xlu0 %v5770, 96
    %v7193 = vpop.permute.xlu0 %7192
    %v7195 = vsel %vm1077, %v7135, 0
    %v7198 = vsel %vm1177, %v7193, 0
    %7200 = vmatprep.subr.bf16.mxu0 0
    %7201 = vmatpush1.bf16.msra.mxu0 0
    %7202 = vmatprep.subr.bf16.mxu0 0
    %7203 = vmatpush1.bf16.msra.mxu0 0
    %7204 = vmatprep.subr.bf16.mxu0 0
    %7205 = vmatpush1.bf16.msra.mxu0 0
    %7206 = vmatprep.subr.bf16.mxu0 0
    %7207 = vmatpush1.bf16.msra.mxu0 0
    %7208 = vmatprep.subr.bf16.mxu0 0
    %7209 = vmatpush1.bf16.msra.mxu0 0
    %7210 = vmatprep.subr.bf16.mxu0 0
    %7211 = vmatpush1.bf16.msra.mxu0 0
    %7212 = vmatprep.subr.bf16.mxu0 0
    %7213 = vmatpush1.bf16.msra.mxu0 0
    %7214 = vmatprep.subr.bf16.mxu0 0
    %7215 = vmatpush1.bf16.msra.mxu0 %v7198
    %7216 = vmatprep.subr.bf16.mxu0 0
    %7217 = vmatpush2.bf16.msra.mxu0 0
    %7218 = vmatprep.subr.bf16.mxu0 0
    %7219 = vmatpush2.bf16.msra.mxu0 0
    %7220 = vmatprep.subr.bf16.mxu0 0
    %7221 = vmatpush2.bf16.msra.mxu0 0
    %7222 = vmatprep.subr.bf16.mxu0 0
    %7223 = vmatpush2.bf16.msra.mxu0 0
    %7224 = vmatprep.subr.bf16.mxu0 0
    %7225 = vmatpush2.bf16.msra.mxu0 0
    %7226 = vmatprep.subr.bf16.mxu0 0
    %7227 = vmatpush2.bf16.msra.mxu0 0
    %7228 = vmatprep.subr.bf16.mxu0 0
    %7229 = vmatpush2.bf16.msra.mxu0 0
    %7230 = vmatprep.subr.bf16.mxu0 0
    %7231 = vmatpush2.bf16.msra.mxu0 0
    %7232 = vmatprep.mubr.bf16.mxu0 0
    %7233 = vmatmul.mubr.bf16.gmra.mxu0 %v7195
    %v7234 = vpop.f32.mrf.mxu0
    %v7235 = vadd.f32 0.0, %v7234
    %v7236 = vpop.f32.mrf.mxu0
    %v7237 = vpop.f32.mrf.mxu0
    %v7238 = vpop.f32.mrf.mxu0
    %7239 = vdwg.mxu0
    %7241 = vrot.lane.b32.xlu0 %v5771, 96
    %v7242 = vpop.permute.xlu0 %7241
    %v7244 = vsel %vm1077, %v7136, 0
    %v7247 = vsel %vm1177, %v7242, 0
    %7249 = vmatprep.subr.bf16.mxu0 0
    %7250 = vmatpush1.bf16.msra.mxu0 0
    %7251 = vmatprep.subr.bf16.mxu0 0
    %7252 = vmatpush1.bf16.msra.mxu0 0
    %7253 = vmatprep.subr.bf16.mxu0 0
    %7254 = vmatpush1.bf16.msra.mxu0 0
    %7255 = vmatprep.subr.bf16.mxu0 0
    %7256 = vmatpush1.bf16.msra.mxu0 0
    %7257 = vmatprep.subr.bf16.mxu0 0
    %7258 = vmatpush1.bf16.msra.mxu0 0
    %7259 = vmatprep.subr.bf16.mxu0 0
    %7260 = vmatpush1.bf16.msra.mxu0 0
    %7261 = vmatprep.subr.bf16.mxu0 0
    %7262 = vmatpush1.bf16.msra.mxu0 0
    %7263 = vmatprep.subr.bf16.mxu0 0
    %7264 = vmatpush1.bf16.msra.mxu0 %v7247
    %7265 = vmatprep.subr.bf16.mxu0 0
    %7266 = vmatpush2.bf16.msra.mxu0 0
    %7267 = vmatprep.subr.bf16.mxu0 0
    %7268 = vmatpush2.bf16.msra.mxu0 0
    %7269 = vmatprep.subr.bf16.mxu0 0
    %7270 = vmatpush2.bf16.msra.mxu0 0
    %7271 = vmatprep.subr.bf16.mxu0 0
    %7272 = vmatpush2.bf16.msra.mxu0 0
    %7273 = vmatprep.subr.bf16.mxu0 0
    %7274 = vmatpush2.bf16.msra.mxu0 0
    %7275 = vmatprep.subr.bf16.mxu0 0
    %7276 = vmatpush2.bf16.msra.mxu0 0
    %7277 = vmatprep.subr.bf16.mxu0 0
    %7278 = vmatpush2.bf16.msra.mxu0 0
    %7279 = vmatprep.subr.bf16.mxu0 0
    %7280 = vmatpush2.bf16.msra.mxu0 0
    %7281 = vmatprep.mubr.bf16.mxu0 0
    %7282 = vmatmul.mubr.bf16.gmra.mxu0 %v7244
    %v7283 = vpop.f32.mrf.mxu0
    %v7284 = vadd.f32 0.0, %v7283
    %v7285 = vpop.f32.mrf.mxu0
    %v7286 = vpop.f32.mrf.mxu0
    %v7287 = vpop.f32.mrf.mxu0
    %7288 = vdwg.mxu0
    %7290 = vrot.lane.b32.xlu0 %v5772, 96
    %v7291 = vpop.permute.xlu0 %7290
    %v7293 = vsel %vm1077, %v7137, 0
    %v7296 = vsel %vm1177, %v7291, 0
    %7298 = vmatprep.subr.bf16.mxu0 0
    %7299 = vmatpush1.bf16.msra.mxu0 0
    %7300 = vmatprep.subr.bf16.mxu0 0
    %7301 = vmatpush1.bf16.msra.mxu0 0
    %7302 = vmatprep.subr.bf16.mxu0 0
    %7303 = vmatpush1.bf16.msra.mxu0 0
    %7304 = vmatprep.subr.bf16.mxu0 0
    %7305 = vmatpush1.bf16.msra.mxu0 0
    %7306 = vmatprep.subr.bf16.mxu0 0
    %7307 = vmatpush1.bf16.msra.mxu0 0
    %7308 = vmatprep.subr.bf16.mxu0 0
    %7309 = vmatpush1.bf16.msra.mxu0 0
    %7310 = vmatprep.subr.bf16.mxu0 0
    %7311 = vmatpush1.bf16.msra.mxu0 0
    %7312 = vmatprep.subr.bf16.mxu0 0
    %7313 = vmatpush1.bf16.msra.mxu0 %v7296
    %7314 = vmatprep.subr.bf16.mxu0 0
    %7315 = vmatpush2.bf16.msra.mxu0 0
    %7316 = vmatprep.subr.bf16.mxu0 0
    %7317 = vmatpush2.bf16.msra.mxu0 0
    %7318 = vmatprep.subr.bf16.mxu0 0
    %7319 = vmatpush2.bf16.msra.mxu0 0
    %7320 = vmatprep.subr.bf16.mxu0 0
    %7321 = vmatpush2.bf16.msra.mxu0 0
    %7322 = vmatprep.subr.bf16.mxu0 0
    %7323 = vmatpush2.bf16.msra.mxu0 0
    %7324 = vmatprep.subr.bf16.mxu0 0
    %7325 = vmatpush2.bf16.msra.mxu0 0
    %7326 = vmatprep.subr.bf16.mxu0 0
    %7327 = vmatpush2.bf16.msra.mxu0 0
    %7328 = vmatprep.subr.bf16.mxu0 0
    %7329 = vmatpush2.bf16.msra.mxu0 0
    %7330 = vmatprep.mubr.bf16.mxu0 0
    %7331 = vmatmul.mubr.bf16.gmra.mxu0 %v7293
    %v7332 = vpop.f32.mrf.mxu0
    %v7333 = vadd.f32 0.0, %v7332
    %v7334 = vpop.f32.mrf.mxu0
    %v7335 = vpop.f32.mrf.mxu0
    %v7336 = vpop.f32.mrf.mxu0
    %7337 = vdwg.mxu0
    %7339 = vrot.lane.b32.xlu0 %v5773, 96
    %v7340 = vpop.permute.xlu0 %7339
    %v7342 = vsel %vm1077, %v7138, 0
    %v7345 = vsel %vm1177, %v7340, 0
    %7347 = vmatprep.subr.bf16.mxu0 0
    %7348 = vmatpush1.bf16.msra.mxu0 0
    %7349 = vmatprep.subr.bf16.mxu0 0
    %7350 = vmatpush1.bf16.msra.mxu0 0
    %7351 = vmatprep.subr.bf16.mxu0 0
    %7352 = vmatpush1.bf16.msra.mxu0 0
    %7353 = vmatprep.subr.bf16.mxu0 0
    %7354 = vmatpush1.bf16.msra.mxu0 0
    %7355 = vmatprep.subr.bf16.mxu0 0
    %7356 = vmatpush1.bf16.msra.mxu0 0
    %7357 = vmatprep.subr.bf16.mxu0 0
    %7358 = vmatpush1.bf16.msra.mxu0 0
    %7359 = vmatprep.subr.bf16.mxu0 0
    %7360 = vmatpush1.bf16.msra.mxu0 0
    %7361 = vmatprep.subr.bf16.mxu0 0
    %7362 = vmatpush1.bf16.msra.mxu0 %v7345
    %7363 = vmatprep.subr.bf16.mxu0 0
    %7364 = vmatpush2.bf16.msra.mxu0 0
    %7365 = vmatprep.subr.bf16.mxu0 0
    %7366 = vmatpush2.bf16.msra.mxu0 0
    %7367 = vmatprep.subr.bf16.mxu0 0
    %7368 = vmatpush2.bf16.msra.mxu0 0
    %7369 = vmatprep.subr.bf16.mxu0 0
    %7370 = vmatpush2.bf16.msra.mxu0 0
    %7371 = vmatprep.subr.bf16.mxu0 0
    %7372 = vmatpush2.bf16.msra.mxu0 0
    %7373 = vmatprep.subr.bf16.mxu0 0
    %7374 = vmatpush2.bf16.msra.mxu0 0
    %7375 = vmatprep.subr.bf16.mxu0 0
    %7376 = vmatpush2.bf16.msra.mxu0 0
    %7377 = vmatprep.subr.bf16.mxu0 0
    %7378 = vmatpush2.bf16.msra.mxu0 0
    %7379 = vmatprep.mubr.bf16.mxu0 0
    %7380 = vmatmul.mubr.bf16.gmra.mxu0 %v7342
    %v7381 = vpop.f32.mrf.mxu0
    %v7382 = vadd.f32 0.0, %v7381
    %v7383 = vpop.f32.mrf.mxu0
    %v7384 = vpop.f32.mrf.mxu0
    %v7385 = vpop.f32.mrf.mxu0
    %7386 = vdwg.mxu0
    %7388 = vrot.lane.b32.xlu0 %v5774, 96
    %v7389 = vpop.permute.xlu0 %7388
    %v7391 = vsel %vm1077, %v7139, 0
    %v7394 = vsel %vm1177, %v7389, 0
    %7396 = vmatprep.subr.bf16.mxu0 0
    %7397 = vmatpush1.bf16.msra.mxu0 0
    %7398 = vmatprep.subr.bf16.mxu0 0
    %7399 = vmatpush1.bf16.msra.mxu0 0
    %7400 = vmatprep.subr.bf16.mxu0 0
    %7401 = vmatpush1.bf16.msra.mxu0 0
    %7402 = vmatprep.subr.bf16.mxu0 0
    %7403 = vmatpush1.bf16.msra.mxu0 0
    %7404 = vmatprep.subr.bf16.mxu0 0
    %7405 = vmatpush1.bf16.msra.mxu0 0
    %7406 = vmatprep.subr.bf16.mxu0 0
    %7407 = vmatpush1.bf16.msra.mxu0 0
    %7408 = vmatprep.subr.bf16.mxu0 0
    %7409 = vmatpush1.bf16.msra.mxu0 0
    %7410 = vmatprep.subr.bf16.mxu0 0
    %7411 = vmatpush1.bf16.msra.mxu0 %v7394
    %7412 = vmatprep.subr.bf16.mxu0 0
    %7413 = vmatpush2.bf16.msra.mxu0 0
    %7414 = vmatprep.subr.bf16.mxu0 0
    %7415 = vmatpush2.bf16.msra.mxu0 0
    %7416 = vmatprep.subr.bf16.mxu0 0
    %7417 = vmatpush2.bf16.msra.mxu0 0
    %7418 = vmatprep.subr.bf16.mxu0 0
    %7419 = vmatpush2.bf16.msra.mxu0 0
    %7420 = vmatprep.subr.bf16.mxu0 0
    %7421 = vmatpush2.bf16.msra.mxu0 0
    %7422 = vmatprep.subr.bf16.mxu0 0
    %7423 = vmatpush2.bf16.msra.mxu0 0
    %7424 = vmatprep.subr.bf16.mxu0 0
    %7425 = vmatpush2.bf16.msra.mxu0 0
    %7426 = vmatprep.subr.bf16.mxu0 0
    %7427 = vmatpush2.bf16.msra.mxu0 0
    %7428 = vmatprep.mubr.bf16.mxu0 0
    %7429 = vmatmul.mubr.bf16.gmra.mxu0 %v7391
    %v7430 = vpop.f32.mrf.mxu0
    %v7431 = vadd.f32 0.0, %v7430
    %v7432 = vpop.f32.mrf.mxu0
    %v7433 = vpop.f32.mrf.mxu0
    %v7434 = vpop.f32.mrf.mxu0
    %7435 = vdwg.mxu0
    %7437 = vrot.lane.b32.xlu0 %v5775, 96
    %v7438 = vpop.permute.xlu0 %7437
    %v7440 = vsel %vm1077, %v7140, 0
    %v7443 = vsel %vm1177, %v7438, 0
    %7445 = vmatprep.subr.bf16.mxu0 0
    %7446 = vmatpush1.bf16.msra.mxu0 0
    %7447 = vmatprep.subr.bf16.mxu0 0
    %7448 = vmatpush1.bf16.msra.mxu0 0
    %7449 = vmatprep.subr.bf16.mxu0 0
    %7450 = vmatpush1.bf16.msra.mxu0 0
    %7451 = vmatprep.subr.bf16.mxu0 0
    %7452 = vmatpush1.bf16.msra.mxu0 0
    %7453 = vmatprep.subr.bf16.mxu0 0
    %7454 = vmatpush1.bf16.msra.mxu0 0
    %7455 = vmatprep.subr.bf16.mxu0 0
    %7456 = vmatpush1.bf16.msra.mxu0 0
    %7457 = vmatprep.subr.bf16.mxu0 0
    %7458 = vmatpush1.bf16.msra.mxu0 0
    %7459 = vmatprep.subr.bf16.mxu0 0
    %7460 = vmatpush1.bf16.msra.mxu0 %v7443
    %7461 = vmatprep.subr.bf16.mxu0 0
    %7462 = vmatpush2.bf16.msra.mxu0 0
    %7463 = vmatprep.subr.bf16.mxu0 0
    %7464 = vmatpush2.bf16.msra.mxu0 0
    %7465 = vmatprep.subr.bf16.mxu0 0
    %7466 = vmatpush2.bf16.msra.mxu0 0
    %7467 = vmatprep.subr.bf16.mxu0 0
    %7468 = vmatpush2.bf16.msra.mxu0 0
    %7469 = vmatprep.subr.bf16.mxu0 0
    %7470 = vmatpush2.bf16.msra.mxu0 0
    %7471 = vmatprep.subr.bf16.mxu0 0
    %7472 = vmatpush2.bf16.msra.mxu0 0
    %7473 = vmatprep.subr.bf16.mxu0 0
    %7474 = vmatpush2.bf16.msra.mxu0 0
    %7475 = vmatprep.subr.bf16.mxu0 0
    %7476 = vmatpush2.bf16.msra.mxu0 0
    %7477 = vmatprep.mubr.bf16.mxu0 0
    %7478 = vmatmul.mubr.bf16.gmra.mxu0 %v7440
    %v7479 = vpop.f32.mrf.mxu0
    %v7480 = vadd.f32 0.0, %v7479
    %v7481 = vpop.f32.mrf.mxu0
    %v7482 = vpop.f32.mrf.mxu0
    %v7483 = vpop.f32.mrf.mxu0
    %7484 = vdwg.mxu0
    %7486 = vrot.lane.b32.xlu0 %v5776, 96
    %v7487 = vpop.permute.xlu0 %7486
    %v7489 = vsel %vm1077, %v7141, 0
    %v7492 = vsel %vm1177, %v7487, 0
    %7494 = vmatprep.subr.bf16.mxu0 0
    %7495 = vmatpush1.bf16.msra.mxu0 0
    %7496 = vmatprep.subr.bf16.mxu0 0
    %7497 = vmatpush1.bf16.msra.mxu0 0
    %7498 = vmatprep.subr.bf16.mxu0 0
    %7499 = vmatpush1.bf16.msra.mxu0 0
    %7500 = vmatprep.subr.bf16.mxu0 0
    %7501 = vmatpush1.bf16.msra.mxu0 0
    %7502 = vmatprep.subr.bf16.mxu0 0
    %7503 = vmatpush1.bf16.msra.mxu0 0
    %7504 = vmatprep.subr.bf16.mxu0 0
    %7505 = vmatpush1.bf16.msra.mxu0 0
    %7506 = vmatprep.subr.bf16.mxu0 0
    %7507 = vmatpush1.bf16.msra.mxu0 0
    %7508 = vmatprep.subr.bf16.mxu0 0
    %7509 = vmatpush1.bf16.msra.mxu0 %v7492
    %7510 = vmatprep.subr.bf16.mxu0 0
    %7511 = vmatpush2.bf16.msra.mxu0 0
    %7512 = vmatprep.subr.bf16.mxu0 0
    %7513 = vmatpush2.bf16.msra.mxu0 0
    %7514 = vmatprep.subr.bf16.mxu0 0
    %7515 = vmatpush2.bf16.msra.mxu0 0
    %7516 = vmatprep.subr.bf16.mxu0 0
    %7517 = vmatpush2.bf16.msra.mxu0 0
    %7518 = vmatprep.subr.bf16.mxu0 0
    %7519 = vmatpush2.bf16.msra.mxu0 0
    %7520 = vmatprep.subr.bf16.mxu0 0
    %7521 = vmatpush2.bf16.msra.mxu0 0
    %7522 = vmatprep.subr.bf16.mxu0 0
    %7523 = vmatpush2.bf16.msra.mxu0 0
    %7524 = vmatprep.subr.bf16.mxu0 0
    %7525 = vmatpush2.bf16.msra.mxu0 0
    %7526 = vmatprep.mubr.bf16.mxu0 0
    %7527 = vmatmul.mubr.bf16.gmra.mxu0 %v7489
    %v7528 = vpop.f32.mrf.mxu0
    %v7529 = vadd.f32 0.0, %v7528
    %v7530 = vpop.f32.mrf.mxu0
    %v7531 = vpop.f32.mrf.mxu0
    %v7532 = vpop.f32.mrf.mxu0
    %7533 = vdwg.mxu0
    %s7534 = scalar_lea.vmem %s6, 320
    %v7535 = vld [vmem:[%s7534] sm:$0xf]
    %v7536 = vld [vmem:[%s7534 + $0x4] sm:$0xf]
    %v7537 = vld [vmem:[%s7534 + $0x8] sm:$0xf]
    %v7538 = vld [vmem:[%s7534 + $0xc] sm:$0xf]
    %v7539 = vld [vmem:[%s7534 + $0x10] sm:$0xf]
    %v7540 = vld [vmem:[%s7534 + $0x14] sm:$0xf]
    %v7541 = vld [vmem:[%s7534 + $0x18] sm:$0xf]
    %v7542 = vld [vmem:[%s7534 + $0x1c] sm:$0xf]
    %v7543 = vld [vmem:[%s7534 + $0x20] sm:$0xf]
    %v7544 = vld [vmem:[%s7534 + $0x24] sm:$0xf]
    %v7545 = vld [vmem:[%s7534 + $0x28] sm:$0xf]
    %v7546 = vld [vmem:[%s7534 + $0x2c] sm:$0xf]
    %v7547 = vld [vmem:[%s7534 + $0x30] sm:$0xf]
    %v7548 = vld [vmem:[%s7534 + $0x34] sm:$0xf]
    %v7549 = vld [vmem:[%s7534 + $0x38] sm:$0xf]
    %v7550 = vld [vmem:[%s7534 + $0x3c] sm:$0xf]
    %v7551 = vpack.c.bf16 %v7235, %v7186
    %v7552 = vpack.c.bf16 %v7333, %v7284
    %v7553 = vpack.c.bf16 %v7431, %v7382
    %v7554 = vpack.c.bf16 %v7529, %v7480
    %v7571 = vunpack.c.l.b16 %v7535
    %v7572 = vunpack.c.l.b16 %v7536
    %v7573 = vunpack.c.l.b16 %v7537
    %v7574 = vunpack.c.l.b16 %v7538
    %v7575 = vunpack.c.l.b16 %v7539
    %v7576 = vunpack.c.l.b16 %v7540
    %v7577 = vunpack.c.l.b16 %v7541
    %v7578 = vunpack.c.l.b16 %v7542
    %v7579 = vunpack.c.l.b16 %v7543
    %v7580 = vunpack.c.l.b16 %v7544
    %v7581 = vunpack.c.l.b16 %v7545
    %v7582 = vunpack.c.l.b16 %v7546
    %v7583 = vunpack.c.l.b16 %v7547
    %v7584 = vunpack.c.l.b16 %v7548
    %v7585 = vunpack.c.l.b16 %v7549
    %v7586 = vunpack.c.l.b16 %v7550
    %v7587 = vpack.c.b16 %v7572, %v7571
    %v7588 = vpack.c.b16 %v7574, %v7573
    %v7589 = vpack.c.b16 %v7576, %v7575
    %v7590 = vpack.c.b16 %v7578, %v7577
    %v7591 = vpack.c.b16 %v7580, %v7579
    %v7592 = vpack.c.b16 %v7582, %v7581
    %v7593 = vpack.c.b16 %v7584, %v7583
    %v7594 = vpack.c.b16 %v7586, %v7585
    %v7596 = vsel %vm708, %v7551, 0
    %v7599 = vsel %vm708, %v7552, 0
    %v7602 = vsel %vm708, %v7553, 0
    %v7605 = vsel %vm708, %v7554, 0
    %v7608 = vsel %vm708, %v7587, 0
    %v7611 = vsel %vm708, %v7588, 0
    %v7614 = vsel %vm708, %v7589, 0
    %v7617 = vsel %vm708, %v7590, 0
    %v7620 = vsel %vm708, %v7591, 0
    %v7623 = vsel %vm708, %v7592, 0
    %v7626 = vsel %vm708, %v7593, 0
    %v7629 = vsel %vm708, %v7594, 0
    %7631 = vmatprep.subr.bf16.mxu0 0
    %7632 = vmatpush1.bf16.xpose.msra.mxu0 %v7629
    %7633 = vmatprep.subr.bf16.mxu0 0
    %7634 = vmatpush1.bf16.xpose.msra.mxu0 %v7626
    %7635 = vmatprep.subr.bf16.mxu0 0
    %7636 = vmatpush1.bf16.xpose.msra.mxu0 %v7623
    %7637 = vmatprep.subr.bf16.mxu0 0
    %7638 = vmatpush1.bf16.xpose.msra.mxu0 %v7620
    %7639 = vmatprep.subr.bf16.mxu0 0
    %7640 = vmatpush1.bf16.xpose.msra.mxu0 %v7617
    %7641 = vmatprep.subr.bf16.mxu0 0
    %7642 = vmatpush1.bf16.xpose.msra.mxu0 %v7614
    %7643 = vmatprep.subr.bf16.mxu0 0
    %7644 = vmatpush1.bf16.xpose.msra.mxu0 %v7611
    %7645 = vmatprep.subr.bf16.mxu0 0
    %7646 = vmatpush1.bf16.xpose.msra.mxu0 %v7608
    %7647 = vmatprep.subr.bf16.mxu0 0
    %7648 = vmatpush2.bf16.xpose.msra.mxu0 0
    %7649 = vmatprep.subr.bf16.mxu0 0
    %7650 = vmatpush2.bf16.xpose.msra.mxu0 0
    %7651 = vmatprep.subr.bf16.mxu0 0
    %7652 = vmatpush2.bf16.xpose.msra.mxu0 0
    %7653 = vmatprep.subr.bf16.mxu0 0
    %7654 = vmatpush2.bf16.xpose.msra.mxu0 0
    %7655 = vmatprep.subr.bf16.mxu0 0
    %7656 = vmatpush2.bf16.xpose.msra.mxu0 0
    %7657 = vmatprep.subr.bf16.mxu0 0
    %7658 = vmatpush2.bf16.xpose.msra.mxu0 0
    %7659 = vmatprep.subr.bf16.mxu0 0
    %7660 = vmatpush2.bf16.xpose.msra.mxu0 0
    %7661 = vmatprep.subr.bf16.mxu0 0
    %7662 = vmatpush2.bf16.xpose.msra.mxu0 0
    %7663 = vmatprep.mubr.bf16.mxu0 0
    %7664 = vmatmul.mubr.bf16.gmra.mxu0 %v7596
    %v7665 = vpop.f32.mrf.mxu0
    %v7666 = vadd.f32 0.0, %v7665
    %v7667 = vpop.f32.mrf.mxu0
    %v7668 = vpop.f32.mrf.mxu0
    %v7669 = vadd.f32 0.0, %v7668
    %v7670 = vpop.f32.mrf.mxu0
    %7671 = vmatprep.mubr.bf16.mxu0 0
    %7672 = vmatmul.mubr.bf16.gmra.mxu0 %v7599
    %v7673 = vpop.f32.mrf.mxu0
    %v7674 = vadd.f32 0.0, %v7673
    %v7675 = vpop.f32.mrf.mxu0
    %v7676 = vpop.f32.mrf.mxu0
    %v7677 = vadd.f32 0.0, %v7676
    %v7678 = vpop.f32.mrf.mxu0
    %7679 = vmatprep.mubr.bf16.mxu0 0
    %7680 = vmatmul.mubr.bf16.gmra.mxu0 %v7602
    %v7681 = vpop.f32.mrf.mxu0
    %v7682 = vadd.f32 0.0, %v7681
    %v7683 = vpop.f32.mrf.mxu0
    %v7684 = vpop.f32.mrf.mxu0
    %v7685 = vadd.f32 0.0, %v7684
    %v7686 = vpop.f32.mrf.mxu0
    %7687 = vmatprep.mubr.bf16.mxu0 0
    %7688 = vmatmul.mubr.bf16.gmra.mxu0 %v7605
    %v7689 = vpop.f32.mrf.mxu0
    %v7690 = vadd.f32 0.0, %v7689
    %v7691 = vpop.f32.mrf.mxu0
    %v7692 = vpop.f32.mrf.mxu0
    %v7693 = vadd.f32 0.0, %v7692
    %v7694 = vpop.f32.mrf.mxu0
    %7695 = vdwg.mxu0
    %v7712 = vunpack.c.l.b16 %v6610
    %v7713 = vunpack.c.l.b16 %v6611
    %v7714 = vunpack.c.l.b16 %v6612
    %v7715 = vunpack.c.l.b16 %v6613
    %v7716 = vunpack.c.l.b16 %v6614
    %v7717 = vunpack.c.l.b16 %v6615
    %v7718 = vunpack.c.l.b16 %v6616
    %v7719 = vunpack.c.l.b16 %v6617
    %v7720 = vunpack.c.l.b16 %v6618
    %v7721 = vunpack.c.l.b16 %v6619
    %v7722 = vunpack.c.l.b16 %v6620
    %v7723 = vunpack.c.l.b16 %v6621
    %v7724 = vunpack.c.l.b16 %v6622
    %v7725 = vunpack.c.l.b16 %v6623
    %v7726 = vunpack.c.l.b16 %v6624
    %v7727 = vunpack.c.l.b16 %v6625
    %v7728 = vpack.c.b16 %v7713, %v7712
    %v7729 = vpack.c.b16 %v7715, %v7714
    %v7730 = vpack.c.b16 %v7717, %v7716
    %v7731 = vpack.c.b16 %v7719, %v7718
    %v7732 = vpack.c.b16 %v7721, %v7720
    %v7733 = vpack.c.b16 %v7723, %v7722
    %v7734 = vpack.c.b16 %v7725, %v7724
    %v7735 = vpack.c.b16 %v7727, %v7726
    %v7737 = vsel %vm708, %v6626, 0
    %v7740 = vsel %vm708, %v6627, 0
    %v7743 = vsel %vm708, %v6628, 0
    %v7746 = vsel %vm708, %v6629, 0
    %v7749 = vsel %vm708, %v7728, 0
    %v7752 = vsel %vm708, %v7729, 0
    %v7755 = vsel %vm708, %v7730, 0
    %v7758 = vsel %vm708, %v7731, 0
    %v7761 = vsel %vm708, %v7732, 0
    %v7764 = vsel %vm708, %v7733, 0
    %v7767 = vsel %vm708, %v7734, 0
    %v7770 = vsel %vm708, %v7735, 0
    %7772 = vmatprep.subr.bf16.mxu0 0
    %7773 = vmatpush1.bf16.xpose.msra.mxu0 %v7770
    %7774 = vmatprep.subr.bf16.mxu0 0
    %7775 = vmatpush1.bf16.xpose.msra.mxu0 %v7767
    %7776 = vmatprep.subr.bf16.mxu0 0
    %7777 = vmatpush1.bf16.xpose.msra.mxu0 %v7764
    %7778 = vmatprep.subr.bf16.mxu0 0
    %7779 = vmatpush1.bf16.xpose.msra.mxu0 %v7761
    %7780 = vmatprep.subr.bf16.mxu0 0
    %7781 = vmatpush1.bf16.xpose.msra.mxu0 %v7758
    %7782 = vmatprep.subr.bf16.mxu0 0
    %7783 = vmatpush1.bf16.xpose.msra.mxu0 %v7755
    %7784 = vmatprep.subr.bf16.mxu0 0
    %7785 = vmatpush1.bf16.xpose.msra.mxu0 %v7752
    %7786 = vmatprep.subr.bf16.mxu0 0
    %7787 = vmatpush1.bf16.xpose.msra.mxu0 %v7749
    %7788 = vmatprep.subr.bf16.mxu0 0
    %7789 = vmatpush2.bf16.xpose.msra.mxu0 0
    %7790 = vmatprep.subr.bf16.mxu0 0
    %7791 = vmatpush2.bf16.xpose.msra.mxu0 0
    %7792 = vmatprep.subr.bf16.mxu0 0
    %7793 = vmatpush2.bf16.xpose.msra.mxu0 0
    %7794 = vmatprep.subr.bf16.mxu0 0
    %7795 = vmatpush2.bf16.xpose.msra.mxu0 0
    %7796 = vmatprep.subr.bf16.mxu0 0
    %7797 = vmatpush2.bf16.xpose.msra.mxu0 0
    %7798 = vmatprep.subr.bf16.mxu0 0
    %7799 = vmatpush2.bf16.xpose.msra.mxu0 0
    %7800 = vmatprep.subr.bf16.mxu0 0
    %7801 = vmatpush2.bf16.xpose.msra.mxu0 0
    %7802 = vmatprep.subr.bf16.mxu0 0
    %7803 = vmatpush2.bf16.xpose.msra.mxu0 0
    %7804 = vmatprep.mubr.bf16.mxu0 0
    %7805 = vmatmul.mubr.bf16.gmra.mxu0 %v7737
    %v7806 = vpop.f32.mrf.mxu0
    %v7807 = vadd.f32 %v7666, %v7806
    %v7808 = vpop.f32.mrf.mxu0
    %v7809 = vpop.f32.mrf.mxu0
    %v7810 = vadd.f32 %v7669, %v7809
    %v7811 = vpop.f32.mrf.mxu0
    %7812 = vmatprep.mubr.bf16.mxu0 0
    %7813 = vmatmul.mubr.bf16.gmra.mxu0 %v7740
    %v7814 = vpop.f32.mrf.mxu0
    %v7815 = vadd.f32 %v7674, %v7814
    %v7816 = vpop.f32.mrf.mxu0
    %v7817 = vpop.f32.mrf.mxu0
    %v7818 = vadd.f32 %v7677, %v7817
    %v7819 = vpop.f32.mrf.mxu0
    %7820 = vmatprep.mubr.bf16.mxu0 0
    %7821 = vmatmul.mubr.bf16.gmra.mxu0 %v7743
    %v7822 = vpop.f32.mrf.mxu0
    %v7823 = vadd.f32 %v7682, %v7822
    %v7824 = vpop.f32.mrf.mxu0
    %v7825 = vpop.f32.mrf.mxu0
    %v7826 = vadd.f32 %v7685, %v7825
    %v7827 = vpop.f32.mrf.mxu0
    %7828 = vmatprep.mubr.bf16.mxu0 0
    %7829 = vmatmul.mubr.bf16.gmra.mxu0 %v7746
    %v7830 = vpop.f32.mrf.mxu0
    %v7831 = vadd.f32 %v7690, %v7830
    %v7832 = vpop.f32.mrf.mxu0
    %v7833 = vpop.f32.mrf.mxu0
    %v7834 = vadd.f32 %v7693, %v7833
    %v7835 = vpop.f32.mrf.mxu0
    %7836 = vdwg.mxu0
    %7837 = vrot.lane.b32.xlu0 %v5753, 64
    %v7838 = vpop.permute.xlu0 %7837
    %7839 = vrot.lane.b32.xlu0 %v5761, 64
    %v7840 = vpop.permute.xlu0 %7839
    %v7842 = vsel %vm708, %v7838, 0
    %v7845 = vsel %vm708, %v7840, 0
    %7847 = vmatprep.subr.bf16.mxu0 0
    %7848 = vmatpush1.bf16.xpose.msra.mxu0 0
    %7849 = vmatprep.subr.bf16.mxu0 0
    %7850 = vmatpush1.bf16.xpose.msra.mxu0 0
    %7851 = vmatprep.subr.bf16.mxu0 0
    %7852 = vmatpush1.bf16.xpose.msra.mxu0 0
    %7853 = vmatprep.subr.bf16.mxu0 0
    %7854 = vmatpush1.bf16.xpose.msra.mxu0 0
    %7855 = vmatprep.subr.bf16.mxu0 0
    %7856 = vmatpush1.bf16.xpose.msra.mxu0 0
    %7857 = vmatprep.subr.bf16.mxu0 0
    %7858 = vmatpush1.bf16.xpose.msra.mxu0 0
    %7859 = vmatprep.subr.bf16.mxu0 0
    %7860 = vmatpush1.bf16.xpose.msra.mxu0 0
    %7861 = vmatprep.subr.bf16.mxu0 0
    %7862 = vmatpush1.bf16.xpose.msra.mxu0 %v7845
    %7863 = vmatprep.subr.bf16.mxu0 0
    %7864 = vmatpush2.bf16.xpose.msra.mxu0 0
    %7865 = vmatprep.subr.bf16.mxu0 0
    %7866 = vmatpush2.bf16.xpose.msra.mxu0 0
    %7867 = vmatprep.subr.bf16.mxu0 0
    %7868 = vmatpush2.bf16.xpose.msra.mxu0 0
    %7869 = vmatprep.subr.bf16.mxu0 0
    %7870 = vmatpush2.bf16.xpose.msra.mxu0 0
    %7871 = vmatprep.subr.bf16.mxu0 0
    %7872 = vmatpush2.bf16.xpose.msra.mxu0 0
    %7873 = vmatprep.subr.bf16.mxu0 0
    %7874 = vmatpush2.bf16.xpose.msra.mxu0 0
    %7875 = vmatprep.subr.bf16.mxu0 0
    %7876 = vmatpush2.bf16.xpose.msra.mxu0 0
    %7877 = vmatprep.subr.bf16.mxu0 0
    %7878 = vmatpush2.bf16.xpose.msra.mxu0 0
    %7879 = vmatprep.mubr.bf16.mxu0 0
    %7880 = vmatmul.mubr.bf16.gmra.mxu0 %v7842
    %v7881 = vpop.f32.mrf.mxu0
    %v7882 = vadd.f32 0.0, %v7881
    %v7883 = vpop.f32.mrf.mxu0
    %v7884 = vpop.f32.mrf.mxu0
    %v7885 = vpop.f32.mrf.mxu0
    %7886 = vdwg.mxu0
    %7887 = vrot.lane.b32.xlu0 %v5754, 64
    %v7888 = vpop.permute.xlu0 %7887
    %7889 = vrot.lane.b32.xlu0 %v5762, 64
    %v7890 = vpop.permute.xlu0 %7889
    %v7892 = vsel %vm708, %v7888, 0
    %v7895 = vsel %vm708, %v7890, 0
    %7897 = vmatprep.subr.bf16.mxu0 0
    %7898 = vmatpush1.bf16.xpose.msra.mxu0 0
    %7899 = vmatprep.subr.bf16.mxu0 0
    %7900 = vmatpush1.bf16.xpose.msra.mxu0 0
    %7901 = vmatprep.subr.bf16.mxu0 0
    %7902 = vmatpush1.bf16.xpose.msra.mxu0 0
    %7903 = vmatprep.subr.bf16.mxu0 0
    %7904 = vmatpush1.bf16.xpose.msra.mxu0 0
    %7905 = vmatprep.subr.bf16.mxu0 0
    %7906 = vmatpush1.bf16.xpose.msra.mxu0 0
    %7907 = vmatprep.subr.bf16.mxu0 0
    %7908 = vmatpush1.bf16.xpose.msra.mxu0 0
    %7909 = vmatprep.subr.bf16.mxu0 0
    %7910 = vmatpush1.bf16.xpose.msra.mxu0 0
    %7911 = vmatprep.subr.bf16.mxu0 0
    %7912 = vmatpush1.bf16.xpose.msra.mxu0 %v7895
    %7913 = vmatprep.subr.bf16.mxu0 0
    %7914 = vmatpush2.bf16.xpose.msra.mxu0 0
    %7915 = vmatprep.subr.bf16.mxu0 0
    %7916 = vmatpush2.bf16.xpose.msra.mxu0 0
    %7917 = vmatprep.subr.bf16.mxu0 0
    %7918 = vmatpush2.bf16.xpose.msra.mxu0 0
    %7919 = vmatprep.subr.bf16.mxu0 0
    %7920 = vmatpush2.bf16.xpose.msra.mxu0 0
    %7921 = vmatprep.subr.bf16.mxu0 0
    %7922 = vmatpush2.bf16.xpose.msra.mxu0 0
    %7923 = vmatprep.subr.bf16.mxu0 0
    %7924 = vmatpush2.bf16.xpose.msra.mxu0 0
    %7925 = vmatprep.subr.bf16.mxu0 0
    %7926 = vmatpush2.bf16.xpose.msra.mxu0 0
    %7927 = vmatprep.subr.bf16.mxu0 0
    %7928 = vmatpush2.bf16.xpose.msra.mxu0 0
    %7929 = vmatprep.mubr.bf16.mxu0 0
    %7930 = vmatmul.mubr.bf16.gmra.mxu0 %v7892
    %v7931 = vpop.f32.mrf.mxu0
    %v7932 = vadd.f32 0.0, %v7931
    %v7933 = vpop.f32.mrf.mxu0
    %v7934 = vpop.f32.mrf.mxu0
    %v7935 = vpop.f32.mrf.mxu0
    %7936 = vdwg.mxu0
    %7937 = vrot.lane.b32.xlu0 %v5755, 64
    %v7938 = vpop.permute.xlu0 %7937
    %7939 = vrot.lane.b32.xlu0 %v5763, 64
    %v7940 = vpop.permute.xlu0 %7939
    %v7942 = vsel %vm708, %v7938, 0
    %v7945 = vsel %vm708, %v7940, 0
    %7947 = vmatprep.subr.bf16.mxu0 0
    %7948 = vmatpush1.bf16.xpose.msra.mxu0 0
    %7949 = vmatprep.subr.bf16.mxu0 0
    %7950 = vmatpush1.bf16.xpose.msra.mxu0 0
    %7951 = vmatprep.subr.bf16.mxu0 0
    %7952 = vmatpush1.bf16.xpose.msra.mxu0 0
    %7953 = vmatprep.subr.bf16.mxu0 0
    %7954 = vmatpush1.bf16.xpose.msra.mxu0 0
    %7955 = vmatprep.subr.bf16.mxu0 0
    %7956 = vmatpush1.bf16.xpose.msra.mxu0 0
    %7957 = vmatprep.subr.bf16.mxu0 0
    %7958 = vmatpush1.bf16.xpose.msra.mxu0 0
    %7959 = vmatprep.subr.bf16.mxu0 0
    %7960 = vmatpush1.bf16.xpose.msra.mxu0 0
    %7961 = vmatprep.subr.bf16.mxu0 0
    %7962 = vmatpush1.bf16.xpose.msra.mxu0 %v7945
    %7963 = vmatprep.subr.bf16.mxu0 0
    %7964 = vmatpush2.bf16.xpose.msra.mxu0 0
    %7965 = vmatprep.subr.bf16.mxu0 0
    %7966 = vmatpush2.bf16.xpose.msra.mxu0 0
    %7967 = vmatprep.subr.bf16.mxu0 0
    %7968 = vmatpush2.bf16.xpose.msra.mxu0 0
    %7969 = vmatprep.subr.bf16.mxu0 0
    %7970 = vmatpush2.bf16.xpose.msra.mxu0 0
    %7971 = vmatprep.subr.bf16.mxu0 0
    %7972 = vmatpush2.bf16.xpose.msra.mxu0 0
    %7973 = vmatprep.subr.bf16.mxu0 0
    %7974 = vmatpush2.bf16.xpose.msra.mxu0 0
    %7975 = vmatprep.subr.bf16.mxu0 0
    %7976 = vmatpush2.bf16.xpose.msra.mxu0 0
    %7977 = vmatprep.subr.bf16.mxu0 0
    %7978 = vmatpush2.bf16.xpose.msra.mxu0 0
    %7979 = vmatprep.mubr.bf16.mxu0 0
    %7980 = vmatmul.mubr.bf16.gmra.mxu0 %v7942
    %v7981 = vpop.f32.mrf.mxu0
    %v7982 = vadd.f32 0.0, %v7981
    %v7983 = vpop.f32.mrf.mxu0
    %v7984 = vpop.f32.mrf.mxu0
    %v7985 = vpop.f32.mrf.mxu0
    %7986 = vdwg.mxu0
    %7987 = vrot.lane.b32.xlu0 %v5756, 64
    %v7988 = vpop.permute.xlu0 %7987
    %7989 = vrot.lane.b32.xlu0 %v5764, 64
    %v7990 = vpop.permute.xlu0 %7989
    %v7992 = vsel %vm708, %v7988, 0
    %v7995 = vsel %vm708, %v7990, 0
    %7997 = vmatprep.subr.bf16.mxu0 0
    %7998 = vmatpush1.bf16.xpose.msra.mxu0 0
    %7999 = vmatprep.subr.bf16.mxu0 0
    %8000 = vmatpush1.bf16.xpose.msra.mxu0 0
    %8001 = vmatprep.subr.bf16.mxu0 0
    %8002 = vmatpush1.bf16.xpose.msra.mxu0 0
    %8003 = vmatprep.subr.bf16.mxu0 0
    %8004 = vmatpush1.bf16.xpose.msra.mxu0 0
    %8005 = vmatprep.subr.bf16.mxu0 0
    %8006 = vmatpush1.bf16.xpose.msra.mxu0 0
    %8007 = vmatprep.subr.bf16.mxu0 0
    %8008 = vmatpush1.bf16.xpose.msra.mxu0 0
    %8009 = vmatprep.subr.bf16.mxu0 0
    %8010 = vmatpush1.bf16.xpose.msra.mxu0 0
    %8011 = vmatprep.subr.bf16.mxu0 0
    %8012 = vmatpush1.bf16.xpose.msra.mxu0 %v7995
    %8013 = vmatprep.subr.bf16.mxu0 0
    %8014 = vmatpush2.bf16.xpose.msra.mxu0 0
    %8015 = vmatprep.subr.bf16.mxu0 0
    %8016 = vmatpush2.bf16.xpose.msra.mxu0 0
    %8017 = vmatprep.subr.bf16.mxu0 0
    %8018 = vmatpush2.bf16.xpose.msra.mxu0 0
    %8019 = vmatprep.subr.bf16.mxu0 0
    %8020 = vmatpush2.bf16.xpose.msra.mxu0 0
    %8021 = vmatprep.subr.bf16.mxu0 0
    %8022 = vmatpush2.bf16.xpose.msra.mxu0 0
    %8023 = vmatprep.subr.bf16.mxu0 0
    %8024 = vmatpush2.bf16.xpose.msra.mxu0 0
    %8025 = vmatprep.subr.bf16.mxu0 0
    %8026 = vmatpush2.bf16.xpose.msra.mxu0 0
    %8027 = vmatprep.subr.bf16.mxu0 0
    %8028 = vmatpush2.bf16.xpose.msra.mxu0 0
    %8029 = vmatprep.mubr.bf16.mxu0 0
    %8030 = vmatmul.mubr.bf16.gmra.mxu0 %v7992
    %v8031 = vpop.f32.mrf.mxu0
    %v8032 = vadd.f32 0.0, %v8031
    %v8033 = vpop.f32.mrf.mxu0
    %v8034 = vpop.f32.mrf.mxu0
    %v8035 = vpop.f32.mrf.mxu0
    %8036 = vdwg.mxu0
    %8037 = vrot.lane.b32.xlu0 %v5757, 64
    %v8038 = vpop.permute.xlu0 %8037
    %8039 = vrot.lane.b32.xlu0 %v5765, 64
    %v8040 = vpop.permute.xlu0 %8039
    %v8042 = vsel %vm708, %v8038, 0
    %v8045 = vsel %vm708, %v8040, 0
    %8047 = vmatprep.subr.bf16.mxu0 0
    %8048 = vmatpush1.bf16.xpose.msra.mxu0 0
    %8049 = vmatprep.subr.bf16.mxu0 0
    %8050 = vmatpush1.bf16.xpose.msra.mxu0 0
    %8051 = vmatprep.subr.bf16.mxu0 0
    %8052 = vmatpush1.bf16.xpose.msra.mxu0 0
    %8053 = vmatprep.subr.bf16.mxu0 0
    %8054 = vmatpush1.bf16.xpose.msra.mxu0 0
    %8055 = vmatprep.subr.bf16.mxu0 0
    %8056 = vmatpush1.bf16.xpose.msra.mxu0 0
    %8057 = vmatprep.subr.bf16.mxu0 0
    %8058 = vmatpush1.bf16.xpose.msra.mxu0 0
    %8059 = vmatprep.subr.bf16.mxu0 0
    %8060 = vmatpush1.bf16.xpose.msra.mxu0 0
    %8061 = vmatprep.subr.bf16.mxu0 0
    %8062 = vmatpush1.bf16.xpose.msra.mxu0 %v8045
    %8063 = vmatprep.subr.bf16.mxu0 0
    %8064 = vmatpush2.bf16.xpose.msra.mxu0 0
    %8065 = vmatprep.subr.bf16.mxu0 0
    %8066 = vmatpush2.bf16.xpose.msra.mxu0 0
    %8067 = vmatprep.subr.bf16.mxu0 0
    %8068 = vmatpush2.bf16.xpose.msra.mxu0 0
    %8069 = vmatprep.subr.bf16.mxu0 0
    %8070 = vmatpush2.bf16.xpose.msra.mxu0 0
    %8071 = vmatprep.subr.bf16.mxu0 0
    %8072 = vmatpush2.bf16.xpose.msra.mxu0 0
    %8073 = vmatprep.subr.bf16.mxu0 0
    %8074 = vmatpush2.bf16.xpose.msra.mxu0 0
    %8075 = vmatprep.subr.bf16.mxu0 0
    %8076 = vmatpush2.bf16.xpose.msra.mxu0 0
    %8077 = vmatprep.subr.bf16.mxu0 0
    %8078 = vmatpush2.bf16.xpose.msra.mxu0 0
    %8079 = vmatprep.mubr.bf16.mxu0 0
    %8080 = vmatmul.mubr.bf16.gmra.mxu0 %v8042
    %v8081 = vpop.f32.mrf.mxu0
    %v8082 = vadd.f32 0.0, %v8081
    %v8083 = vpop.f32.mrf.mxu0
    %v8084 = vpop.f32.mrf.mxu0
    %v8085 = vpop.f32.mrf.mxu0
    %8086 = vdwg.mxu0
    %8087 = vrot.lane.b32.xlu0 %v5758, 64
    %v8088 = vpop.permute.xlu0 %8087
    %8089 = vrot.lane.b32.xlu0 %v5766, 64
    %v8090 = vpop.permute.xlu0 %8089
    %v8092 = vsel %vm708, %v8088, 0
    %v8095 = vsel %vm708, %v8090, 0
    %8097 = vmatprep.subr.bf16.mxu0 0
    %8098 = vmatpush1.bf16.xpose.msra.mxu0 0
    %8099 = vmatprep.subr.bf16.mxu0 0
    %8100 = vmatpush1.bf16.xpose.msra.mxu0 0
    %8101 = vmatprep.subr.bf16.mxu0 0
    %8102 = vmatpush1.bf16.xpose.msra.mxu0 0
    %8103 = vmatprep.subr.bf16.mxu0 0
    %8104 = vmatpush1.bf16.xpose.msra.mxu0 0
    %8105 = vmatprep.subr.bf16.mxu0 0
    %8106 = vmatpush1.bf16.xpose.msra.mxu0 0
    %8107 = vmatprep.subr.bf16.mxu0 0
    %8108 = vmatpush1.bf16.xpose.msra.mxu0 0
    %8109 = vmatprep.subr.bf16.mxu0 0
    %8110 = vmatpush1.bf16.xpose.msra.mxu0 0
    %8111 = vmatprep.subr.bf16.mxu0 0
    %8112 = vmatpush1.bf16.xpose.msra.mxu0 %v8095
    %8113 = vmatprep.subr.bf16.mxu0 0
    %8114 = vmatpush2.bf16.xpose.msra.mxu0 0
    %8115 = vmatprep.subr.bf16.mxu0 0
    %8116 = vmatpush2.bf16.xpose.msra.mxu0 0
    %8117 = vmatprep.subr.bf16.mxu0 0
    %8118 = vmatpush2.bf16.xpose.msra.mxu0 0
    %8119 = vmatprep.subr.bf16.mxu0 0
    %8120 = vmatpush2.bf16.xpose.msra.mxu0 0
    %8121 = vmatprep.subr.bf16.mxu0 0
    %8122 = vmatpush2.bf16.xpose.msra.mxu0 0
    %8123 = vmatprep.subr.bf16.mxu0 0
    %8124 = vmatpush2.bf16.xpose.msra.mxu0 0
    %8125 = vmatprep.subr.bf16.mxu0 0
    %8126 = vmatpush2.bf16.xpose.msra.mxu0 0
    %8127 = vmatprep.subr.bf16.mxu0 0
    %8128 = vmatpush2.bf16.xpose.msra.mxu0 0
    %8129 = vmatprep.mubr.bf16.mxu0 0
    %8130 = vmatmul.mubr.bf16.gmra.mxu0 %v8092
    %v8131 = vpop.f32.mrf.mxu0
    %v8132 = vadd.f32 0.0, %v8131
    %v8133 = vpop.f32.mrf.mxu0
    %v8134 = vpop.f32.mrf.mxu0
    %v8135 = vpop.f32.mrf.mxu0
    %8136 = vdwg.mxu0
    %8137 = vrot.lane.b32.xlu0 %v5759, 64
    %v8138 = vpop.permute.xlu0 %8137
    %8139 = vrot.lane.b32.xlu0 %v5767, 64
    %v8140 = vpop.permute.xlu0 %8139
    %v8142 = vsel %vm708, %v8138, 0
    %v8145 = vsel %vm708, %v8140, 0
    %8147 = vmatprep.subr.bf16.mxu0 0
    %8148 = vmatpush1.bf16.xpose.msra.mxu0 0
    %8149 = vmatprep.subr.bf16.mxu0 0
    %8150 = vmatpush1.bf16.xpose.msra.mxu0 0
    %8151 = vmatprep.subr.bf16.mxu0 0
    %8152 = vmatpush1.bf16.xpose.msra.mxu0 0
    %8153 = vmatprep.subr.bf16.mxu0 0
    %8154 = vmatpush1.bf16.xpose.msra.mxu0 0
    %8155 = vmatprep.subr.bf16.mxu0 0
    %8156 = vmatpush1.bf16.xpose.msra.mxu0 0
    %8157 = vmatprep.subr.bf16.mxu0 0
    %8158 = vmatpush1.bf16.xpose.msra.mxu0 0
    %8159 = vmatprep.subr.bf16.mxu0 0
    %8160 = vmatpush1.bf16.xpose.msra.mxu0 0
    %8161 = vmatprep.subr.bf16.mxu0 0
    %8162 = vmatpush1.bf16.xpose.msra.mxu0 %v8145
    %8163 = vmatprep.subr.bf16.mxu0 0
    %8164 = vmatpush2.bf16.xpose.msra.mxu0 0
    %8165 = vmatprep.subr.bf16.mxu0 0
    %8166 = vmatpush2.bf16.xpose.msra.mxu0 0
    %8167 = vmatprep.subr.bf16.mxu0 0
    %8168 = vmatpush2.bf16.xpose.msra.mxu0 0
    %8169 = vmatprep.subr.bf16.mxu0 0
    %8170 = vmatpush2.bf16.xpose.msra.mxu0 0
    %8171 = vmatprep.subr.bf16.mxu0 0
    %8172 = vmatpush2.bf16.xpose.msra.mxu0 0
    %8173 = vmatprep.subr.bf16.mxu0 0
    %8174 = vmatpush2.bf16.xpose.msra.mxu0 0
    %8175 = vmatprep.subr.bf16.mxu0 0
    %8176 = vmatpush2.bf16.xpose.msra.mxu0 0
    %8177 = vmatprep.subr.bf16.mxu0 0
    %8178 = vmatpush2.bf16.xpose.msra.mxu0 0
    %8179 = vmatprep.mubr.bf16.mxu0 0
    %8180 = vmatmul.mubr.bf16.gmra.mxu0 %v8142
    %v8181 = vpop.f32.mrf.mxu0
    %v8182 = vadd.f32 0.0, %v8181
    %v8183 = vpop.f32.mrf.mxu0
    %v8184 = vpop.f32.mrf.mxu0
    %v8185 = vpop.f32.mrf.mxu0
    %8186 = vdwg.mxu0
    %8187 = vrot.lane.b32.xlu0 %v5760, 64
    %v8188 = vpop.permute.xlu0 %8187
    %8189 = vrot.lane.b32.xlu0 %v5768, 64
    %v8190 = vpop.permute.xlu0 %8189
    %v8192 = vsel %vm708, %v8188, 0
    %v8195 = vsel %vm708, %v8190, 0
    %8197 = vmatprep.subr.bf16.mxu0 0
    %8198 = vmatpush1.bf16.xpose.msra.mxu0 0
    %8199 = vmatprep.subr.bf16.mxu0 0
    %8200 = vmatpush1.bf16.xpose.msra.mxu0 0
    %8201 = vmatprep.subr.bf16.mxu0 0
    %8202 = vmatpush1.bf16.xpose.msra.mxu0 0
    %8203 = vmatprep.subr.bf16.mxu0 0
    %8204 = vmatpush1.bf16.xpose.msra.mxu0 0
    %8205 = vmatprep.subr.bf16.mxu0 0
    %8206 = vmatpush1.bf16.xpose.msra.mxu0 0
    %8207 = vmatprep.subr.bf16.mxu0 0
    %8208 = vmatpush1.bf16.xpose.msra.mxu0 0
    %8209 = vmatprep.subr.bf16.mxu0 0
    %8210 = vmatpush1.bf16.xpose.msra.mxu0 0
    %8211 = vmatprep.subr.bf16.mxu0 0
    %8212 = vmatpush1.bf16.xpose.msra.mxu0 %v8195
    %8213 = vmatprep.subr.bf16.mxu0 0
    %8214 = vmatpush2.bf16.xpose.msra.mxu0 0
    %8215 = vmatprep.subr.bf16.mxu0 0
    %8216 = vmatpush2.bf16.xpose.msra.mxu0 0
    %8217 = vmatprep.subr.bf16.mxu0 0
    %8218 = vmatpush2.bf16.xpose.msra.mxu0 0
    %8219 = vmatprep.subr.bf16.mxu0 0
    %8220 = vmatpush2.bf16.xpose.msra.mxu0 0
    %8221 = vmatprep.subr.bf16.mxu0 0
    %8222 = vmatpush2.bf16.xpose.msra.mxu0 0
    %8223 = vmatprep.subr.bf16.mxu0 0
    %8224 = vmatpush2.bf16.xpose.msra.mxu0 0
    %8225 = vmatprep.subr.bf16.mxu0 0
    %8226 = vmatpush2.bf16.xpose.msra.mxu0 0
    %8227 = vmatprep.subr.bf16.mxu0 0
    %8228 = vmatpush2.bf16.xpose.msra.mxu0 0
    %8229 = vmatprep.mubr.bf16.mxu0 0
    %8230 = vmatmul.mubr.bf16.gmra.mxu0 %v8192
    %v8231 = vpop.f32.mrf.mxu0
    %v8232 = vadd.f32 0.0, %v8231
    %v8233 = vpop.f32.mrf.mxu0
    %v8234 = vpop.f32.mrf.mxu0
    %v8235 = vpop.f32.mrf.mxu0
    %8236 = vdwg.mxu0
    %v8237 = vsel %vm1077, %v7882, -inf
    %8238 = vmax.xlane.f32.xlu0 %v8237
    %v8239 = vpop.xlane.xlu0 %8238
    %v8240 = vsel %vm1077, %v7932, -inf
    %8241 = vmax.xlane.f32.xlu0 %v8240
    %v8242 = vpop.xlane.xlu0 %8241
    %v8243 = vsel %vm1077, %v7982, -inf
    %8244 = vmax.xlane.f32.xlu0 %v8243
    %v8245 = vpop.xlane.xlu0 %8244
    %v8246 = vsel %vm1077, %v8032, -inf
    %8247 = vmax.xlane.f32.xlu0 %v8246
    %v8248 = vpop.xlane.xlu0 %8247
    %v8249 = vsel %vm1077, %v8082, -inf
    %8250 = vmax.xlane.f32.xlu0 %v8249
    %v8251 = vpop.xlane.xlu0 %8250
    %v8252 = vsel %vm1077, %v8132, -inf
    %8253 = vmax.xlane.f32.xlu0 %v8252
    %v8254 = vpop.xlane.xlu0 %8253
    %v8255 = vsel %vm1077, %v8182, -inf
    %8256 = vmax.xlane.f32.xlu0 %v8255
    %v8257 = vpop.xlane.xlu0 %8256
    %v8258 = vsel %vm1077, %v8232, -inf
    %8259 = vmax.xlane.f32.xlu0 %v8258
    %v8260 = vpop.xlane.xlu0 %8259
    %v8261 = vsub.f32 %v7882, %v8239
    %v8262 = vsub.f32 %v7932, %v8242
    %v8263 = vsub.f32 %v7982, %v8245
    %v8264 = vsub.f32 %v8032, %v8248
    %v8265 = vsub.f32 %v8082, %v8251
    %v8266 = vsub.f32 %v8132, %v8254
    %v8267 = vsub.f32 %v8182, %v8257
    %v8268 = vsub.f32 %v8232, %v8260
    %v8269 = vmul.f32 %v8261, 1.442695
    %v8270 = vpow.pop %v8269
    %v8271 = vmul.f32 %v8262, 1.442695
    %v8272 = vpow.pop %v8271
    %v8273 = vmul.f32 %v8263, 1.442695
    %v8274 = vpow.pop %v8273
    %v8275 = vmul.f32 %v8264, 1.442695
    %v8276 = vpow.pop %v8275
    %v8277 = vmul.f32 %v8265, 1.442695
    %v8278 = vpow.pop %v8277
    %v8279 = vmul.f32 %v8266, 1.442695
    %v8280 = vpow.pop %v8279
    %v8281 = vmul.f32 %v8267, 1.442695
    %v8282 = vpow.pop %v8281
    %v8283 = vmul.f32 %v8268, 1.442695
    %v8284 = vpow.pop %v8283
    %v8285 = vsel %vm1077, %v8270, 0.0
    %8286 = vadd.xlane.f32.xlu0 %v8285
    %v8287 = vpop.xlane.xlu0 %8286
    %v8288 = vsel %vm1077, %v8272, 0.0
    %8289 = vadd.xlane.f32.xlu0 %v8288
    %v8290 = vpop.xlane.xlu0 %8289
    %v8291 = vsel %vm1077, %v8274, 0.0
    %8292 = vadd.xlane.f32.xlu0 %v8291
    %v8293 = vpop.xlane.xlu0 %8292
    %v8294 = vsel %vm1077, %v8276, 0.0
    %8295 = vadd.xlane.f32.xlu0 %v8294
    %v8296 = vpop.xlane.xlu0 %8295
    %v8297 = vsel %vm1077, %v8278, 0.0
    %8298 = vadd.xlane.f32.xlu0 %v8297
    %v8299 = vpop.xlane.xlu0 %8298
    %v8300 = vsel %vm1077, %v8280, 0.0
    %8301 = vadd.xlane.f32.xlu0 %v8300
    %v8302 = vpop.xlane.xlu0 %8301
    %v8303 = vsel %vm1077, %v8282, 0.0
    %8304 = vadd.xlane.f32.xlu0 %v8303
    %v8305 = vpop.xlane.xlu0 %8304
    %v8306 = vsel %vm1077, %v8284, 0.0
    %8307 = vadd.xlane.f32.xlu0 %v8306
    %v8308 = vpop.xlane.xlu0 %8307
    %v8309 = vrcp.pop %v8287
    %v8310 = vrcp.pop %v8290
    %v8311 = vrcp.pop %v8293
    %v8312 = vrcp.pop %v8296
    %v8313 = vrcp.pop %v8299
    %v8314 = vrcp.pop %v8302
    %v8315 = vrcp.pop %v8305
    %v8316 = vrcp.pop %v8308
    %v8317 = vmul.f32 %v8270, %v8309
    %v8318 = vmul.f32 %v8272, %v8310
    %v8319 = vmul.f32 %v8274, %v8311
    %v8320 = vmul.f32 %v8276, %v8312
    %v8321 = vmul.f32 %v8278, %v8313
    %v8322 = vmul.f32 %v8280, %v8314
    %v8323 = vmul.f32 %v8282, %v8315
    %v8324 = vmul.f32 %v8284, %v8316
    %v8325 = vpack.c.bf16 %v8317, %v8317
    %v8326 = vpack.c.bf16 %v8318, %v8318
    %v8327 = vpack.c.bf16 %v8319, %v8319
    %v8328 = vpack.c.bf16 %v8320, %v8320
    %v8329 = vpack.c.bf16 %v8321, %v8321
    %v8330 = vpack.c.bf16 %v8322, %v8322
    %v8331 = vpack.c.bf16 %v8323, %v8323
    %v8332 = vpack.c.bf16 %v8324, %v8324
    %8333 = vrot.lane.b32.xlu0 %v5769, 64
    %v8334 = vpop.permute.xlu0 %8333
    %v8336 = vsel %vm1077, %v8325, 0
    %v8339 = vsel %vm1177, %v8334, 0
    %8341 = vmatprep.subr.bf16.mxu0 0
    %8342 = vmatpush1.bf16.msra.mxu0 0
    %8343 = vmatprep.subr.bf16.mxu0 0
    %8344 = vmatpush1.bf16.msra.mxu0 0
    %8345 = vmatprep.subr.bf16.mxu0 0
    %8346 = vmatpush1.bf16.msra.mxu0 0
    %8347 = vmatprep.subr.bf16.mxu0 0
    %8348 = vmatpush1.bf16.msra.mxu0 0
    %8349 = vmatprep.subr.bf16.mxu0 0
    %8350 = vmatpush1.bf16.msra.mxu0 0
    %8351 = vmatprep.subr.bf16.mxu0 0
    %8352 = vmatpush1.bf16.msra.mxu0 0
    %8353 = vmatprep.subr.bf16.mxu0 0
    %8354 = vmatpush1.bf16.msra.mxu0 0
    %8355 = vmatprep.subr.bf16.mxu0 0
    %8356 = vmatpush1.bf16.msra.mxu0 %v8339
    %8357 = vmatprep.subr.bf16.mxu0 0
    %8358 = vmatpush2.bf16.msra.mxu0 0
    %8359 = vmatprep.subr.bf16.mxu0 0
    %8360 = vmatpush2.bf16.msra.mxu0 0
    %8361 = vmatprep.subr.bf16.mxu0 0
    %8362 = vmatpush2.bf16.msra.mxu0 0
    %8363 = vmatprep.subr.bf16.mxu0 0
    %8364 = vmatpush2.bf16.msra.mxu0 0
    %8365 = vmatprep.subr.bf16.mxu0 0
    %8366 = vmatpush2.bf16.msra.mxu0 0
    %8367 = vmatprep.subr.bf16.mxu0 0
    %8368 = vmatpush2.bf16.msra.mxu0 0
    %8369 = vmatprep.subr.bf16.mxu0 0
    %8370 = vmatpush2.bf16.msra.mxu0 0
    %8371 = vmatprep.subr.bf16.mxu0 0
    %8372 = vmatpush2.bf16.msra.mxu0 0
    %8373 = vmatprep.mubr.bf16.mxu0 0
    %8374 = vmatmul.mubr.bf16.gmra.mxu0 %v8336
    %v8375 = vpop.f32.mrf.mxu0
    %v8376 = vadd.f32 0.0, %v8375
    %v8377 = vpop.f32.mrf.mxu0
    %v8378 = vpop.f32.mrf.mxu0
    %v8379 = vpop.f32.mrf.mxu0
    %8380 = vdwg.mxu0
    %8381 = vrot.lane.b32.xlu0 %v5770, 64
    %v8382 = vpop.permute.xlu0 %8381
    %v8384 = vsel %vm1077, %v8326, 0
    %v8387 = vsel %vm1177, %v8382, 0
    %8389 = vmatprep.subr.bf16.mxu0 0
    %8390 = vmatpush1.bf16.msra.mxu0 0
    %8391 = vmatprep.subr.bf16.mxu0 0
    %8392 = vmatpush1.bf16.msra.mxu0 0
    %8393 = vmatprep.subr.bf16.mxu0 0
    %8394 = vmatpush1.bf16.msra.mxu0 0
    %8395 = vmatprep.subr.bf16.mxu0 0
    %8396 = vmatpush1.bf16.msra.mxu0 0
    %8397 = vmatprep.subr.bf16.mxu0 0
    %8398 = vmatpush1.bf16.msra.mxu0 0
    %8399 = vmatprep.subr.bf16.mxu0 0
    %8400 = vmatpush1.bf16.msra.mxu0 0
    %8401 = vmatprep.subr.bf16.mxu0 0
    %8402 = vmatpush1.bf16.msra.mxu0 0
    %8403 = vmatprep.subr.bf16.mxu0 0
    %8404 = vmatpush1.bf16.msra.mxu0 %v8387
    %8405 = vmatprep.subr.bf16.mxu0 0
    %8406 = vmatpush2.bf16.msra.mxu0 0
    %8407 = vmatprep.subr.bf16.mxu0 0
    %8408 = vmatpush2.bf16.msra.mxu0 0
    %8409 = vmatprep.subr.bf16.mxu0 0
    %8410 = vmatpush2.bf16.msra.mxu0 0
    %8411 = vmatprep.subr.bf16.mxu0 0
    %8412 = vmatpush2.bf16.msra.mxu0 0
    %8413 = vmatprep.subr.bf16.mxu0 0
    %8414 = vmatpush2.bf16.msra.mxu0 0
    %8415 = vmatprep.subr.bf16.mxu0 0
    %8416 = vmatpush2.bf16.msra.mxu0 0
    %8417 = vmatprep.subr.bf16.mxu0 0
    %8418 = vmatpush2.bf16.msra.mxu0 0
    %8419 = vmatprep.subr.bf16.mxu0 0
    %8420 = vmatpush2.bf16.msra.mxu0 0
    %8421 = vmatprep.mubr.bf16.mxu0 0
    %8422 = vmatmul.mubr.bf16.gmra.mxu0 %v8384
    %v8423 = vpop.f32.mrf.mxu0
    %v8424 = vadd.f32 0.0, %v8423
    %v8425 = vpop.f32.mrf.mxu0
    %v8426 = vpop.f32.mrf.mxu0
    %v8427 = vpop.f32.mrf.mxu0
    %8428 = vdwg.mxu0
    %8429 = vrot.lane.b32.xlu0 %v5771, 64
    %v8430 = vpop.permute.xlu0 %8429
    %v8432 = vsel %vm1077, %v8327, 0
    %v8435 = vsel %vm1177, %v8430, 0
    %8437 = vmatprep.subr.bf16.mxu0 0
    %8438 = vmatpush1.bf16.msra.mxu0 0
    %8439 = vmatprep.subr.bf16.mxu0 0
    %8440 = vmatpush1.bf16.msra.mxu0 0
    %8441 = vmatprep.subr.bf16.mxu0 0
    %8442 = vmatpush1.bf16.msra.mxu0 0
    %8443 = vmatprep.subr.bf16.mxu0 0
    %8444 = vmatpush1.bf16.msra.mxu0 0
    %8445 = vmatprep.subr.bf16.mxu0 0
    %8446 = vmatpush1.bf16.msra.mxu0 0
    %8447 = vmatprep.subr.bf16.mxu0 0
    %8448 = vmatpush1.bf16.msra.mxu0 0
    %8449 = vmatprep.subr.bf16.mxu0 0
    %8450 = vmatpush1.bf16.msra.mxu0 0
    %8451 = vmatprep.subr.bf16.mxu0 0
    %8452 = vmatpush1.bf16.msra.mxu0 %v8435
    %8453 = vmatprep.subr.bf16.mxu0 0
    %8454 = vmatpush2.bf16.msra.mxu0 0
    %8455 = vmatprep.subr.bf16.mxu0 0
    %8456 = vmatpush2.bf16.msra.mxu0 0
    %8457 = vmatprep.subr.bf16.mxu0 0
    %8458 = vmatpush2.bf16.msra.mxu0 0
    %8459 = vmatprep.subr.bf16.mxu0 0
    %8460 = vmatpush2.bf16.msra.mxu0 0
    %8461 = vmatprep.subr.bf16.mxu0 0
    %8462 = vmatpush2.bf16.msra.mxu0 0
    %8463 = vmatprep.subr.bf16.mxu0 0
    %8464 = vmatpush2.bf16.msra.mxu0 0
    %8465 = vmatprep.subr.bf16.mxu0 0
    %8466 = vmatpush2.bf16.msra.mxu0 0
    %8467 = vmatprep.subr.bf16.mxu0 0
    %8468 = vmatpush2.bf16.msra.mxu0 0
    %8469 = vmatprep.mubr.bf16.mxu0 0
    %8470 = vmatmul.mubr.bf16.gmra.mxu0 %v8432
    %v8471 = vpop.f32.mrf.mxu0
    %v8472 = vadd.f32 0.0, %v8471
    %v8473 = vpop.f32.mrf.mxu0
    %v8474 = vpop.f32.mrf.mxu0
    %v8475 = vpop.f32.mrf.mxu0
    %8476 = vdwg.mxu0
    %8477 = vrot.lane.b32.xlu0 %v5772, 64
    %v8478 = vpop.permute.xlu0 %8477
    %v8480 = vsel %vm1077, %v8328, 0
    %v8483 = vsel %vm1177, %v8478, 0
    %8485 = vmatprep.subr.bf16.mxu0 0
    %8486 = vmatpush1.bf16.msra.mxu0 0
    %8487 = vmatprep.subr.bf16.mxu0 0
    %8488 = vmatpush1.bf16.msra.mxu0 0
    %8489 = vmatprep.subr.bf16.mxu0 0
    %8490 = vmatpush1.bf16.msra.mxu0 0
    %8491 = vmatprep.subr.bf16.mxu0 0
    %8492 = vmatpush1.bf16.msra.mxu0 0
    %8493 = vmatprep.subr.bf16.mxu0 0
    %8494 = vmatpush1.bf16.msra.mxu0 0
    %8495 = vmatprep.subr.bf16.mxu0 0
    %8496 = vmatpush1.bf16.msra.mxu0 0
    %8497 = vmatprep.subr.bf16.mxu0 0
    %8498 = vmatpush1.bf16.msra.mxu0 0
    %8499 = vmatprep.subr.bf16.mxu0 0
    %8500 = vmatpush1.bf16.msra.mxu0 %v8483
    %8501 = vmatprep.subr.bf16.mxu0 0
    %8502 = vmatpush2.bf16.msra.mxu0 0
    %8503 = vmatprep.subr.bf16.mxu0 0
    %8504 = vmatpush2.bf16.msra.mxu0 0
    %8505 = vmatprep.subr.bf16.mxu0 0
    %8506 = vmatpush2.bf16.msra.mxu0 0
    %8507 = vmatprep.subr.bf16.mxu0 0
    %8508 = vmatpush2.bf16.msra.mxu0 0
    %8509 = vmatprep.subr.bf16.mxu0 0
    %8510 = vmatpush2.bf16.msra.mxu0 0
    %8511 = vmatprep.subr.bf16.mxu0 0
    %8512 = vmatpush2.bf16.msra.mxu0 0
    %8513 = vmatprep.subr.bf16.mxu0 0
    %8514 = vmatpush2.bf16.msra.mxu0 0
    %8515 = vmatprep.subr.bf16.mxu0 0
    %8516 = vmatpush2.bf16.msra.mxu0 0
    %8517 = vmatprep.mubr.bf16.mxu0 0
    %8518 = vmatmul.mubr.bf16.gmra.mxu0 %v8480
    %v8519 = vpop.f32.mrf.mxu0
    %v8520 = vadd.f32 0.0, %v8519
    %v8521 = vpop.f32.mrf.mxu0
    %v8522 = vpop.f32.mrf.mxu0
    %v8523 = vpop.f32.mrf.mxu0
    %8524 = vdwg.mxu0
    %8525 = vrot.lane.b32.xlu0 %v5773, 64
    %v8526 = vpop.permute.xlu0 %8525
    %v8528 = vsel %vm1077, %v8329, 0
    %v8531 = vsel %vm1177, %v8526, 0
    %8533 = vmatprep.subr.bf16.mxu0 0
    %8534 = vmatpush1.bf16.msra.mxu0 0
    %8535 = vmatprep.subr.bf16.mxu0 0
    %8536 = vmatpush1.bf16.msra.mxu0 0
    %8537 = vmatprep.subr.bf16.mxu0 0
    %8538 = vmatpush1.bf16.msra.mxu0 0
    %8539 = vmatprep.subr.bf16.mxu0 0
    %8540 = vmatpush1.bf16.msra.mxu0 0
    %8541 = vmatprep.subr.bf16.mxu0 0
    %8542 = vmatpush1.bf16.msra.mxu0 0
    %8543 = vmatprep.subr.bf16.mxu0 0
    %8544 = vmatpush1.bf16.msra.mxu0 0
    %8545 = vmatprep.subr.bf16.mxu0 0
    %8546 = vmatpush1.bf16.msra.mxu0 0
    %8547 = vmatprep.subr.bf16.mxu0 0
    %8548 = vmatpush1.bf16.msra.mxu0 %v8531
    %8549 = vmatprep.subr.bf16.mxu0 0
    %8550 = vmatpush2.bf16.msra.mxu0 0
    %8551 = vmatprep.subr.bf16.mxu0 0
    %8552 = vmatpush2.bf16.msra.mxu0 0
    %8553 = vmatprep.subr.bf16.mxu0 0
    %8554 = vmatpush2.bf16.msra.mxu0 0
    %8555 = vmatprep.subr.bf16.mxu0 0
    %8556 = vmatpush2.bf16.msra.mxu0 0
    %8557 = vmatprep.subr.bf16.mxu0 0
    %8558 = vmatpush2.bf16.msra.mxu0 0
    %8559 = vmatprep.subr.bf16.mxu0 0
    %8560 = vmatpush2.bf16.msra.mxu0 0
    %8561 = vmatprep.subr.bf16.mxu0 0
    %8562 = vmatpush2.bf16.msra.mxu0 0
    %8563 = vmatprep.subr.bf16.mxu0 0
    %8564 = vmatpush2.bf16.msra.mxu0 0
    %8565 = vmatprep.mubr.bf16.mxu0 0
    %8566 = vmatmul.mubr.bf16.gmra.mxu0 %v8528
    %v8567 = vpop.f32.mrf.mxu0
    %v8568 = vadd.f32 0.0, %v8567
    %v8569 = vpop.f32.mrf.mxu0
    %v8570 = vpop.f32.mrf.mxu0
    %v8571 = vpop.f32.mrf.mxu0
    %8572 = vdwg.mxu0
    %8573 = vrot.lane.b32.xlu0 %v5774, 64
    %v8574 = vpop.permute.xlu0 %8573
    %v8576 = vsel %vm1077, %v8330, 0
    %v8579 = vsel %vm1177, %v8574, 0
    %8581 = vmatprep.subr.bf16.mxu0 0
    %8582 = vmatpush1.bf16.msra.mxu0 0
    %8583 = vmatprep.subr.bf16.mxu0 0
    %8584 = vmatpush1.bf16.msra.mxu0 0
    %8585 = vmatprep.subr.bf16.mxu0 0
    %8586 = vmatpush1.bf16.msra.mxu0 0
    %8587 = vmatprep.subr.bf16.mxu0 0
    %8588 = vmatpush1.bf16.msra.mxu0 0
    %8589 = vmatprep.subr.bf16.mxu0 0
    %8590 = vmatpush1.bf16.msra.mxu0 0
    %8591 = vmatprep.subr.bf16.mxu0 0
    %8592 = vmatpush1.bf16.msra.mxu0 0
    %8593 = vmatprep.subr.bf16.mxu0 0
    %8594 = vmatpush1.bf16.msra.mxu0 0
    %8595 = vmatprep.subr.bf16.mxu0 0
    %8596 = vmatpush1.bf16.msra.mxu0 %v8579
    %8597 = vmatprep.subr.bf16.mxu0 0
    %8598 = vmatpush2.bf16.msra.mxu0 0
    %8599 = vmatprep.subr.bf16.mxu0 0
    %8600 = vmatpush2.bf16.msra.mxu0 0
    %8601 = vmatprep.subr.bf16.mxu0 0
    %8602 = vmatpush2.bf16.msra.mxu0 0
    %8603 = vmatprep.subr.bf16.mxu0 0
    %8604 = vmatpush2.bf16.msra.mxu0 0
    %8605 = vmatprep.subr.bf16.mxu0 0
    %8606 = vmatpush2.bf16.msra.mxu0 0
    %8607 = vmatprep.subr.bf16.mxu0 0
    %8608 = vmatpush2.bf16.msra.mxu0 0
    %8609 = vmatprep.subr.bf16.mxu0 0
    %8610 = vmatpush2.bf16.msra.mxu0 0
    %8611 = vmatprep.subr.bf16.mxu0 0
    %8612 = vmatpush2.bf16.msra.mxu0 0
    %8613 = vmatprep.mubr.bf16.mxu0 0
    %8614 = vmatmul.mubr.bf16.gmra.mxu0 %v8576
    %v8615 = vpop.f32.mrf.mxu0
    %v8616 = vadd.f32 0.0, %v8615
    %v8617 = vpop.f32.mrf.mxu0
    %v8618 = vpop.f32.mrf.mxu0
    %v8619 = vpop.f32.mrf.mxu0
    %8620 = vdwg.mxu0
    %8621 = vrot.lane.b32.xlu0 %v5775, 64
    %v8622 = vpop.permute.xlu0 %8621
    %v8624 = vsel %vm1077, %v8331, 0
    %v8627 = vsel %vm1177, %v8622, 0
    %8629 = vmatprep.subr.bf16.mxu0 0
    %8630 = vmatpush1.bf16.msra.mxu0 0
    %8631 = vmatprep.subr.bf16.mxu0 0
    %8632 = vmatpush1.bf16.msra.mxu0 0
    %8633 = vmatprep.subr.bf16.mxu0 0
    %8634 = vmatpush1.bf16.msra.mxu0 0
    %8635 = vmatprep.subr.bf16.mxu0 0
    %8636 = vmatpush1.bf16.msra.mxu0 0
    %8637 = vmatprep.subr.bf16.mxu0 0
    %8638 = vmatpush1.bf16.msra.mxu0 0
    %8639 = vmatprep.subr.bf16.mxu0 0
    %8640 = vmatpush1.bf16.msra.mxu0 0
    %8641 = vmatprep.subr.bf16.mxu0 0
    %8642 = vmatpush1.bf16.msra.mxu0 0
    %8643 = vmatprep.subr.bf16.mxu0 0
    %8644 = vmatpush1.bf16.msra.mxu0 %v8627
    %8645 = vmatprep.subr.bf16.mxu0 0
    %8646 = vmatpush2.bf16.msra.mxu0 0
    %8647 = vmatprep.subr.bf16.mxu0 0
    %8648 = vmatpush2.bf16.msra.mxu0 0
    %8649 = vmatprep.subr.bf16.mxu0 0
    %8650 = vmatpush2.bf16.msra.mxu0 0
    %8651 = vmatprep.subr.bf16.mxu0 0
    %8652 = vmatpush2.bf16.msra.mxu0 0
    %8653 = vmatprep.subr.bf16.mxu0 0
    %8654 = vmatpush2.bf16.msra.mxu0 0
    %8655 = vmatprep.subr.bf16.mxu0 0
    %8656 = vmatpush2.bf16.msra.mxu0 0
    %8657 = vmatprep.subr.bf16.mxu0 0
    %8658 = vmatpush2.bf16.msra.mxu0 0
    %8659 = vmatprep.subr.bf16.mxu0 0
    %8660 = vmatpush2.bf16.msra.mxu0 0
    %8661 = vmatprep.mubr.bf16.mxu0 0
    %8662 = vmatmul.mubr.bf16.gmra.mxu0 %v8624
    %v8663 = vpop.f32.mrf.mxu0
    %v8664 = vadd.f32 0.0, %v8663
    %v8665 = vpop.f32.mrf.mxu0
    %v8666 = vpop.f32.mrf.mxu0
    %v8667 = vpop.f32.mrf.mxu0
    %8668 = vdwg.mxu0
    %8669 = vrot.lane.b32.xlu0 %v5776, 64
    %v8670 = vpop.permute.xlu0 %8669
    %v8672 = vsel %vm1077, %v8332, 0
    %v8675 = vsel %vm1177, %v8670, 0
    %8677 = vmatprep.subr.bf16.mxu0 0
    %8678 = vmatpush1.bf16.msra.mxu0 0
    %8679 = vmatprep.subr.bf16.mxu0 0
    %8680 = vmatpush1.bf16.msra.mxu0 0
    %8681 = vmatprep.subr.bf16.mxu0 0
    %8682 = vmatpush1.bf16.msra.mxu0 0
    %8683 = vmatprep.subr.bf16.mxu0 0
    %8684 = vmatpush1.bf16.msra.mxu0 0
    %8685 = vmatprep.subr.bf16.mxu0 0
    %8686 = vmatpush1.bf16.msra.mxu0 0
    %8687 = vmatprep.subr.bf16.mxu0 0
    %8688 = vmatpush1.bf16.msra.mxu0 0
    %8689 = vmatprep.subr.bf16.mxu0 0
    %8690 = vmatpush1.bf16.msra.mxu0 0
    %8691 = vmatprep.subr.bf16.mxu0 0
    %8692 = vmatpush1.bf16.msra.mxu0 %v8675
    %8693 = vmatprep.subr.bf16.mxu0 0
    %8694 = vmatpush2.bf16.msra.mxu0 0
    %8695 = vmatprep.subr.bf16.mxu0 0
    %8696 = vmatpush2.bf16.msra.mxu0 0
    %8697 = vmatprep.subr.bf16.mxu0 0
    %8698 = vmatpush2.bf16.msra.mxu0 0
    %8699 = vmatprep.subr.bf16.mxu0 0
    %8700 = vmatpush2.bf16.msra.mxu0 0
    %8701 = vmatprep.subr.bf16.mxu0 0
    %8702 = vmatpush2.bf16.msra.mxu0 0
    %8703 = vmatprep.subr.bf16.mxu0 0
    %8704 = vmatpush2.bf16.msra.mxu0 0
    %8705 = vmatprep.subr.bf16.mxu0 0
    %8706 = vmatpush2.bf16.msra.mxu0 0
    %8707 = vmatprep.subr.bf16.mxu0 0
    %8708 = vmatpush2.bf16.msra.mxu0 0
    %8709 = vmatprep.mubr.bf16.mxu0 0
    %8710 = vmatmul.mubr.bf16.gmra.mxu0 %v8672
    %v8711 = vpop.f32.mrf.mxu0
    %v8712 = vadd.f32 0.0, %v8711
    %v8713 = vpop.f32.mrf.mxu0
    %v8714 = vpop.f32.mrf.mxu0
    %v8715 = vpop.f32.mrf.mxu0
    %8716 = vdwg.mxu0
    %s8717 = scalar_lea.vmem %s6, 384
    %v8718 = vld [vmem:[%s8717] sm:$0xf]
    %v8719 = vld [vmem:[%s8717 + $0x4] sm:$0xf]
    %v8720 = vld [vmem:[%s8717 + $0x8] sm:$0xf]
    %v8721 = vld [vmem:[%s8717 + $0xc] sm:$0xf]
    %v8722 = vld [vmem:[%s8717 + $0x10] sm:$0xf]
    %v8723 = vld [vmem:[%s8717 + $0x14] sm:$0xf]
    %v8724 = vld [vmem:[%s8717 + $0x18] sm:$0xf]
    %v8725 = vld [vmem:[%s8717 + $0x1c] sm:$0xf]
    %v8726 = vld [vmem:[%s8717 + $0x20] sm:$0xf]
    %v8727 = vld [vmem:[%s8717 + $0x24] sm:$0xf]
    %v8728 = vld [vmem:[%s8717 + $0x28] sm:$0xf]
    %v8729 = vld [vmem:[%s8717 + $0x2c] sm:$0xf]
    %v8730 = vld [vmem:[%s8717 + $0x30] sm:$0xf]
    %v8731 = vld [vmem:[%s8717 + $0x34] sm:$0xf]
    %v8732 = vld [vmem:[%s8717 + $0x38] sm:$0xf]
    %v8733 = vld [vmem:[%s8717 + $0x3c] sm:$0xf]
    %v8734 = vpack.c.bf16 %v8424, %v8376
    %v8735 = vpack.c.bf16 %v8520, %v8472
    %v8736 = vpack.c.bf16 %v8616, %v8568
    %v8737 = vpack.c.bf16 %v8712, %v8664
    %v8754 = vunpack.c.l.b16 %v8718
    %v8755 = vunpack.c.l.b16 %v8719
    %v8756 = vunpack.c.l.b16 %v8720
    %v8757 = vunpack.c.l.b16 %v8721
    %v8758 = vunpack.c.l.b16 %v8722
    %v8759 = vunpack.c.l.b16 %v8723
    %v8760 = vunpack.c.l.b16 %v8724
    %v8761 = vunpack.c.l.b16 %v8725
    %v8762 = vunpack.c.l.b16 %v8726
    %v8763 = vunpack.c.l.b16 %v8727
    %v8764 = vunpack.c.l.b16 %v8728
    %v8765 = vunpack.c.l.b16 %v8729
    %v8766 = vunpack.c.l.b16 %v8730
    %v8767 = vunpack.c.l.b16 %v8731
    %v8768 = vunpack.c.l.b16 %v8732
    %v8769 = vunpack.c.l.b16 %v8733
    %v8770 = vpack.c.b16 %v8755, %v8754
    %v8771 = vpack.c.b16 %v8757, %v8756
    %v8772 = vpack.c.b16 %v8759, %v8758
    %v8773 = vpack.c.b16 %v8761, %v8760
    %v8774 = vpack.c.b16 %v8763, %v8762
    %v8775 = vpack.c.b16 %v8765, %v8764
    %v8776 = vpack.c.b16 %v8767, %v8766
    %v8777 = vpack.c.b16 %v8769, %v8768
    %v8779 = vsel %vm708, %v8734, 0
    %v8782 = vsel %vm708, %v8735, 0
    %v8785 = vsel %vm708, %v8736, 0
    %v8788 = vsel %vm708, %v8737, 0
    %v8791 = vsel %vm708, %v8770, 0
    %v8794 = vsel %vm708, %v8771, 0
    %v8797 = vsel %vm708, %v8772, 0
    %v8800 = vsel %vm708, %v8773, 0
    %v8803 = vsel %vm708, %v8774, 0
    %v8806 = vsel %vm708, %v8775, 0
    %v8809 = vsel %vm708, %v8776, 0
    %v8812 = vsel %vm708, %v8777, 0
    %8814 = vmatprep.subr.bf16.mxu0 0
    %8815 = vmatpush1.bf16.xpose.msra.mxu0 %v8812
    %8816 = vmatprep.subr.bf16.mxu0 0
    %8817 = vmatpush1.bf16.xpose.msra.mxu0 %v8809
    %8818 = vmatprep.subr.bf16.mxu0 0
    %8819 = vmatpush1.bf16.xpose.msra.mxu0 %v8806
    %8820 = vmatprep.subr.bf16.mxu0 0
    %8821 = vmatpush1.bf16.xpose.msra.mxu0 %v8803
    %8822 = vmatprep.subr.bf16.mxu0 0
    %8823 = vmatpush1.bf16.xpose.msra.mxu0 %v8800
    %8824 = vmatprep.subr.bf16.mxu0 0
    %8825 = vmatpush1.bf16.xpose.msra.mxu0 %v8797
    %8826 = vmatprep.subr.bf16.mxu0 0
    %8827 = vmatpush1.bf16.xpose.msra.mxu0 %v8794
    %8828 = vmatprep.subr.bf16.mxu0 0
    %8829 = vmatpush1.bf16.xpose.msra.mxu0 %v8791
    %8830 = vmatprep.subr.bf16.mxu0 0
    %8831 = vmatpush2.bf16.xpose.msra.mxu0 0
    %8832 = vmatprep.subr.bf16.mxu0 0
    %8833 = vmatpush2.bf16.xpose.msra.mxu0 0
    %8834 = vmatprep.subr.bf16.mxu0 0
    %8835 = vmatpush2.bf16.xpose.msra.mxu0 0
    %8836 = vmatprep.subr.bf16.mxu0 0
    %8837 = vmatpush2.bf16.xpose.msra.mxu0 0
    %8838 = vmatprep.subr.bf16.mxu0 0
    %8839 = vmatpush2.bf16.xpose.msra.mxu0 0
    %8840 = vmatprep.subr.bf16.mxu0 0
    %8841 = vmatpush2.bf16.xpose.msra.mxu0 0
    %8842 = vmatprep.subr.bf16.mxu0 0
    %8843 = vmatpush2.bf16.xpose.msra.mxu0 0
    %8844 = vmatprep.subr.bf16.mxu0 0
    %8845 = vmatpush2.bf16.xpose.msra.mxu0 0
    %8846 = vmatprep.mubr.bf16.mxu0 0
    %8847 = vmatmul.mubr.bf16.gmra.mxu0 %v8779
    %v8848 = vpop.f32.mrf.mxu0
    %v8849 = vadd.f32 0.0, %v8848
    %v8850 = vpop.f32.mrf.mxu0
    %v8851 = vpop.f32.mrf.mxu0
    %v8852 = vadd.f32 0.0, %v8851
    %v8853 = vpop.f32.mrf.mxu0
    %8854 = vmatprep.mubr.bf16.mxu0 0
    %8855 = vmatmul.mubr.bf16.gmra.mxu0 %v8782
    %v8856 = vpop.f32.mrf.mxu0
    %v8857 = vadd.f32 0.0, %v8856
    %v8858 = vpop.f32.mrf.mxu0
    %v8859 = vpop.f32.mrf.mxu0
    %v8860 = vadd.f32 0.0, %v8859
    %v8861 = vpop.f32.mrf.mxu0
    %8862 = vmatprep.mubr.bf16.mxu0 0
    %8863 = vmatmul.mubr.bf16.gmra.mxu0 %v8785
    %v8864 = vpop.f32.mrf.mxu0
    %v8865 = vadd.f32 0.0, %v8864
    %v8866 = vpop.f32.mrf.mxu0
    %v8867 = vpop.f32.mrf.mxu0
    %v8868 = vadd.f32 0.0, %v8867
    %v8869 = vpop.f32.mrf.mxu0
    %8870 = vmatprep.mubr.bf16.mxu0 0
    %8871 = vmatmul.mubr.bf16.gmra.mxu0 %v8788
    %v8872 = vpop.f32.mrf.mxu0
    %v8873 = vadd.f32 0.0, %v8872
    %v8874 = vpop.f32.mrf.mxu0
    %v8875 = vpop.f32.mrf.mxu0
    %v8876 = vadd.f32 0.0, %v8875
    %v8877 = vpop.f32.mrf.mxu0
    %8878 = vdwg.mxu0
    %v8879 = vadd.f32 %v7807, %v8849
    %v8880 = vadd.f32 %v7810, %v8852
    %v8881 = vadd.f32 %v7815, %v8857
    %v8882 = vadd.f32 %v7818, %v8860
    %v8883 = vadd.f32 %v7823, %v8865
    %v8884 = vadd.f32 %v7826, %v8868
    %v8885 = vadd.f32 %v7831, %v8873
    %v8886 = vadd.f32 %v7834, %v8876
    %8887 = vrot.lane.b32.xlu0 %v5753, 32
    %v8888 = vpop.permute.xlu0 %8887
    %8889 = vrot.lane.b32.xlu0 %v5761, 32
    %v8890 = vpop.permute.xlu0 %8889
    %v8892 = vsel %vm708, %v8888, 0
    %v8895 = vsel %vm708, %v8890, 0
    %8897 = vmatprep.subr.bf16.mxu0 0
    %8898 = vmatpush1.bf16.xpose.msra.mxu0 0
    %8899 = vmatprep.subr.bf16.mxu0 0
    %8900 = vmatpush1.bf16.xpose.msra.mxu0 0
    %8901 = vmatprep.subr.bf16.mxu0 0
    %8902 = vmatpush1.bf16.xpose.msra.mxu0 0
    %8903 = vmatprep.subr.bf16.mxu0 0
    %8904 = vmatpush1.bf16.xpose.msra.mxu0 0
    %8905 = vmatprep.subr.bf16.mxu0 0
    %8906 = vmatpush1.bf16.xpose.msra.mxu0 0
    %8907 = vmatprep.subr.bf16.mxu0 0
    %8908 = vmatpush1.bf16.xpose.msra.mxu0 0
    %8909 = vmatprep.subr.bf16.mxu0 0
    %8910 = vmatpush1.bf16.xpose.msra.mxu0 0
    %8911 = vmatprep.subr.bf16.mxu0 0
    %8912 = vmatpush1.bf16.xpose.msra.mxu0 %v8895
    %8913 = vmatprep.subr.bf16.mxu0 0
    %8914 = vmatpush2.bf16.xpose.msra.mxu0 0
    %8915 = vmatprep.subr.bf16.mxu0 0
    %8916 = vmatpush2.bf16.xpose.msra.mxu0 0
    %8917 = vmatprep.subr.bf16.mxu0 0
    %8918 = vmatpush2.bf16.xpose.msra.mxu0 0
    %8919 = vmatprep.subr.bf16.mxu0 0
    %8920 = vmatpush2.bf16.xpose.msra.mxu0 0
    %8921 = vmatprep.subr.bf16.mxu0 0
    %8922 = vmatpush2.bf16.xpose.msra.mxu0 0
    %8923 = vmatprep.subr.bf16.mxu0 0
    %8924 = vmatpush2.bf16.xpose.msra.mxu0 0
    %8925 = vmatprep.subr.bf16.mxu0 0
    %8926 = vmatpush2.bf16.xpose.msra.mxu0 0
    %8927 = vmatprep.subr.bf16.mxu0 0
    %8928 = vmatpush2.bf16.xpose.msra.mxu0 0
    %8929 = vmatprep.mubr.bf16.mxu0 0
    %8930 = vmatmul.mubr.bf16.gmra.mxu0 %v8892
    %v8931 = vpop.f32.mrf.mxu0
    %v8932 = vadd.f32 0.0, %v8931
    %v8933 = vpop.f32.mrf.mxu0
    %v8934 = vpop.f32.mrf.mxu0
    %v8935 = vpop.f32.mrf.mxu0
    %8936 = vdwg.mxu0
    %8937 = vrot.lane.b32.xlu0 %v5754, 32
    %v8938 = vpop.permute.xlu0 %8937
    %8939 = vrot.lane.b32.xlu0 %v5762, 32
    %v8940 = vpop.permute.xlu0 %8939
    %v8942 = vsel %vm708, %v8938, 0
    %v8945 = vsel %vm708, %v8940, 0
    %8947 = vmatprep.subr.bf16.mxu0 0
    %8948 = vmatpush1.bf16.xpose.msra.mxu0 0
    %8949 = vmatprep.subr.bf16.mxu0 0
    %8950 = vmatpush1.bf16.xpose.msra.mxu0 0
    %8951 = vmatprep.subr.bf16.mxu0 0
    %8952 = vmatpush1.bf16.xpose.msra.mxu0 0
    %8953 = vmatprep.subr.bf16.mxu0 0
    %8954 = vmatpush1.bf16.xpose.msra.mxu0 0
    %8955 = vmatprep.subr.bf16.mxu0 0
    %8956 = vmatpush1.bf16.xpose.msra.mxu0 0
    %8957 = vmatprep.subr.bf16.mxu0 0
    %8958 = vmatpush1.bf16.xpose.msra.mxu0 0
    %8959 = vmatprep.subr.bf16.mxu0 0
    %8960 = vmatpush1.bf16.xpose.msra.mxu0 0
    %8961 = vmatprep.subr.bf16.mxu0 0
    %8962 = vmatpush1.bf16.xpose.msra.mxu0 %v8945
    %8963 = vmatprep.subr.bf16.mxu0 0
    %8964 = vmatpush2.bf16.xpose.msra.mxu0 0
    %8965 = vmatprep.subr.bf16.mxu0 0
    %8966 = vmatpush2.bf16.xpose.msra.mxu0 0
    %8967 = vmatprep.subr.bf16.mxu0 0
    %8968 = vmatpush2.bf16.xpose.msra.mxu0 0
    %8969 = vmatprep.subr.bf16.mxu0 0
    %8970 = vmatpush2.bf16.xpose.msra.mxu0 0
    %8971 = vmatprep.subr.bf16.mxu0 0
    %8972 = vmatpush2.bf16.xpose.msra.mxu0 0
    %8973 = vmatprep.subr.bf16.mxu0 0
    %8974 = vmatpush2.bf16.xpose.msra.mxu0 0
    %8975 = vmatprep.subr.bf16.mxu0 0
    %8976 = vmatpush2.bf16.xpose.msra.mxu0 0
    %8977 = vmatprep.subr.bf16.mxu0 0
    %8978 = vmatpush2.bf16.xpose.msra.mxu0 0
    %8979 = vmatprep.mubr.bf16.mxu0 0
    %8980 = vmatmul.mubr.bf16.gmra.mxu0 %v8942
    %v8981 = vpop.f32.mrf.mxu0
    %v8982 = vadd.f32 0.0, %v8981
    %v8983 = vpop.f32.mrf.mxu0
    %v8984 = vpop.f32.mrf.mxu0
    %v8985 = vpop.f32.mrf.mxu0
    %8986 = vdwg.mxu0
    %8987 = vrot.lane.b32.xlu0 %v5755, 32
    %v8988 = vpop.permute.xlu0 %8987
    %8989 = vrot.lane.b32.xlu0 %v5763, 32
    %v8990 = vpop.permute.xlu0 %8989
    %v8992 = vsel %vm708, %v8988, 0
    %v8995 = vsel %vm708, %v8990, 0
    %8997 = vmatprep.subr.bf16.mxu0 0
    %8998 = vmatpush1.bf16.xpose.msra.mxu0 0
    %8999 = vmatprep.subr.bf16.mxu0 0
    %9000 = vmatpush1.bf16.xpose.msra.mxu0 0
    %9001 = vmatprep.subr.bf16.mxu0 0
    %9002 = vmatpush1.bf16.xpose.msra.mxu0 0
    %9003 = vmatprep.subr.bf16.mxu0 0
    %9004 = vmatpush1.bf16.xpose.msra.mxu0 0
    %9005 = vmatprep.subr.bf16.mxu0 0
    %9006 = vmatpush1.bf16.xpose.msra.mxu0 0
    %9007 = vmatprep.subr.bf16.mxu0 0
    %9008 = vmatpush1.bf16.xpose.msra.mxu0 0
    %9009 = vmatprep.subr.bf16.mxu0 0
    %9010 = vmatpush1.bf16.xpose.msra.mxu0 0
    %9011 = vmatprep.subr.bf16.mxu0 0
    %9012 = vmatpush1.bf16.xpose.msra.mxu0 %v8995
    %9013 = vmatprep.subr.bf16.mxu0 0
    %9014 = vmatpush2.bf16.xpose.msra.mxu0 0
    %9015 = vmatprep.subr.bf16.mxu0 0
    %9016 = vmatpush2.bf16.xpose.msra.mxu0 0
    %9017 = vmatprep.subr.bf16.mxu0 0
    %9018 = vmatpush2.bf16.xpose.msra.mxu0 0
    %9019 = vmatprep.subr.bf16.mxu0 0
    %9020 = vmatpush2.bf16.xpose.msra.mxu0 0
    %9021 = vmatprep.subr.bf16.mxu0 0
    %9022 = vmatpush2.bf16.xpose.msra.mxu0 0
    %9023 = vmatprep.subr.bf16.mxu0 0
    %9024 = vmatpush2.bf16.xpose.msra.mxu0 0
    %9025 = vmatprep.subr.bf16.mxu0 0
    %9026 = vmatpush2.bf16.xpose.msra.mxu0 0
    %9027 = vmatprep.subr.bf16.mxu0 0
    %9028 = vmatpush2.bf16.xpose.msra.mxu0 0
    %9029 = vmatprep.mubr.bf16.mxu0 0
    %9030 = vmatmul.mubr.bf16.gmra.mxu0 %v8992
    %v9031 = vpop.f32.mrf.mxu0
    %v9032 = vadd.f32 0.0, %v9031
    %v9033 = vpop.f32.mrf.mxu0
    %v9034 = vpop.f32.mrf.mxu0
    %v9035 = vpop.f32.mrf.mxu0
    %9036 = vdwg.mxu0
    %9037 = vrot.lane.b32.xlu0 %v5756, 32
    %v9038 = vpop.permute.xlu0 %9037
    %9039 = vrot.lane.b32.xlu0 %v5764, 32
    %v9040 = vpop.permute.xlu0 %9039
    %v9042 = vsel %vm708, %v9038, 0
    %v9045 = vsel %vm708, %v9040, 0
    %9047 = vmatprep.subr.bf16.mxu0 0
    %9048 = vmatpush1.bf16.xpose.msra.mxu0 0
    %9049 = vmatprep.subr.bf16.mxu0 0
    %9050 = vmatpush1.bf16.xpose.msra.mxu0 0
    %9051 = vmatprep.subr.bf16.mxu0 0
    %9052 = vmatpush1.bf16.xpose.msra.mxu0 0
    %9053 = vmatprep.subr.bf16.mxu0 0
    %9054 = vmatpush1.bf16.xpose.msra.mxu0 0
    %9055 = vmatprep.subr.bf16.mxu0 0
    %9056 = vmatpush1.bf16.xpose.msra.mxu0 0
    %9057 = vmatprep.subr.bf16.mxu0 0
    %9058 = vmatpush1.bf16.xpose.msra.mxu0 0
    %9059 = vmatprep.subr.bf16.mxu0 0
    %9060 = vmatpush1.bf16.xpose.msra.mxu0 0
    %9061 = vmatprep.subr.bf16.mxu0 0
    %9062 = vmatpush1.bf16.xpose.msra.mxu0 %v9045
    %9063 = vmatprep.subr.bf16.mxu0 0
    %9064 = vmatpush2.bf16.xpose.msra.mxu0 0
    %9065 = vmatprep.subr.bf16.mxu0 0
    %9066 = vmatpush2.bf16.xpose.msra.mxu0 0
    %9067 = vmatprep.subr.bf16.mxu0 0
    %9068 = vmatpush2.bf16.xpose.msra.mxu0 0
    %9069 = vmatprep.subr.bf16.mxu0 0
    %9070 = vmatpush2.bf16.xpose.msra.mxu0 0
    %9071 = vmatprep.subr.bf16.mxu0 0
    %9072 = vmatpush2.bf16.xpose.msra.mxu0 0
    %9073 = vmatprep.subr.bf16.mxu0 0
    %9074 = vmatpush2.bf16.xpose.msra.mxu0 0
    %9075 = vmatprep.subr.bf16.mxu0 0
    %9076 = vmatpush2.bf16.xpose.msra.mxu0 0
    %9077 = vmatprep.subr.bf16.mxu0 0
    %9078 = vmatpush2.bf16.xpose.msra.mxu0 0
    %9079 = vmatprep.mubr.bf16.mxu0 0
    %9080 = vmatmul.mubr.bf16.gmra.mxu0 %v9042
    %v9081 = vpop.f32.mrf.mxu0
    %v9082 = vadd.f32 0.0, %v9081
    %v9083 = vpop.f32.mrf.mxu0
    %v9084 = vpop.f32.mrf.mxu0
    %v9085 = vpop.f32.mrf.mxu0
    %9086 = vdwg.mxu0
    %9087 = vrot.lane.b32.xlu0 %v5757, 32
    %v9088 = vpop.permute.xlu0 %9087
    %9089 = vrot.lane.b32.xlu0 %v5765, 32
    %v9090 = vpop.permute.xlu0 %9089
    %v9092 = vsel %vm708, %v9088, 0
    %v9095 = vsel %vm708, %v9090, 0
    %9097 = vmatprep.subr.bf16.mxu0 0
    %9098 = vmatpush1.bf16.xpose.msra.mxu0 0
    %9099 = vmatprep.subr.bf16.mxu0 0
    %9100 = vmatpush1.bf16.xpose.msra.mxu0 0
    %9101 = vmatprep.subr.bf16.mxu0 0
    %9102 = vmatpush1.bf16.xpose.msra.mxu0 0
    %9103 = vmatprep.subr.bf16.mxu0 0
    %9104 = vmatpush1.bf16.xpose.msra.mxu0 0
    %9105 = vmatprep.subr.bf16.mxu0 0
    %9106 = vmatpush1.bf16.xpose.msra.mxu0 0
    %9107 = vmatprep.subr.bf16.mxu0 0
    %9108 = vmatpush1.bf16.xpose.msra.mxu0 0
    %9109 = vmatprep.subr.bf16.mxu0 0
    %9110 = vmatpush1.bf16.xpose.msra.mxu0 0
    %9111 = vmatprep.subr.bf16.mxu0 0
    %9112 = vmatpush1.bf16.xpose.msra.mxu0 %v9095
    %9113 = vmatprep.subr.bf16.mxu0 0
    %9114 = vmatpush2.bf16.xpose.msra.mxu0 0
    %9115 = vmatprep.subr.bf16.mxu0 0
    %9116 = vmatpush2.bf16.xpose.msra.mxu0 0
    %9117 = vmatprep.subr.bf16.mxu0 0
    %9118 = vmatpush2.bf16.xpose.msra.mxu0 0
    %9119 = vmatprep.subr.bf16.mxu0 0
    %9120 = vmatpush2.bf16.xpose.msra.mxu0 0
    %9121 = vmatprep.subr.bf16.mxu0 0
    %9122 = vmatpush2.bf16.xpose.msra.mxu0 0
    %9123 = vmatprep.subr.bf16.mxu0 0
    %9124 = vmatpush2.bf16.xpose.msra.mxu0 0
    %9125 = vmatprep.subr.bf16.mxu0 0
    %9126 = vmatpush2.bf16.xpose.msra.mxu0 0
    %9127 = vmatprep.subr.bf16.mxu0 0
    %9128 = vmatpush2.bf16.xpose.msra.mxu0 0
    %9129 = vmatprep.mubr.bf16.mxu0 0
    %9130 = vmatmul.mubr.bf16.gmra.mxu0 %v9092
    %v9131 = vpop.f32.mrf.mxu0
    %v9132 = vadd.f32 0.0, %v9131
    %v9133 = vpop.f32.mrf.mxu0
    %v9134 = vpop.f32.mrf.mxu0
    %v9135 = vpop.f32.mrf.mxu0
    %9136 = vdwg.mxu0
    %9137 = vrot.lane.b32.xlu0 %v5758, 32
    %v9138 = vpop.permute.xlu0 %9137
    %9139 = vrot.lane.b32.xlu0 %v5766, 32
    %v9140 = vpop.permute.xlu0 %9139
    %v9142 = vsel %vm708, %v9138, 0
    %v9145 = vsel %vm708, %v9140, 0
    %9147 = vmatprep.subr.bf16.mxu0 0
    %9148 = vmatpush1.bf16.xpose.msra.mxu0 0
    %9149 = vmatprep.subr.bf16.mxu0 0
    %9150 = vmatpush1.bf16.xpose.msra.mxu0 0
    %9151 = vmatprep.subr.bf16.mxu0 0
    %9152 = vmatpush1.bf16.xpose.msra.mxu0 0
    %9153 = vmatprep.subr.bf16.mxu0 0
    %9154 = vmatpush1.bf16.xpose.msra.mxu0 0
    %9155 = vmatprep.subr.bf16.mxu0 0
    %9156 = vmatpush1.bf16.xpose.msra.mxu0 0
    %9157 = vmatprep.subr.bf16.mxu0 0
    %9158 = vmatpush1.bf16.xpose.msra.mxu0 0
    %9159 = vmatprep.subr.bf16.mxu0 0
    %9160 = vmatpush1.bf16.xpose.msra.mxu0 0
    %9161 = vmatprep.subr.bf16.mxu0 0
    %9162 = vmatpush1.bf16.xpose.msra.mxu0 %v9145
    %9163 = vmatprep.subr.bf16.mxu0 0
    %9164 = vmatpush2.bf16.xpose.msra.mxu0 0
    %9165 = vmatprep.subr.bf16.mxu0 0
    %9166 = vmatpush2.bf16.xpose.msra.mxu0 0
    %9167 = vmatprep.subr.bf16.mxu0 0
    %9168 = vmatpush2.bf16.xpose.msra.mxu0 0
    %9169 = vmatprep.subr.bf16.mxu0 0
    %9170 = vmatpush2.bf16.xpose.msra.mxu0 0
    %9171 = vmatprep.subr.bf16.mxu0 0
    %9172 = vmatpush2.bf16.xpose.msra.mxu0 0
    %9173 = vmatprep.subr.bf16.mxu0 0
    %9174 = vmatpush2.bf16.xpose.msra.mxu0 0
    %9175 = vmatprep.subr.bf16.mxu0 0
    %9176 = vmatpush2.bf16.xpose.msra.mxu0 0
    %9177 = vmatprep.subr.bf16.mxu0 0
    %9178 = vmatpush2.bf16.xpose.msra.mxu0 0
    %9179 = vmatprep.mubr.bf16.mxu0 0
    %9180 = vmatmul.mubr.bf16.gmra.mxu0 %v9142
    %v9181 = vpop.f32.mrf.mxu0
    %v9182 = vadd.f32 0.0, %v9181
    %v9183 = vpop.f32.mrf.mxu0
    %v9184 = vpop.f32.mrf.mxu0
    %v9185 = vpop.f32.mrf.mxu0
    %9186 = vdwg.mxu0
    %9187 = vrot.lane.b32.xlu0 %v5759, 32
    %v9188 = vpop.permute.xlu0 %9187
    %9189 = vrot.lane.b32.xlu0 %v5767, 32
    %v9190 = vpop.permute.xlu0 %9189
    %v9192 = vsel %vm708, %v9188, 0
    %v9195 = vsel %vm708, %v9190, 0
    %9197 = vmatprep.subr.bf16.mxu0 0
    %9198 = vmatpush1.bf16.xpose.msra.mxu0 0
    %9199 = vmatprep.subr.bf16.mxu0 0
    %9200 = vmatpush1.bf16.xpose.msra.mxu0 0
    %9201 = vmatprep.subr.bf16.mxu0 0
    %9202 = vmatpush1.bf16.xpose.msra.mxu0 0
    %9203 = vmatprep.subr.bf16.mxu0 0
    %9204 = vmatpush1.bf16.xpose.msra.mxu0 0
    %9205 = vmatprep.subr.bf16.mxu0 0
    %9206 = vmatpush1.bf16.xpose.msra.mxu0 0
    %9207 = vmatprep.subr.bf16.mxu0 0
    %9208 = vmatpush1.bf16.xpose.msra.mxu0 0
    %9209 = vmatprep.subr.bf16.mxu0 0
    %9210 = vmatpush1.bf16.xpose.msra.mxu0 0
    %9211 = vmatprep.subr.bf16.mxu0 0
    %9212 = vmatpush1.bf16.xpose.msra.mxu0 %v9195
    %9213 = vmatprep.subr.bf16.mxu0 0
    %9214 = vmatpush2.bf16.xpose.msra.mxu0 0
    %9215 = vmatprep.subr.bf16.mxu0 0
    %9216 = vmatpush2.bf16.xpose.msra.mxu0 0
    %9217 = vmatprep.subr.bf16.mxu0 0
    %9218 = vmatpush2.bf16.xpose.msra.mxu0 0
    %9219 = vmatprep.subr.bf16.mxu0 0
    %9220 = vmatpush2.bf16.xpose.msra.mxu0 0
    %9221 = vmatprep.subr.bf16.mxu0 0
    %9222 = vmatpush2.bf16.xpose.msra.mxu0 0
    %9223 = vmatprep.subr.bf16.mxu0 0
    %9224 = vmatpush2.bf16.xpose.msra.mxu0 0
    %9225 = vmatprep.subr.bf16.mxu0 0
    %9226 = vmatpush2.bf16.xpose.msra.mxu0 0
    %9227 = vmatprep.subr.bf16.mxu0 0
    %9228 = vmatpush2.bf16.xpose.msra.mxu0 0
    %9229 = vmatprep.mubr.bf16.mxu0 0
    %9230 = vmatmul.mubr.bf16.gmra.mxu0 %v9192
    %v9231 = vpop.f32.mrf.mxu0
    %v9232 = vadd.f32 0.0, %v9231
    %v9233 = vpop.f32.mrf.mxu0
    %v9234 = vpop.f32.mrf.mxu0
    %v9235 = vpop.f32.mrf.mxu0
    %9236 = vdwg.mxu0
    %9237 = vrot.lane.b32.xlu0 %v5760, 32
    %v9238 = vpop.permute.xlu0 %9237
    %9239 = vrot.lane.b32.xlu0 %v5768, 32
    %v9240 = vpop.permute.xlu0 %9239
    %v9242 = vsel %vm708, %v9238, 0
    %v9245 = vsel %vm708, %v9240, 0
    %9247 = vmatprep.subr.bf16.mxu0 0
    %9248 = vmatpush1.bf16.xpose.msra.mxu0 0
    %9249 = vmatprep.subr.bf16.mxu0 0
    %9250 = vmatpush1.bf16.xpose.msra.mxu0 0
    %9251 = vmatprep.subr.bf16.mxu0 0
    %9252 = vmatpush1.bf16.xpose.msra.mxu0 0
    %9253 = vmatprep.subr.bf16.mxu0 0
    %9254 = vmatpush1.bf16.xpose.msra.mxu0 0
    %9255 = vmatprep.subr.bf16.mxu0 0
    %9256 = vmatpush1.bf16.xpose.msra.mxu0 0
    %9257 = vmatprep.subr.bf16.mxu0 0
    %9258 = vmatpush1.bf16.xpose.msra.mxu0 0
    %9259 = vmatprep.subr.bf16.mxu0 0
    %9260 = vmatpush1.bf16.xpose.msra.mxu0 0
    %9261 = vmatprep.subr.bf16.mxu0 0
    %9262 = vmatpush1.bf16.xpose.msra.mxu0 %v9245
    %9263 = vmatprep.subr.bf16.mxu0 0
    %9264 = vmatpush2.bf16.xpose.msra.mxu0 0
    %9265 = vmatprep.subr.bf16.mxu0 0
    %9266 = vmatpush2.bf16.xpose.msra.mxu0 0
    %9267 = vmatprep.subr.bf16.mxu0 0
    %9268 = vmatpush2.bf16.xpose.msra.mxu0 0
    %9269 = vmatprep.subr.bf16.mxu0 0
    %9270 = vmatpush2.bf16.xpose.msra.mxu0 0
    %9271 = vmatprep.subr.bf16.mxu0 0
    %9272 = vmatpush2.bf16.xpose.msra.mxu0 0
    %9273 = vmatprep.subr.bf16.mxu0 0
    %9274 = vmatpush2.bf16.xpose.msra.mxu0 0
    %9275 = vmatprep.subr.bf16.mxu0 0
    %9276 = vmatpush2.bf16.xpose.msra.mxu0 0
    %9277 = vmatprep.subr.bf16.mxu0 0
    %9278 = vmatpush2.bf16.xpose.msra.mxu0 0
    %9279 = vmatprep.mubr.bf16.mxu0 0
    %9280 = vmatmul.mubr.bf16.gmra.mxu0 %v9242
    %v9281 = vpop.f32.mrf.mxu0
    %v9282 = vadd.f32 0.0, %v9281
    %v9283 = vpop.f32.mrf.mxu0
    %v9284 = vpop.f32.mrf.mxu0
    %v9285 = vpop.f32.mrf.mxu0
    %9286 = vdwg.mxu0
    %v9287 = vsel %vm1077, %v8932, -inf
    %9288 = vmax.xlane.f32.xlu0 %v9287
    %v9289 = vpop.xlane.xlu0 %9288
    %v9290 = vsel %vm1077, %v8982, -inf
    %9291 = vmax.xlane.f32.xlu0 %v9290
    %v9292 = vpop.xlane.xlu0 %9291
    %v9293 = vsel %vm1077, %v9032, -inf
    %9294 = vmax.xlane.f32.xlu0 %v9293
    %v9295 = vpop.xlane.xlu0 %9294
    %v9296 = vsel %vm1077, %v9082, -inf
    %9297 = vmax.xlane.f32.xlu0 %v9296
    %v9298 = vpop.xlane.xlu0 %9297
    %v9299 = vsel %vm1077, %v9132, -inf
    %9300 = vmax.xlane.f32.xlu0 %v9299
    %v9301 = vpop.xlane.xlu0 %9300
    %v9302 = vsel %vm1077, %v9182, -inf
    %9303 = vmax.xlane.f32.xlu0 %v9302
    %v9304 = vpop.xlane.xlu0 %9303
    %v9305 = vsel %vm1077, %v9232, -inf
    %9306 = vmax.xlane.f32.xlu0 %v9305
    %v9307 = vpop.xlane.xlu0 %9306
    %v9308 = vsel %vm1077, %v9282, -inf
    %9309 = vmax.xlane.f32.xlu0 %v9308
    %v9310 = vpop.xlane.xlu0 %9309
    %v9311 = vsub.f32 %v8932, %v9289
    %v9312 = vsub.f32 %v8982, %v9292
    %v9313 = vsub.f32 %v9032, %v9295
    %v9314 = vsub.f32 %v9082, %v9298
    %v9315 = vsub.f32 %v9132, %v9301
    %v9316 = vsub.f32 %v9182, %v9304
    %v9317 = vsub.f32 %v9232, %v9307
    %v9318 = vsub.f32 %v9282, %v9310
    %v9319 = vmul.f32 %v9311, 1.442695
    %v9320 = vpow.pop %v9319
    %v9321 = vmul.f32 %v9312, 1.442695
    %v9322 = vpow.pop %v9321
    %v9323 = vmul.f32 %v9313, 1.442695
    %v9324 = vpow.pop %v9323
    %v9325 = vmul.f32 %v9314, 1.442695
    %v9326 = vpow.pop %v9325
    %v9327 = vmul.f32 %v9315, 1.442695
    %v9328 = vpow.pop %v9327
    %v9329 = vmul.f32 %v9316, 1.442695
    %v9330 = vpow.pop %v9329
    %v9331 = vmul.f32 %v9317, 1.442695
    %v9332 = vpow.pop %v9331
    %v9333 = vmul.f32 %v9318, 1.442695
    %v9334 = vpow.pop %v9333
    %v9335 = vsel %vm1077, %v9320, 0.0
    %9336 = vadd.xlane.f32.xlu0 %v9335
    %v9337 = vpop.xlane.xlu0 %9336
    %v9338 = vsel %vm1077, %v9322, 0.0
    %9339 = vadd.xlane.f32.xlu0 %v9338
    %v9340 = vpop.xlane.xlu0 %9339
    %v9341 = vsel %vm1077, %v9324, 0.0
    %9342 = vadd.xlane.f32.xlu0 %v9341
    %v9343 = vpop.xlane.xlu0 %9342
    %v9344 = vsel %vm1077, %v9326, 0.0
    %9345 = vadd.xlane.f32.xlu0 %v9344
    %v9346 = vpop.xlane.xlu0 %9345
    %v9347 = vsel %vm1077, %v9328, 0.0
    %9348 = vadd.xlane.f32.xlu0 %v9347
    %v9349 = vpop.xlane.xlu0 %9348
    %v9350 = vsel %vm1077, %v9330, 0.0
    %9351 = vadd.xlane.f32.xlu0 %v9350
    %v9352 = vpop.xlane.xlu0 %9351
    %v9353 = vsel %vm1077, %v9332, 0.0
    %9354 = vadd.xlane.f32.xlu0 %v9353
    %v9355 = vpop.xlane.xlu0 %9354
    %v9356 = vsel %vm1077, %v9334, 0.0
    %9357 = vadd.xlane.f32.xlu0 %v9356
    %v9358 = vpop.xlane.xlu0 %9357
    %v9359 = vrcp.pop %v9337
    %v9360 = vrcp.pop %v9340
    %v9361 = vrcp.pop %v9343
    %v9362 = vrcp.pop %v9346
    %v9363 = vrcp.pop %v9349
    %v9364 = vrcp.pop %v9352
    %v9365 = vrcp.pop %v9355
    %v9366 = vrcp.pop %v9358
    %v9367 = vmul.f32 %v9320, %v9359
    %v9368 = vmul.f32 %v9322, %v9360
    %v9369 = vmul.f32 %v9324, %v9361
    %v9370 = vmul.f32 %v9326, %v9362
    %v9371 = vmul.f32 %v9328, %v9363
    %v9372 = vmul.f32 %v9330, %v9364
    %v9373 = vmul.f32 %v9332, %v9365
    %v9374 = vmul.f32 %v9334, %v9366
    %v9375 = vpack.c.bf16 %v9367, %v9367
    %v9376 = vpack.c.bf16 %v9368, %v9368
    %v9377 = vpack.c.bf16 %v9369, %v9369
    %v9378 = vpack.c.bf16 %v9370, %v9370
    %v9379 = vpack.c.bf16 %v9371, %v9371
    %v9380 = vpack.c.bf16 %v9372, %v9372
    %v9381 = vpack.c.bf16 %v9373, %v9373
    %v9382 = vpack.c.bf16 %v9374, %v9374
    %9383 = vrot.lane.b32.xlu0 %v5769, 32
    %v9384 = vpop.permute.xlu0 %9383
    %v9386 = vsel %vm1077, %v9375, 0
    %v9389 = vsel %vm1177, %v9384, 0
    %9391 = vmatprep.subr.bf16.mxu0 0
    %9392 = vmatpush1.bf16.msra.mxu0 0
    %9393 = vmatprep.subr.bf16.mxu0 0
    %9394 = vmatpush1.bf16.msra.mxu0 0
    %9395 = vmatprep.subr.bf16.mxu0 0
    %9396 = vmatpush1.bf16.msra.mxu0 0
    %9397 = vmatprep.subr.bf16.mxu0 0
    %9398 = vmatpush1.bf16.msra.mxu0 0
    %9399 = vmatprep.subr.bf16.mxu0 0
    %9400 = vmatpush1.bf16.msra.mxu0 0
    %9401 = vmatprep.subr.bf16.mxu0 0
    %9402 = vmatpush1.bf16.msra.mxu0 0
    %9403 = vmatprep.subr.bf16.mxu0 0
    %9404 = vmatpush1.bf16.msra.mxu0 0
    %9405 = vmatprep.subr.bf16.mxu0 0
    %9406 = vmatpush1.bf16.msra.mxu0 %v9389
    %9407 = vmatprep.subr.bf16.mxu0 0
    %9408 = vmatpush2.bf16.msra.mxu0 0
    %9409 = vmatprep.subr.bf16.mxu0 0
    %9410 = vmatpush2.bf16.msra.mxu0 0
    %9411 = vmatprep.subr.bf16.mxu0 0
    %9412 = vmatpush2.bf16.msra.mxu0 0
    %9413 = vmatprep.subr.bf16.mxu0 0
    %9414 = vmatpush2.bf16.msra.mxu0 0
    %9415 = vmatprep.subr.bf16.mxu0 0
    %9416 = vmatpush2.bf16.msra.mxu0 0
    %9417 = vmatprep.subr.bf16.mxu0 0
    %9418 = vmatpush2.bf16.msra.mxu0 0
    %9419 = vmatprep.subr.bf16.mxu0 0
    %9420 = vmatpush2.bf16.msra.mxu0 0
    %9421 = vmatprep.subr.bf16.mxu0 0
    %9422 = vmatpush2.bf16.msra.mxu0 0
    %9423 = vmatprep.mubr.bf16.mxu0 0
    %9424 = vmatmul.mubr.bf16.gmra.mxu0 %v9386
    %v9425 = vpop.f32.mrf.mxu0
    %v9426 = vadd.f32 0.0, %v9425
    %v9427 = vpop.f32.mrf.mxu0
    %v9428 = vpop.f32.mrf.mxu0
    %v9429 = vpop.f32.mrf.mxu0
    %9430 = vdwg.mxu0
    %9431 = vrot.lane.b32.xlu0 %v5770, 32
    %v9432 = vpop.permute.xlu0 %9431
    %v9434 = vsel %vm1077, %v9376, 0
    %v9437 = vsel %vm1177, %v9432, 0
    %9439 = vmatprep.subr.bf16.mxu0 0
    %9440 = vmatpush1.bf16.msra.mxu0 0
    %9441 = vmatprep.subr.bf16.mxu0 0
    %9442 = vmatpush1.bf16.msra.mxu0 0
    %9443 = vmatprep.subr.bf16.mxu0 0
    %9444 = vmatpush1.bf16.msra.mxu0 0
    %9445 = vmatprep.subr.bf16.mxu0 0
    %9446 = vmatpush1.bf16.msra.mxu0 0
    %9447 = vmatprep.subr.bf16.mxu0 0
    %9448 = vmatpush1.bf16.msra.mxu0 0
    %9449 = vmatprep.subr.bf16.mxu0 0
    %9450 = vmatpush1.bf16.msra.mxu0 0
    %9451 = vmatprep.subr.bf16.mxu0 0
    %9452 = vmatpush1.bf16.msra.mxu0 0
    %9453 = vmatprep.subr.bf16.mxu0 0
    %9454 = vmatpush1.bf16.msra.mxu0 %v9437
    %9455 = vmatprep.subr.bf16.mxu0 0
    %9456 = vmatpush2.bf16.msra.mxu0 0
    %9457 = vmatprep.subr.bf16.mxu0 0
    %9458 = vmatpush2.bf16.msra.mxu0 0
    %9459 = vmatprep.subr.bf16.mxu0 0
    %9460 = vmatpush2.bf16.msra.mxu0 0
    %9461 = vmatprep.subr.bf16.mxu0 0
    %9462 = vmatpush2.bf16.msra.mxu0 0
    %9463 = vmatprep.subr.bf16.mxu0 0
    %9464 = vmatpush2.bf16.msra.mxu0 0
    %9465 = vmatprep.subr.bf16.mxu0 0
    %9466 = vmatpush2.bf16.msra.mxu0 0
    %9467 = vmatprep.subr.bf16.mxu0 0
    %9468 = vmatpush2.bf16.msra.mxu0 0
    %9469 = vmatprep.subr.bf16.mxu0 0
    %9470 = vmatpush2.bf16.msra.mxu0 0
    %9471 = vmatprep.mubr.bf16.mxu0 0
    %9472 = vmatmul.mubr.bf16.gmra.mxu0 %v9434
    %v9473 = vpop.f32.mrf.mxu0
    %v9474 = vadd.f32 0.0, %v9473
    %v9475 = vpop.f32.mrf.mxu0
    %v9476 = vpop.f32.mrf.mxu0
    %v9477 = vpop.f32.mrf.mxu0
    %9478 = vdwg.mxu0
    %9479 = vrot.lane.b32.xlu0 %v5771, 32
    %v9480 = vpop.permute.xlu0 %9479
    %v9482 = vsel %vm1077, %v9377, 0
    %v9485 = vsel %vm1177, %v9480, 0
    %9487 = vmatprep.subr.bf16.mxu0 0
    %9488 = vmatpush1.bf16.msra.mxu0 0
    %9489 = vmatprep.subr.bf16.mxu0 0
    %9490 = vmatpush1.bf16.msra.mxu0 0
    %9491 = vmatprep.subr.bf16.mxu0 0
    %9492 = vmatpush1.bf16.msra.mxu0 0
    %9493 = vmatprep.subr.bf16.mxu0 0
    %9494 = vmatpush1.bf16.msra.mxu0 0
    %9495 = vmatprep.subr.bf16.mxu0 0
    %9496 = vmatpush1.bf16.msra.mxu0 0
    %9497 = vmatprep.subr.bf16.mxu0 0
    %9498 = vmatpush1.bf16.msra.mxu0 0
    %9499 = vmatprep.subr.bf16.mxu0 0
    %9500 = vmatpush1.bf16.msra.mxu0 0
    %9501 = vmatprep.subr.bf16.mxu0 0
    %9502 = vmatpush1.bf16.msra.mxu0 %v9485
    %9503 = vmatprep.subr.bf16.mxu0 0
    %9504 = vmatpush2.bf16.msra.mxu0 0
    %9505 = vmatprep.subr.bf16.mxu0 0
    %9506 = vmatpush2.bf16.msra.mxu0 0
    %9507 = vmatprep.subr.bf16.mxu0 0
    %9508 = vmatpush2.bf16.msra.mxu0 0
    %9509 = vmatprep.subr.bf16.mxu0 0
    %9510 = vmatpush2.bf16.msra.mxu0 0
    %9511 = vmatprep.subr.bf16.mxu0 0
    %9512 = vmatpush2.bf16.msra.mxu0 0
    %9513 = vmatprep.subr.bf16.mxu0 0
    %9514 = vmatpush2.bf16.msra.mxu0 0
    %9515 = vmatprep.subr.bf16.mxu0 0
    %9516 = vmatpush2.bf16.msra.mxu0 0
    %9517 = vmatprep.subr.bf16.mxu0 0
    %9518 = vmatpush2.bf16.msra.mxu0 0
    %9519 = vmatprep.mubr.bf16.mxu0 0
    %9520 = vmatmul.mubr.bf16.gmra.mxu0 %v9482
    %v9521 = vpop.f32.mrf.mxu0
    %v9522 = vadd.f32 0.0, %v9521
    %v9523 = vpop.f32.mrf.mxu0
    %v9524 = vpop.f32.mrf.mxu0
    %v9525 = vpop.f32.mrf.mxu0
    %9526 = vdwg.mxu0
    %9527 = vrot.lane.b32.xlu0 %v5772, 32
    %v9528 = vpop.permute.xlu0 %9527
    %v9530 = vsel %vm1077, %v9378, 0
    %v9533 = vsel %vm1177, %v9528, 0
    %9535 = vmatprep.subr.bf16.mxu0 0
    %9536 = vmatpush1.bf16.msra.mxu0 0
    %9537 = vmatprep.subr.bf16.mxu0 0
    %9538 = vmatpush1.bf16.msra.mxu0 0
    %9539 = vmatprep.subr.bf16.mxu0 0
    %9540 = vmatpush1.bf16.msra.mxu0 0
    %9541 = vmatprep.subr.bf16.mxu0 0
    %9542 = vmatpush1.bf16.msra.mxu0 0
    %9543 = vmatprep.subr.bf16.mxu0 0
    %9544 = vmatpush1.bf16.msra.mxu0 0
    %9545 = vmatprep.subr.bf16.mxu0 0
    %9546 = vmatpush1.bf16.msra.mxu0 0
    %9547 = vmatprep.subr.bf16.mxu0 0
    %9548 = vmatpush1.bf16.msra.mxu0 0
    %9549 = vmatprep.subr.bf16.mxu0 0
    %9550 = vmatpush1.bf16.msra.mxu0 %v9533
    %9551 = vmatprep.subr.bf16.mxu0 0
    %9552 = vmatpush2.bf16.msra.mxu0 0
    %9553 = vmatprep.subr.bf16.mxu0 0
    %9554 = vmatpush2.bf16.msra.mxu0 0
    %9555 = vmatprep.subr.bf16.mxu0 0
    %9556 = vmatpush2.bf16.msra.mxu0 0
    %9557 = vmatprep.subr.bf16.mxu0 0
    %9558 = vmatpush2.bf16.msra.mxu0 0
    %9559 = vmatprep.subr.bf16.mxu0 0
    %9560 = vmatpush2.bf16.msra.mxu0 0
    %9561 = vmatprep.subr.bf16.mxu0 0
    %9562 = vmatpush2.bf16.msra.mxu0 0
    %9563 = vmatprep.subr.bf16.mxu0 0
    %9564 = vmatpush2.bf16.msra.mxu0 0
    %9565 = vmatprep.subr.bf16.mxu0 0
    %9566 = vmatpush2.bf16.msra.mxu0 0
    %9567 = vmatprep.mubr.bf16.mxu0 0
    %9568 = vmatmul.mubr.bf16.gmra.mxu0 %v9530
    %v9569 = vpop.f32.mrf.mxu0
    %v9570 = vadd.f32 0.0, %v9569
    %v9571 = vpop.f32.mrf.mxu0
    %v9572 = vpop.f32.mrf.mxu0
    %v9573 = vpop.f32.mrf.mxu0
    %9574 = vdwg.mxu0
    %9575 = vrot.lane.b32.xlu0 %v5773, 32
    %v9576 = vpop.permute.xlu0 %9575
    %v9578 = vsel %vm1077, %v9379, 0
    %v9581 = vsel %vm1177, %v9576, 0
    %9583 = vmatprep.subr.bf16.mxu0 0
    %9584 = vmatpush1.bf16.msra.mxu0 0
    %9585 = vmatprep.subr.bf16.mxu0 0
    %9586 = vmatpush1.bf16.msra.mxu0 0
    %9587 = vmatprep.subr.bf16.mxu0 0
    %9588 = vmatpush1.bf16.msra.mxu0 0
    %9589 = vmatprep.subr.bf16.mxu0 0
    %9590 = vmatpush1.bf16.msra.mxu0 0
    %9591 = vmatprep.subr.bf16.mxu0 0
    %9592 = vmatpush1.bf16.msra.mxu0 0
    %9593 = vmatprep.subr.bf16.mxu0 0
    %9594 = vmatpush1.bf16.msra.mxu0 0
    %9595 = vmatprep.subr.bf16.mxu0 0
    %9596 = vmatpush1.bf16.msra.mxu0 0
    %9597 = vmatprep.subr.bf16.mxu0 0
    %9598 = vmatpush1.bf16.msra.mxu0 %v9581
    %9599 = vmatprep.subr.bf16.mxu0 0
    %9600 = vmatpush2.bf16.msra.mxu0 0
    %9601 = vmatprep.subr.bf16.mxu0 0
    %9602 = vmatpush2.bf16.msra.mxu0 0
    %9603 = vmatprep.subr.bf16.mxu0 0
    %9604 = vmatpush2.bf16.msra.mxu0 0
    %9605 = vmatprep.subr.bf16.mxu0 0
    %9606 = vmatpush2.bf16.msra.mxu0 0
    %9607 = vmatprep.subr.bf16.mxu0 0
    %9608 = vmatpush2.bf16.msra.mxu0 0
    %9609 = vmatprep.subr.bf16.mxu0 0
    %9610 = vmatpush2.bf16.msra.mxu0 0
    %9611 = vmatprep.subr.bf16.mxu0 0
    %9612 = vmatpush2.bf16.msra.mxu0 0
    %9613 = vmatprep.subr.bf16.mxu0 0
    %9614 = vmatpush2.bf16.msra.mxu0 0
    %9615 = vmatprep.mubr.bf16.mxu0 0
    %9616 = vmatmul.mubr.bf16.gmra.mxu0 %v9578
    %v9617 = vpop.f32.mrf.mxu0
    %v9618 = vadd.f32 0.0, %v9617
    %v9619 = vpop.f32.mrf.mxu0
    %v9620 = vpop.f32.mrf.mxu0
    %v9621 = vpop.f32.mrf.mxu0
    %9622 = vdwg.mxu0
    %9623 = vrot.lane.b32.xlu0 %v5774, 32
    %v9624 = vpop.permute.xlu0 %9623
    %v9626 = vsel %vm1077, %v9380, 0
    %v9629 = vsel %vm1177, %v9624, 0
    %9631 = vmatprep.subr.bf16.mxu0 0
    %9632 = vmatpush1.bf16.msra.mxu0 0
    %9633 = vmatprep.subr.bf16.mxu0 0
    %9634 = vmatpush1.bf16.msra.mxu0 0
    %9635 = vmatprep.subr.bf16.mxu0 0
    %9636 = vmatpush1.bf16.msra.mxu0 0
    %9637 = vmatprep.subr.bf16.mxu0 0
    %9638 = vmatpush1.bf16.msra.mxu0 0
    %9639 = vmatprep.subr.bf16.mxu0 0
    %9640 = vmatpush1.bf16.msra.mxu0 0
    %9641 = vmatprep.subr.bf16.mxu0 0
    %9642 = vmatpush1.bf16.msra.mxu0 0
    %9643 = vmatprep.subr.bf16.mxu0 0
    %9644 = vmatpush1.bf16.msra.mxu0 0
    %9645 = vmatprep.subr.bf16.mxu0 0
    %9646 = vmatpush1.bf16.msra.mxu0 %v9629
    %9647 = vmatprep.subr.bf16.mxu0 0
    %9648 = vmatpush2.bf16.msra.mxu0 0
    %9649 = vmatprep.subr.bf16.mxu0 0
    %9650 = vmatpush2.bf16.msra.mxu0 0
    %9651 = vmatprep.subr.bf16.mxu0 0
    %9652 = vmatpush2.bf16.msra.mxu0 0
    %9653 = vmatprep.subr.bf16.mxu0 0
    %9654 = vmatpush2.bf16.msra.mxu0 0
    %9655 = vmatprep.subr.bf16.mxu0 0
    %9656 = vmatpush2.bf16.msra.mxu0 0
    %9657 = vmatprep.subr.bf16.mxu0 0
    %9658 = vmatpush2.bf16.msra.mxu0 0
    %9659 = vmatprep.subr.bf16.mxu0 0
    %9660 = vmatpush2.bf16.msra.mxu0 0
    %9661 = vmatprep.subr.bf16.mxu0 0
    %9662 = vmatpush2.bf16.msra.mxu0 0
    %9663 = vmatprep.mubr.bf16.mxu0 0
    %9664 = vmatmul.mubr.bf16.gmra.mxu0 %v9626
    %v9665 = vpop.f32.mrf.mxu0
    %v9666 = vadd.f32 0.0, %v9665
    %v9667 = vpop.f32.mrf.mxu0
    %v9668 = vpop.f32.mrf.mxu0
    %v9669 = vpop.f32.mrf.mxu0
    %9670 = vdwg.mxu0
    %9671 = vrot.lane.b32.xlu0 %v5775, 32
    %v9672 = vpop.permute.xlu0 %9671
    %v9674 = vsel %vm1077, %v9381, 0
    %v9677 = vsel %vm1177, %v9672, 0
    %9679 = vmatprep.subr.bf16.mxu0 0
    %9680 = vmatpush1.bf16.msra.mxu0 0
    %9681 = vmatprep.subr.bf16.mxu0 0
    %9682 = vmatpush1.bf16.msra.mxu0 0
    %9683 = vmatprep.subr.bf16.mxu0 0
    %9684 = vmatpush1.bf16.msra.mxu0 0
    %9685 = vmatprep.subr.bf16.mxu0 0
    %9686 = vmatpush1.bf16.msra.mxu0 0
    %9687 = vmatprep.subr.bf16.mxu0 0
    %9688 = vmatpush1.bf16.msra.mxu0 0
    %9689 = vmatprep.subr.bf16.mxu0 0
    %9690 = vmatpush1.bf16.msra.mxu0 0
    %9691 = vmatprep.subr.bf16.mxu0 0
    %9692 = vmatpush1.bf16.msra.mxu0 0
    %9693 = vmatprep.subr.bf16.mxu0 0
    %9694 = vmatpush1.bf16.msra.mxu0 %v9677
    %9695 = vmatprep.subr.bf16.mxu0 0
    %9696 = vmatpush2.bf16.msra.mxu0 0
    %9697 = vmatprep.subr.bf16.mxu0 0
    %9698 = vmatpush2.bf16.msra.mxu0 0
    %9699 = vmatprep.subr.bf16.mxu0 0
    %9700 = vmatpush2.bf16.msra.mxu0 0
    %9701 = vmatprep.subr.bf16.mxu0 0
    %9702 = vmatpush2.bf16.msra.mxu0 0
    %9703 = vmatprep.subr.bf16.mxu0 0
    %9704 = vmatpush2.bf16.msra.mxu0 0
    %9705 = vmatprep.subr.bf16.mxu0 0
    %9706 = vmatpush2.bf16.msra.mxu0 0
    %9707 = vmatprep.subr.bf16.mxu0 0
    %9708 = vmatpush2.bf16.msra.mxu0 0
    %9709 = vmatprep.subr.bf16.mxu0 0
    %9710 = vmatpush2.bf16.msra.mxu0 0
    %9711 = vmatprep.mubr.bf16.mxu0 0
    %9712 = vmatmul.mubr.bf16.gmra.mxu0 %v9674
    %v9713 = vpop.f32.mrf.mxu0
    %v9714 = vadd.f32 0.0, %v9713
    %v9715 = vpop.f32.mrf.mxu0
    %v9716 = vpop.f32.mrf.mxu0
    %v9717 = vpop.f32.mrf.mxu0
    %9718 = vdwg.mxu0
    %9719 = vrot.lane.b32.xlu0 %v5776, 32
    %v9720 = vpop.permute.xlu0 %9719
    %v9722 = vsel %vm1077, %v9382, 0
    %v9725 = vsel %vm1177, %v9720, 0
    %9727 = vmatprep.subr.bf16.mxu0 0
    %9728 = vmatpush1.bf16.msra.mxu0 0
    %9729 = vmatprep.subr.bf16.mxu0 0
    %9730 = vmatpush1.bf16.msra.mxu0 0
    %9731 = vmatprep.subr.bf16.mxu0 0
    %9732 = vmatpush1.bf16.msra.mxu0 0
    %9733 = vmatprep.subr.bf16.mxu0 0
    %9734 = vmatpush1.bf16.msra.mxu0 0
    %9735 = vmatprep.subr.bf16.mxu0 0
    %9736 = vmatpush1.bf16.msra.mxu0 0
    %9737 = vmatprep.subr.bf16.mxu0 0
    %9738 = vmatpush1.bf16.msra.mxu0 0
    %9739 = vmatprep.subr.bf16.mxu0 0
    %9740 = vmatpush1.bf16.msra.mxu0 0
    %9741 = vmatprep.subr.bf16.mxu0 0
    %9742 = vmatpush1.bf16.msra.mxu0 %v9725
    %9743 = vmatprep.subr.bf16.mxu0 0
    %9744 = vmatpush2.bf16.msra.mxu0 0
    %9745 = vmatprep.subr.bf16.mxu0 0
    %9746 = vmatpush2.bf16.msra.mxu0 0
    %9747 = vmatprep.subr.bf16.mxu0 0
    %9748 = vmatpush2.bf16.msra.mxu0 0
    %9749 = vmatprep.subr.bf16.mxu0 0
    %9750 = vmatpush2.bf16.msra.mxu0 0
    %9751 = vmatprep.subr.bf16.mxu0 0
    %9752 = vmatpush2.bf16.msra.mxu0 0
    %9753 = vmatprep.subr.bf16.mxu0 0
    %9754 = vmatpush2.bf16.msra.mxu0 0
    %9755 = vmatprep.subr.bf16.mxu0 0
    %9756 = vmatpush2.bf16.msra.mxu0 0
    %9757 = vmatprep.subr.bf16.mxu0 0
    %9758 = vmatpush2.bf16.msra.mxu0 0
    %9759 = vmatprep.mubr.bf16.mxu0 0
    %9760 = vmatmul.mubr.bf16.gmra.mxu0 %v9722
    %v9761 = vpop.f32.mrf.mxu0
    %v9762 = vadd.f32 0.0, %v9761
    %v9763 = vpop.f32.mrf.mxu0
    %v9764 = vpop.f32.mrf.mxu0
    %v9765 = vpop.f32.mrf.mxu0
    %9766 = vdwg.mxu0
    %s9767 = scalar_lea.vmem %s6, 448
    %v9768 = vld [vmem:[%s9767] sm:$0xf]
    %v9769 = vld [vmem:[%s9767 + $0x4] sm:$0xf]
    %v9770 = vld [vmem:[%s9767 + $0x8] sm:$0xf]
    %v9771 = vld [vmem:[%s9767 + $0xc] sm:$0xf]
    %v9772 = vld [vmem:[%s9767 + $0x10] sm:$0xf]
    %v9773 = vld [vmem:[%s9767 + $0x14] sm:$0xf]
    %v9774 = vld [vmem:[%s9767 + $0x18] sm:$0xf]
    %v9775 = vld [vmem:[%s9767 + $0x1c] sm:$0xf]
    %v9776 = vld [vmem:[%s9767 + $0x20] sm:$0xf]
    %v9777 = vld [vmem:[%s9767 + $0x24] sm:$0xf]
    %v9778 = vld [vmem:[%s9767 + $0x28] sm:$0xf]
    %v9779 = vld [vmem:[%s9767 + $0x2c] sm:$0xf]
    %v9780 = vld [vmem:[%s9767 + $0x30] sm:$0xf]
    %v9781 = vld [vmem:[%s9767 + $0x34] sm:$0xf]
    %v9782 = vld [vmem:[%s9767 + $0x38] sm:$0xf]
    %v9783 = vld [vmem:[%s9767 + $0x3c] sm:$0xf]
    %v9784 = vpack.c.bf16 %v9474, %v9426
    %v9785 = vpack.c.bf16 %v9570, %v9522
    %v9786 = vpack.c.bf16 %v9666, %v9618
    %v9787 = vpack.c.bf16 %v9762, %v9714
    %v9804 = vunpack.c.l.b16 %v9768
    %v9805 = vunpack.c.l.b16 %v9769
    %v9806 = vunpack.c.l.b16 %v9770
    %v9807 = vunpack.c.l.b16 %v9771
    %v9808 = vunpack.c.l.b16 %v9772
    %v9809 = vunpack.c.l.b16 %v9773
    %v9810 = vunpack.c.l.b16 %v9774
    %v9811 = vunpack.c.l.b16 %v9775
    %v9812 = vunpack.c.l.b16 %v9776
    %v9813 = vunpack.c.l.b16 %v9777
    %v9814 = vunpack.c.l.b16 %v9778
    %v9815 = vunpack.c.l.b16 %v9779
    %v9816 = vunpack.c.l.b16 %v9780
    %v9817 = vunpack.c.l.b16 %v9781
    %v9818 = vunpack.c.l.b16 %v9782
    %v9819 = vunpack.c.l.b16 %v9783
    %v9820 = vpack.c.b16 %v9805, %v9804
    %v9821 = vpack.c.b16 %v9807, %v9806
    %v9822 = vpack.c.b16 %v9809, %v9808
    %v9823 = vpack.c.b16 %v9811, %v9810
    %v9824 = vpack.c.b16 %v9813, %v9812
    %v9825 = vpack.c.b16 %v9815, %v9814
    %v9826 = vpack.c.b16 %v9817, %v9816
    %v9827 = vpack.c.b16 %v9819, %v9818
    %v9829 = vsel %vm708, %v9784, 0
    %v9832 = vsel %vm708, %v9785, 0
    %v9835 = vsel %vm708, %v9786, 0
    %v9838 = vsel %vm708, %v9787, 0
    %v9841 = vsel %vm708, %v9820, 0
    %v9844 = vsel %vm708, %v9821, 0
    %v9847 = vsel %vm708, %v9822, 0
    %v9850 = vsel %vm708, %v9823, 0
    %v9853 = vsel %vm708, %v9824, 0
    %v9856 = vsel %vm708, %v9825, 0
    %v9859 = vsel %vm708, %v9826, 0
    %v9862 = vsel %vm708, %v9827, 0
    %9864 = vmatprep.subr.bf16.mxu0 0
    %9865 = vmatpush1.bf16.xpose.msra.mxu0 %v9862
    %9866 = vmatprep.subr.bf16.mxu0 0
    %9867 = vmatpush1.bf16.xpose.msra.mxu0 %v9859
    %9868 = vmatprep.subr.bf16.mxu0 0
    %9869 = vmatpush1.bf16.xpose.msra.mxu0 %v9856
    %9870 = vmatprep.subr.bf16.mxu0 0
    %9871 = vmatpush1.bf16.xpose.msra.mxu0 %v9853
    %9872 = vmatprep.subr.bf16.mxu0 0
    %9873 = vmatpush1.bf16.xpose.msra.mxu0 %v9850
    %9874 = vmatprep.subr.bf16.mxu0 0
    %9875 = vmatpush1.bf16.xpose.msra.mxu0 %v9847
    %9876 = vmatprep.subr.bf16.mxu0 0
    %9877 = vmatpush1.bf16.xpose.msra.mxu0 %v9844
    %9878 = vmatprep.subr.bf16.mxu0 0
    %9879 = vmatpush1.bf16.xpose.msra.mxu0 %v9841
    %9880 = vmatprep.subr.bf16.mxu0 0
    %9881 = vmatpush2.bf16.xpose.msra.mxu0 0
    %9882 = vmatprep.subr.bf16.mxu0 0
    %9883 = vmatpush2.bf16.xpose.msra.mxu0 0
    %9884 = vmatprep.subr.bf16.mxu0 0
    %9885 = vmatpush2.bf16.xpose.msra.mxu0 0
    %9886 = vmatprep.subr.bf16.mxu0 0
    %9887 = vmatpush2.bf16.xpose.msra.mxu0 0
    %9888 = vmatprep.subr.bf16.mxu0 0
    %9889 = vmatpush2.bf16.xpose.msra.mxu0 0
    %9890 = vmatprep.subr.bf16.mxu0 0
    %9891 = vmatpush2.bf16.xpose.msra.mxu0 0
    %9892 = vmatprep.subr.bf16.mxu0 0
    %9893 = vmatpush2.bf16.xpose.msra.mxu0 0
    %9894 = vmatprep.subr.bf16.mxu0 0
    %9895 = vmatpush2.bf16.xpose.msra.mxu0 0
    %9896 = vmatprep.mubr.bf16.mxu0 0
    %9897 = vmatmul.mubr.bf16.gmra.mxu0 %v9829
    %v9898 = vpop.f32.mrf.mxu0
    %v9899 = vadd.f32 0.0, %v9898
    %v9900 = vpop.f32.mrf.mxu0
    %v9901 = vpop.f32.mrf.mxu0
    %v9902 = vadd.f32 0.0, %v9901
    %v9903 = vpop.f32.mrf.mxu0
    %9904 = vmatprep.mubr.bf16.mxu0 0
    %9905 = vmatmul.mubr.bf16.gmra.mxu0 %v9832
    %v9906 = vpop.f32.mrf.mxu0
    %v9907 = vadd.f32 0.0, %v9906
    %v9908 = vpop.f32.mrf.mxu0
    %v9909 = vpop.f32.mrf.mxu0
    %v9910 = vadd.f32 0.0, %v9909
    %v9911 = vpop.f32.mrf.mxu0
    %9912 = vmatprep.mubr.bf16.mxu0 0
    %9913 = vmatmul.mubr.bf16.gmra.mxu0 %v9835
    %v9914 = vpop.f32.mrf.mxu0
    %v9915 = vadd.f32 0.0, %v9914
    %v9916 = vpop.f32.mrf.mxu0
    %v9917 = vpop.f32.mrf.mxu0
    %v9918 = vadd.f32 0.0, %v9917
    %v9919 = vpop.f32.mrf.mxu0
    %9920 = vmatprep.mubr.bf16.mxu0 0
    %9921 = vmatmul.mubr.bf16.gmra.mxu0 %v9838
    %v9922 = vpop.f32.mrf.mxu0
    %v9923 = vadd.f32 0.0, %v9922
    %v9924 = vpop.f32.mrf.mxu0
    %v9925 = vpop.f32.mrf.mxu0
    %v9926 = vadd.f32 0.0, %v9925
    %v9927 = vpop.f32.mrf.mxu0
    %9928 = vdwg.mxu0
    %v9929 = vadd.f32 %v8879, %v9899
    %v9930 = vadd.f32 %v8880, %v9902
    %v9931 = vadd.f32 %v8881, %v9907
    %v9932 = vadd.f32 %v8882, %v9910
    %v9933 = vadd.f32 %v8883, %v9915
    %v9934 = vadd.f32 %v8884, %v9918
    %v9935 = vadd.f32 %v8885, %v9923
    %v9936 = vadd.f32 %v8886, %v9926
    %v9937 = vld [vmem:[%s7 + $0x1] sm:$0x1]
    %v9938 = vlaneseq
    %v9939 = vshrl.u32 %v9938, 7
    %v9940 = vsub.s32 0, %v9939
    %v9941 = vrot.slane %v9937, %v9940
    %v9942 = vadd.f32 %v9929, %v9941
    %v9943 = vadd.f32 %v9930, %v9941
    %v9944 = vadd.f32 %v9931, %v9941
    %v9945 = vadd.f32 %v9932, %v9941
    %v9946 = vadd.f32 %v9933, %v9941
    %v9947 = vadd.f32 %v9934, %v9941
    %v9948 = vadd.f32 %v9935, %v9941
    %v9949 = vadd.f32 %v9936, %v9941
    %v9950 = vadd.f32 %v5384, %v9942
    %v9951 = vadd.f32 %v5385, %v9943
    %v9952 = vadd.f32 %v5386, %v9944
    %v9953 = vadd.f32 %v5387, %v9945
    %v9954 = vadd.f32 %v5388, %v9946
    %v9955 = vadd.f32 %v5389, %v9947
    %v9956 = vadd.f32 %v5390, %v9948
    %v9957 = vadd.f32 %v5391, %v9949
    %v9958 = vld [vmem:[%s12 + $0x1] sm:$0x1]
    %v9959 = vld [vmem:[%s13 + $0x1] sm:$0x1]
    %9960 = vadd.xlane.f32.xlu0 %v9950
    %v9961 = vpop.xlane.xlu0 %9960
    %9962 = vadd.xlane.f32.xlu0 %v9951
    %v9963 = vpop.xlane.xlu0 %9962
    %9964 = vadd.xlane.f32.xlu0 %v9952
    %v9965 = vpop.xlane.xlu0 %9964
    %9966 = vadd.xlane.f32.xlu0 %v9953
    %v9967 = vpop.xlane.xlu0 %9966
    %9968 = vadd.xlane.f32.xlu0 %v9954
    %v9969 = vpop.xlane.xlu0 %9968
    %9970 = vadd.xlane.f32.xlu0 %v9955
    %v9971 = vpop.xlane.xlu0 %9970
    %9972 = vadd.xlane.f32.xlu0 %v9956
    %v9973 = vpop.xlane.xlu0 %9972
    %9974 = vadd.xlane.f32.xlu0 %v9957
    %v9975 = vpop.xlane.xlu0 %9974
    %v9976 = vmul.f32 %v9961, %v4909
    %v9977 = vmul.f32 %v9963, %v4909
    %v9978 = vmul.f32 %v9965, %v4909
    %v9979 = vmul.f32 %v9967, %v4909
    %v9980 = vmul.f32 %v9969, %v4909
    %v9981 = vmul.f32 %v9971, %v4909
    %v9982 = vmul.f32 %v9973, %v4909
    %v9983 = vmul.f32 %v9975, %v4909
    %v9984 = vsub.f32 %v9950, %v9976
    %v9985 = vsub.f32 %v9951, %v9977
    %v9986 = vsub.f32 %v9952, %v9978
    %v9987 = vsub.f32 %v9953, %v9979
    %v9988 = vsub.f32 %v9954, %v9980
    %v9989 = vsub.f32 %v9955, %v9981
    %v9990 = vsub.f32 %v9956, %v9982
    %v9991 = vsub.f32 %v9957, %v9983
    %v9992 = vmul.f32 %v9984, %v9984
    %v9993 = vmul.f32 %v9985, %v9985
    %v9994 = vmul.f32 %v9986, %v9986
    %v9995 = vmul.f32 %v9987, %v9987
    %v9996 = vmul.f32 %v9988, %v9988
    %v9997 = vmul.f32 %v9989, %v9989
    %v9998 = vmul.f32 %v9990, %v9990
    %v9999 = vmul.f32 %v9991, %v9991
    %10000 = vadd.xlane.f32.xlu0 %v9992
    %v10001 = vpop.xlane.xlu0 %10000
    %10002 = vadd.xlane.f32.xlu0 %v9993
    %v10003 = vpop.xlane.xlu0 %10002
    %10004 = vadd.xlane.f32.xlu0 %v9994
    %v10005 = vpop.xlane.xlu0 %10004
    %10006 = vadd.xlane.f32.xlu0 %v9995
    %v10007 = vpop.xlane.xlu0 %10006
    %10008 = vadd.xlane.f32.xlu0 %v9996
    %v10009 = vpop.xlane.xlu0 %10008
    %10010 = vadd.xlane.f32.xlu0 %v9997
    %v10011 = vpop.xlane.xlu0 %10010
    %10012 = vadd.xlane.f32.xlu0 %v9998
    %v10013 = vpop.xlane.xlu0 %10012
    %10014 = vadd.xlane.f32.xlu0 %v9999
    %v10015 = vpop.xlane.xlu0 %10014
    %v10016 = vmul.f32 %v10001, %v4909
    %v10017 = vmul.f32 %v10003, %v4909
    %v10018 = vmul.f32 %v10005, %v4909
    %v10019 = vmul.f32 %v10007, %v4909
    %v10020 = vmul.f32 %v10009, %v4909
    %v10021 = vmul.f32 %v10011, %v4909
    %v10022 = vmul.f32 %v10013, %v4909
    %v10023 = vmul.f32 %v10015, %v4909
    %v10024 = vadd.f32 %v10016, 1e-05
    %v10025 = vadd.f32 %v10017, 1e-05
    %v10026 = vadd.f32 %v10018, 1e-05
    %v10027 = vadd.f32 %v10019, 1e-05
    %v10028 = vadd.f32 %v10020, 1e-05
    %v10029 = vadd.f32 %v10021, 1e-05
    %v10030 = vadd.f32 %v10022, 1e-05
    %v10031 = vadd.f32 %v10023, 1e-05
    %v10032 = vrsqrt.pop %v10024
    %v10033 = vrsqrt.pop %v10025
    %v10034 = vrsqrt.pop %v10026
    %v10035 = vrsqrt.pop %v10027
    %v10036 = vrsqrt.pop %v10028
    %v10037 = vrsqrt.pop %v10029
    %v10038 = vrsqrt.pop %v10030
    %v10039 = vrsqrt.pop %v10031
    %v10040 = vmul.f32 %v9984, %v10032
    %v10041 = vmul.f32 %v9985, %v10033
    %v10042 = vmul.f32 %v9986, %v10034
    %v10043 = vmul.f32 %v9987, %v10035
    %v10044 = vmul.f32 %v9988, %v10036
    %v10045 = vmul.f32 %v9989, %v10037
    %v10046 = vmul.f32 %v9990, %v10038
    %v10047 = vmul.f32 %v9991, %v10039
    %v10048 = vlaneseq
    %v10049 = vshrl.u32 %v10048, 7
    %v10050 = vsub.s32 0, %v10049
    %v10051 = vrot.slane %v9958, %v10050
    %v10052 = vmul.f32 %v10040, %v10051
    %v10053 = vmul.f32 %v10041, %v10051
    %v10054 = vmul.f32 %v10042, %v10051
    %v10055 = vmul.f32 %v10043, %v10051
    %v10056 = vmul.f32 %v10044, %v10051
    %v10057 = vmul.f32 %v10045, %v10051
    %v10058 = vmul.f32 %v10046, %v10051
    %v10059 = vmul.f32 %v10047, %v10051
    %v10060 = vlaneseq
    %v10061 = vshrl.u32 %v10060, 7
    %v10062 = vsub.s32 0, %v10061
    %v10063 = vrot.slane %v9959, %v10062
    %v10064 = vadd.f32 %v10052, %v10063
    %v10065 = vadd.f32 %v10053, %v10063
    %v10066 = vadd.f32 %v10054, %v10063
    %v10067 = vadd.f32 %v10055, %v10063
    %v10068 = vadd.f32 %v10056, %v10063
    %v10069 = vadd.f32 %v10057, %v10063
    %v10070 = vadd.f32 %v10058, %v10063
    %v10071 = vadd.f32 %v10059, %v10063
    %s10072 = scalar_lea.vmem %s8, 16
    %v10073 = vld [vmem:[%s10072] sm:$0xf]
    %v10074 = vld [vmem:[%s10072 + $0x4] sm:$0xf]
    %v10075 = vld [vmem:[%s10072 + $0x8] sm:$0xf]
    %v10076 = vld [vmem:[%s10072 + $0xc] sm:$0xf]
    %v10077 = vpack.c.bf16 %v10065, %v10064
    %v10078 = vpack.c.bf16 %v10067, %v10066
    %v10079 = vpack.c.bf16 %v10069, %v10068
    %v10080 = vpack.c.bf16 %v10071, %v10070
    %v10081 = vld [vmem:[%s9 + $0x1] sm:$0x1]
    %v10082 = vlaneseq
    %v10083 = vshrl.u32 %v10082, 7
    %v10084 = vsub.s32 0, %v10083
    %v10085 = vrot.slane %v10081, %v10084
    %v10090 = vunpack.c.l.b16 %v10073
    %v10091 = vunpack.c.l.b16 %v10074
    %v10092 = vunpack.c.l.b16 %v10075
    %v10093 = vunpack.c.l.b16 %v10076
    %v10094 = vpack.c.b16 %v10091, %v10090
    %v10095 = vpack.c.b16 %v10093, %v10092
    %10098 = vmatprep.subr.bf16.mxu0 0
    %10099 = vmatpush1.bf16.xpose.msra.mxu0 0
    %10100 = vmatprep.subr.bf16.mxu0 0
    %10101 = vmatpush1.bf16.xpose.msra.mxu0 0
    %10102 = vmatprep.subr.bf16.mxu0 0
    %10103 = vmatpush1.bf16.xpose.msra.mxu0 0
    %10104 = vmatprep.subr.bf16.mxu0 0
    %10105 = vmatpush1.bf16.xpose.msra.mxu0 0
    %10106 = vmatprep.subr.bf16.mxu0 0
    %10107 = vmatpush1.bf16.xpose.msra.mxu0 0
    %10108 = vmatprep.subr.bf16.mxu0 0
    %10109 = vmatpush1.bf16.xpose.msra.mxu0 0
    %10110 = vmatprep.subr.bf16.mxu0 0
    %10111 = vmatpush1.bf16.xpose.msra.mxu0 %v10095
    %10112 = vmatprep.subr.bf16.mxu0 0
    %10113 = vmatpush1.bf16.xpose.msra.mxu0 %v10094
    %10114 = vmatprep.subr.bf16.mxu0 0
    %10115 = vmatpush2.bf16.xpose.msra.mxu0 0
    %10116 = vmatprep.subr.bf16.mxu0 0
    %10117 = vmatpush2.bf16.xpose.msra.mxu0 0
    %10118 = vmatprep.subr.bf16.mxu0 0
    %10119 = vmatpush2.bf16.xpose.msra.mxu0 0
    %10120 = vmatprep.subr.bf16.mxu0 0
    %10121 = vmatpush2.bf16.xpose.msra.mxu0 0
    %10122 = vmatprep.subr.bf16.mxu0 0
    %10123 = vmatpush2.bf16.xpose.msra.mxu0 0
    %10124 = vmatprep.subr.bf16.mxu0 0
    %10125 = vmatpush2.bf16.xpose.msra.mxu0 0
    %10126 = vmatprep.subr.bf16.mxu0 0
    %10127 = vmatpush2.bf16.xpose.msra.mxu0 0
    %10128 = vmatprep.subr.bf16.mxu0 0
    %10129 = vmatpush2.bf16.xpose.msra.mxu0 0
    %10130 = vmatprep.mubr.bf16.mxu0 0
    %10131 = vmatmul.mubr.bf16.gmra.mxu0 %v10077
    %v10132 = vpop.f32.mrf.mxu0
    %v10133 = vadd.f32 %v10085, %v10132
    %v10134 = vpop.f32.mrf.mxu0
    %v10135 = vpop.f32.mrf.mxu0
    %v10136 = vadd.f32 %v10085, %v10135
    %v10137 = vpop.f32.mrf.mxu0
    %10138 = vmatprep.mubr.bf16.mxu0 0
    %10139 = vmatmul.mubr.bf16.gmra.mxu0 %v10078
    %v10140 = vpop.f32.mrf.mxu0
    %v10141 = vadd.f32 %v10085, %v10140
    %v10142 = vpop.f32.mrf.mxu0
    %v10143 = vpop.f32.mrf.mxu0
    %v10144 = vadd.f32 %v10085, %v10143
    %v10145 = vpop.f32.mrf.mxu0
    %10146 = vmatprep.mubr.bf16.mxu0 0
    %10147 = vmatmul.mubr.bf16.gmra.mxu0 %v10079
    %v10148 = vpop.f32.mrf.mxu0
    %v10149 = vadd.f32 %v10085, %v10148
    %v10150 = vpop.f32.mrf.mxu0
    %v10151 = vpop.f32.mrf.mxu0
    %v10152 = vadd.f32 %v10085, %v10151
    %v10153 = vpop.f32.mrf.mxu0
    %10154 = vmatprep.mubr.bf16.mxu0 0
    %10155 = vmatmul.mubr.bf16.gmra.mxu0 %v10080
    %v10156 = vpop.f32.mrf.mxu0
    %v10157 = vadd.f32 %v10085, %v10156
    %v10158 = vpop.f32.mrf.mxu0
    %v10159 = vpop.f32.mrf.mxu0
    %v10160 = vadd.f32 %v10085, %v10159
    %v10161 = vpop.f32.mrf.mxu0
    %10162 = vdwg.mxu0
    %v10163 = vmax.f32 %v10133, 0.0
    %v10164 = vmax.f32 %v10136, 0.0
    %v10165 = vmax.f32 %v10141, 0.0
    %v10166 = vmax.f32 %v10144, 0.0
    %v10167 = vmax.f32 %v10149, 0.0
    %v10168 = vmax.f32 %v10152, 0.0
    %v10169 = vmax.f32 %v10157, 0.0
    %v10170 = vmax.f32 %v10160, 0.0
    %s10171 = scalar_lea.vmem %s10, 64
    %v10172 = vld [vmem:[%s10171] sm:$0xf]
    %v10173 = vld [vmem:[%s10171 + $0x4] sm:$0xf]
    %v10174 = vld [vmem:[%s10171 + $0x8] sm:$0xf]
    %v10175 = vld [vmem:[%s10171 + $0xc] sm:$0xf]
    %v10176 = vld [vmem:[%s10171 + $0x10] sm:$0xf]
    %v10177 = vld [vmem:[%s10171 + $0x14] sm:$0xf]
    %v10178 = vld [vmem:[%s10171 + $0x18] sm:$0xf]
    %v10179 = vld [vmem:[%s10171 + $0x1c] sm:$0xf]
    %v10180 = vld [vmem:[%s10171 + $0x20] sm:$0xf]
    %v10181 = vld [vmem:[%s10171 + $0x24] sm:$0xf]
    %v10182 = vld [vmem:[%s10171 + $0x28] sm:$0xf]
    %v10183 = vld [vmem:[%s10171 + $0x2c] sm:$0xf]
    %v10184 = vld [vmem:[%s10171 + $0x30] sm:$0xf]
    %v10185 = vld [vmem:[%s10171 + $0x34] sm:$0xf]
    %v10186 = vld [vmem:[%s10171 + $0x38] sm:$0xf]
    %v10187 = vld [vmem:[%s10171 + $0x3c] sm:$0xf]
    %v10188 = vpack.c.bf16 %v10164, %v10163
    %v10189 = vpack.c.bf16 %v10166, %v10165
    %v10190 = vpack.c.bf16 %v10168, %v10167
    %v10191 = vpack.c.bf16 %v10170, %v10169
    %v10192 = vld [vmem:[%s11 + $0x1] sm:$0x1]
    %v10193 = vlaneseq
    %v10194 = vshrl.u32 %v10193, 7
    %v10195 = vsub.s32 0, %v10194
    %v10196 = vrot.slane %v10192, %v10195
    %v10213 = vunpack.c.l.b16 %v10172
    %v10214 = vunpack.c.l.b16 %v10173
    %v10215 = vunpack.c.l.b16 %v10174
    %v10216 = vunpack.c.l.b16 %v10175
    %v10217 = vunpack.c.l.b16 %v10176
    %v10218 = vunpack.c.l.b16 %v10177
    %v10219 = vunpack.c.l.b16 %v10178
    %v10220 = vunpack.c.l.b16 %v10179
    %v10221 = vunpack.c.l.b16 %v10180
    %v10222 = vunpack.c.l.b16 %v10181
    %v10223 = vunpack.c.l.b16 %v10182
    %v10224 = vunpack.c.l.b16 %v10183
    %v10225 = vunpack.c.l.b16 %v10184
    %v10226 = vunpack.c.l.b16 %v10185
    %v10227 = vunpack.c.l.b16 %v10186
    %v10228 = vunpack.c.l.b16 %v10187
    %v10229 = vpack.c.b16 %v10214, %v10213
    %v10230 = vpack.c.b16 %v10216, %v10215
    %v10231 = vpack.c.b16 %v10218, %v10217
    %v10232 = vpack.c.b16 %v10220, %v10219
    %v10233 = vpack.c.b16 %v10222, %v10221
    %v10234 = vpack.c.b16 %v10224, %v10223
    %v10235 = vpack.c.b16 %v10226, %v10225
    %v10236 = vpack.c.b16 %v10228, %v10227
    %v10238 = vsel %vm708, %v10188, 0
    %v10241 = vsel %vm708, %v10189, 0
    %v10244 = vsel %vm708, %v10190, 0
    %v10247 = vsel %vm708, %v10191, 0
    %v10250 = vsel %vm708, %v10229, 0
    %v10253 = vsel %vm708, %v10230, 0
    %v10256 = vsel %vm708, %v10231, 0
    %v10259 = vsel %vm708, %v10232, 0
    %v10262 = vsel %vm708, %v10233, 0
    %v10265 = vsel %vm708, %v10234, 0
    %v10268 = vsel %vm708, %v10235, 0
    %v10271 = vsel %vm708, %v10236, 0
    %10273 = vmatprep.subr.bf16.mxu0 0
    %10274 = vmatpush1.bf16.xpose.msra.mxu0 %v10271
    %10275 = vmatprep.subr.bf16.mxu0 0
    %10276 = vmatpush1.bf16.xpose.msra.mxu0 %v10268
    %10277 = vmatprep.subr.bf16.mxu0 0
    %10278 = vmatpush1.bf16.xpose.msra.mxu0 %v10265
    %10279 = vmatprep.subr.bf16.mxu0 0
    %10280 = vmatpush1.bf16.xpose.msra.mxu0 %v10262
    %10281 = vmatprep.subr.bf16.mxu0 0
    %10282 = vmatpush1.bf16.xpose.msra.mxu0 %v10259
    %10283 = vmatprep.subr.bf16.mxu0 0
    %10284 = vmatpush1.bf16.xpose.msra.mxu0 %v10256
    %10285 = vmatprep.subr.bf16.mxu0 0
    %10286 = vmatpush1.bf16.xpose.msra.mxu0 %v10253
    %10287 = vmatprep.subr.bf16.mxu0 0
    %10288 = vmatpush1.bf16.xpose.msra.mxu0 %v10250
    %10289 = vmatprep.subr.bf16.mxu0 0
    %10290 = vmatpush2.bf16.xpose.msra.mxu0 0
    %10291 = vmatprep.subr.bf16.mxu0 0
    %10292 = vmatpush2.bf16.xpose.msra.mxu0 0
    %10293 = vmatprep.subr.bf16.mxu0 0
    %10294 = vmatpush2.bf16.xpose.msra.mxu0 0
    %10295 = vmatprep.subr.bf16.mxu0 0
    %10296 = vmatpush2.bf16.xpose.msra.mxu0 0
    %10297 = vmatprep.subr.bf16.mxu0 0
    %10298 = vmatpush2.bf16.xpose.msra.mxu0 0
    %10299 = vmatprep.subr.bf16.mxu0 0
    %10300 = vmatpush2.bf16.xpose.msra.mxu0 0
    %10301 = vmatprep.subr.bf16.mxu0 0
    %10302 = vmatpush2.bf16.xpose.msra.mxu0 0
    %10303 = vmatprep.subr.bf16.mxu0 0
    %10304 = vmatpush2.bf16.xpose.msra.mxu0 0
    %10305 = vmatprep.mubr.bf16.mxu0 0
    %10306 = vmatmul.mubr.bf16.gmra.mxu0 %v10238
    %v10307 = vpop.f32.mrf.mxu0
    %v10308 = vadd.f32 %v10196, %v10307
    %v10309 = vpop.f32.mrf.mxu0
    %v10310 = vpop.f32.mrf.mxu0
    %v10311 = vadd.f32 %v10196, %v10310
    %v10312 = vpop.f32.mrf.mxu0
    %10313 = vmatprep.mubr.bf16.mxu0 0
    %10314 = vmatmul.mubr.bf16.gmra.mxu0 %v10241
    %v10315 = vpop.f32.mrf.mxu0
    %v10316 = vadd.f32 %v10196, %v10315
    %v10317 = vpop.f32.mrf.mxu0
    %v10318 = vpop.f32.mrf.mxu0
    %v10319 = vadd.f32 %v10196, %v10318
    %v10320 = vpop.f32.mrf.mxu0
    %10321 = vmatprep.mubr.bf16.mxu0 0
    %10322 = vmatmul.mubr.bf16.gmra.mxu0 %v10244
    %v10323 = vpop.f32.mrf.mxu0
    %v10324 = vadd.f32 %v10196, %v10323
    %v10325 = vpop.f32.mrf.mxu0
    %v10326 = vpop.f32.mrf.mxu0
    %v10327 = vadd.f32 %v10196, %v10326
    %v10328 = vpop.f32.mrf.mxu0
    %10329 = vmatprep.mubr.bf16.mxu0 0
    %10330 = vmatmul.mubr.bf16.gmra.mxu0 %v10247
    %v10331 = vpop.f32.mrf.mxu0
    %v10332 = vadd.f32 %v10196, %v10331
    %v10333 = vpop.f32.mrf.mxu0
    %v10334 = vpop.f32.mrf.mxu0
    %v10335 = vadd.f32 %v10196, %v10334
    %v10336 = vpop.f32.mrf.mxu0
    %10337 = vdwg.mxu0
    %v10338 = vadd.f32 %v10064, %v10308
    %v10339 = vadd.f32 %v10065, %v10311
    %v10340 = vadd.f32 %v10066, %v10316
    %v10341 = vadd.f32 %v10067, %v10319
    %v10342 = vadd.f32 %v10068, %v10324
    %v10343 = vadd.f32 %v10069, %v10327
    %v10344 = vadd.f32 %v10070, %v10332
    %v10345 = vadd.f32 %v10071, %v10335
    %v10346 = vld [vmem:[%s14 + $0x1] sm:$0x1]
    %v10347 = vld [vmem:[%s15 + $0x1] sm:$0x1]
    %10348 = vadd.xlane.f32.xlu0 %v10338
    %v10349 = vpop.xlane.xlu0 %10348
    %10350 = vadd.xlane.f32.xlu0 %v10339
    %v10351 = vpop.xlane.xlu0 %10350
    %10352 = vadd.xlane.f32.xlu0 %v10340
    %v10353 = vpop.xlane.xlu0 %10352
    %10354 = vadd.xlane.f32.xlu0 %v10341
    %v10355 = vpop.xlane.xlu0 %10354
    %10356 = vadd.xlane.f32.xlu0 %v10342
    %v10357 = vpop.xlane.xlu0 %10356
    %10358 = vadd.xlane.f32.xlu0 %v10343
    %v10359 = vpop.xlane.xlu0 %10358
    %10360 = vadd.xlane.f32.xlu0 %v10344
    %v10361 = vpop.xlane.xlu0 %10360
    %10362 = vadd.xlane.f32.xlu0 %v10345
    %v10363 = vpop.xlane.xlu0 %10362
    %v10364 = vmul.f32 %v10349, %v4909
    %v10365 = vmul.f32 %v10351, %v4909
    %v10366 = vmul.f32 %v10353, %v4909
    %v10367 = vmul.f32 %v10355, %v4909
    %v10368 = vmul.f32 %v10357, %v4909
    %v10369 = vmul.f32 %v10359, %v4909
    %v10370 = vmul.f32 %v10361, %v4909
    %v10371 = vmul.f32 %v10363, %v4909
    %v10372 = vsub.f32 %v10338, %v10364
    %v10373 = vsub.f32 %v10339, %v10365
    %v10374 = vsub.f32 %v10340, %v10366
    %v10375 = vsub.f32 %v10341, %v10367
    %v10376 = vsub.f32 %v10342, %v10368
    %v10377 = vsub.f32 %v10343, %v10369
    %v10378 = vsub.f32 %v10344, %v10370
    %v10379 = vsub.f32 %v10345, %v10371
    %v10380 = vmul.f32 %v10372, %v10372
    %v10381 = vmul.f32 %v10373, %v10373
    %v10382 = vmul.f32 %v10374, %v10374
    %v10383 = vmul.f32 %v10375, %v10375
    %v10384 = vmul.f32 %v10376, %v10376
    %v10385 = vmul.f32 %v10377, %v10377
    %v10386 = vmul.f32 %v10378, %v10378
    %v10387 = vmul.f32 %v10379, %v10379
    %10388 = vadd.xlane.f32.xlu0 %v10380
    %v10389 = vpop.xlane.xlu0 %10388
    %10390 = vadd.xlane.f32.xlu0 %v10381
    %v10391 = vpop.xlane.xlu0 %10390
    %10392 = vadd.xlane.f32.xlu0 %v10382
    %v10393 = vpop.xlane.xlu0 %10392
    %10394 = vadd.xlane.f32.xlu0 %v10383
    %v10395 = vpop.xlane.xlu0 %10394
    %10396 = vadd.xlane.f32.xlu0 %v10384
    %v10397 = vpop.xlane.xlu0 %10396
    %10398 = vadd.xlane.f32.xlu0 %v10385
    %v10399 = vpop.xlane.xlu0 %10398
    %10400 = vadd.xlane.f32.xlu0 %v10386
    %v10401 = vpop.xlane.xlu0 %10400
    %10402 = vadd.xlane.f32.xlu0 %v10387
    %v10403 = vpop.xlane.xlu0 %10402
    %v10404 = vmul.f32 %v10389, %v4909
    %v10405 = vmul.f32 %v10391, %v4909
    %v10406 = vmul.f32 %v10393, %v4909
    %v10407 = vmul.f32 %v10395, %v4909
    %v10408 = vmul.f32 %v10397, %v4909
    %v10409 = vmul.f32 %v10399, %v4909
    %v10410 = vmul.f32 %v10401, %v4909
    %v10411 = vmul.f32 %v10403, %v4909
    %v10412 = vadd.f32 %v10404, 1e-05
    %v10413 = vadd.f32 %v10405, 1e-05
    %v10414 = vadd.f32 %v10406, 1e-05
    %v10415 = vadd.f32 %v10407, 1e-05
    %v10416 = vadd.f32 %v10408, 1e-05
    %v10417 = vadd.f32 %v10409, 1e-05
    %v10418 = vadd.f32 %v10410, 1e-05
    %v10419 = vadd.f32 %v10411, 1e-05
    %v10420 = vrsqrt.pop %v10412
    %v10421 = vrsqrt.pop %v10413
    %v10422 = vrsqrt.pop %v10414
    %v10423 = vrsqrt.pop %v10415
    %v10424 = vrsqrt.pop %v10416
    %v10425 = vrsqrt.pop %v10417
    %v10426 = vrsqrt.pop %v10418
    %v10427 = vrsqrt.pop %v10419
    %v10428 = vmul.f32 %v10372, %v10420
    %v10429 = vmul.f32 %v10373, %v10421
    %v10430 = vmul.f32 %v10374, %v10422
    %v10431 = vmul.f32 %v10375, %v10423
    %v10432 = vmul.f32 %v10376, %v10424
    %v10433 = vmul.f32 %v10377, %v10425
    %v10434 = vmul.f32 %v10378, %v10426
    %v10435 = vmul.f32 %v10379, %v10427
    %v10436 = vlaneseq
    %v10437 = vshrl.u32 %v10436, 7
    %v10438 = vsub.s32 0, %v10437
    %v10439 = vrot.slane %v10346, %v10438
    %v10440 = vmul.f32 %v10428, %v10439
    %v10441 = vmul.f32 %v10429, %v10439
    %v10442 = vmul.f32 %v10430, %v10439
    %v10443 = vmul.f32 %v10431, %v10439
    %v10444 = vmul.f32 %v10432, %v10439
    %v10445 = vmul.f32 %v10433, %v10439
    %v10446 = vmul.f32 %v10434, %v10439
    %v10447 = vmul.f32 %v10435, %v10439
    %v10448 = vlaneseq
    %v10449 = vshrl.u32 %v10448, 7
    %v10450 = vsub.s32 0, %v10449
    %v10451 = vrot.slane %v10347, %v10450
    %v10452 = vadd.f32 %v10440, %v10451
    %v10453 = vadd.f32 %v10441, %v10451
    %v10454 = vadd.f32 %v10442, %v10451
    %v10455 = vadd.f32 %v10443, %v10451
    %v10456 = vadd.f32 %v10444, %v10451
    %v10457 = vadd.f32 %v10445, %v10451
    %v10458 = vadd.f32 %v10446, %v10451
    %v10459 = vadd.f32 %v10447, %v10451
    %v10460 = vadd.f32 %v10452, %v10453
    %v10461 = vadd.f32 %v10460, %v10454
    %v10462 = vadd.f32 %v10461, %v10455
    %v10463 = vadd.f32 %v10462, %v10456
    %v10464 = vadd.f32 %v10463, %v10457
    %v10465 = vadd.f32 %v10464, %v10458
    %v10466 = vadd.f32 %v10465, %v10459
    %v10467 = vld [vmem:[%s16] sm:$0xf]
    %v10468 = vld [vmem:[%s16 + $0x4] sm:$0xf]
    %v10469 = vld [vmem:[%s16 + $0x8] sm:$0xf]
    %v10470 = vld [vmem:[%s16 + $0xc] sm:$0xf]
    %v10471 = vld [vmem:[%s16 + $0x10] sm:$0xf]
    %v10472 = vld [vmem:[%s16 + $0x14] sm:$0xf]
    %v10473 = vld [vmem:[%s16 + $0x18] sm:$0xf]
    %v10474 = vld [vmem:[%s16 + $0x1c] sm:$0xf]
    %v10475 = vld [vmem:[%s16 + $0x20] sm:$0xf]
    %v10476 = vld [vmem:[%s16 + $0x24] sm:$0xf]
    %v10477 = vld [vmem:[%s16 + $0x28] sm:$0xf]
    %v10478 = vld [vmem:[%s16 + $0x2c] sm:$0xf]
    %v10479 = vld [vmem:[%s16 + $0x30] sm:$0xf]
    %v10480 = vld [vmem:[%s16 + $0x34] sm:$0xf]
    %v10481 = vld [vmem:[%s16 + $0x38] sm:$0xf]
    %v10482 = vld [vmem:[%s16 + $0x3c] sm:$0xf]
    %v10483 = vpack.c.bf16 %v10466, %v10466
    %v10500 = vunpack.c.l.b16 %v10467
    %v10501 = vunpack.c.l.b16 %v10468
    %v10502 = vunpack.c.l.b16 %v10469
    %v10503 = vunpack.c.l.b16 %v10470
    %v10504 = vunpack.c.l.b16 %v10471
    %v10505 = vunpack.c.l.b16 %v10472
    %v10506 = vunpack.c.l.b16 %v10473
    %v10507 = vunpack.c.l.b16 %v10474
    %v10508 = vunpack.c.l.b16 %v10475
    %v10509 = vunpack.c.l.b16 %v10476
    %v10510 = vunpack.c.l.b16 %v10477
    %v10511 = vunpack.c.l.b16 %v10478
    %v10512 = vunpack.c.l.b16 %v10479
    %v10513 = vunpack.c.l.b16 %v10480
    %v10514 = vunpack.c.l.b16 %v10481
    %v10515 = vunpack.c.l.b16 %v10482
    %v10516 = vpack.c.b16 %v10501, %v10500
    %v10517 = vpack.c.b16 %v10503, %v10502
    %v10518 = vpack.c.b16 %v10505, %v10504
    %v10519 = vpack.c.b16 %v10507, %v10506
    %v10520 = vpack.c.b16 %v10509, %v10508
    %v10521 = vpack.c.b16 %v10511, %v10510
    %v10522 = vpack.c.b16 %v10513, %v10512
    %v10523 = vpack.c.b16 %v10515, %v10514
    %10532 = vmatprep.subr.bf16.mxu0 0
    %10533 = vmatpush1.bf16.xpose.msra.mxu0 %v10523
    %10534 = vmatprep.subr.bf16.mxu0 0
    %10535 = vmatpush1.bf16.xpose.msra.mxu0 %v10522
    %10536 = vmatprep.subr.bf16.mxu0 0
    %10537 = vmatpush1.bf16.xpose.msra.mxu0 %v10521
    %10538 = vmatprep.subr.bf16.mxu0 0
    %10539 = vmatpush1.bf16.xpose.msra.mxu0 %v10520
    %10540 = vmatprep.subr.bf16.mxu0 0
    %10541 = vmatpush1.bf16.xpose.msra.mxu0 %v10519
    %10542 = vmatprep.subr.bf16.mxu0 0
    %10543 = vmatpush1.bf16.xpose.msra.mxu0 %v10518
    %10544 = vmatprep.subr.bf16.mxu0 0
    %10545 = vmatpush1.bf16.xpose.msra.mxu0 %v10517
    %10546 = vmatprep.subr.bf16.mxu0 0
    %10547 = vmatpush1.bf16.xpose.msra.mxu0 %v10516
    %10548 = vmatprep.subr.bf16.mxu0 0
    %10549 = vmatpush2.bf16.xpose.msra.mxu0 0
    %10550 = vmatprep.subr.bf16.mxu0 0
    %10551 = vmatpush2.bf16.xpose.msra.mxu0 0
    %10552 = vmatprep.subr.bf16.mxu0 0
    %10553 = vmatpush2.bf16.xpose.msra.mxu0 0
    %10554 = vmatprep.subr.bf16.mxu0 0
    %10555 = vmatpush2.bf16.xpose.msra.mxu0 0
    %10556 = vmatprep.subr.bf16.mxu0 0
    %10557 = vmatpush2.bf16.xpose.msra.mxu0 0
    %10558 = vmatprep.subr.bf16.mxu0 0
    %10559 = vmatpush2.bf16.xpose.msra.mxu0 0
    %10560 = vmatprep.subr.bf16.mxu0 0
    %10561 = vmatpush2.bf16.xpose.msra.mxu0 0
    %10562 = vmatprep.subr.bf16.mxu0 0
    %10563 = vmatpush2.bf16.xpose.msra.mxu0 0
    %10564 = vmatprep.mubr.bf16.mxu0 0
    %10565 = vmatmul.mubr.bf16.gmra.mxu0 %v10483
    %v10566 = vpop.f32.mrf.mxu0
    %v10567 = vadd.f32 0.0, %v10566
    %v10568 = vpop.f32.mrf.mxu0
    %v10569 = vpop.f32.mrf.mxu0
    %v10570 = vpop.f32.mrf.mxu0
    %10571 = vdwg.mxu0
    %10572 = vst [vmem:[#allocation2] sm:$0xff] %v10567
    // Predicated region
    $region70: #{tpu_custom_call.1} parent=1 // pred_check
      _
    $region71: #{tpu_custom_call.1} parent=1 // pred_check_branch
      %10574 = sbr.rel (0) target = $region73
    $region72: #{tpu_custom_call.1} parent=1 // pred_region
      %s10576 = ssub.s32 128, 128
      %10577 = vsyncadd [#allocation3], %s10576
      %s10579 = sshll.u32 [#allocation2], 4
      %s10580 = int_to_ptr.vmem [resolvable:$true] %s10579
      %10582 = dma.vmem_to_hbm [thread:$0]  %s10580, 128, %s17, [#allocation3]
    $region73: #{tpu_custom_call.1} parent=1 // pred_fallthru
      _
    // Predicated region
    $region74: #{tpu_custom_call.1} parent=1 // pred_check
      _
    $region75: #{tpu_custom_call.1} parent=1 // pred_check_branch
      %10584 = sbr.rel (0) target = $region77
    $region76: #{tpu_custom_call.1} parent=1 // pred_region
      %10585 = dma.done [#allocation3], 128
    $region77: #{tpu_custom_call.1} parent=1 // pred_fallthru
      _
    %10586 = vsyncpa [#allocation3], 1

</llo_original>
